<compile_context>
chip_gen: v5e
topology: v5e:2x2
jax: 0.10.0
libtpu: 0.0.40
codegen_flags: <defaults>
</compile_context>

<pallas_src>
import functools
import math

import jax
import jax.numpy as jnp
from jax.experimental import pallas as pl
from jax.experimental.pallas import tpu as pltpu

LN_EPS = 1e-5


# ----------------------------- in-kernel helpers ----------------------------

def _mm(x, w):
    """MXU matmul: bf16 operands, f32 accumulation."""
    return jnp.dot(x.astype(jnp.bfloat16), w.astype(jnp.bfloat16),
                   preferred_element_type=jnp.float32)


def _layernorm(x, g, b):
    mu = jnp.mean(x, axis=-1, keepdims=True)
    var = jnp.mean((x - mu) ** 2, axis=-1, keepdims=True)
    return (x - mu) * jax.lax.rsqrt(var + LN_EPS) * g + b


def _attention(q, k, v, wo, num_heads):
    """Multi-head attention on already-projected q/k/v (rows = tokens).

    Per-head softmax(q k^T / sqrt(dh)) v is computed in f32; the head outputs
    are concatenated once and projected with a single dense (E,E) matmul.
    """
    E = q.shape[-1]
    dh = E // num_heads
    scale = 1.0 / float(dh) ** 0.5
    heads = []
    for h in range(num_heads):
        sl = slice(h * dh, (h + 1) * dh)
        qh = q[:, sl].astype(jnp.bfloat16)
        kh = k[:, sl].astype(jnp.bfloat16)
        vh = v[:, sl].astype(jnp.bfloat16)
        # q @ k^T without materialising a transpose: contract the last dims.
        s = jax.lax.dot_general(qh, kh, (((1,), (1,)), ((), ())),
                                preferred_element_type=jnp.float32) * scale
        s = s - jnp.max(s, axis=-1, keepdims=True)
        p = jnp.exp(s)
        p = p * pl.reciprocal(jnp.sum(p, axis=-1, keepdims=True), approx=True)
        heads.append(jnp.dot(p.astype(jnp.bfloat16), vh,
                             preferred_element_type=jnp.float32))
    o = jnp.concatenate(heads, axis=-1)                       # (S, E) f32
    return jnp.dot(o.astype(jnp.bfloat16), wo,
                   preferred_element_type=jnp.float32)


# --------------------------- fused stack kernels ------------------------------

# packed bias/LN row layout (encoder layer):
#   0:bq 1:bk 2:bv 3:bo 4:n1w 5:n1b 6:b_ffn2 7:n2w 8:n2b
def _encoder_stack_kernel(x_ref, wqkv_ref, wo_ref, w1_ref, w2_ref,
                          vece_ref, vecf_ref,
                          enc_ref, pooled_ref, carry_ref, *, num_heads):
    l = pl.program_id(1)

    @pl.when(l == 0)
    def _():
        carry_ref[...] = x_ref[...].astype(jnp.float32)

    x = carry_ref[...]                                        # (S, E) f32
    E = x.shape[-1]
    vec = vece_ref[...]                                       # (9, E) f32

    qkv = _mm(x, wqkv_ref[...])                               # (S, 3E)
    q = qkv[:, :E] + vec[0:1]
    k = qkv[:, E:2 * E] + vec[1:2]
    v = qkv[:, 2 * E:] + vec[2:3]
    a = _attention(q, k, v, wo_ref[...], num_heads) + vec[3:4]
    x = _layernorm(x + a, vec[4:5], vec[5:6])

    h = jnp.maximum(_mm(x, w1_ref[...]) + vecf_ref[...], 0.0).astype(jnp.bfloat16)
    h = jnp.dot(h, w2_ref[...], preferred_element_type=jnp.float32) + vec[6:7]
    x = _layernorm(x + h, vec[7:8], vec[8:9])

    carry_ref[...] = x

    @pl.when(l == pl.num_programs(1) - 1)
    def _():
        enc_ref[...] = x.astype(enc_ref.dtype)
        pooled_ref[...] = jnp.mean(x, axis=0, keepdims=True)  # (1, E) f32


# packed bias/LN row layout (decoder layer):
#   0:bq_s 1:bk_s 2:bv_s 3:bo_s 4:n1w 5:n1b
#   6:bq_c 7:bk_c 8:bv_c 9:bo_c 10:n2w 11:n2b
#   12:b_ffn2 13:n3w 14:n3b
def _decoder_stack_kernel(z_ref, mem_ref, wqkv_ref, wos_ref,
                          wqc_ref, wkvc_ref, woc_ref, w1_ref, w2_ref,
                          vece_ref, vecf_ref,
                          dec_ref, carry_ref, *, num_heads):
    l = pl.program_id(1)

    @pl.when(l == 0)
    def _():
        carry_ref[...] = jnp.broadcast_to(z_ref[...].astype(jnp.float32),
                                          carry_ref.shape)

    x = carry_ref[...]                                        # (S, E) f32
    E = x.shape[-1]
    vec = vece_ref[...]                                       # (15, E) f32
    mem = mem_ref[...]                                        # (S, E) bf16

    # self-attention
    qkv = _mm(x, wqkv_ref[...])
    q = qkv[:, :E] + vec[0:1]
    k = qkv[:, E:2 * E] + vec[1:2]
    v = qkv[:, 2 * E:] + vec[2:3]
    a = _attention(q, k, v, wos_ref[...], num_heads) + vec[3:4]
    x = _layernorm(x + a, vec[4:5], vec[5:6])

    # cross-attention against the encoder memory
    q = _mm(x, wqc_ref[...]) + vec[6:7]
    kv = jnp.dot(mem, wkvc_ref[...], preferred_element_type=jnp.float32)
    k = kv[:, :E] + vec[7:8]
    v = kv[:, E:] + vec[8:9]
    a = _attention(q, k, v, woc_ref[...], num_heads) + vec[9:10]
    x = _layernorm(x + a, vec[10:11], vec[11:12])

    # feed-forward
    h = jnp.maximum(_mm(x, w1_ref[...]) + vecf_ref[...], 0.0).astype(jnp.bfloat16)
    h = jnp.dot(h, w2_ref[...], preferred_element_type=jnp.float32) + vec[12:13]
    x = _layernorm(x + h, vec[13:14], vec[14:15])

    carry_ref[...] = x

    @pl.when(l == pl.num_programs(1) - 1)
    def _():
        dec_ref[...] = x.astype(dec_ref.dtype)


def _latent_head_kernel(pooled_ref, wml_ref, bml_ref, wze_ref, bze_ref, eps_ref,
                        mu_ref, lv_ref, zp_ref, *, latent_dim):
    # fused fc_mu|fc_logvar matmul, reparameterisation, latent_to_embedding.
    pooled = pooled_ref[...]                                  # (Nb, E) f32
    y = _mm(pooled, wml_ref[...]) + bml_ref[...]              # (Nb, 2L)
    mu = y[:, :latent_dim]
    logvar = y[:, latent_dim:]
    z = mu + jnp.exp(0.5 * logvar) * eps_ref[...]
    zp = _mm(z, wze_ref[...]) + bze_ref[...]                  # (Nb, E)
    mu_ref[...] = mu
    lv_ref[...] = logvar
    zp_ref[...] = zp.astype(zp_ref.dtype)


def _linear_kernel(x_ref, w_ref, b_ref, o_ref):
    y = _mm(x_ref[...], w_ref[...]) + b_ref[...]
    o_ref[...] = y.astype(o_ref.dtype)


# ------------------------------- wrappers ------------------------------------

def _rep_spec(shape):
    """BlockSpec that always maps to the same (whole-array) block."""
    zeros = (0,) * len(shape)
    return pl.BlockSpec(shape, lambda *_: zeros)


def _nbytes(shape, dtype):
    return math.prod(shape) * jnp.dtype(dtype).itemsize


def _vmem_limit(block_bytes, extra_bytes=0):
    """Scoped-VMEM request: double-buffered blocks + live intermediates + slack."""
    est = 2 * (2 * block_bytes + extra_bytes) + (4 << 20)
    return int(max(8 << 20, min(est, 48 << 20)))


def _row_block(m):
    if m % 8 != 0:
        return m
    for bm in (512, 256, 128, 64, 32, 16, 8):
        if m % bm == 0 and m // bm >= 2:
            return bm
    return m


def linear_pallas(x2d, w, b, out_dtype=jnp.float32):
    """y = x @ W + b with pre-transposed W (in, out) and bias (1, out)."""
    M, K = x2d.shape
    N = w.shape[1]
    bm = _row_block(M)
    blk = (_nbytes((bm, K), x2d.dtype) + _nbytes((K, N), w.dtype)
           + _nbytes((1, N), b.dtype) + _nbytes((bm, N), out_dtype))
    return pl.pallas_call(
        _linear_kernel,
        out_shape=jax.ShapeDtypeStruct((M, N), out_dtype),
        grid=(M // bm,),
        in_specs=[
            pl.BlockSpec((bm, K), lambda i: (i, 0)),
            _rep_spec((K, N)),
            _rep_spec((1, N)),
        ],
        out_specs=pl.BlockSpec((bm, N), lambda i: (i, 0)),
        compiler_params=pltpu.CompilerParams(
            dimension_semantics=("parallel",),
            vmem_limit_bytes=_vmem_limit(blk, _nbytes((bm, N), jnp.float32))),
    )(x2d, w, b)


def encoder_stack_pallas(x, p, num_heads):
    Nb, S, E = x.shape
    L = p["wqkv"].shape[0]
    F = p["w1"].shape[-1]
    nv = p["vec_e"].shape[1]
    kernel = functools.partial(_encoder_stack_kernel, num_heads=num_heads)

    blk = (_nbytes((S, E), x.dtype)
           + _nbytes((E, 3 * E), jnp.bfloat16) + _nbytes((E, E), jnp.bfloat16)
           + _nbytes((E, F), jnp.bfloat16) + _nbytes((F, E), jnp.bfloat16)
           + _nbytes((nv, E), jnp.float32) + _nbytes((1, F), jnp.float32)
           + _nbytes((S, E), jnp.bfloat16) + _nbytes((1, E), jnp.float32))
    extra = (_nbytes((S, E), jnp.float32)                       # carry scratch
             + _nbytes((S, F), jnp.float32)                     # FFN intermediate
             + num_heads * _nbytes((S, S), jnp.float32))        # score matrices

    return pl.pallas_call(
        kernel,
        out_shape=(jax.ShapeDtypeStruct((Nb, S, E), jnp.bfloat16),
                   jax.ShapeDtypeStruct((Nb, 1, E), jnp.float32)),
        grid=(Nb, L),
        in_specs=[
            pl.BlockSpec((None, S, E), lambda n, l: (n, 0, 0)),
            pl.BlockSpec((None, E, 3 * E), lambda n, l: (l, 0, 0)),
            pl.BlockSpec((None, E, E), lambda n, l: (l, 0, 0)),
            pl.BlockSpec((None, E, F), lambda n, l: (l, 0, 0)),
            pl.BlockSpec((None, F, E), lambda n, l: (l, 0, 0)),
            pl.BlockSpec((None, nv, E), lambda n, l: (l, 0, 0)),
            pl.BlockSpec((None, 1, F), lambda n, l: (l, 0, 0)),
        ],
        out_specs=(pl.BlockSpec((None, S, E), lambda n, l: (n, 0, 0)),
                   pl.BlockSpec((None, 1, E), lambda n, l: (n, 0, 0))),
        scratch_shapes=[pltpu.VMEM((S, E), jnp.float32)],
        compiler_params=pltpu.CompilerParams(
            dimension_semantics=("parallel", "arbitrary"),
            vmem_limit_bytes=_vmem_limit(blk, extra)),
    )(x, p["wqkv"], p["wo"], p["w1"], p["w2"], p["vec_e"], p["vec_f"])


def decoder_stack_pallas(z_proj, mem, p, num_heads):
    Nb, S, E = mem.shape
    L = p["wqkv"].shape[0]
    F = p["w1"].shape[-1]
    nv = p["vec_e"].shape[1]
    kernel = functools.partial(_decoder_stack_kernel, num_heads=num_heads)

    blk = (_nbytes((1, E), z_proj.dtype) + _nbytes((S, E), mem.dtype)
           + _nbytes((E, 3 * E), jnp.bfloat16) + 3 * _nbytes((E, E), jnp.bfloat16)
           + _nbytes((E, 2 * E), jnp.bfloat16)
           + _nbytes((E, F), jnp.bfloat16) + _nbytes((F, E), jnp.bfloat16)
           + _nbytes((nv, E), jnp.float32) + _nbytes((1, F), jnp.float32)
           + _nbytes((S, E), jnp.bfloat16))
    extra = (_nbytes((S, E), jnp.float32)
             + _nbytes((S, F), jnp.float32)
             + num_heads * _nbytes((S, S), jnp.float32))

    return pl.pallas_call(
        kernel,
        out_shape=jax.ShapeDtypeStruct((Nb, S, E), jnp.bfloat16),
        grid=(Nb, L),
        in_specs=[
            pl.BlockSpec((None, 1, E), lambda n, l: (n, 0, 0)),
            pl.BlockSpec((None, S, E), lambda n, l: (n, 0, 0)),
            pl.BlockSpec((None, E, 3 * E), lambda n, l: (l, 0, 0)),
            pl.BlockSpec((None, E, E), lambda n, l: (l, 0, 0)),
            pl.BlockSpec((None, E, E), lambda n, l: (l, 0, 0)),
            pl.BlockSpec((None, E, 2 * E), lambda n, l: (l, 0, 0)),
            pl.BlockSpec((None, E, E), lambda n, l: (l, 0, 0)),
            pl.BlockSpec((None, E, F), lambda n, l: (l, 0, 0)),
            pl.BlockSpec((None, F, E), lambda n, l: (l, 0, 0)),
            pl.BlockSpec((None, nv, E), lambda n, l: (l, 0, 0)),
            pl.BlockSpec((None, 1, F), lambda n, l: (l, 0, 0)),
        ],
        out_specs=pl.BlockSpec((None, S, E), lambda n, l: (n, 0, 0)),
        scratch_shapes=[pltpu.VMEM((S, E), jnp.float32)],
        compiler_params=pltpu.CompilerParams(
            dimension_semantics=("parallel", "arbitrary"),
            vmem_limit_bytes=_vmem_limit(blk, extra)),
    )(z_proj, mem, p["wqkv"], p["wo_s"], p["wq_c"], p["wkv_c"], p["wo_c"],
      p["w1"], p["w2"], p["vec_e"], p["vec_f"])


def latent_head_pallas(pooled, p, eps):
    Nb, E = pooled.shape
    Ld = eps.shape[-1]
    kernel = functools.partial(_latent_head_kernel, latent_dim=Ld)
    return pl.pallas_call(
        kernel,
        out_shape=(jax.ShapeDtypeStruct((Nb, Ld), jnp.float32),
                   jax.ShapeDtypeStruct((Nb, Ld), jnp.float32),
                   jax.ShapeDtypeStruct((Nb, E), jnp.bfloat16)),
        grid=(1,),
        in_specs=[
            _rep_spec((Nb, E)),
            _rep_spec((E, 2 * Ld)), _rep_spec((1, 2 * Ld)),
            _rep_spec((Ld, E)), _rep_spec((1, E)),
            _rep_spec((Nb, Ld)),
        ],
        out_specs=(_rep_spec((Nb, Ld)), _rep_spec((Nb, Ld)), _rep_spec((Nb, E))),
        compiler_params=pltpu.CompilerParams(vmem_limit_bytes=_vmem_limit(
            _nbytes((Nb, E), jnp.float32) + _nbytes((E, 2 * Ld), jnp.bfloat16)
            + _nbytes((Ld, E), jnp.bfloat16) + 3 * _nbytes((Nb, E), jnp.float32))),
    )(pooled, p["w_ml"], p["b_ml"], p["w_ze"], p["b_ze"], eps)


# ------------------------------ full forward ---------------------------------

def transformer_vae_forward(params, x, eps, num_heads):
    """x: (S, Nb, input_dim) -> (recon (S, Nb, input_dim), mu, logvar)."""
    S, Nb, D = x.shape
    E = params["input_projection"]["w"].shape[1]

    # batch-major internal layout (Nb, S, E); inter-kernel activations in bf16.
    xb = jnp.transpose(x, (1, 0, 2)).reshape(Nb * S, D)
    h = linear_pallas(xb, params["input_projection"]["w"],
                      params["input_projection"]["b"],
                      out_dtype=jnp.bfloat16).reshape(Nb, S, E)

    enc, pooled = encoder_stack_pallas(h, params["encoder"], num_heads)

    mu, logvar, z_proj = latent_head_pallas(pooled.reshape(Nb, E),
                                            params["latent_head"], eps)

    dec = decoder_stack_pallas(z_proj.reshape(Nb, 1, E), enc,
                               params["decoder"], num_heads)

    recon = linear_pallas(dec.reshape(Nb * S, E),
                          params["fc_out"]["w"], params["fc_out"]["b"],
                          out_dtype=jnp.float32)
    recon = jnp.transpose(recon.reshape(Nb, S, D), (1, 0, 2))
    return recon, mu, logvar


# ------------------------ deterministic param init ---------------------------

def init_params(key, input_dim, latent_dim, num_heads, num_layers,
                dim_feedforward=2048):
    E = input_dim
    if input_dim % num_heads != 0:
        E = num_heads * (input_dim // num_heads + 1)
    F = dim_feedforward
    keys = iter(jax.random.split(key, 4096))
    wdt = jnp.bfloat16   # MXU operand dtype; accumulation stays f32 in-kernel

    def w_(shape):
        return (jax.random.normal(next(keys), shape, jnp.float32) * 0.05).astype(wdt)

    def b_(n):
        return jax.random.normal(next(keys), (n,), jnp.float32) * 0.05

    ones_e = jnp.ones((E,), jnp.float32)
    zeros_e = jnp.zeros((E,), jnp.float32)

    def enc_layer():
        vec_e = jnp.stack([b_(E), b_(E), b_(E),      # bq, bk, bv
                           b_(E),                    # attn out bias
                           ones_e, zeros_e,          # norm1 gamma/beta
                           b_(E),                    # ffn2 bias
                           ones_e, zeros_e])         # norm2 gamma/beta
        return {"wqkv": w_((E, 3 * E)), "wo": w_((E, E)),
                "w1": w_((E, F)), "w2": w_((F, E)),
                "vec_e": vec_e, "vec_f": b_(F).reshape(1, F)}

    def dec_layer():
        vec_e = jnp.stack([b_(E), b_(E), b_(E), b_(E),   # self: bq bk bv bo
                           ones_e, zeros_e,              # norm1
                           b_(E), b_(E), b_(E), b_(E),   # cross: bq bk bv bo
                           ones_e, zeros_e,              # norm2
                           b_(E),                        # ffn2 bias
                           ones_e, zeros_e])             # norm3
        return {"wqkv": w_((E, 3 * E)), "wo_s": w_((E, E)),
                "wq_c": w_((E, E)), "wkv_c": w_((E, 2 * E)), "wo_c": w_((E, E)),
                "w1": w_((E, F)), "w2": w_((F, E)),
                "vec_e": vec_e, "vec_f": b_(F).reshape(1, F)}

    def stack(layers):
        return jax.tree_util.tree_map(lambda *xs: jnp.stack(xs), *layers)

    return {
        "input_projection": {"w": w_((input_dim, E)), "b": b_(E).reshape(1, E)},
        "encoder": stack([enc_layer() for _ in range(num_layers)]),
        "latent_head": {"w_ml": w_((E, 2 * latent_dim)),
                        "b_ml": b_(2 * latent_dim).reshape(1, -1),
                        "w_ze": w_((latent_dim, E)),
                        "b_ze": b_(E).reshape(1, E)},
        "decoder": stack([dec_layer() for _ in range(num_layers)]),
        "fc_out": {"w": w_((E, input_dim)), "b": b_(input_dim).reshape(1, -1)},
    }


# --------------------------------- main ---------------------------------------

if __name__ == "__main__":
    input_dim, latent_dim, num_heads, num_layers = 10, 8, 2, 2
    S, Nb = 8, 2   # seq len, batch

    key = jax.random.PRNGKey(0)
    pkey, xkey, ekey = jax.random.split(key, 3)

    params = init_params(pkey, input_dim, latent_dim, num_heads, num_layers)
    x = jax.random.normal(xkey, (S, Nb, input_dim), jnp.float32)
    eps = jax.random.normal(ekey, (Nb, latent_dim), jnp.float32)  # randn_like stand-in

    fwd = jax.jit(functools.partial(transformer_vae_forward, num_heads=num_heads))
    recon, mu, logvar = fwd(params, x, eps)
    jax.block_until_ready((recon, mu, logvar))

    assert recon.shape == (S, Nb, input_dim)
    assert mu.shape == (Nb, latent_dim)
    assert logvar.shape == (Nb, latent_dim)
    assert bool(jnp.all(jnp.isfinite(recon)))
    assert bool(jnp.all(jnp.isfinite(mu)))
    assert bool(jnp.all(jnp.isfinite(logvar)))
    # 10 % 2 == 0 -> no d_model adjustment for this config
    assert params["input_projection"]["w"].shape[1] == 10

    print("KERNEL_OK")
</pallas_src>

<mosaic_0001>
module attributes {stable_mosaic.version = 11 : i64} {
  func.func @_linear_kernel(%arg0: i32, %arg1: memref<8x10xf32, #tpu.memory_space<vmem>>, %arg2: memref<10x10xbf16, #tpu.memory_space<vmem>>, %arg3: memref<1x10xf32, #tpu.memory_space<vmem>>, %arg4: memref<8x10xbf16, #tpu.memory_space<vmem>>) attributes {dimension_semantics = [#tpu.dimension_semantics<parallel>], iteration_bounds = array<i64: 2>, scalar_prefetch = 0 : i64, scratch_operands = 0 : i64, tpu.core_type = #tpu.core_type<tc>, window_params = [{transform_indices = @transform_0, window_bounds = array<i64: 8, 10>}, {pipeline_mode = #tpu.pipeline_mode<synchronous>, transform_indices = @transform_1, window_bounds = array<i64: 10, 10>}, {pipeline_mode = #tpu.pipeline_mode<synchronous>, transform_indices = @transform_2, window_bounds = array<i64: 1, 10>}, {transform_indices = @transform_3, window_bounds = array<i64: 8, 10>}]} {
    %c0 = arith.constant 0 : index
    %c0_0 = arith.constant 0 : index
    %0 = vector.load %arg1[%c0, %c0_0] : memref<8x10xf32, #tpu.memory_space<vmem>>, vector<8x10xf32>
    %c0_1 = arith.constant 0 : index
    %c0_2 = arith.constant 0 : index
    %1 = vector.load %arg2[%c0_1, %c0_2] : memref<10x10xbf16, #tpu.memory_space<vmem>>, vector<10x10xbf16>
    %2 = arith.truncf %0 : vector<8x10xf32> to vector<8x10xbf16>
    %cst = arith.constant dense<0.000000e+00> : vector<8x10xf32>
    %3 = tpu.matmul %2, %1, %cst {dimension_numbers = #tpu.dot_dimension_numbers<[1], [0], [0], [1], [0, 0, 1, 1], [], []>} : vector<8x10xbf16>, vector<10x10xbf16>, vector<8x10xf32> -> vector<8x10xf32>
    %c0_3 = arith.constant 0 : index
    %c0_4 = arith.constant 0 : index
    %4 = vector.load %arg3[%c0_3, %c0_4] : memref<1x10xf32, #tpu.memory_space<vmem>>, vector<1x10xf32>
    %5 = vector.broadcast %4 : vector<1x10xf32> to vector<8x10xf32>
    %6 = arith.addf %3, %5 : vector<8x10xf32>
    %7 = arith.truncf %6 : vector<8x10xf32> to vector<8x10xbf16>
    %c0_5 = arith.constant 0 : index
    %c0_6 = arith.constant 0 : index
    %8 = vector.load %arg4[%c0_5, %c0_6] : memref<8x10xbf16, #tpu.memory_space<vmem>>, vector<8x10xbf16>
    tpu.vector_store %arg4[%c0_5, %c0_6], %7 {strides = array<i32>} : memref<8x10xbf16, #tpu.memory_space<vmem>>, vector<8x10xbf16>,
    return
  }
  func.func @transform_0(%arg0: i32) -> (i32, i32) {
    %c0_i32 = arith.constant 0 : i32
    %c0_i32_0 = arith.constant 0 : i32
    return %arg0, %c0_i32 : i32, i32
  }
  func.func @transform_1(%arg0: i32) -> (i32, i32) {
    %c0_i32 = arith.constant 0 : i32
    %c0_i32_0 = arith.constant 0 : i32
    %c0_i32_1 = arith.constant 0 : i32
    return %c0_i32, %c0_i32_0 : i32, i32
  }
  func.func @transform_2(%arg0: i32) -> (i32, i32) {
    %c0_i32 = arith.constant 0 : i32
    %c0_i32_0 = arith.constant 0 : i32
    %c0_i32_1 = arith.constant 0 : i32
    return %c0_i32, %c0_i32_0 : i32, i32
  }
  func.func @transform_3(%arg0: i32) -> (i32, i32) {
    %c0_i32 = arith.constant 0 : i32
    %c0_i32_0 = arith.constant 0 : i32
    return %arg0, %c0_i32 : i32, i32
  }
}

module attributes {stable_mosaic.version = 11 : i64} {
  func.func @_latent_head_kernel(%arg0: i32, %arg1: memref<2x10xf32, #tpu.memory_space<vmem>>, %arg2: memref<10x16xbf16, #tpu.memory_space<vmem>>, %arg3: memref<1x16xf32, #tpu.memory_space<vmem>>, %arg4: memref<8x10xbf16, #tpu.memory_space<vmem>>, %arg5: memref<1x10xf32, #tpu.memory_space<vmem>>, %arg6: memref<2x8xf32, #tpu.memory_space<vmem>>, %arg7: memref<2x8xf32, #tpu.memory_space<vmem>>, %arg8: memref<2x8xf32, #tpu.memory_space<vmem>>, %arg9: memref<2x10xbf16, #tpu.memory_space<vmem>>) attributes {dimension_semantics = [#tpu.dimension_semantics<arbitrary>], iteration_bounds = array<i64: 1>, scalar_prefetch = 0 : i64, scratch_operands = 0 : i64, tpu.core_type = #tpu.core_type<tc>, window_params = [{pipeline_mode = #tpu.pipeline_mode<synchronous>, transform_indices = @transform_0, window_bounds = array<i64: 2, 10>}, {pipeline_mode = #tpu.pipeline_mode<synchronous>, transform_indices = @transform_1, window_bounds = array<i64: 10, 16>}, {pipeline_mode = #tpu.pipeline_mode<synchronous>, transform_indices = @transform_2, window_bounds = array<i64: 1, 16>}, {pipeline_mode = #tpu.pipeline_mode<synchronous>, transform_indices = @transform_3, window_bounds = array<i64: 8, 10>}, {pipeline_mode = #tpu.pipeline_mode<synchronous>, transform_indices = @transform_4, window_bounds = array<i64: 1, 10>}, {pipeline_mode = #tpu.pipeline_mode<synchronous>, transform_indices = @transform_5, window_bounds = array<i64: 2, 8>}, {pipeline_mode = #tpu.pipeline_mode<synchronous>, transform_indices = @transform_6, window_bounds = array<i64: 2, 8>}, {pipeline_mode = #tpu.pipeline_mode<synchronous>, transform_indices = @transform_7, window_bounds = array<i64: 2, 8>}, {pipeline_mode = #tpu.pipeline_mode<synchronous>, transform_indices = @transform_8, window_bounds = array<i64: 2, 10>}]} {
    %c0 = arith.constant 0 : index
    %c0_0 = arith.constant 0 : index
    %0 = vector.load %arg1[%c0, %c0_0] : memref<2x10xf32, #tpu.memory_space<vmem>>, vector<2x10xf32>
    %c0_1 = arith.constant 0 : index
    %c0_2 = arith.constant 0 : index
    %1 = vector.load %arg2[%c0_1, %c0_2] : memref<10x16xbf16, #tpu.memory_space<vmem>>, vector<10x16xbf16>
    %2 = arith.truncf %0 : vector<2x10xf32> to vector<2x10xbf16>
    %cst = arith.constant dense<0.000000e+00> : vector<2x16xf32>
    %3 = tpu.matmul %2, %1, %cst {dimension_numbers = #tpu.dot_dimension_numbers<[1], [0], [0], [1], [0, 0, 1, 1], [], []>} : vector<2x10xbf16>, vector<10x16xbf16>, vector<2x16xf32> -> vector<2x16xf32>
    %c0_3 = arith.constant 0 : index
    %c0_4 = arith.constant 0 : index
    %4 = vector.load %arg3[%c0_3, %c0_4] : memref<1x16xf32, #tpu.memory_space<vmem>>, vector<1x16xf32>
    %5 = vector.broadcast %4 : vector<1x16xf32> to vector<2x16xf32>
    %6 = arith.addf %3, %5 : vector<2x16xf32>
    %7 = vector.extract_strided_slice %6 {offsets = [0, 0], sizes = [2, 8], strides = [1, 1]} : vector<2x16xf32> to vector<2x8xf32>
    %8 = vector.extract_strided_slice %6 {offsets = [0, 8], sizes = [2, 8], strides = [1, 1]} : vector<2x16xf32> to vector<2x8xf32>
    %cst_5 = arith.constant 5.000000e-01 : f32
    %9 = vector.broadcast %cst_5 : f32 to vector<2x8xf32>
    %10 = arith.mulf %9, %8 : vector<2x8xf32>
    %11 = math.exp %10 : vector<2x8xf32>
    %c0_6 = arith.constant 0 : index
    %c0_7 = arith.constant 0 : index
    %12 = vector.load %arg6[%c0_6, %c0_7] : memref<2x8xf32, #tpu.memory_space<vmem>>, vector<2x8xf32>
    %13 = arith.mulf %11, %12 : vector<2x8xf32>
    %14 = arith.addf %7, %13 : vector<2x8xf32>
    %c0_8 = arith.constant 0 : index
    %c0_9 = arith.constant 0 : index
    %15 = vector.load %arg4[%c0_8, %c0_9] : memref<8x10xbf16, #tpu.memory_space<vmem>>, vector<8x10xbf16>
    %16 = arith.truncf %14 : vector<2x8xf32> to vector<2x8xbf16>
    %cst_10 = arith.constant dense<0.000000e+00> : vector<2x10xf32>
    %17 = tpu.matmul %16, %15, %cst_10 {dimension_numbers = #tpu.dot_dimension_numbers<[1], [0], [0], [1], [0, 0, 1, 1], [], []>} : vector<2x8xbf16>, vector<8x10xbf16>, vector<2x10xf32> -> vector<2x10xf32>
    %c0_11 = arith.constant 0 : index
    %c0_12 = arith.constant 0 : index
    %18 = vector.load %arg5[%c0_11, %c0_12] : memref<1x10xf32, #tpu.memory_space<vmem>>, vector<1x10xf32>
    %19 = vector.broadcast %18 : vector<1x10xf32> to vector<2x10xf32>
    %20 = arith.addf %17, %19 : vector<2x10xf32>
    %c0_13 = arith.constant 0 : index
    %c0_14 = arith.constant 0 : index
    %21 = vector.load %arg7[%c0_13, %c0_14] : memref<2x8xf32, #tpu.memory_space<vmem>>, vector<2x8xf32>
    tpu.vector_store %arg7[%c0_13, %c0_14], %7 {strides = array<i32>} : memref<2x8xf32, #tpu.memory_space<vmem>>, vector<2x8xf32>,
    %c0_15 = arith.constant 0 : index
    %c0_16 = arith.constant 0 : index
    %22 = vector.load %arg8[%c0_15, %c0_16] : memref<2x8xf32, #tpu.memory_space<vmem>>, vector<2x8xf32>
    tpu.vector_store %arg8[%c0_15, %c0_16], %8 {strides = array<i32>} : memref<2x8xf32, #tpu.memory_space<vmem>>, vector<2x8xf32>,
    %23 = arith.truncf %20 : vector<2x10xf32> to vector<2x10xbf16>
    %c0_17 = arith.constant 0 : index
    %c0_18 = arith.constant 0 : index
    %24 = vector.load %arg9[%c0_17, %c0_18] : memref<2x10xbf16, #tpu.memory_space<vmem>>, vector<2x10xbf16>
    tpu.vector_store %arg9[%c0_17, %c0_18], %23 {strides = array<i32>} : memref<2x10xbf16, #tpu.memory_space<vmem>>, vector<2x10xbf16>,
    return
  }
  func.func @transform_0(%arg0: i32) -> (i32, i32) {
    %c0_i32 = arith.constant 0 : i32
    %c0_i32_0 = arith.constant 0 : i32
    %c0_i32_1 = arith.constant 0 : i32
    return %c0_i32, %c0_i32_0 : i32, i32
  }
  func.func @transform_1(%arg0: i32) -> (i32, i32) {
    %c0_i32 = arith.constant 0 : i32
    %c0_i32_0 = arith.constant 0 : i32
    %c0_i32_1 = arith.constant 0 : i32
    return %c0_i32, %c0_i32_0 : i32, i32
  }
  func.func @transform_2(%arg0: i32) -> (i32, i32) {
    %c0_i32 = arith.constant 0 : i32
    %c0_i32_0 = arith.constant 0 : i32
    %c0_i32_1 = arith.constant 0 : i32
    return %c0_i32, %c0_i32_0 : i32, i32
  }
  func.func @transform_3(%arg0: i32) -> (i32, i32) {
    %c0_i32 = arith.constant 0 : i32
    %c0_i32_0 = arith.constant 0 : i32
    %c0_i32_1 = arith.constant 0 : i32
    return %c0_i32, %c0_i32_0 : i32, i32
  }
  func.func @transform_4(%arg0: i32) -> (i32, i32) {
    %c0_i32 = arith.constant 0 : i32
    %c0_i32_0 = arith.constant 0 : i32
    %c0_i32_1 = arith.constant 0 : i32
    return %c0_i32, %c0_i32_0 : i32, i32
  }
  func.func @transform_5(%arg0: i32) -> (i32, i32) {
    %c0_i32 = arith.constant 0 : i32
    %c0_i32_0 = arith.constant 0 : i32
    %c0_i32_1 = arith.constant 0 : i32
    return %c0_i32, %c0_i32_0 : i32, i32
  }
  func.func @transform_6(%arg0: i32) -> (i32, i32) {
    %c0_i32 = arith.constant 0 : i32
    %c0_i32_0 = arith.constant 0 : i32
    %c0_i32_1 = arith.constant 0 : i32
    return %c0_i32, %c0_i32_0 : i32, i32
  }
  func.func @transform_7(%arg0: i32) -> (i32, i32) {
    %c0_i32 = arith.constant 0 : i32
    %c0_i32_0 = arith.constant 0 : i32
    %c0_i32_1 = arith.constant 0 : i32
    return %c0_i32, %c0_i32_0 : i32, i32
  }
  func.func @transform_8(%arg0: i32) -> (i32, i32) {
    %c0_i32 = arith.constant 0 : i32
    %c0_i32_0 = arith.constant 0 : i32
    %c0_i32_1 = arith.constant 0 : i32
    return %c0_i32, %c0_i32_0 : i32, i32
  }
}

module attributes {stable_mosaic.version = 11 : i64} {
  func.func @_encoder_stack_kernel(%arg0: i32, %arg1: i32, %arg2: memref<1x8x10xbf16, #tpu.memory_space<vmem>>, %arg3: memref<1x10x30xbf16, #tpu.memory_space<vmem>>, %arg4: memref<1x10x10xbf16, #tpu.memory_space<vmem>>, %arg5: memref<1x10x2048xbf16, #tpu.memory_space<vmem>>, %arg6: memref<1x2048x10xbf16, #tpu.memory_space<vmem>>, %arg7: memref<1x9x10xf32, #tpu.memory_space<vmem>>, %arg8: memref<1x1x2048xf32, #tpu.memory_space<vmem>>, %arg9: memref<1x8x10xbf16, #tpu.memory_space<vmem>>, %arg10: memref<1x1x10xf32, #tpu.memory_space<vmem>>, %arg11: memref<8x10xf32, #tpu.memory_space<vmem>>) attributes {dimension_semantics = [#tpu.dimension_semantics<parallel>, #tpu.dimension_semantics<arbitrary>], iteration_bounds = array<i64: 2, 2>, scalar_prefetch = 0 : i64, scratch_operands = 1 : i64, tpu.core_type = #tpu.core_type<tc>, window_params = [{transform_indices = @transform_0, window_bounds = array<i64: 1, 8, 10>}, {transform_indices = @transform_1, window_bounds = array<i64: 1, 10, 30>}, {transform_indices = @transform_2, window_bounds = array<i64: 1, 10, 10>}, {transform_indices = @transform_3, window_bounds = array<i64: 1, 10, 2048>}, {transform_indices = @transform_4, window_bounds = array<i64: 1, 2048, 10>}, {transform_indices = @transform_5, window_bounds = array<i64: 1, 9, 10>}, {transform_indices = @transform_6, window_bounds = array<i64: 1, 1, 2048>}, {transform_indices = @transform_7, window_bounds = array<i64: 1, 8, 10>}, {transform_indices = @transform_8, window_bounds = array<i64: 1, 1, 10>}]} {
    %c0_i32 = arith.constant 0 : i32
    %0 = arith.cmpi eq, %arg1, %c0_i32 : i32
    %1 = arith.extui %0 : i1 to i32
    %c0_i32_0 = arith.constant 0 : i32
    %2 = arith.cmpi ne, %1, %c0_i32_0 : i32
    scf.if %2 {
      %c0_47 = arith.constant 0 : index
      %c0_48 = arith.constant 0 : index
      %c0_49 = arith.constant 0 : index
      %143 = vector.load %arg2[%c0_47, %c0_48, %c0_49] : memref<1x8x10xbf16, #tpu.memory_space<vmem>>, vector<1x8x10xbf16>
      %144 = vector.shape_cast %143 : vector<1x8x10xbf16> to vector<8x10xbf16>
      %145 = arith.extf %144 : vector<8x10xbf16> to vector<8x10xf32>
      %c0_50 = arith.constant 0 : index
      %c0_51 = arith.constant 0 : index
      %146 = vector.load %arg11[%c0_50, %c0_51] : memref<8x10xf32, #tpu.memory_space<vmem>>, vector<8x10xf32>
      tpu.vector_store %arg11[%c0_50, %c0_51], %145 {strides = array<i32>} : memref<8x10xf32, #tpu.memory_space<vmem>>, vector<8x10xf32>,
    } else {
    }
    %c0 = arith.constant 0 : index
    %c0_1 = arith.constant 0 : index
    %3 = vector.load %arg11[%c0, %c0_1] : memref<8x10xf32, #tpu.memory_space<vmem>>, vector<8x10xf32>
    %c0_2 = arith.constant 0 : index
    %c0_3 = arith.constant 0 : index
    %c0_4 = arith.constant 0 : index
    %4 = vector.load %arg7[%c0_2, %c0_3, %c0_4] : memref<1x9x10xf32, #tpu.memory_space<vmem>>, vector<1x9x10xf32>
    %5 = vector.shape_cast %4 : vector<1x9x10xf32> to vector<9x10xf32>
    %c0_5 = arith.constant 0 : index
    %c0_6 = arith.constant 0 : index
    %c0_7 = arith.constant 0 : index
    %6 = vector.load %arg3[%c0_5, %c0_6, %c0_7] : memref<1x10x30xbf16, #tpu.memory_space<vmem>>, vector<1x10x30xbf16>
    %7 = vector.shape_cast %6 : vector<1x10x30xbf16> to vector<10x30xbf16>
    %8 = arith.truncf %3 : vector<8x10xf32> to vector<8x10xbf16>
    %cst = arith.constant dense<0.000000e+00> : vector<8x30xf32>
    %9 = tpu.matmul %8, %7, %cst {dimension_numbers = #tpu.dot_dimension_numbers<[1], [0], [0], [1], [0, 0, 1, 1], [], []>} : vector<8x10xbf16>, vector<10x30xbf16>, vector<8x30xf32> -> vector<8x30xf32>
    %10 = vector.extract_strided_slice %9 {offsets = [0, 0], sizes = [8, 10], strides = [1, 1]} : vector<8x30xf32> to vector<8x10xf32>
    %11 = vector.extract_strided_slice %5 {offsets = [0, 0], sizes = [1, 10], strides = [1, 1]} : vector<9x10xf32> to vector<1x10xf32>
    %12 = vector.broadcast %11 : vector<1x10xf32> to vector<8x10xf32>
    %13 = arith.addf %10, %12 : vector<8x10xf32>
    %14 = vector.extract_strided_slice %9 {offsets = [0, 10], sizes = [8, 10], strides = [1, 1]} : vector<8x30xf32> to vector<8x10xf32>
    %15 = vector.extract_strided_slice %5 {offsets = [1, 0], sizes = [1, 10], strides = [1, 1]} : vector<9x10xf32> to vector<1x10xf32>
    %16 = vector.broadcast %15 : vector<1x10xf32> to vector<8x10xf32>
    %17 = arith.addf %14, %16 : vector<8x10xf32>
    %18 = vector.extract_strided_slice %9 {offsets = [0, 20], sizes = [8, 10], strides = [1, 1]} : vector<8x30xf32> to vector<8x10xf32>
    %19 = vector.extract_strided_slice %5 {offsets = [2, 0], sizes = [1, 10], strides = [1, 1]} : vector<9x10xf32> to vector<1x10xf32>
    %20 = vector.broadcast %19 : vector<1x10xf32> to vector<8x10xf32>
    %21 = arith.addf %18, %20 : vector<8x10xf32>
    %c0_8 = arith.constant 0 : index
    %c0_9 = arith.constant 0 : index
    %c0_10 = arith.constant 0 : index
    %22 = vector.load %arg4[%c0_8, %c0_9, %c0_10] : memref<1x10x10xbf16, #tpu.memory_space<vmem>>, vector<1x10x10xbf16>
    %23 = vector.shape_cast %22 : vector<1x10x10xbf16> to vector<10x10xbf16>
    %24 = vector.extract_strided_slice %13 {offsets = [0, 0], sizes = [8, 5], strides = [1, 1]} : vector<8x10xf32> to vector<8x5xf32>
    %25 = arith.truncf %24 : vector<8x5xf32> to vector<8x5xbf16>
    %26 = vector.extract_strided_slice %17 {offsets = [0, 0], sizes = [8, 5], strides = [1, 1]} : vector<8x10xf32> to vector<8x5xf32>
    %27 = arith.truncf %26 : vector<8x5xf32> to vector<8x5xbf16>
    %28 = vector.extract_strided_slice %21 {offsets = [0, 0], sizes = [8, 5], strides = [1, 1]} : vector<8x10xf32> to vector<8x5xf32>
    %29 = arith.truncf %28 : vector<8x5xf32> to vector<8x5xbf16>
    %cst_11 = arith.constant dense<0.000000e+00> : vector<8x8xf32>
    %30 = tpu.matmul %25, %27, %cst_11 {dimension_numbers = #tpu.dot_dimension_numbers<[1], [1], [0], [0], [0, 0, 1, 0], [], []>} : vector<8x5xbf16>, vector<8x5xbf16>, vector<8x8xf32> -> vector<8x8xf32>
    %cst_12 = arith.constant 0.44721359 : f32
    %31 = vector.broadcast %cst_12 : f32 to vector<8x8xf32>
    %32 = arith.mulf %30, %31 : vector<8x8xf32>
    %cst_13 = arith.constant dense<0xFF800000> : vector<8xf32>
    %33 = vector.multi_reduction <maximumf>, %32, %cst_13 [1] : vector<8x8xf32> to vector<8xf32>
    %34 = vector.shape_cast %33 : vector<8xf32> to vector<8x1xf32>
    %35 = vector.broadcast %34 : vector<8x1xf32> to vector<8x8xf32>
    %36 = arith.subf %32, %35 : vector<8x8xf32>
    %37 = math.exp %36 : vector<8x8xf32>
    %cst_14 = arith.constant dense<0.000000e+00> : vector<8xf32>
    %38 = vector.multi_reduction <add>, %37, %cst_14 [1] : vector<8x8xf32> to vector<8xf32>
    %39 = vector.shape_cast %38 : vector<8xf32> to vector<8x1xf32>
    %40 = tpu.reciprocal %39 {approx = true} : vector<8x1xf32> -> vector<8x1xf32>
    %41 = vector.broadcast %40 : vector<8x1xf32> to vector<8x8xf32>
    %42 = arith.mulf %37, %41 : vector<8x8xf32>
    %43 = arith.truncf %42 : vector<8x8xf32> to vector<8x8xbf16>
    %cst_15 = arith.constant dense<0.000000e+00> : vector<8x5xf32>
    %44 = tpu.matmul %43, %29, %cst_15 {dimension_numbers = #tpu.dot_dimension_numbers<[1], [0], [0], [1], [0, 0, 1, 1], [], []>} : vector<8x8xbf16>, vector<8x5xbf16>, vector<8x5xf32> -> vector<8x5xf32>
    %45 = vector.extract_strided_slice %13 {offsets = [0, 5], sizes = [8, 5], strides = [1, 1]} : vector<8x10xf32> to vector<8x5xf32>
    %46 = arith.truncf %45 : vector<8x5xf32> to vector<8x5xbf16>
    %47 = vector.extract_strided_slice %17 {offsets = [0, 5], sizes = [8, 5], strides = [1, 1]} : vector<8x10xf32> to vector<8x5xf32>
    %48 = arith.truncf %47 : vector<8x5xf32> to vector<8x5xbf16>
    %49 = vector.extract_strided_slice %21 {offsets = [0, 5], sizes = [8, 5], strides = [1, 1]} : vector<8x10xf32> to vector<8x5xf32>
    %50 = arith.truncf %49 : vector<8x5xf32> to vector<8x5xbf16>
    %cst_16 = arith.constant dense<0.000000e+00> : vector<8x8xf32>
    %51 = tpu.matmul %46, %48, %cst_16 {dimension_numbers = #tpu.dot_dimension_numbers<[1], [1], [0], [0], [0, 0, 1, 0], [], []>} : vector<8x5xbf16>, vector<8x5xbf16>, vector<8x8xf32> -> vector<8x8xf32>
    %cst_17 = arith.constant 0.44721359 : f32
    %52 = vector.broadcast %cst_17 : f32 to vector<8x8xf32>
    %53 = arith.mulf %51, %52 : vector<8x8xf32>
    %cst_18 = arith.constant dense<0xFF800000> : vector<8xf32>
    %54 = vector.multi_reduction <maximumf>, %53, %cst_18 [1] : vector<8x8xf32> to vector<8xf32>
    %55 = vector.shape_cast %54 : vector<8xf32> to vector<8x1xf32>
    %56 = vector.broadcast %55 : vector<8x1xf32> to vector<8x8xf32>
    %57 = arith.subf %53, %56 : vector<8x8xf32>
    %58 = math.exp %57 : vector<8x8xf32>
    %cst_19 = arith.constant dense<0.000000e+00> : vector<8xf32>
    %59 = vector.multi_reduction <add>, %58, %cst_19 [1] : vector<8x8xf32> to vector<8xf32>
    %60 = vector.shape_cast %59 : vector<8xf32> to vector<8x1xf32>
    %61 = tpu.reciprocal %60 {approx = true} : vector<8x1xf32> -> vector<8x1xf32>
    %62 = vector.broadcast %61 : vector<8x1xf32> to vector<8x8xf32>
    %63 = arith.mulf %58, %62 : vector<8x8xf32>
    %64 = arith.truncf %63 : vector<8x8xf32> to vector<8x8xbf16>
    %cst_20 = arith.constant dense<0.000000e+00> : vector<8x5xf32>
    %65 = tpu.matmul %64, %50, %cst_20 {dimension_numbers = #tpu.dot_dimension_numbers<[1], [0], [0], [1], [0, 0, 1, 1], [], []>} : vector<8x8xbf16>, vector<8x5xbf16>, vector<8x5xf32> -> vector<8x5xf32>
    %66 = tpu.concatenate %44, %65 in 1 : vector<8x5xf32>, vector<8x5xf32> -> vector<8x10xf32>
    %67 = arith.truncf %66 : vector<8x10xf32> to vector<8x10xbf16>
    %cst_21 = arith.constant dense<0.000000e+00> : vector<8x10xf32>
    %68 = tpu.matmul %67, %23, %cst_21 {dimension_numbers = #tpu.dot_dimension_numbers<[1], [0], [0], [1], [0, 0, 1, 1], [], []>} : vector<8x10xbf16>, vector<10x10xbf16>, vector<8x10xf32> -> vector<8x10xf32>
    %69 = vector.extract_strided_slice %5 {offsets = [3, 0], sizes = [1, 10], strides = [1, 1]} : vector<9x10xf32> to vector<1x10xf32>
    %70 = vector.broadcast %69 : vector<1x10xf32> to vector<8x10xf32>
    %71 = arith.addf %68, %70 : vector<8x10xf32>
    %72 = arith.addf %3, %71 : vector<8x10xf32>
    %73 = vector.extract_strided_slice %5 {offsets = [4, 0], sizes = [1, 10], strides = [1, 1]} : vector<9x10xf32> to vector<1x10xf32>
    %74 = vector.extract_strided_slice %5 {offsets = [5, 0], sizes = [1, 10], strides = [1, 1]} : vector<9x10xf32> to vector<1x10xf32>
    %cst_22 = arith.constant dense<0.000000e+00> : vector<8xf32>
    %75 = vector.multi_reduction <add>, %72, %cst_22 [1] : vector<8x10xf32> to vector<8xf32>
    %76 = vector.shape_cast %75 : vector<8xf32> to vector<8x1xf32>
    %cst_23 = arith.constant 1.000000e+01 : f32
    %77 = vector.broadcast %cst_23 : f32 to vector<8x1xf32>
    %78 = arith.divf %76, %77 : vector<8x1xf32>
    %79 = vector.broadcast %78 : vector<8x1xf32> to vector<8x10xf32>
    %80 = arith.subf %72, %79 : vector<8x10xf32>
    %81 = arith.mulf %80, %80 : vector<8x10xf32>
    %cst_24 = arith.constant dense<0.000000e+00> : vector<8xf32>
    %82 = vector.multi_reduction <add>, %81, %cst_24 [1] : vector<8x10xf32> to vector<8xf32>
    %83 = vector.shape_cast %82 : vector<8xf32> to vector<8x1xf32>
    %cst_25 = arith.constant 1.000000e+01 : f32
    %84 = vector.broadcast %cst_25 : f32 to vector<8x1xf32>
    %85 = arith.divf %83, %84 : vector<8x1xf32>
    %86 = vector.broadcast %78 : vector<8x1xf32> to vector<8x10xf32>
    %87 = arith.subf %72, %86 : vector<8x10xf32>
    %cst_26 = arith.constant 9.99999974E-6 : f32
    %88 = vector.broadcast %cst_26 : f32 to vector<8x1xf32>
    %89 = arith.addf %85, %88 : vector<8x1xf32>
    %90 = math.rsqrt %89 : vector<8x1xf32>
    %91 = vector.broadcast %90 : vector<8x1xf32> to vector<8x10xf32>
    %92 = arith.mulf %87, %91 : vector<8x10xf32>
    %93 = vector.broadcast %73 : vector<1x10xf32> to vector<8x10xf32>
    %94 = arith.mulf %92, %93 : vector<8x10xf32>
    %95 = vector.broadcast %74 : vector<1x10xf32> to vector<8x10xf32>
    %96 = arith.addf %94, %95 : vector<8x10xf32>
    %c0_27 = arith.constant 0 : index
    %c0_28 = arith.constant 0 : index
    %c0_29 = arith.constant 0 : index
    %97 = vector.load %arg5[%c0_27, %c0_28, %c0_29] : memref<1x10x2048xbf16, #tpu.memory_space<vmem>>, vector<1x10x2048xbf16>
    %98 = vector.shape_cast %97 : vector<1x10x2048xbf16> to vector<10x2048xbf16>
    %99 = arith.truncf %96 : vector<8x10xf32> to vector<8x10xbf16>
    %cst_30 = arith.constant dense<0.000000e+00> : vector<8x2048xf32>
    %100 = tpu.matmul %99, %98, %cst_30 {dimension_numbers = #tpu.dot_dimension_numbers<[1], [0], [0], [1], [0, 0, 1, 1], [], []>} : vector<8x10xbf16>, vector<10x2048xbf16>, vector<8x2048xf32> -> vector<8x2048xf32>
    %c0_31 = arith.constant 0 : index
    %c0_32 = arith.constant 0 : index
    %c0_33 = arith.constant 0 : index
    %101 = vector.load %arg8[%c0_31, %c0_32, %c0_33] : memref<1x1x2048xf32, #tpu.memory_space<vmem>>, vector<1x1x2048xf32>
    %102 = vector.shape_cast %101 : vector<1x1x2048xf32> to vector<1x2048xf32>
    %103 = vector.broadcast %102 : vector<1x2048xf32> to vector<8x2048xf32>
    %104 = arith.addf %100, %103 : vector<8x2048xf32>
    %cst_34 = arith.constant 0.000000e+00 : f32
    %105 = vector.broadcast %cst_34 : f32 to vector<8x2048xf32>
    %106 = arith.maximumf %104, %105 : vector<8x2048xf32>
    %107 = arith.truncf %106 : vector<8x2048xf32> to vector<8x2048xbf16>
    %c0_35 = arith.constant 0 : index
    %c0_36 = arith.constant 0 : index
    %c0_37 = arith.constant 0 : index
    %108 = vector.load %arg6[%c0_35, %c0_36, %c0_37] : memref<1x2048x10xbf16, #tpu.memory_space<vmem>>, vector<1x2048x10xbf16>
    %109 = vector.shape_cast %108 : vector<1x2048x10xbf16> to vector<2048x10xbf16>
    %cst_38 = arith.constant dense<0.000000e+00> : vector<8x10xf32>
    %110 = tpu.matmul %107, %109, %cst_38 {dimension_numbers = #tpu.dot_dimension_numbers<[1], [0], [0], [1], [0, 0, 1, 1], [], []>} : vector<8x2048xbf16>, vector<2048x10xbf16>, vector<8x10xf32> -> vector<8x10xf32>
    %111 = vector.extract_strided_slice %5 {offsets = [6, 0], sizes = [1, 10], strides = [1, 1]} : vector<9x10xf32> to vector<1x10xf32>
    %112 = vector.broadcast %111 : vector<1x10xf32> to vector<8x10xf32>
    %113 = arith.addf %110, %112 : vector<8x10xf32>
    %114 = arith.addf %96, %113 : vector<8x10xf32>
    %115 = vector.extract_strided_slice %5 {offsets = [7, 0], sizes = [1, 10], strides = [1, 1]} : vector<9x10xf32> to vector<1x10xf32>
    %116 = vector.extract_strided_slice %5 {offsets = [8, 0], sizes = [1, 10], strides = [1, 1]} : vector<9x10xf32> to vector<1x10xf32>
    %cst_39 = arith.constant dense<0.000000e+00> : vector<8xf32>
    %117 = vector.multi_reduction <add>, %114, %cst_39 [1] : vector<8x10xf32> to vector<8xf32>
    %118 = vector.shape_cast %117 : vector<8xf32> to vector<8x1xf32>
    %cst_40 = arith.constant 1.000000e+01 : f32
    %119 = vector.broadcast %cst_40 : f32 to vector<8x1xf32>
    %120 = arith.divf %118, %119 : vector<8x1xf32>
    %121 = vector.broadcast %120 : vector<8x1xf32> to vector<8x10xf32>
    %122 = arith.subf %114, %121 : vector<8x10xf32>
    %123 = arith.mulf %122, %122 : vector<8x10xf32>
    %cst_41 = arith.constant dense<0.000000e+00> : vector<8xf32>
    %124 = vector.multi_reduction <add>, %123, %cst_41 [1] : vector<8x10xf32> to vector<8xf32>
    %125 = vector.shape_cast %124 : vector<8xf32> to vector<8x1xf32>
    %cst_42 = arith.constant 1.000000e+01 : f32
    %126 = vector.broadcast %cst_42 : f32 to vector<8x1xf32>
    %127 = arith.divf %125, %126 : vector<8x1xf32>
    %128 = vector.broadcast %120 : vector<8x1xf32> to vector<8x10xf32>
    %129 = arith.subf %114, %128 : vector<8x10xf32>
    %cst_43 = arith.constant 9.99999974E-6 : f32
    %130 = vector.broadcast %cst_43 : f32 to vector<8x1xf32>
    %131 = arith.addf %127, %130 : vector<8x1xf32>
    %132 = math.rsqrt %131 : vector<8x1xf32>
    %133 = vector.broadcast %132 : vector<8x1xf32> to vector<8x10xf32>
    %134 = arith.mulf %129, %133 : vector<8x10xf32>
    %135 = vector.broadcast %115 : vector<1x10xf32> to vector<8x10xf32>
    %136 = arith.mulf %134, %135 : vector<8x10xf32>
    %137 = vector.broadcast %116 : vector<1x10xf32> to vector<8x10xf32>
    %138 = arith.addf %136, %137 : vector<8x10xf32>
    %c0_44 = arith.constant 0 : index
    %c0_45 = arith.constant 0 : index
    %139 = vector.load %arg11[%c0_44, %c0_45] : memref<8x10xf32, #tpu.memory_space<vmem>>, vector<8x10xf32>
    tpu.vector_store %arg11[%c0_44, %c0_45], %138 {strides = array<i32>} : memref<8x10xf32, #tpu.memory_space<vmem>>, vector<8x10xf32>,
    %c1_i32 = arith.constant 1 : i32
    %140 = arith.cmpi eq, %arg1, %c1_i32 : i32
    %141 = arith.extui %140 : i1 to i32
    %c0_i32_46 = arith.constant 0 : i32
    %142 = arith.cmpi ne, %141, %c0_i32_46 : i32
    scf.if %142 {
      %143 = arith.truncf %138 : vector<8x10xf32> to vector<8x10xbf16>
      %c0_47 = arith.constant 0 : index
      %c0_48 = arith.constant 0 : index
      %c0_49 = arith.constant 0 : index
      %144 = vector.load %arg9[%c0_47, %c0_48, %c0_49] : memref<1x8x10xbf16, #tpu.memory_space<vmem>>, vector<1x8x10xbf16>
      %145 = vector.shape_cast %144 : vector<1x8x10xbf16> to vector<8x10xbf16>
      %146 = vector.shape_cast %143 : vector<8x10xbf16> to vector<1x8x10xbf16>
      tpu.vector_store %arg9[%c0_47, %c0_48, %c0_49], %146 {strides = array<i32>} : memref<1x8x10xbf16, #tpu.memory_space<vmem>>, vector<1x8x10xbf16>,
      %cst_50 = arith.constant dense<0.000000e+00> : vector<10xf32>
      %147 = vector.multi_reduction <add>, %138, %cst_50 [0] : vector<8x10xf32> to vector<10xf32>
      %148 = vector.shape_cast %147 : vector<10xf32> to vector<1x10xf32>
      %cst_51 = arith.constant 8.000000e+00 : f32
      %149 = vector.broadcast %cst_51 : f32 to vector<1x10xf32>
      %150 = arith.divf %148, %149 : vector<1x10xf32>
      %c0_52 = arith.constant 0 : index
      %c0_53 = arith.constant 0 : index
      %c0_54 = arith.constant 0 : index
      %151 = vector.load %arg10[%c0_52, %c0_53, %c0_54] : memref<1x1x10xf32, #tpu.memory_space<vmem>>, vector<1x1x10xf32>
      %152 = vector.shape_cast %151 : vector<1x1x10xf32> to vector<1x10xf32>
      %153 = vector.shape_cast %150 : vector<1x10xf32> to vector<1x1x10xf32>
      tpu.vector_store %arg10[%c0_52, %c0_53, %c0_54], %153 {strides = array<i32>} : memref<1x1x10xf32, #tpu.memory_space<vmem>>, vector<1x1x10xf32>,
    } else {
    }
    return
  }
  func.func @transform_0(%arg0: i32, %arg1: i32) -> (i32, i32, i32) {
    %c0_i32 = arith.constant 0 : i32
    %c0_i32_0 = arith.constant 0 : i32
    %c0_i32_1 = arith.constant 0 : i32
    return %arg0, %c0_i32, %c0_i32_0 : i32, i32, i32
  }
  func.func @transform_1(%arg0: i32, %arg1: i32) -> (i32, i32, i32) {
    %c0_i32 = arith.constant 0 : i32
    %c0_i32_0 = arith.constant 0 : i32
    %c0_i32_1 = arith.constant 0 : i32
    return %arg1, %c0_i32, %c0_i32_0 : i32, i32, i32
  }
  func.func @transform_2(%arg0: i32, %arg1: i32) -> (i32, i32, i32) {
    %c0_i32 = arith.constant 0 : i32
    %c0_i32_0 = arith.constant 0 : i32
    %c0_i32_1 = arith.constant 0 : i32
    return %arg1, %c0_i32, %c0_i32_0 : i32, i32, i32
  }
  func.func @transform_3(%arg0: i32, %arg1: i32) -> (i32, i32, i32) {
    %c0_i32 = arith.constant 0 : i32
    %c0_i32_0 = arith.constant 0 : i32
    %c0_i32_1 = arith.constant 0 : i32
    return %arg1, %c0_i32, %c0_i32_0 : i32, i32, i32
  }
  func.func @transform_4(%arg0: i32, %arg1: i32) -> (i32, i32, i32) {
    %c0_i32 = arith.constant 0 : i32
    %c0_i32_0 = arith.constant 0 : i32
    %c0_i32_1 = arith.constant 0 : i32
    return %arg1, %c0_i32, %c0_i32_0 : i32, i32, i32
  }
  func.func @transform_5(%arg0: i32, %arg1: i32) -> (i32, i32, i32) {
    %c0_i32 = arith.constant 0 : i32
    %c0_i32_0 = arith.constant 0 : i32
    %c0_i32_1 = arith.constant 0 : i32
    return %arg1, %c0_i32, %c0_i32_0 : i32, i32, i32
  }
  func.func @transform_6(%arg0: i32, %arg1: i32) -> (i32, i32, i32) {
    %c0_i32 = arith.constant 0 : i32
    %c0_i32_0 = arith.constant 0 : i32
    %c0_i32_1 = arith.constant 0 : i32
    return %arg1, %c0_i32, %c0_i32_0 : i32, i32, i32
  }
  func.func @transform_7(%arg0: i32, %arg1: i32) -> (i32, i32, i32) {
    %c0_i32 = arith.constant 0 : i32
    %c0_i32_0 = arith.constant 0 : i32
    %c0_i32_1 = arith.constant 0 : i32
    return %arg0, %c0_i32, %c0_i32_0 : i32, i32, i32
  }
  func.func @transform_8(%arg0: i32, %arg1: i32) -> (i32, i32, i32) {
    %c0_i32 = arith.constant 0 : i32
    %c0_i32_0 = arith.constant 0 : i32
    %c0_i32_1 = arith.constant 0 : i32
    return %arg0, %c0_i32, %c0_i32_0 : i32, i32, i32
  }
}

module attributes {stable_mosaic.version = 11 : i64} {
  func.func @_decoder_stack_kernel(%arg0: i32, %arg1: i32, %arg2: memref<1x1x10xbf16, #tpu.memory_space<vmem>>, %arg3: memref<1x8x10xbf16, #tpu.memory_space<vmem>>, %arg4: memref<1x10x30xbf16, #tpu.memory_space<vmem>>, %arg5: memref<1x10x10xbf16, #tpu.memory_space<vmem>>, %arg6: memref<1x10x10xbf16, #tpu.memory_space<vmem>>, %arg7: memref<1x10x20xbf16, #tpu.memory_space<vmem>>, %arg8: memref<1x10x10xbf16, #tpu.memory_space<vmem>>, %arg9: memref<1x10x2048xbf16, #tpu.memory_space<vmem>>, %arg10: memref<1x2048x10xbf16, #tpu.memory_space<vmem>>, %arg11: memref<1x15x10xf32, #tpu.memory_space<vmem>>, %arg12: memref<1x1x2048xf32, #tpu.memory_space<vmem>>, %arg13: memref<1x8x10xbf16, #tpu.memory_space<vmem>>, %arg14: memref<8x10xf32, #tpu.memory_space<vmem>>) attributes {dimension_semantics = [#tpu.dimension_semantics<parallel>, #tpu.dimension_semantics<arbitrary>], iteration_bounds = array<i64: 2, 2>, scalar_prefetch = 0 : i64, scratch_operands = 1 : i64, tpu.core_type = #tpu.core_type<tc>, window_params = [{transform_indices = @transform_0, window_bounds = array<i64: 1, 1, 10>}, {transform_indices = @transform_1, window_bounds = array<i64: 1, 8, 10>}, {transform_indices = @transform_2, window_bounds = array<i64: 1, 10, 30>}, {transform_indices = @transform_3, window_bounds = array<i64: 1, 10, 10>}, {transform_indices = @transform_4, window_bounds = array<i64: 1, 10, 10>}, {transform_indices = @transform_5, window_bounds = array<i64: 1, 10, 20>}, {transform_indices = @transform_6, window_bounds = array<i64: 1, 10, 10>}, {transform_indices = @transform_7, window_bounds = array<i64: 1, 10, 2048>}, {transform_indices = @transform_8, window_bounds = array<i64: 1, 2048, 10>}, {transform_indices = @transform_9, window_bounds = array<i64: 1, 15, 10>}, {transform_indices = @transform_10, window_bounds = array<i64: 1, 1, 2048>}, {transform_indices = @transform_11, window_bounds = array<i64: 1, 8, 10>}]} {
    %c0_i32 = arith.constant 0 : i32
    %0 = arith.cmpi eq, %arg1, %c0_i32 : i32
    %1 = arith.extui %0 : i1 to i32
    %c0_i32_0 = arith.constant 0 : i32
    %2 = arith.cmpi ne, %1, %c0_i32_0 : i32
    scf.if %2 {
      %c0_77 = arith.constant 0 : index
      %c0_78 = arith.constant 0 : index
      %c0_79 = arith.constant 0 : index
      %238 = vector.load %arg2[%c0_77, %c0_78, %c0_79] : memref<1x1x10xbf16, #tpu.memory_space<vmem>>, vector<1x1x10xbf16>
      %239 = vector.shape_cast %238 : vector<1x1x10xbf16> to vector<1x10xbf16>
      %240 = arith.extf %239 : vector<1x10xbf16> to vector<1x10xf32>
      %241 = vector.shape_cast %240 : vector<1x10xf32> to vector<1x10xf32>
      %242 = vector.broadcast %241 : vector<1x10xf32> to vector<8x10xf32>
      %c0_80 = arith.constant 0 : index
      %c0_81 = arith.constant 0 : index
      %243 = vector.load %arg14[%c0_80, %c0_81] : memref<8x10xf32, #tpu.memory_space<vmem>>, vector<8x10xf32>
      tpu.vector_store %arg14[%c0_80, %c0_81], %242 {strides = array<i32>} : memref<8x10xf32, #tpu.memory_space<vmem>>, vector<8x10xf32>,
    } else {
    }
    %c0 = arith.constant 0 : index
    %c0_1 = arith.constant 0 : index
    %3 = vector.load %arg14[%c0, %c0_1] : memref<8x10xf32, #tpu.memory_space<vmem>>, vector<8x10xf32>
    %c0_2 = arith.constant 0 : index
    %c0_3 = arith.constant 0 : index
    %c0_4 = arith.constant 0 : index
    %4 = vector.load %arg11[%c0_2, %c0_3, %c0_4] : memref<1x15x10xf32, #tpu.memory_space<vmem>>, vector<1x15x10xf32>
    %5 = vector.shape_cast %4 : vector<1x15x10xf32> to vector<15x10xf32>
    %c0_5 = arith.constant 0 : index
    %c0_6 = arith.constant 0 : index
    %c0_7 = arith.constant 0 : index
    %6 = vector.load %arg3[%c0_5, %c0_6, %c0_7] : memref<1x8x10xbf16, #tpu.memory_space<vmem>>, vector<1x8x10xbf16>
    %7 = vector.shape_cast %6 : vector<1x8x10xbf16> to vector<8x10xbf16>
    %c0_8 = arith.constant 0 : index
    %c0_9 = arith.constant 0 : index
    %c0_10 = arith.constant 0 : index
    %8 = vector.load %arg4[%c0_8, %c0_9, %c0_10] : memref<1x10x30xbf16, #tpu.memory_space<vmem>>, vector<1x10x30xbf16>
    %9 = vector.shape_cast %8 : vector<1x10x30xbf16> to vector<10x30xbf16>
    %10 = arith.truncf %3 : vector<8x10xf32> to vector<8x10xbf16>
    %cst = arith.constant dense<0.000000e+00> : vector<8x30xf32>
    %11 = tpu.matmul %10, %9, %cst {dimension_numbers = #tpu.dot_dimension_numbers<[1], [0], [0], [1], [0, 0, 1, 1], [], []>} : vector<8x10xbf16>, vector<10x30xbf16>, vector<8x30xf32> -> vector<8x30xf32>
    %12 = vector.extract_strided_slice %11 {offsets = [0, 0], sizes = [8, 10], strides = [1, 1]} : vector<8x30xf32> to vector<8x10xf32>
    %13 = vector.extract_strided_slice %5 {offsets = [0, 0], sizes = [1, 10], strides = [1, 1]} : vector<15x10xf32> to vector<1x10xf32>
    %14 = vector.broadcast %13 : vector<1x10xf32> to vector<8x10xf32>
    %15 = arith.addf %12, %14 : vector<8x10xf32>
    %16 = vector.extract_strided_slice %11 {offsets = [0, 10], sizes = [8, 10], strides = [1, 1]} : vector<8x30xf32> to vector<8x10xf32>
    %17 = vector.extract_strided_slice %5 {offsets = [1, 0], sizes = [1, 10], strides = [1, 1]} : vector<15x10xf32> to vector<1x10xf32>
    %18 = vector.broadcast %17 : vector<1x10xf32> to vector<8x10xf32>
    %19 = arith.addf %16, %18 : vector<8x10xf32>
    %20 = vector.extract_strided_slice %11 {offsets = [0, 20], sizes = [8, 10], strides = [1, 1]} : vector<8x30xf32> to vector<8x10xf32>
    %21 = vector.extract_strided_slice %5 {offsets = [2, 0], sizes = [1, 10], strides = [1, 1]} : vector<15x10xf32> to vector<1x10xf32>
    %22 = vector.broadcast %21 : vector<1x10xf32> to vector<8x10xf32>
    %23 = arith.addf %20, %22 : vector<8x10xf32>
    %c0_11 = arith.constant 0 : index
    %c0_12 = arith.constant 0 : index
    %c0_13 = arith.constant 0 : index
    %24 = vector.load %arg5[%c0_11, %c0_12, %c0_13] : memref<1x10x10xbf16, #tpu.memory_space<vmem>>, vector<1x10x10xbf16>
    %25 = vector.shape_cast %24 : vector<1x10x10xbf16> to vector<10x10xbf16>
    %26 = vector.extract_strided_slice %15 {offsets = [0, 0], sizes = [8, 5], strides = [1, 1]} : vector<8x10xf32> to vector<8x5xf32>
    %27 = arith.truncf %26 : vector<8x5xf32> to vector<8x5xbf16>
    %28 = vector.extract_strided_slice %19 {offsets = [0, 0], sizes = [8, 5], strides = [1, 1]} : vector<8x10xf32> to vector<8x5xf32>
    %29 = arith.truncf %28 : vector<8x5xf32> to vector<8x5xbf16>
    %30 = vector.extract_strided_slice %23 {offsets = [0, 0], sizes = [8, 5], strides = [1, 1]} : vector<8x10xf32> to vector<8x5xf32>
    %31 = arith.truncf %30 : vector<8x5xf32> to vector<8x5xbf16>
    %cst_14 = arith.constant dense<0.000000e+00> : vector<8x8xf32>
    %32 = tpu.matmul %27, %29, %cst_14 {dimension_numbers = #tpu.dot_dimension_numbers<[1], [1], [0], [0], [0, 0, 1, 0], [], []>} : vector<8x5xbf16>, vector<8x5xbf16>, vector<8x8xf32> -> vector<8x8xf32>
    %cst_15 = arith.constant 0.44721359 : f32
    %33 = vector.broadcast %cst_15 : f32 to vector<8x8xf32>
    %34 = arith.mulf %32, %33 : vector<8x8xf32>
    %cst_16 = arith.constant dense<0xFF800000> : vector<8xf32>
    %35 = vector.multi_reduction <maximumf>, %34, %cst_16 [1] : vector<8x8xf32> to vector<8xf32>
    %36 = vector.shape_cast %35 : vector<8xf32> to vector<8x1xf32>
    %37 = vector.broadcast %36 : vector<8x1xf32> to vector<8x8xf32>
    %38 = arith.subf %34, %37 : vector<8x8xf32>
    %39 = math.exp %38 : vector<8x8xf32>
    %cst_17 = arith.constant dense<0.000000e+00> : vector<8xf32>
    %40 = vector.multi_reduction <add>, %39, %cst_17 [1] : vector<8x8xf32> to vector<8xf32>
    %41 = vector.shape_cast %40 : vector<8xf32> to vector<8x1xf32>
    %42 = tpu.reciprocal %41 {approx = true} : vector<8x1xf32> -> vector<8x1xf32>
    %43 = vector.broadcast %42 : vector<8x1xf32> to vector<8x8xf32>
    %44 = arith.mulf %39, %43 : vector<8x8xf32>
    %45 = arith.truncf %44 : vector<8x8xf32> to vector<8x8xbf16>
    %cst_18 = arith.constant dense<0.000000e+00> : vector<8x5xf32>
    %46 = tpu.matmul %45, %31, %cst_18 {dimension_numbers = #tpu.dot_dimension_numbers<[1], [0], [0], [1], [0, 0, 1, 1], [], []>} : vector<8x8xbf16>, vector<8x5xbf16>, vector<8x5xf32> -> vector<8x5xf32>
    %47 = vector.extract_strided_slice %15 {offsets = [0, 5], sizes = [8, 5], strides = [1, 1]} : vector<8x10xf32> to vector<8x5xf32>
    %48 = arith.truncf %47 : vector<8x5xf32> to vector<8x5xbf16>
    %49 = vector.extract_strided_slice %19 {offsets = [0, 5], sizes = [8, 5], strides = [1, 1]} : vector<8x10xf32> to vector<8x5xf32>
    %50 = arith.truncf %49 : vector<8x5xf32> to vector<8x5xbf16>
    %51 = vector.extract_strided_slice %23 {offsets = [0, 5], sizes = [8, 5], strides = [1, 1]} : vector<8x10xf32> to vector<8x5xf32>
    %52 = arith.truncf %51 : vector<8x5xf32> to vector<8x5xbf16>
    %cst_19 = arith.constant dense<0.000000e+00> : vector<8x8xf32>
    %53 = tpu.matmul %48, %50, %cst_19 {dimension_numbers = #tpu.dot_dimension_numbers<[1], [1], [0], [0], [0, 0, 1, 0], [], []>} : vector<8x5xbf16>, vector<8x5xbf16>, vector<8x8xf32> -> vector<8x8xf32>
    %cst_20 = arith.constant 0.44721359 : f32
    %54 = vector.broadcast %cst_20 : f32 to vector<8x8xf32>
    %55 = arith.mulf %53, %54 : vector<8x8xf32>
    %cst_21 = arith.constant dense<0xFF800000> : vector<8xf32>
    %56 = vector.multi_reduction <maximumf>, %55, %cst_21 [1] : vector<8x8xf32> to vector<8xf32>
    %57 = vector.shape_cast %56 : vector<8xf32> to vector<8x1xf32>
    %58 = vector.broadcast %57 : vector<8x1xf32> to vector<8x8xf32>
    %59 = arith.subf %55, %58 : vector<8x8xf32>
    %60 = math.exp %59 : vector<8x8xf32>
    %cst_22 = arith.constant dense<0.000000e+00> : vector<8xf32>
    %61 = vector.multi_reduction <add>, %60, %cst_22 [1] : vector<8x8xf32> to vector<8xf32>
    %62 = vector.shape_cast %61 : vector<8xf32> to vector<8x1xf32>
    %63 = tpu.reciprocal %62 {approx = true} : vector<8x1xf32> -> vector<8x1xf32>
    %64 = vector.broadcast %63 : vector<8x1xf32> to vector<8x8xf32>
    %65 = arith.mulf %60, %64 : vector<8x8xf32>
    %66 = arith.truncf %65 : vector<8x8xf32> to vector<8x8xbf16>
    %cst_23 = arith.constant dense<0.000000e+00> : vector<8x5xf32>
    %67 = tpu.matmul %66, %52, %cst_23 {dimension_numbers = #tpu.dot_dimension_numbers<[1], [0], [0], [1], [0, 0, 1, 1], [], []>} : vector<8x8xbf16>, vector<8x5xbf16>, vector<8x5xf32> -> vector<8x5xf32>
    %68 = tpu.concatenate %46, %67 in 1 : vector<8x5xf32>, vector<8x5xf32> -> vector<8x10xf32>
    %69 = arith.truncf %68 : vector<8x10xf32> to vector<8x10xbf16>
    %cst_24 = arith.constant dense<0.000000e+00> : vector<8x10xf32>
    %70 = tpu.matmul %69, %25, %cst_24 {dimension_numbers = #tpu.dot_dimension_numbers<[1], [0], [0], [1], [0, 0, 1, 1], [], []>} : vector<8x10xbf16>, vector<10x10xbf16>, vector<8x10xf32> -> vector<8x10xf32>
    %71 = vector.extract_strided_slice %5 {offsets = [3, 0], sizes = [1, 10], strides = [1, 1]} : vector<15x10xf32> to vector<1x10xf32>
    %72 = vector.broadcast %71 : vector<1x10xf32> to vector<8x10xf32>
    %73 = arith.addf %70, %72 : vector<8x10xf32>
    %74 = arith.addf %3, %73 : vector<8x10xf32>
    %75 = vector.extract_strided_slice %5 {offsets = [4, 0], sizes = [1, 10], strides = [1, 1]} : vector<15x10xf32> to vector<1x10xf32>
    %76 = vector.extract_strided_slice %5 {offsets = [5, 0], sizes = [1, 10], strides = [1, 1]} : vector<15x10xf32> to vector<1x10xf32>
    %cst_25 = arith.constant dense<0.000000e+00> : vector<8xf32>
    %77 = vector.multi_reduction <add>, %74, %cst_25 [1] : vector<8x10xf32> to vector<8xf32>
    %78 = vector.shape_cast %77 : vector<8xf32> to vector<8x1xf32>
    %cst_26 = arith.constant 1.000000e+01 : f32
    %79 = vector.broadcast %cst_26 : f32 to vector<8x1xf32>
    %80 = arith.divf %78, %79 : vector<8x1xf32>
    %81 = vector.broadcast %80 : vector<8x1xf32> to vector<8x10xf32>
    %82 = arith.subf %74, %81 : vector<8x10xf32>
    %83 = arith.mulf %82, %82 : vector<8x10xf32>
    %cst_27 = arith.constant dense<0.000000e+00> : vector<8xf32>
    %84 = vector.multi_reduction <add>, %83, %cst_27 [1] : vector<8x10xf32> to vector<8xf32>
    %85 = vector.shape_cast %84 : vector<8xf32> to vector<8x1xf32>
    %cst_28 = arith.constant 1.000000e+01 : f32
    %86 = vector.broadcast %cst_28 : f32 to vector<8x1xf32>
    %87 = arith.divf %85, %86 : vector<8x1xf32>
    %88 = vector.broadcast %80 : vector<8x1xf32> to vector<8x10xf32>
    %89 = arith.subf %74, %88 : vector<8x10xf32>
    %cst_29 = arith.constant 9.99999974E-6 : f32
    %90 = vector.broadcast %cst_29 : f32 to vector<8x1xf32>
    %91 = arith.addf %87, %90 : vector<8x1xf32>
    %92 = math.rsqrt %91 : vector<8x1xf32>
    %93 = vector.broadcast %92 : vector<8x1xf32> to vector<8x10xf32>
    %94 = arith.mulf %89, %93 : vector<8x10xf32>
    %95 = vector.broadcast %75 : vector<1x10xf32> to vector<8x10xf32>
    %96 = arith.mulf %94, %95 : vector<8x10xf32>
    %97 = vector.broadcast %76 : vector<1x10xf32> to vector<8x10xf32>
    %98 = arith.addf %96, %97 : vector<8x10xf32>
    %c0_30 = arith.constant 0 : index
    %c0_31 = arith.constant 0 : index
    %c0_32 = arith.constant 0 : index
    %99 = vector.load %arg6[%c0_30, %c0_31, %c0_32] : memref<1x10x10xbf16, #tpu.memory_space<vmem>>, vector<1x10x10xbf16>
    %100 = vector.shape_cast %99 : vector<1x10x10xbf16> to vector<10x10xbf16>
    %101 = arith.truncf %98 : vector<8x10xf32> to vector<8x10xbf16>
    %cst_33 = arith.constant dense<0.000000e+00> : vector<8x10xf32>
    %102 = tpu.matmul %101, %100, %cst_33 {dimension_numbers = #tpu.dot_dimension_numbers<[1], [0], [0], [1], [0, 0, 1, 1], [], []>} : vector<8x10xbf16>, vector<10x10xbf16>, vector<8x10xf32> -> vector<8x10xf32>
    %103 = vector.extract_strided_slice %5 {offsets = [6, 0], sizes = [1, 10], strides = [1, 1]} : vector<15x10xf32> to vector<1x10xf32>
    %104 = vector.broadcast %103 : vector<1x10xf32> to vector<8x10xf32>
    %105 = arith.addf %102, %104 : vector<8x10xf32>
    %c0_34 = arith.constant 0 : index
    %c0_35 = arith.constant 0 : index
    %c0_36 = arith.constant 0 : index
    %106 = vector.load %arg7[%c0_34, %c0_35, %c0_36] : memref<1x10x20xbf16, #tpu.memory_space<vmem>>, vector<1x10x20xbf16>
    %107 = vector.shape_cast %106 : vector<1x10x20xbf16> to vector<10x20xbf16>
    %cst_37 = arith.constant dense<0.000000e+00> : vector<8x20xf32>
    %108 = tpu.matmul %7, %107, %cst_37 {dimension_numbers = #tpu.dot_dimension_numbers<[1], [0], [0], [1], [0, 0, 1, 1], [], []>} : vector<8x10xbf16>, vector<10x20xbf16>, vector<8x20xf32> -> vector<8x20xf32>
    %109 = vector.extract_strided_slice %108 {offsets = [0, 0], sizes = [8, 10], strides = [1, 1]} : vector<8x20xf32> to vector<8x10xf32>
    %110 = vector.extract_strided_slice %5 {offsets = [7, 0], sizes = [1, 10], strides = [1, 1]} : vector<15x10xf32> to vector<1x10xf32>
    %111 = vector.broadcast %110 : vector<1x10xf32> to vector<8x10xf32>
    %112 = arith.addf %109, %111 : vector<8x10xf32>
    %113 = vector.extract_strided_slice %108 {offsets = [0, 10], sizes = [8, 10], strides = [1, 1]} : vector<8x20xf32> to vector<8x10xf32>
    %114 = vector.extract_strided_slice %5 {offsets = [8, 0], sizes = [1, 10], strides = [1, 1]} : vector<15x10xf32> to vector<1x10xf32>
    %115 = vector.broadcast %114 : vector<1x10xf32> to vector<8x10xf32>
    %116 = arith.addf %113, %115 : vector<8x10xf32>
    %c0_38 = arith.constant 0 : index
    %c0_39 = arith.constant 0 : index
    %c0_40 = arith.constant 0 : index
    %117 = vector.load %arg8[%c0_38, %c0_39, %c0_40] : memref<1x10x10xbf16, #tpu.memory_space<vmem>>, vector<1x10x10xbf16>
    %118 = vector.shape_cast %117 : vector<1x10x10xbf16> to vector<10x10xbf16>
    %119 = vector.extract_strided_slice %105 {offsets = [0, 0], sizes = [8, 5], strides = [1, 1]} : vector<8x10xf32> to vector<8x5xf32>
    %120 = arith.truncf %119 : vector<8x5xf32> to vector<8x5xbf16>
    %121 = vector.extract_strided_slice %112 {offsets = [0, 0], sizes = [8, 5], strides = [1, 1]} : vector<8x10xf32> to vector<8x5xf32>
    %122 = arith.truncf %121 : vector<8x5xf32> to vector<8x5xbf16>
    %123 = vector.extract_strided_slice %116 {offsets = [0, 0], sizes = [8, 5], strides = [1, 1]} : vector<8x10xf32> to vector<8x5xf32>
    %124 = arith.truncf %123 : vector<8x5xf32> to vector<8x5xbf16>
    %cst_41 = arith.constant dense<0.000000e+00> : vector<8x8xf32>
    %125 = tpu.matmul %120, %122, %cst_41 {dimension_numbers = #tpu.dot_dimension_numbers<[1], [1], [0], [0], [0, 0, 1, 0], [], []>} : vector<8x5xbf16>, vector<8x5xbf16>, vector<8x8xf32> -> vector<8x8xf32>
    %cst_42 = arith.constant 0.44721359 : f32
    %126 = vector.broadcast %cst_42 : f32 to vector<8x8xf32>
    %127 = arith.mulf %125, %126 : vector<8x8xf32>
    %cst_43 = arith.constant dense<0xFF800000> : vector<8xf32>
    %128 = vector.multi_reduction <maximumf>, %127, %cst_43 [1] : vector<8x8xf32> to vector<8xf32>
    %129 = vector.shape_cast %128 : vector<8xf32> to vector<8x1xf32>
    %130 = vector.broadcast %129 : vector<8x1xf32> to vector<8x8xf32>
    %131 = arith.subf %127, %130 : vector<8x8xf32>
    %132 = math.exp %131 : vector<8x8xf32>
    %cst_44 = arith.constant dense<0.000000e+00> : vector<8xf32>
    %133 = vector.multi_reduction <add>, %132, %cst_44 [1] : vector<8x8xf32> to vector<8xf32>
    %134 = vector.shape_cast %133 : vector<8xf32> to vector<8x1xf32>
    %135 = tpu.reciprocal %134 {approx = true} : vector<8x1xf32> -> vector<8x1xf32>
    %136 = vector.broadcast %135 : vector<8x1xf32> to vector<8x8xf32>
    %137 = arith.mulf %132, %136 : vector<8x8xf32>
    %138 = arith.truncf %137 : vector<8x8xf32> to vector<8x8xbf16>
    %cst_45 = arith.constant dense<0.000000e+00> : vector<8x5xf32>
    %139 = tpu.matmul %138, %124, %cst_45 {dimension_numbers = #tpu.dot_dimension_numbers<[1], [0], [0], [1], [0, 0, 1, 1], [], []>} : vector<8x8xbf16>, vector<8x5xbf16>, vector<8x5xf32> -> vector<8x5xf32>
    %140 = vector.extract_strided_slice %105 {offsets = [0, 5], sizes = [8, 5], strides = [1, 1]} : vector<8x10xf32> to vector<8x5xf32>
    %141 = arith.truncf %140 : vector<8x5xf32> to vector<8x5xbf16>
    %142 = vector.extract_strided_slice %112 {offsets = [0, 5], sizes = [8, 5], strides = [1, 1]} : vector<8x10xf32> to vector<8x5xf32>
    %143 = arith.truncf %142 : vector<8x5xf32> to vector<8x5xbf16>
    %144 = vector.extract_strided_slice %116 {offsets = [0, 5], sizes = [8, 5], strides = [1, 1]} : vector<8x10xf32> to vector<8x5xf32>
    %145 = arith.truncf %144 : vector<8x5xf32> to vector<8x5xbf16>
    %cst_46 = arith.constant dense<0.000000e+00> : vector<8x8xf32>
    %146 = tpu.matmul %141, %143, %cst_46 {dimension_numbers = #tpu.dot_dimension_numbers<[1], [1], [0], [0], [0, 0, 1, 0], [], []>} : vector<8x5xbf16>, vector<8x5xbf16>, vector<8x8xf32> -> vector<8x8xf32>
    %cst_47 = arith.constant 0.44721359 : f32
    %147 = vector.broadcast %cst_47 : f32 to vector<8x8xf32>
    %148 = arith.mulf %146, %147 : vector<8x8xf32>
    %cst_48 = arith.constant dense<0xFF800000> : vector<8xf32>
    %149 = vector.multi_reduction <maximumf>, %148, %cst_48 [1] : vector<8x8xf32> to vector<8xf32>
    %150 = vector.shape_cast %149 : vector<8xf32> to vector<8x1xf32>
    %151 = vector.broadcast %150 : vector<8x1xf32> to vector<8x8xf32>
    %152 = arith.subf %148, %151 : vector<8x8xf32>
    %153 = math.exp %152 : vector<8x8xf32>
    %cst_49 = arith.constant dense<0.000000e+00> : vector<8xf32>
    %154 = vector.multi_reduction <add>, %153, %cst_49 [1] : vector<8x8xf32> to vector<8xf32>
    %155 = vector.shape_cast %154 : vector<8xf32> to vector<8x1xf32>
    %156 = tpu.reciprocal %155 {approx = true} : vector<8x1xf32> -> vector<8x1xf32>
    %157 = vector.broadcast %156 : vector<8x1xf32> to vector<8x8xf32>
    %158 = arith.mulf %153, %157 : vector<8x8xf32>
    %159 = arith.truncf %158 : vector<8x8xf32> to vector<8x8xbf16>
    %cst_50 = arith.constant dense<0.000000e+00> : vector<8x5xf32>
    %160 = tpu.matmul %159, %145, %cst_50 {dimension_numbers = #tpu.dot_dimension_numbers<[1], [0], [0], [1], [0, 0, 1, 1], [], []>} : vector<8x8xbf16>, vector<8x5xbf16>, vector<8x5xf32> -> vector<8x5xf32>
    %161 = tpu.concatenate %139, %160 in 1 : vector<8x5xf32>, vector<8x5xf32> -> vector<8x10xf32>
    %162 = arith.truncf %161 : vector<8x10xf32> to vector<8x10xbf16>
    %cst_51 = arith.constant dense<0.000000e+00> : vector<8x10xf32>
    %163 = tpu.matmul %162, %118, %cst_51 {dimension_numbers = #tpu.dot_dimension_numbers<[1], [0], [0], [1], [0, 0, 1, 1], [], []>} : vector<8x10xbf16>, vector<10x10xbf16>, vector<8x10xf32> -> vector<8x10xf32>
    %164 = vector.extract_strided_slice %5 {offsets = [9, 0], sizes = [1, 10], strides = [1, 1]} : vector<15x10xf32> to vector<1x10xf32>
    %165 = vector.broadcast %164 : vector<1x10xf32> to vector<8x10xf32>
    %166 = arith.addf %163, %165 : vector<8x10xf32>
    %167 = arith.addf %98, %166 : vector<8x10xf32>
    %168 = vector.extract_strided_slice %5 {offsets = [10, 0], sizes = [1, 10], strides = [1, 1]} : vector<15x10xf32> to vector<1x10xf32>
    %169 = vector.extract_strided_slice %5 {offsets = [11, 0], sizes = [1, 10], strides = [1, 1]} : vector<15x10xf32> to vector<1x10xf32>
    %cst_52 = arith.constant dense<0.000000e+00> : vector<8xf32>
    %170 = vector.multi_reduction <add>, %167, %cst_52 [1] : vector<8x10xf32> to vector<8xf32>
    %171 = vector.shape_cast %170 : vector<8xf32> to vector<8x1xf32>
    %cst_53 = arith.constant 1.000000e+01 : f32
    %172 = vector.broadcast %cst_53 : f32 to vector<8x1xf32>
    %173 = arith.divf %171, %172 : vector<8x1xf32>
    %174 = vector.broadcast %173 : vector<8x1xf32> to vector<8x10xf32>
    %175 = arith.subf %167, %174 : vector<8x10xf32>
    %176 = arith.mulf %175, %175 : vector<8x10xf32>
    %cst_54 = arith.constant dense<0.000000e+00> : vector<8xf32>
    %177 = vector.multi_reduction <add>, %176, %cst_54 [1] : vector<8x10xf32> to vector<8xf32>
    %178 = vector.shape_cast %177 : vector<8xf32> to vector<8x1xf32>
    %cst_55 = arith.constant 1.000000e+01 : f32
    %179 = vector.broadcast %cst_55 : f32 to vector<8x1xf32>
    %180 = arith.divf %178, %179 : vector<8x1xf32>
    %181 = vector.broadcast %173 : vector<8x1xf32> to vector<8x10xf32>
    %182 = arith.subf %167, %181 : vector<8x10xf32>
    %cst_56 = arith.constant 9.99999974E-6 : f32
    %183 = vector.broadcast %cst_56 : f32 to vector<8x1xf32>
    %184 = arith.addf %180, %183 : vector<8x1xf32>
    %185 = math.rsqrt %184 : vector<8x1xf32>
    %186 = vector.broadcast %185 : vector<8x1xf32> to vector<8x10xf32>
    %187 = arith.mulf %182, %186 : vector<8x10xf32>
    %188 = vector.broadcast %168 : vector<1x10xf32> to vector<8x10xf32>
    %189 = arith.mulf %187, %188 : vector<8x10xf32>
    %190 = vector.broadcast %169 : vector<1x10xf32> to vector<8x10xf32>
    %191 = arith.addf %189, %190 : vector<8x10xf32>
    %c0_57 = arith.constant 0 : index
    %c0_58 = arith.constant 0 : index
    %c0_59 = arith.constant 0 : index
    %192 = vector.load %arg9[%c0_57, %c0_58, %c0_59] : memref<1x10x2048xbf16, #tpu.memory_space<vmem>>, vector<1x10x2048xbf16>
    %193 = vector.shape_cast %192 : vector<1x10x2048xbf16> to vector<10x2048xbf16>
    %194 = arith.truncf %191 : vector<8x10xf32> to vector<8x10xbf16>
    %cst_60 = arith.constant dense<0.000000e+00> : vector<8x2048xf32>
    %195 = tpu.matmul %194, %193, %cst_60 {dimension_numbers = #tpu.dot_dimension_numbers<[1], [0], [0], [1], [0, 0, 1, 1], [], []>} : vector<8x10xbf16>, vector<10x2048xbf16>, vector<8x2048xf32> -> vector<8x2048xf32>
    %c0_61 = arith.constant 0 : index
    %c0_62 = arith.constant 0 : index
    %c0_63 = arith.constant 0 : index
    %196 = vector.load %arg12[%c0_61, %c0_62, %c0_63] : memref<1x1x2048xf32, #tpu.memory_space<vmem>>, vector<1x1x2048xf32>
    %197 = vector.shape_cast %196 : vector<1x1x2048xf32> to vector<1x2048xf32>
    %198 = vector.broadcast %197 : vector<1x2048xf32> to vector<8x2048xf32>
    %199 = arith.addf %195, %198 : vector<8x2048xf32>
    %cst_64 = arith.constant 0.000000e+00 : f32
    %200 = vector.broadcast %cst_64 : f32 to vector<8x2048xf32>
    %201 = arith.maximumf %199, %200 : vector<8x2048xf32>
    %202 = arith.truncf %201 : vector<8x2048xf32> to vector<8x2048xbf16>
    %c0_65 = arith.constant 0 : index
    %c0_66 = arith.constant 0 : index
    %c0_67 = arith.constant 0 : index
    %203 = vector.load %arg10[%c0_65, %c0_66, %c0_67] : memref<1x2048x10xbf16, #tpu.memory_space<vmem>>, vector<1x2048x10xbf16>
    %204 = vector.shape_cast %203 : vector<1x2048x10xbf16> to vector<2048x10xbf16>
    %cst_68 = arith.constant dense<0.000000e+00> : vector<8x10xf32>
    %205 = tpu.matmul %202, %204, %cst_68 {dimension_numbers = #tpu.dot_dimension_numbers<[1], [0], [0], [1], [0, 0, 1, 1], [], []>} : vector<8x2048xbf16>, vector<2048x10xbf16>, vector<8x10xf32> -> vector<8x10xf32>
    %206 = vector.extract_strided_slice %5 {offsets = [12, 0], sizes = [1, 10], strides = [1, 1]} : vector<15x10xf32> to vector<1x10xf32>
    %207 = vector.broadcast %206 : vector<1x10xf32> to vector<8x10xf32>
    %208 = arith.addf %205, %207 : vector<8x10xf32>
    %209 = arith.addf %191, %208 : vector<8x10xf32>
    %210 = vector.extract_strided_slice %5 {offsets = [13, 0], sizes = [1, 10], strides = [1, 1]} : vector<15x10xf32> to vector<1x10xf32>
    %211 = vector.extract_strided_slice %5 {offsets = [14, 0], sizes = [1, 10], strides = [1, 1]} : vector<15x10xf32> to vector<1x10xf32>
    %cst_69 = arith.constant dense<0.000000e+00> : vector<8xf32>
    %212 = vector.multi_reduction <add>, %209, %cst_69 [1] : vector<8x10xf32> to vector<8xf32>
    %213 = vector.shape_cast %212 : vector<8xf32> to vector<8x1xf32>
    %cst_70 = arith.constant 1.000000e+01 : f32
    %214 = vector.broadcast %cst_70 : f32 to vector<8x1xf32>
    %215 = arith.divf %213, %214 : vector<8x1xf32>
    %216 = vector.broadcast %215 : vector<8x1xf32> to vector<8x10xf32>
    %217 = arith.subf %209, %216 : vector<8x10xf32>
    %218 = arith.mulf %217, %217 : vector<8x10xf32>
    %cst_71 = arith.constant dense<0.000000e+00> : vector<8xf32>
    %219 = vector.multi_reduction <add>, %218, %cst_71 [1] : vector<8x10xf32> to vector<8xf32>
    %220 = vector.shape_cast %219 : vector<8xf32> to vector<8x1xf32>
    %cst_72 = arith.constant 1.000000e+01 : f32
    %221 = vector.broadcast %cst_72 : f32 to vector<8x1xf32>
    %222 = arith.divf %220, %221 : vector<8x1xf32>
    %223 = vector.broadcast %215 : vector<8x1xf32> to vector<8x10xf32>
    %224 = arith.subf %209, %223 : vector<8x10xf32>
    %cst_73 = arith.constant 9.99999974E-6 : f32
    %225 = vector.broadcast %cst_73 : f32 to vector<8x1xf32>
    %226 = arith.addf %222, %225 : vector<8x1xf32>
    %227 = math.rsqrt %226 : vector<8x1xf32>
    %228 = vector.broadcast %227 : vector<8x1xf32> to vector<8x10xf32>
    %229 = arith.mulf %224, %228 : vector<8x10xf32>
    %230 = vector.broadcast %210 : vector<1x10xf32> to vector<8x10xf32>
    %231 = arith.mulf %229, %230 : vector<8x10xf32>
    %232 = vector.broadcast %211 : vector<1x10xf32> to vector<8x10xf32>
    %233 = arith.addf %231, %232 : vector<8x10xf32>
    %c0_74 = arith.constant 0 : index
    %c0_75 = arith.constant 0 : index
    %234 = vector.load %arg14[%c0_74, %c0_75] : memref<8x10xf32, #tpu.memory_space<vmem>>, vector<8x10xf32>
    tpu.vector_store %arg14[%c0_74, %c0_75], %233 {strides = array<i32>} : memref<8x10xf32, #tpu.memory_space<vmem>>, vector<8x10xf32>,
    %c1_i32 = arith.constant 1 : i32
    %235 = arith.cmpi eq, %arg1, %c1_i32 : i32
    %236 = arith.extui %235 : i1 to i32
    %c0_i32_76 = arith.constant 0 : i32
    %237 = arith.cmpi ne, %236, %c0_i32_76 : i32
    scf.if %237 {
      %238 = arith.truncf %233 : vector<8x10xf32> to vector<8x10xbf16>
      %c0_77 = arith.constant 0 : index
      %c0_78 = arith.constant 0 : index
      %c0_79 = arith.constant 0 : index
      %239 = vector.load %arg13[%c0_77, %c0_78, %c0_79] : memref<1x8x10xbf16, #tpu.memory_space<vmem>>, vector<1x8x10xbf16>
      %240 = vector.shape_cast %239 : vector<1x8x10xbf16> to vector<8x10xbf16>
      %241 = vector.shape_cast %238 : vector<8x10xbf16> to vector<1x8x10xbf16>
      tpu.vector_store %arg13[%c0_77, %c0_78, %c0_79], %241 {strides = array<i32>} : memref<1x8x10xbf16, #tpu.memory_space<vmem>>, vector<1x8x10xbf16>,
    } else {
    }
    return
  }
  func.func @transform_0(%arg0: i32, %arg1: i32) -> (i32, i32, i32) {
    %c0_i32 = arith.constant 0 : i32
    %c0_i32_0 = arith.constant 0 : i32
    %c0_i32_1 = arith.constant 0 : i32
    return %arg0, %c0_i32, %c0_i32_0 : i32, i32, i32
  }
  func.func @transform_1(%arg0: i32, %arg1: i32) -> (i32, i32, i32) {
    %c0_i32 = arith.constant 0 : i32
    %c0_i32_0 = arith.constant 0 : i32
    %c0_i32_1 = arith.constant 0 : i32
    return %arg0, %c0_i32, %c0_i32_0 : i32, i32, i32
  }
  func.func @transform_2(%arg0: i32, %arg1: i32) -> (i32, i32, i32) {
    %c0_i32 = arith.constant 0 : i32
    %c0_i32_0 = arith.constant 0 : i32
    %c0_i32_1 = arith.constant 0 : i32
    return %arg1, %c0_i32, %c0_i32_0 : i32, i32, i32
  }
  func.func @transform_3(%arg0: i32, %arg1: i32) -> (i32, i32, i32) {
    %c0_i32 = arith.constant 0 : i32
    %c0_i32_0 = arith.constant 0 : i32
    %c0_i32_1 = arith.constant 0 : i32
    return %arg1, %c0_i32, %c0_i32_0 : i32, i32, i32
  }
  func.func @transform_4(%arg0: i32, %arg1: i32) -> (i32, i32, i32) {
    %c0_i32 = arith.constant 0 : i32
    %c0_i32_0 = arith.constant 0 : i32
    %c0_i32_1 = arith.constant 0 : i32
    return %arg1, %c0_i32, %c0_i32_0 : i32, i32, i32
  }
  func.func @transform_5(%arg0: i32, %arg1: i32) -> (i32, i32, i32) {
    %c0_i32 = arith.constant 0 : i32
    %c0_i32_0 = arith.constant 0 : i32
    %c0_i32_1 = arith.constant 0 : i32
    return %arg1, %c0_i32, %c0_i32_0 : i32, i32, i32
  }
  func.func @transform_6(%arg0: i32, %arg1: i32) -> (i32, i32, i32) {
    %c0_i32 = arith.constant 0 : i32
    %c0_i32_0 = arith.constant 0 : i32
    %c0_i32_1 = arith.constant 0 : i32
    return %arg1, %c0_i32, %c0_i32_0 : i32, i32, i32
  }
  func.func @transform_7(%arg0: i32, %arg1: i32) -> (i32, i32, i32) {
    %c0_i32 = arith.constant 0 : i32
    %c0_i32_0 = arith.constant 0 : i32
    %c0_i32_1 = arith.constant 0 : i32
    return %arg1, %c0_i32, %c0_i32_0 : i32, i32, i32
  }
  func.func @transform_8(%arg0: i32, %arg1: i32) -> (i32, i32, i32) {
    %c0_i32 = arith.constant 0 : i32
    %c0_i32_0 = arith.constant 0 : i32
    %c0_i32_1 = arith.constant 0 : i32
    return %arg1, %c0_i32, %c0_i32_0 : i32, i32, i32
  }
  func.func @transform_9(%arg0: i32, %arg1: i32) -> (i32, i32, i32) {
    %c0_i32 = arith.constant 0 : i32
    %c0_i32_0 = arith.constant 0 : i32
    %c0_i32_1 = arith.constant 0 : i32
    return %arg1, %c0_i32, %c0_i32_0 : i32, i32, i32
  }
  func.func @transform_10(%arg0: i32, %arg1: i32) -> (i32, i32, i32) {
    %c0_i32 = arith.constant 0 : i32
    %c0_i32_0 = arith.constant 0 : i32
    %c0_i32_1 = arith.constant 0 : i32
    return %arg1, %c0_i32, %c0_i32_0 : i32, i32, i32
  }
  func.func @transform_11(%arg0: i32, %arg1: i32) -> (i32, i32, i32) {
    %c0_i32 = arith.constant 0 : i32
    %c0_i32_0 = arith.constant 0 : i32
    %c0_i32_1 = arith.constant 0 : i32
    return %arg0, %c0_i32, %c0_i32_0 : i32, i32, i32
  }
}

module attributes {stable_mosaic.version = 11 : i64} {
  func.func @_linear_kernel(%arg0: i32, %arg1: memref<8x10xbf16, #tpu.memory_space<vmem>>, %arg2: memref<10x10xbf16, #tpu.memory_space<vmem>>, %arg3: memref<1x10xf32, #tpu.memory_space<vmem>>, %arg4: memref<8x10xf32, #tpu.memory_space<vmem>>) attributes {dimension_semantics = [#tpu.dimension_semantics<parallel>], iteration_bounds = array<i64: 2>, scalar_prefetch = 0 : i64, scratch_operands = 0 : i64, tpu.core_type = #tpu.core_type<tc>, window_params = [{transform_indices = @transform_0, window_bounds = array<i64: 8, 10>}, {pipeline_mode = #tpu.pipeline_mode<synchronous>, transform_indices = @transform_1, window_bounds = array<i64: 10, 10>}, {pipeline_mode = #tpu.pipeline_mode<synchronous>, transform_indices = @transform_2, window_bounds = array<i64: 1, 10>}, {transform_indices = @transform_3, window_bounds = array<i64: 8, 10>}]} {
    %c0 = arith.constant 0 : index
    %c0_0 = arith.constant 0 : index
    %0 = vector.load %arg1[%c0, %c0_0] : memref<8x10xbf16, #tpu.memory_space<vmem>>, vector<8x10xbf16>
    %c0_1 = arith.constant 0 : index
    %c0_2 = arith.constant 0 : index
    %1 = vector.load %arg2[%c0_1, %c0_2] : memref<10x10xbf16, #tpu.memory_space<vmem>>, vector<10x10xbf16>
    %cst = arith.constant dense<0.000000e+00> : vector<8x10xf32>
    %2 = tpu.matmul %0, %1, %cst {dimension_numbers = #tpu.dot_dimension_numbers<[1], [0], [0], [1], [0, 0, 1, 1], [], []>} : vector<8x10xbf16>, vector<10x10xbf16>, vector<8x10xf32> -> vector<8x10xf32>
    %c0_3 = arith.constant 0 : index
    %c0_4 = arith.constant 0 : index
    %3 = vector.load %arg3[%c0_3, %c0_4] : memref<1x10xf32, #tpu.memory_space<vmem>>, vector<1x10xf32>
    %4 = vector.broadcast %3 : vector<1x10xf32> to vector<8x10xf32>
    %5 = arith.addf %2, %4 : vector<8x10xf32>
    %c0_5 = arith.constant 0 : index
    %c0_6 = arith.constant 0 : index
    %6 = vector.load %arg4[%c0_5, %c0_6] : memref<8x10xf32, #tpu.memory_space<vmem>>, vector<8x10xf32>
    tpu.vector_store %arg4[%c0_5, %c0_6], %5 {strides = array<i32>} : memref<8x10xf32, #tpu.memory_space<vmem>>, vector<8x10xf32>,
    return
  }
  func.func @transform_0(%arg0: i32) -> (i32, i32) {
    %c0_i32 = arith.constant 0 : i32
    %c0_i32_0 = arith.constant 0 : i32
    return %arg0, %c0_i32 : i32, i32
  }
  func.func @transform_1(%arg0: i32) -> (i32, i32) {
    %c0_i32 = arith.constant 0 : i32
    %c0_i32_0 = arith.constant 0 : i32
    %c0_i32_1 = arith.constant 0 : i32
    return %c0_i32, %c0_i32_0 : i32, i32
  }
  func.func @transform_2(%arg0: i32) -> (i32, i32) {
    %c0_i32 = arith.constant 0 : i32
    %c0_i32_0 = arith.constant 0 : i32
    %c0_i32_1 = arith.constant 0 : i32
    return %c0_i32, %c0_i32_0 : i32, i32
  }
  func.func @transform_3(%arg0: i32) -> (i32, i32) {
    %c0_i32 = arith.constant 0 : i32
    %c0_i32_0 = arith.constant 0 : i32
    return %arg0, %c0_i32 : i32, i32
  }
}

</mosaic_0001>

<llo_original>
// kernel: transformer_vae_forward.7
$region0: #{transformer_vae_forward.7}
  #allocation0 [shape = 'u32[]', space=smem, size = 0x4, offset = 0x4, fixed_abs, tag = 'smem constant byte address 0x4 - core index']
  #allocation1 [shape = 'u32[72,128]{1,0:T(1,128)}', space=vmem, size = 0x9000, scoped, tag = 'internal scratch']
  %s0 = inlined_call_operand.vmem [shape: f32[2,10], index: 0, kind: input, shape index: {}]
  %s1 = inlined_call_operand.vmem [shape: bf16[10,16], index: 1, kind: input, shape index: {}]
  %s2 = inlined_call_operand.vmem [shape: f32[1,16], index: 2, kind: input, shape index: {}]
  %s3 = inlined_call_operand.vmem [shape: bf16[8,10], index: 3, kind: input, shape index: {}]
  %s4 = inlined_call_operand.vmem [shape: f32[1,10], index: 4, kind: input, shape index: {}]
  %s5 = inlined_call_operand.vmem [shape: f32[2,8], index: 5, kind: input, shape index: {}]
  %s6 = inlined_call_operand.hbm [shape: f32[2,8], index: 6, kind: output, shape index: {0}]
  %s7 = inlined_call_operand.hbm [shape: f32[2,8], index: 7, kind: output, shape index: {1}]
  %s8 = inlined_call_operand.vmem [shape: bf16[2,10], index: 8, kind: output, shape index: {2}]
  %9 = xla_tuple %s6, %s7, %s8
  %s10 = sld [smem:[#allocation0]]
  $region50: #{transformer_vae_forward.7} parent=0
    _
  %s12 = ssub.s32 1, %s10
  %s13 = scalar_select 0, %s12, %s10
  $region1: #{transformer_vae_forward.7} parent=0
    #allocation2 [shape = 'u8[1024]{0}', space=vmem, size = 0x400, scoped, tag = 'output window, operand 0, single buffered']
    #allocation3 [shape = 's32[1]{0}', space=sflag, size = 0x4, scoped, tag = 'scoped memory for transformer_vae_forward.7']
    #allocation4 [shape = 'u8[1024]{0}', space=vmem, size = 0x400, scoped, tag = 'output window, operand 1, single buffered']
    #allocation5 [shape = 's32[1]{0}', space=sflag, size = 0x4, scoped, tag = 'scoped memory for transformer_vae_forward.7']
    %14 = vsyncpa [#allocation3], 0
    %15 = vsyncpa [#allocation5], 0
    // Predicated region
    $region2: #{transformer_vae_forward.7} parent=1 // pred_check
      _
    $region3: #{transformer_vae_forward.7} parent=1 // pred_check_branch
      %17 = sbr.rel (0) target = $region5
    $region4: #{transformer_vae_forward.7} parent=1 // pred_region
      _
    $region5: #{transformer_vae_forward.7} parent=1 // pred_fallthru
      _
    // Predicated region
    $region6: #{transformer_vae_forward.7} parent=1 // pred_check
      _
    $region7: #{transformer_vae_forward.7} parent=1 // pred_check_branch
      %19 = sbr.rel (0) target = $region9
    $region8: #{transformer_vae_forward.7} parent=1 // pred_region
      _
    $region9: #{transformer_vae_forward.7} parent=1 // pred_fallthru
      _
    // Predicated region
    $region10: #{transformer_vae_forward.7} parent=1 // pred_check
      _
    $region11: #{transformer_vae_forward.7} parent=1 // pred_check_branch
      %21 = sbr.rel (0) target = $region13
    $region12: #{transformer_vae_forward.7} parent=1 // pred_region
      _
    $region13: #{transformer_vae_forward.7} parent=1 // pred_fallthru
      _
    // Predicated region
    $region14: #{transformer_vae_forward.7} parent=1 // pred_check
      _
    $region15: #{transformer_vae_forward.7} parent=1 // pred_check_branch
      %23 = sbr.rel (0) target = $region17
    $region16: #{transformer_vae_forward.7} parent=1 // pred_region
      _
    $region17: #{transformer_vae_forward.7} parent=1 // pred_fallthru
      _
    // Predicated region
    $region18: #{transformer_vae_forward.7} parent=1 // pred_check
      _
    $region19: #{transformer_vae_forward.7} parent=1 // pred_check_branch
      %25 = sbr.rel (0) target = $region21
    $region20: #{transformer_vae_forward.7} parent=1 // pred_region
      _
    $region21: #{transformer_vae_forward.7} parent=1 // pred_fallthru
      _
    // Predicated region
    $region22: #{transformer_vae_forward.7} parent=1 // pred_check
      _
    $region23: #{transformer_vae_forward.7} parent=1 // pred_check_branch
      %27 = sbr.rel (0) target = $region25
    $region24: #{transformer_vae_forward.7} parent=1 // pred_region
      _
    $region25: #{transformer_vae_forward.7} parent=1 // pred_fallthru
      _
    %v29 = vld [vmem:[%s0] sm:$0x3]
    %v30 = vld [vmem:[%s1] sm:$0xf]
    %v31 = vld [vmem:[%s1 + $0x4] sm:$0x1]
    %v32 = vpack.c.bf16 %v29, %v29
    %v33 = vld [vmem:[%s2] sm:$0x1]
    %v35 = vperm.slane %v33, 0
    %v39 = vunpack.c.l.b16 %v30
    %v40 = vunpack.c.l.b16 %v31
    %v41 = vpack.c.b16 %v40, %v39
    %vm42 = vcmask 80896
    %v44 = vsel %vm42, %v32, 0
    %vm46 = vcmask 1044480
    %v48 = vsel %vm46, %v41, 0
    %50 = vmatpush.bf16.msra.mxu0 0
    %51 = vmatpush.bf16.msra.mxu0 0
    %52 = vmatpush.bf16.msra.mxu0 0
    %53 = vmatpush.bf16.msra.mxu0 0
    %54 = vmatpush.bf16.msra.mxu0 0
    %55 = vmatpush.bf16.msra.mxu0 0
    %56 = vmatpush.bf16.msra.mxu0 0
    %57 = vmatpush.bf16.msra.mxu0 %v48
    %58 = vmatmul.bf16.gmra.mxu0 %v44
    %v59 = vpop.f32.mrf.mxu0
    %v60 = vadd.f32 %v35, %v59
    %v61 = vpop.f32.mrf.mxu0
    %62 = vdwg.mxu0
    %v63 = vmul.f32 %v60, 0.5
    %v64 = vmul.f32 %v63, 1.442695
    %v65 = vpow.pop %v64
    %v66 = vld [vmem:[%s5] sm:$0x3]
    %68 = vrot.lane.b32.xlu0 %v66, 8
    %v69 = vpop.permute.xlu0 %68
    %v71 = vmul.f32 %v65, %v69
    %73 = vrot.lane.b32.xlu0 %v71, 120
    %v74 = vpop.permute.xlu0 %73
    %v76 = vadd.f32 %v60, %v74
    %v77 = vld [vmem:[%s3] sm:$0xf]
    %v78 = vpack.c.bf16 %v76, %v76
    %v79 = vld [vmem:[%s4] sm:$0x1]
    %v81 = vperm.slane %v79, 0
    %vm83 = vcmask 64512
    %v85 = vsel %vm83, %v78, 0
    %vm87 = vcmask 1043456
    %v89 = vsel %vm87, %v77, 0
    %91 = vmatpush.bf16.msra.mxu0 0
    %92 = vmatpush.bf16.msra.mxu0 0
    %93 = vmatpush.bf16.msra.mxu0 0
    %94 = vmatpush.bf16.msra.mxu0 0
    %95 = vmatpush.bf16.msra.mxu0 0
    %96 = vmatpush.bf16.msra.mxu0 0
    %97 = vmatpush.bf16.msra.mxu0 0
    %98 = vmatpush.bf16.msra.mxu0 %v89
    %99 = vmatmul.bf16.gmra.mxu0 %v85
    %v100 = vpop.f32.mrf.mxu0
    %v101 = vadd.f32 %v81, %v100
    %v102 = vpop.f32.mrf.mxu0
    %103 = vdwg.mxu0
    %vm104 = vcmask 58368
    %105 = vst.msk [vmem:[#allocation2] sm:$0x3] %vm104, %v60
    %107 = vrot.lane.b32.xlu0 %v60, 120
    %v108 = vpop.permute.xlu0 %107
    %110 = vst.msk [vmem:[#allocation4] sm:$0x3] %vm104, %v108
    %v111 = vpack.c.bf16 %v101, %v101
    %vm112 = vcmask 73728
    %113 = vst.msk [vmem:[%s8] sm:$0x1] %vm112, %v111
    // Predicated region
    $region26: #{transformer_vae_forward.7} parent=1 // pred_check
      _
    $region27: #{transformer_vae_forward.7} parent=1 // pred_check_branch
      %115 = sbr.rel (0) target = $region29
    $region28: #{transformer_vae_forward.7} parent=1 // pred_region
      %117 = vsyncadd [#allocation3], 0
      %s119 = sshll.u32 [#allocation2], 4
      %s120 = int_to_ptr.vmem [resolvable:$true] %s119
      %s121 = sshll.u32 %s6, 4
      %s122 = int_to_ptr.hbm [resolvable:$true] %s121
      %124 = dma.vmem_to_hbm [thread:$0]  %s120, 32, %s122, [#allocation3]
    $region29: #{transformer_vae_forward.7} parent=1 // pred_fallthru
      _
    // Predicated region
    $region30: #{transformer_vae_forward.7} parent=1 // pred_check
      _
    $region31: #{transformer_vae_forward.7} parent=1 // pred_check_branch
      %126 = sbr.rel (0) target = $region33
    $region32: #{transformer_vae_forward.7} parent=1 // pred_region
      %128 = vsyncadd [#allocation5], 0
      %s130 = sshll.u32 [#allocation4], 4
      %s131 = int_to_ptr.vmem [resolvable:$true] %s130
      %s132 = sshll.u32 %s7, 4
      %s133 = int_to_ptr.hbm [resolvable:$true] %s132
      %135 = dma.vmem_to_hbm [thread:$0]  %s131, 32, %s133, [#allocation5]
    $region33: #{transformer_vae_forward.7} parent=1 // pred_fallthru
      _
    // Predicated region
    $region34: #{transformer_vae_forward.7} parent=1 // pred_check
      _
    $region35: #{transformer_vae_forward.7} parent=1 // pred_check_branch
      %137 = sbr.rel (0) target = $region37
    $region36: #{transformer_vae_forward.7} parent=1 // pred_region
      _
    $region37: #{transformer_vae_forward.7} parent=1 // pred_fallthru
      _
    // Predicated region
    $region38: #{transformer_vae_forward.7} parent=1 // pred_check
      _
    $region39: #{transformer_vae_forward.7} parent=1 // pred_check_branch
      %139 = sbr.rel (0) target = $region41
    $region40: #{transformer_vae_forward.7} parent=1 // pred_region
      %141 = dma.done [#allocation3], 32
    $region41: #{transformer_vae_forward.7} parent=1 // pred_fallthru
      _
    // Predicated region
    $region42: #{transformer_vae_forward.7} parent=1 // pred_check
      _
    $region43: #{transformer_vae_forward.7} parent=1 // pred_check_branch
      %143 = sbr.rel (0) target = $region45
    $region44: #{transformer_vae_forward.7} parent=1 // pred_region
      %145 = dma.done [#allocation5], 32
    $region45: #{transformer_vae_forward.7} parent=1 // pred_fallthru
      _
    // Predicated region
    $region46: #{transformer_vae_forward.7} parent=1 // pred_check
      _
    $region47: #{transformer_vae_forward.7} parent=1 // pred_check_branch
      %147 = sbr.rel (0) target = $region49
    $region48: #{transformer_vae_forward.7} parent=1 // pred_region
      _
    $region49: #{transformer_vae_forward.7} parent=1 // pred_fallthru
      _
    %148 = vsyncpa [#allocation3], 1
    %149 = vsyncpa [#allocation5], 1

// kernel: transformer_vae_forward.5
$region0: #{transformer_vae_forward.5}
  #allocation0 [shape = 'u32[]', space=smem, size = 0x4, offset = 0x4, fixed_abs, tag = 'smem constant byte address 0x4 - core index']
  #allocation1 [shape = 'u32[72,128]{1,0:T(1,128)}', space=vmem, size = 0x9000, scoped, tag = 'internal scratch']
  %s0 = inlined_call_operand.vmem [shape: f32[16,10], index: 0, kind: input, shape index: {}]
  %s1 = inlined_call_operand.vmem [shape: bf16[10,10], index: 1, kind: input, shape index: {}]
  %s2 = inlined_call_operand.vmem [shape: f32[1,10], index: 2, kind: input, shape index: {}]
  %s3 = inlined_call_operand.vmem [shape: bf16[16,10], index: 3, kind: output, shape index: {}]
  %s4 = sld [smem:[#allocation0]]
  $region45: #{transformer_vae_forward.5} parent=0
    _
  %s6 = ssub.s32 1, %s4
  %s7 = scalar_select 0, %s6, %s4
  loop: start=0, step=1, limit=4
  $region2: #{transformer_vae_forward.5} parent=0 // loop_pre_header
    _
  $region3: #{transformer_vae_forward.5} parent=0 // loop_header
    %s9 = sphi 0, %s13
    %p10 = scmp.ge.s32.totalorder %s9, 4
    %s19 = sphi 0, %s21
    %s22 = sphi 0, %s19
    %s23 = sphi 0, %s22
    %s39 = sphi 0, %s23
    %s43 = sphi 0, %s43
    %s45 = sphi 0, %s43
    %s46 = sphi 0, %s45
    %s60 = sphi 0, %s46
    %s64 = sphi 0, %s64
    %s66 = sphi 0, %s64
    %s67 = sphi 0, %s66
    %s81 = sphi 0, %s67
    %s87 = sphi 0, %s89
    %s90 = sphi 0, %s87
    %s91 = sphi 0, %s90
    %s107 = sphi 0, %s91
  $region4: #{transformer_vae_forward.5} parent=0 // loop_header_branch
    %12 = sbr.rel (%p10) target = $region8
  $region5: #{transformer_vae_forward.5} parent=0 // loop_body
    %s14 = ssub.s32 %s9, 1
    %s15 = ssub.s32 %s9, 2
    %s16 = sadd.s32 %s9, 1
    %s17 = ssub.s32 %s9, %s16
    %p18 = scmp.eq.s32.totalorder %s17, 0
    %s20 = sadd.s32 %s19, 1
    %s21 = scalar_select %p18, %s19, %s20
    %p24 = pneg %p18
    %p25 = scmp.eq.s32.totalorder %s9, 1
    %p26 = por %p24, %p25
    %p27 = scmp.ne.s32.totalorder %s19, %s22
    %p28 = scmp.eq.s32.totalorder %s9, 0
    %p29 = por %p27, %p28
    %p30 = scmp.ne.s32.totalorder %s19, %s22
    %p31 = scmp.eq.s32.totalorder %s14, 1
    %p32 = por %p30, %p31
    %p33 = scmp.ne.s32.totalorder %s22, %s23
    %p34 = scmp.eq.s32.totalorder %s14, 0
    %p35 = por %p33, %p34
    %p36 = scmp.ne.s32.totalorder %s22, %s23
    %p37 = scmp.eq.s32.totalorder %s15, 1
    %p38 = por %p36, %p37
    %p40 = scmp.ne.s32.totalorder %s23, %s39
    %p41 = scmp.eq.s32.totalorder %s15, 0
    %p42 = por %p40, %p41
    %s44 = sadd.s32 %s43, 1
    %p47 = scmp.eq.s32.totalorder %s9, 1
    %p48 = scmp.ne.s32.totalorder %s43, %s45
    %p49 = scmp.eq.s32.totalorder %s9, 0
    %p50 = por %p48, %p49
    %p51 = scmp.ne.s32.totalorder %s43, %s45
    %p52 = scmp.eq.s32.totalorder %s14, 1
    %p53 = por %p51, %p52
    %p54 = scmp.ne.s32.totalorder %s45, %s46
    %p55 = scmp.eq.s32.totalorder %s14, 0
    %p56 = por %p54, %p55
    %p57 = scmp.ne.s32.totalorder %s45, %s46
    %p58 = scmp.eq.s32.totalorder %s15, 1
    %p59 = por %p57, %p58
    %p61 = scmp.ne.s32.totalorder %s46, %s60
    %p62 = scmp.eq.s32.totalorder %s15, 0
    %p63 = por %p61, %p62
    %s65 = sadd.s32 %s64, 1
    %p68 = scmp.eq.s32.totalorder %s9, 1
    %p69 = scmp.ne.s32.totalorder %s64, %s66
    %p70 = scmp.eq.s32.totalorder %s9, 0
    %p71 = por %p69, %p70
    %p72 = scmp.ne.s32.totalorder %s64, %s66
    %p73 = scmp.eq.s32.totalorder %s14, 1
    %p74 = por %p72, %p73
    %p75 = scmp.ne.s32.totalorder %s66, %s67
    %p76 = scmp.eq.s32.totalorder %s14, 0
    %p77 = por %p75, %p76
    %p78 = scmp.ne.s32.totalorder %s66, %s67
    %p79 = scmp.eq.s32.totalorder %s15, 1
    %p80 = por %p78, %p79
    %p82 = scmp.ne.s32.totalorder %s67, %s81
    %p83 = scmp.eq.s32.totalorder %s15, 0
    %p84 = por %p82, %p83
    %s85 = ssub.s32 %s9, %s16
    %p86 = scmp.eq.s32.totalorder %s85, 0
    %s88 = sadd.s32 %s87, 1
    %s89 = scalar_select %p86, %s87, %s88
    %p92 = pneg %p86
    %p93 = scmp.eq.s32.totalorder %s9, 1
    %p94 = por %p92, %p93
    %p95 = scmp.ne.s32.totalorder %s87, %s90
    %p96 = scmp.eq.s32.totalorder %s9, 0
    %p97 = por %p95, %p96
    %p98 = scmp.ne.s32.totalorder %s87, %s90
    %p99 = scmp.eq.s32.totalorder %s14, 1
    %p100 = por %p98, %p99
    %p101 = scmp.ne.s32.totalorder %s90, %s91
    %p102 = scmp.eq.s32.totalorder %s14, 0
    %p103 = por %p101, %p102
    %p104 = scmp.ne.s32.totalorder %s90, %s91
    %p105 = scmp.eq.s32.totalorder %s15, 1
    %p106 = por %p104, %p105
    %p108 = scmp.ne.s32.totalorder %s91, %s107
    %p109 = scmp.eq.s32.totalorder %s15, 0
    %p110 = por %p108, %p109
    %p111 = scmp.le.s32.totalorder 1, %s9
    %p112 = scmp.lt.s32.totalorder %s9, 3
    %p113 = pnand %p111, %p112
    %p114 = pneg %p113
    // Predicated region
    $region9: #{transformer_vae_forward.5} parent=5 // pred_check
      _
    $region10: #{transformer_vae_forward.5} parent=5 // pred_check_branch
      %116 = sbr.rel (%p113) target = $region12
    $region11: #{transformer_vae_forward.5} parent=5 // pred_region
      %s117 = ssub.s32 %s9, 1
      // Predicated region
      $region13: #{transformer_vae_forward.5} parent=11 // pred_check
        %p118 = pneg %p56
      $region14: #{transformer_vae_forward.5} parent=11 // pred_check_branch
        %120 = sbr.rel (%p118) target = $region16
      $region15: #{transformer_vae_forward.5} parent=11 // pred_region
        _
      $region16: #{transformer_vae_forward.5} parent=11 // pred_fallthru
        _
      // Predicated region
      $region17: #{transformer_vae_forward.5} parent=11 // pred_check
        %p121 = pneg %p77
      $region18: #{transformer_vae_forward.5} parent=11 // pred_check_branch
        %123 = sbr.rel (%p121) target = $region20
      $region19: #{transformer_vae_forward.5} parent=11 // pred_region
        _
      $region20: #{transformer_vae_forward.5} parent=11 // pred_fallthru
        _
    $region12: #{transformer_vae_forward.5} parent=5 // pred_fallthru
      _
    %p124 = scmp.lt.s32.totalorder %s9, 2
    // Predicated region
    $region21: #{transformer_vae_forward.5} parent=5 // pred_check
      %p125 = pneg %p124
    $region22: #{transformer_vae_forward.5} parent=5 // pred_check_branch
      %127 = sbr.rel (%p125) target = $region24
    $region23: #{transformer_vae_forward.5} parent=5 // pred_region
      // Predicated region
      $region25: #{transformer_vae_forward.5} parent=23 // pred_check
        %p128 = pneg %p29
      $region26: #{transformer_vae_forward.5} parent=23 // pred_check_branch
        %130 = sbr.rel (%p128) target = $region28
      $region27: #{transformer_vae_forward.5} parent=23 // pred_region
        %p131 = scmp.lt.s32.totalorder %s9, 1
        %s132 = scalar_select %p131, %s9, 1
        %s133 = smul.addr %s132, 8
        %s134 = scalar_lea.vmem %s0, %s133
      $region28: #{transformer_vae_forward.5} parent=23 // pred_fallthru
        _
    $region24: #{transformer_vae_forward.5} parent=5 // pred_fallthru
      _
    %p135 = scmp.le.s32.totalorder 1, %s9
    %p136 = scmp.lt.s32.totalorder %s9, 3
    %p137 = pnand %p135, %p136
    %p138 = pneg %p137
    // Predicated region
    $region29: #{transformer_vae_forward.5} parent=5 // pred_check
      _
    $region30: #{transformer_vae_forward.5} parent=5 // pred_check_branch
      %140 = sbr.rel (%p137) target = $region32
    $region31: #{transformer_vae_forward.5} parent=5 // pred_region
      %s141 = ssub.s32 %s9, 1
      %p142 = scmp.lt.s32.totalorder %s14, 1
      %s143 = scalar_select %p142, %s14, 1
      %s144 = smul.addr %s143, 8
      %s145 = scalar_lea.vmem %s0, %s144
      %p146 = pneg %p35
      %p147 = pneg %p32
      %p148 = pneg %p56
      %p149 = pneg %p53
      %p150 = pneg %p77
      %p151 = pneg %p74
      %p152 = pneg %p103
      %p153 = pneg %p100
      %p154 = scmp.lt.s32.totalorder %s14, 1
      %s155 = scalar_select %p154, %s14, 1
      %s156 = smul.addr %s155, 4
      %s157 = scalar_lea.vmem %s3, %s156
      %p158 = scmp.lt.s32.totalorder %s14, 1
      %s159 = scalar_select %p158, %s14, 1
      %s160 = smul.addr %s159, 8
      %s161 = scalar_lea.vmem %s0, %s160
      %p162 = scmp.lt.s32.totalorder %s14, 1
      %s163 = scalar_select %p162, %s14, 1
      %s164 = smul.addr %s163, 4
      %s165 = scalar_lea.vmem %s3, %s164
      %v167 = vld [vmem:[%s161] sm:$0xff]
      %v168 = vld [vmem:[%s1] sm:$0xf]
      %v169 = vld [vmem:[%s1 + $0x4] sm:$0x1]
      %v170 = vpack.c.bf16 %v167, %v167
      %v171 = vld [vmem:[%s2] sm:$0x1]
      %v173 = vperm.slane %v171, 0
      %v177 = vunpack.c.l.b16 %v168
      %v178 = vunpack.c.l.b16 %v169
      %v179 = vpack.c.b16 %v178, %v177
      %vm180 = vcmask 80896
      %v182 = vsel %vm180, %v170, 0
      %vm184 = vcmask 1044480
      %v186 = vsel %vm184, %v179, 0
      %188 = vmatpush.bf16.msra.mxu0 0
      %189 = vmatpush.bf16.msra.mxu0 0
      %190 = vmatpush.bf16.msra.mxu0 0
      %191 = vmatpush.bf16.msra.mxu0 0
      %192 = vmatpush.bf16.msra.mxu0 0
      %193 = vmatpush.bf16.msra.mxu0 0
      %194 = vmatpush.bf16.msra.mxu0 0
      %195 = vmatpush.bf16.msra.mxu0 %v186
      %196 = vmatmul.bf16.gmra.mxu0 %v182
      %v197 = vpop.f32.mrf.mxu0
      %v198 = vadd.f32 %v173, %v197
      %v199 = vpop.f32.mrf.mxu0
      %200 = vdwg.mxu0
      %v201 = vpack.c.bf16 %v198, %v198
      %vm202 = vcmask 76800
      %203 = vst.msk [vmem:[%s165] sm:$0xf] %vm202, %v201
      %p204 = scmp.lt.s32.totalorder %s14, 1
      %s205 = scalar_select %p204, %s14, 1
      %s206 = smul.addr %s205, 4
      %s207 = scalar_lea.vmem %s3, %s206
      // Predicated region
      $region33: #{transformer_vae_forward.5} parent=31 // pred_check
        %p208 = pneg %p100
      $region34: #{transformer_vae_forward.5} parent=31 // pred_check_branch
        %210 = sbr.rel (%p208) target = $region36
      $region35: #{transformer_vae_forward.5} parent=31 // pred_region
        _
      $region36: #{transformer_vae_forward.5} parent=31 // pred_fallthru
        _
    $region32: #{transformer_vae_forward.5} parent=5 // pred_fallthru
      _
    %p211 = scmp.le.s32.totalorder 2, %s9
    // Predicated region
    $region37: #{transformer_vae_forward.5} parent=5 // pred_check
      %p212 = pneg %p211
    $region38: #{transformer_vae_forward.5} parent=5 // pred_check_branch
      %214 = sbr.rel (%p212) target = $region40
    $region39: #{transformer_vae_forward.5} parent=5 // pred_region
      %s215 = ssub.s32 %s9, 2
      // Predicated region
      $region41: #{transformer_vae_forward.5} parent=39 // pred_check
        %p216 = pneg %p106
      $region42: #{transformer_vae_forward.5} parent=39 // pred_check_branch
        %218 = sbr.rel (%p216) target = $region44
      $region43: #{transformer_vae_forward.5} parent=39 // pred_region
        %p219 = scmp.lt.s32.totalorder %s15, 1
        %s220 = scalar_select %p219, %s15, 1
        %s221 = smul.addr %s220, 4
        %s222 = scalar_lea.vmem %s3, %s221
      $region44: #{transformer_vae_forward.5} parent=39 // pred_fallthru
        _
    $region40: #{transformer_vae_forward.5} parent=5 // pred_fallthru
      _
  $region6: #{transformer_vae_forward.5} parent=0 // loop_footer
    %s13 = sadd.s32 1, %s9
  $region7: #{transformer_vae_forward.5} parent=0 // loop_footer_branch
    %8 = sbr.rel target = $region3
  $region8: #{transformer_vae_forward.5} parent=0 // loop_exit
    _

// kernel: transformer_vae_forward.6
$region0: #{transformer_vae_forward.6}
  #allocation0 [shape = 'u32[]', space=smem, size = 0x4, offset = 0x4, fixed_abs, tag = 'smem constant byte address 0x4 - core index']
  #allocation1 [shape = 'u32[72,128]{1,0:T(1,128)}', space=vmem, size = 0x9000, scoped, tag = 'internal scratch']
  #allocation2 [shape = 'f32[8,10]{1,0:T(8,128)}', space=vmem, size = 0x1000, scoped, tag = 'scratch operand']
  %s0 = inlined_call_operand.vmem [shape: bf16[2,8,10], index: 0, kind: input, shape index: {}]
  %s1 = inlined_call_operand.vmem [shape: bf16[2,10,30], index: 1, kind: input, shape index: {}]
  %s2 = inlined_call_operand.vmem [shape: bf16[2,10,10], index: 2, kind: input, shape index: {}]
  %s3 = inlined_call_operand.vmem [shape: bf16[2,10,2048], index: 3, kind: input, shape index: {}]
  %s4 = inlined_call_operand.vmem [shape: bf16[2,2048,10], index: 4, kind: input, shape index: {}]
  %s5 = inlined_call_operand.vmem [shape: f32[2,9,10], index: 5, kind: input, shape index: {}]
  %s6 = inlined_call_operand.vmem [shape: f32[2,1,2048], index: 6, kind: input, shape index: {}]
  %s7 = inlined_call_operand.vmem [shape: bf16[2,8,10], index: 7, kind: output, shape index: {0}]
  %s8 = inlined_call_operand.vmem [shape: f32[2,1,10], index: 8, kind: output, shape index: {1}]
  %9 = xla_tuple %s7, %s8
  %s10 = sld [smem:[#allocation0]]
  $region77: #{transformer_vae_forward.6} parent=0
    _
  %s12 = ssub.s32 1, %s10
  %s13 = scalar_select 0, %s12, %s10
  loop: start=0, step=1, limit=6
  $region2: #{transformer_vae_forward.6} parent=0 // loop_pre_header
    _
  $region3: #{transformer_vae_forward.6} parent=0 // loop_header
    %s15 = sphi 0, %s19
    %p16 = scmp.ge.s32.totalorder %s15, 6
    %s22 = sphi 0, %s34
    %s23 = sphi 0, %s30
    %s24 = sphi 0, %s22
    %s25 = sphi 0, %s23
    %s26 = sphi 0, %s24
    %s27 = sphi 0, %s25
    %s37 = sphi 0, %s39
    %s40 = sphi 0, %s37
    %s41 = sphi 0, %s40
    %s57 = sphi 0, %s41
    %s63 = sphi 0, %s65
    %s66 = sphi 0, %s63
    %s67 = sphi 0, %s66
    %s83 = sphi 0, %s67
    %s89 = sphi 0, %s91
    %s92 = sphi 0, %s89
    %s93 = sphi 0, %s92
    %s109 = sphi 0, %s93
    %s115 = sphi 0, %s117
    %s118 = sphi 0, %s115
    %s119 = sphi 0, %s118
    %s135 = sphi 0, %s119
    %s141 = sphi 0, %s143
    %s144 = sphi 0, %s141
    %s145 = sphi 0, %s144
    %s161 = sphi 0, %s145
    %s167 = sphi 0, %s169
    %s170 = sphi 0, %s167
    %s171 = sphi 0, %s170
    %s187 = sphi 0, %s171
    %s193 = sphi 0, %s195
    %s196 = sphi 0, %s193
    %s197 = sphi 0, %s196
    %s213 = sphi 0, %s197
    %s219 = sphi 0, %s221
    %s222 = sphi 0, %s219
    %s223 = sphi 0, %s222
    %s239 = sphi 0, %s223
    %s245 = sphi 0, %s247
    %s248 = sphi 0, %s245
    %s249 = sphi 0, %s248
    %s265 = sphi 0, %s249
  $region4: #{transformer_vae_forward.6} parent=0 // loop_header_branch
    %18 = sbr.rel (%p16) target = $region8
  $region5: #{transformer_vae_forward.6} parent=0 // loop_body
    %s20 = ssub.s32 %s15, 1
    %s21 = ssub.s32 %s15, 2
    %s28 = sadd.s32 1, %s23
    %p29 = scmp.ge.s32.totalorder %s28, 2
    %s30 = scalar_select %p29, 0, %s28
    %s31 = sadd.s32 1, %s22
    %s32 = scalar_select %p29, %s31, %s22
    %p33 = scmp.ge.s32.totalorder %s32, 2
    %s34 = scalar_select %p33, 0, %s32
    %s35 = ssub.s32 %s22, %s34
    %p36 = scmp.eq.s32.totalorder %s35, 0
    %s38 = sadd.s32 %s37, 1
    %s39 = scalar_select %p36, %s37, %s38
    %p42 = pneg %p36
    %p43 = scmp.eq.s32.totalorder %s15, 3
    %p44 = por %p42, %p43
    %p45 = scmp.ne.s32.totalorder %s37, %s40
    %p46 = scmp.eq.s32.totalorder %s15, 0
    %p47 = por %p45, %p46
    %p48 = scmp.ne.s32.totalorder %s37, %s40
    %p49 = scmp.eq.s32.totalorder %s20, 3
    %p50 = por %p48, %p49
    %p51 = scmp.ne.s32.totalorder %s40, %s41
    %p52 = scmp.eq.s32.totalorder %s20, 0
    %p53 = por %p51, %p52
    %p54 = scmp.ne.s32.totalorder %s40, %s41
    %p55 = scmp.eq.s32.totalorder %s21, 3
    %p56 = por %p54, %p55
    %p58 = scmp.ne.s32.totalorder %s41, %s57
    %p59 = scmp.eq.s32.totalorder %s21, 0
    %p60 = por %p58, %p59
    %s61 = ssub.s32 %s23, %s30
    %p62 = scmp.eq.s32.totalorder %s61, 0
    %s64 = sadd.s32 %s63, 1
    %s65 = scalar_select %p62, %s63, %s64
    %p68 = pneg %p62
    %p69 = scmp.eq.s32.totalorder %s15, 3
    %p70 = por %p68, %p69
    %p71 = scmp.ne.s32.totalorder %s63, %s66
    %p72 = scmp.eq.s32.totalorder %s15, 0
    %p73 = por %p71, %p72
    %p74 = scmp.ne.s32.totalorder %s63, %s66
    %p75 = scmp.eq.s32.totalorder %s20, 3
    %p76 = por %p74, %p75
    %p77 = scmp.ne.s32.totalorder %s66, %s67
    %p78 = scmp.eq.s32.totalorder %s20, 0
    %p79 = por %p77, %p78
    %p80 = scmp.ne.s32.totalorder %s66, %s67
    %p81 = scmp.eq.s32.totalorder %s21, 3
    %p82 = por %p80, %p81
    %p84 = scmp.ne.s32.totalorder %s67, %s83
    %p85 = scmp.eq.s32.totalorder %s21, 0
    %p86 = por %p84, %p85
    %s87 = ssub.s32 %s23, %s30
    %p88 = scmp.eq.s32.totalorder %s87, 0
    %s90 = sadd.s32 %s89, 1
    %s91 = scalar_select %p88, %s89, %s90
    %p94 = pneg %p88
    %p95 = scmp.eq.s32.totalorder %s15, 3
    %p96 = por %p94, %p95
    %p97 = scmp.ne.s32.totalorder %s89, %s92
    %p98 = scmp.eq.s32.totalorder %s15, 0
    %p99 = por %p97, %p98
    %p100 = scmp.ne.s32.totalorder %s89, %s92
    %p101 = scmp.eq.s32.totalorder %s20, 3
    %p102 = por %p100, %p101
    %p103 = scmp.ne.s32.totalorder %s92, %s93
    %p104 = scmp.eq.s32.totalorder %s20, 0
    %p105 = por %p103, %p104
    %p106 = scmp.ne.s32.totalorder %s92, %s93
    %p107 = scmp.eq.s32.totalorder %s21, 3
    %p108 = por %p106, %p107
    %p110 = scmp.ne.s32.totalorder %s93, %s109
    %p111 = scmp.eq.s32.totalorder %s21, 0
    %p112 = por %p110, %p111
    %s113 = ssub.s32 %s23, %s30
    %p114 = scmp.eq.s32.totalorder %s113, 0
    %s116 = sadd.s32 %s115, 1
    %s117 = scalar_select %p114, %s115, %s116
    %p120 = pneg %p114
    %p121 = scmp.eq.s32.totalorder %s15, 3
    %p122 = por %p120, %p121
    %p123 = scmp.ne.s32.totalorder %s115, %s118
    %p124 = scmp.eq.s32.totalorder %s15, 0
    %p125 = por %p123, %p124
    %p126 = scmp.ne.s32.totalorder %s115, %s118
    %p127 = scmp.eq.s32.totalorder %s20, 3
    %p128 = por %p126, %p127
    %p129 = scmp.ne.s32.totalorder %s118, %s119
    %p130 = scmp.eq.s32.totalorder %s20, 0
    %p131 = por %p129, %p130
    %p132 = scmp.ne.s32.totalorder %s118, %s119
    %p133 = scmp.eq.s32.totalorder %s21, 3
    %p134 = por %p132, %p133
    %p136 = scmp.ne.s32.totalorder %s119, %s135
    %p137 = scmp.eq.s32.totalorder %s21, 0
    %p138 = por %p136, %p137
    %s139 = ssub.s32 %s23, %s30
    %p140 = scmp.eq.s32.totalorder %s139, 0
    %s142 = sadd.s32 %s141, 1
    %s143 = scalar_select %p140, %s141, %s142
    %p146 = pneg %p140
    %p147 = scmp.eq.s32.totalorder %s15, 3
    %p148 = por %p146, %p147
    %p149 = scmp.ne.s32.totalorder %s141, %s144
    %p150 = scmp.eq.s32.totalorder %s15, 0
    %p151 = por %p149, %p150
    %p152 = scmp.ne.s32.totalorder %s141, %s144
    %p153 = scmp.eq.s32.totalorder %s20, 3
    %p154 = por %p152, %p153
    %p155 = scmp.ne.s32.totalorder %s144, %s145
    %p156 = scmp.eq.s32.totalorder %s20, 0
    %p157 = por %p155, %p156
    %p158 = scmp.ne.s32.totalorder %s144, %s145
    %p159 = scmp.eq.s32.totalorder %s21, 3
    %p160 = por %p158, %p159
    %p162 = scmp.ne.s32.totalorder %s145, %s161
    %p163 = scmp.eq.s32.totalorder %s21, 0
    %p164 = por %p162, %p163
    %s165 = ssub.s32 %s23, %s30
    %p166 = scmp.eq.s32.totalorder %s165, 0
    %s168 = sadd.s32 %s167, 1
    %s169 = scalar_select %p166, %s167, %s168
    %p172 = pneg %p166
    %p173 = scmp.eq.s32.totalorder %s15, 3
    %p174 = por %p172, %p173
    %p175 = scmp.ne.s32.totalorder %s167, %s170
    %p176 = scmp.eq.s32.totalorder %s15, 0
    %p177 = por %p175, %p176
    %p178 = scmp.ne.s32.totalorder %s167, %s170
    %p179 = scmp.eq.s32.totalorder %s20, 3
    %p180 = por %p178, %p179
    %p181 = scmp.ne.s32.totalorder %s170, %s171
    %p182 = scmp.eq.s32.totalorder %s20, 0
    %p183 = por %p181, %p182
    %p184 = scmp.ne.s32.totalorder %s170, %s171
    %p185 = scmp.eq.s32.totalorder %s21, 3
    %p186 = por %p184, %p185
    %p188 = scmp.ne.s32.totalorder %s171, %s187
    %p189 = scmp.eq.s32.totalorder %s21, 0
    %p190 = por %p188, %p189
    %s191 = ssub.s32 %s23, %s30
    %p192 = scmp.eq.s32.totalorder %s191, 0
    %s194 = sadd.s32 %s193, 1
    %s195 = scalar_select %p192, %s193, %s194
    %p198 = pneg %p192
    %p199 = scmp.eq.s32.totalorder %s15, 3
    %p200 = por %p198, %p199
    %p201 = scmp.ne.s32.totalorder %s193, %s196
    %p202 = scmp.eq.s32.totalorder %s15, 0
    %p203 = por %p201, %p202
    %p204 = scmp.ne.s32.totalorder %s193, %s196
    %p205 = scmp.eq.s32.totalorder %s20, 3
    %p206 = por %p204, %p205
    %p207 = scmp.ne.s32.totalorder %s196, %s197
    %p208 = scmp.eq.s32.totalorder %s20, 0
    %p209 = por %p207, %p208
    %p210 = scmp.ne.s32.totalorder %s196, %s197
    %p211 = scmp.eq.s32.totalorder %s21, 3
    %p212 = por %p210, %p211
    %p214 = scmp.ne.s32.totalorder %s197, %s213
    %p215 = scmp.eq.s32.totalorder %s21, 0
    %p216 = por %p214, %p215
    %s217 = ssub.s32 %s22, %s34
    %p218 = scmp.eq.s32.totalorder %s217, 0
    %s220 = sadd.s32 %s219, 1
    %s221 = scalar_select %p218, %s219, %s220
    %p224 = pneg %p218
    %p225 = scmp.eq.s32.totalorder %s15, 3
    %p226 = por %p224, %p225
    %p227 = scmp.ne.s32.totalorder %s219, %s222
    %p228 = scmp.eq.s32.totalorder %s15, 0
    %p229 = por %p227, %p228
    %p230 = scmp.ne.s32.totalorder %s219, %s222
    %p231 = scmp.eq.s32.totalorder %s20, 3
    %p232 = por %p230, %p231
    %p233 = scmp.ne.s32.totalorder %s222, %s223
    %p234 = scmp.eq.s32.totalorder %s20, 0
    %p235 = por %p233, %p234
    %p236 = scmp.ne.s32.totalorder %s222, %s223
    %p237 = scmp.eq.s32.totalorder %s21, 3
    %p238 = por %p236, %p237
    %p240 = scmp.ne.s32.totalorder %s223, %s239
    %p241 = scmp.eq.s32.totalorder %s21, 0
    %p242 = por %p240, %p241
    %s243 = ssub.s32 %s22, %s34
    %p244 = scmp.eq.s32.totalorder %s243, 0
    %s246 = sadd.s32 %s245, 1
    %s247 = scalar_select %p244, %s245, %s246
    %p250 = pneg %p244
    %p251 = scmp.eq.s32.totalorder %s15, 3
    %p252 = por %p250, %p251
    %p253 = scmp.ne.s32.totalorder %s245, %s248
    %p254 = scmp.eq.s32.totalorder %s15, 0
    %p255 = por %p253, %p254
    %p256 = scmp.ne.s32.totalorder %s245, %s248
    %p257 = scmp.eq.s32.totalorder %s20, 3
    %p258 = por %p256, %p257
    %p259 = scmp.ne.s32.totalorder %s248, %s249
    %p260 = scmp.eq.s32.totalorder %s20, 0
    %p261 = por %p259, %p260
    %p262 = scmp.ne.s32.totalorder %s248, %s249
    %p263 = scmp.eq.s32.totalorder %s21, 3
    %p264 = por %p262, %p263
    %p266 = scmp.ne.s32.totalorder %s249, %s265
    %p267 = scmp.eq.s32.totalorder %s21, 0
    %p268 = por %p266, %p267
    %p269 = scmp.le.s32.totalorder 1, %s15
    %p270 = scmp.lt.s32.totalorder %s15, 5
    %p271 = pnand %p269, %p270
    %p272 = pneg %p271
    // Predicated region
    $region9: #{transformer_vae_forward.6} parent=5 // pred_check
      _
    $region10: #{transformer_vae_forward.6} parent=5 // pred_check_branch
      %274 = sbr.rel (%p271) target = $region12
    $region11: #{transformer_vae_forward.6} parent=5 // pred_region
      %s275 = ssub.s32 %s15, 1
    $region12: #{transformer_vae_forward.6} parent=5 // pred_fallthru
      _
    %p276 = scmp.lt.s32.totalorder %s15, 4
    // Predicated region
    $region13: #{transformer_vae_forward.6} parent=5 // pred_check
      %p277 = pneg %p276
    $region14: #{transformer_vae_forward.6} parent=5 // pred_check_branch
      %279 = sbr.rel (%p277) target = $region16
    $region15: #{transformer_vae_forward.6} parent=5 // pred_region
      // Predicated region
      $region17: #{transformer_vae_forward.6} parent=15 // pred_check
        %p280 = pneg %p47
      $region18: #{transformer_vae_forward.6} parent=15 // pred_check_branch
        %282 = sbr.rel (%p280) target = $region20
      $region19: #{transformer_vae_forward.6} parent=15 // pred_region
        %p283 = scmp.lt.s32.totalorder %s22, 1
        %s284 = scalar_select %p283, %s22, 1
        %s285 = smul.addr %s284, 4
        %s286 = scalar_lea.vmem %s0, %s285
      $region20: #{transformer_vae_forward.6} parent=15 // pred_fallthru
        _
      // Predicated region
      $region21: #{transformer_vae_forward.6} parent=15 // pred_check
        %p287 = pneg %p73
      $region22: #{transformer_vae_forward.6} parent=15 // pred_check_branch
        %289 = sbr.rel (%p287) target = $region24
      $region23: #{transformer_vae_forward.6} parent=15 // pred_region
        %p290 = scmp.lt.s32.totalorder %s23, 1
        %s291 = scalar_select %p290, %s23, 1
        %s292 = smul.addr %s291, 2
        %s293 = smul.addr %s292, 4
        %s294 = scalar_lea.vmem %s1, %s293
      $region24: #{transformer_vae_forward.6} parent=15 // pred_fallthru
        _
      // Predicated region
      $region25: #{transformer_vae_forward.6} parent=15 // pred_check
        %p295 = pneg %p99
      $region26: #{transformer_vae_forward.6} parent=15 // pred_check_branch
        %297 = sbr.rel (%p295) target = $region28
      $region27: #{transformer_vae_forward.6} parent=15 // pred_region
        %p298 = scmp.lt.s32.totalorder %s23, 1
        %s299 = scalar_select %p298, %s23, 1
        %s300 = smul.addr %s299, 2
        %s301 = smul.addr %s300, 4
        %s302 = scalar_lea.vmem %s2, %s301
      $region28: #{transformer_vae_forward.6} parent=15 // pred_fallthru
        _
      // Predicated region
      $region29: #{transformer_vae_forward.6} parent=15 // pred_check
        %p303 = pneg %p125
      $region30: #{transformer_vae_forward.6} parent=15 // pred_check_branch
        %305 = sbr.rel (%p303) target = $region32
      $region31: #{transformer_vae_forward.6} parent=15 // pred_region
        %p306 = scmp.lt.s32.totalorder %s23, 1
        %s307 = scalar_select %p306, %s23, 1
        %s308 = smul.addr %s307, 32
        %s309 = smul.addr %s308, 4
        %s310 = scalar_lea.vmem %s3, %s309
      $region32: #{transformer_vae_forward.6} parent=15 // pred_fallthru
        _
      // Predicated region
      $region33: #{transformer_vae_forward.6} parent=15 // pred_check
        %p311 = pneg %p151
      $region34: #{transformer_vae_forward.6} parent=15 // pred_check_branch
        %313 = sbr.rel (%p311) target = $region36
      $region35: #{transformer_vae_forward.6} parent=15 // pred_region
        %p314 = scmp.lt.s32.totalorder %s23, 1
        %s315 = scalar_select %p314, %s23, 1
        %s316 = smul.addr %s315, 256
        %s317 = smul.addr %s316, 4
        %s318 = scalar_lea.vmem %s4, %s317
      $region36: #{transformer_vae_forward.6} parent=15 // pred_fallthru
        _
      // Predicated region
      $region37: #{transformer_vae_forward.6} parent=15 // pred_check
        %p319 = pneg %p177
      $region38: #{transformer_vae_forward.6} parent=15 // pred_check_branch
        %321 = sbr.rel (%p319) target = $region40
      $region39: #{transformer_vae_forward.6} parent=15 // pred_region
        %p322 = scmp.lt.s32.totalorder %s23, 1
        %s323 = scalar_select %p322, %s23, 1
        %s324 = smul.addr %s323, 2
        %s325 = smul.addr %s324, 8
        %s326 = scalar_lea.vmem %s5, %s325
      $region40: #{transformer_vae_forward.6} parent=15 // pred_fallthru
        _
      // Predicated region
      $region41: #{transformer_vae_forward.6} parent=15 // pred_check
        %p327 = pneg %p203
      $region42: #{transformer_vae_forward.6} parent=15 // pred_check_branch
        %329 = sbr.rel (%p327) target = $region44
      $region43: #{transformer_vae_forward.6} parent=15 // pred_region
        %p330 = scmp.lt.s32.totalorder %s23, 1
        %s331 = scalar_select %p330, %s23, 1
        %s332 = smul.addr %s331, 16
        %s333 = scalar_lea.vmem %s6, %s332
      $region44: #{transformer_vae_forward.6} parent=15 // pred_fallthru
        _
    $region16: #{transformer_vae_forward.6} parent=5 // pred_fallthru
      _
    %p334 = scmp.le.s32.totalorder 1, %s15
    %p335 = scmp.lt.s32.totalorder %s15, 5
    %p336 = pnand %p334, %p335
    %p337 = pneg %p336
    // Predicated region
    $region45: #{transformer_vae_forward.6} parent=5 // pred_check
      _
    $region46: #{transformer_vae_forward.6} parent=5 // pred_check_branch
      %339 = sbr.rel (%p336) target = $region48
    $region47: #{transformer_vae_forward.6} parent=5 // pred_region
      %s340 = ssub.s32 %s15, 1
      %p341 = scmp.lt.s32.totalorder %s24, 1
      %s342 = scalar_select %p341, %s24, 1
      %s343 = smul.addr %s342, 4
      %s344 = scalar_lea.vmem %s0, %s343
      %p345 = pneg %p53
      %p346 = pneg %p50
      %p347 = scmp.lt.s32.totalorder %s25, 1
      %s348 = scalar_select %p347, %s25, 1
      %s349 = smul.addr %s348, 2
      %s350 = smul.addr %s349, 4
      %s351 = scalar_lea.vmem %s1, %s350
      %p352 = pneg %p79
      %p353 = pneg %p76
      %p354 = scmp.lt.s32.totalorder %s25, 1
      %s355 = scalar_select %p354, %s25, 1
      %s356 = smul.addr %s355, 2
      %s357 = smul.addr %s356, 4
      %s358 = scalar_lea.vmem %s2, %s357
      %p359 = pneg %p105
      %p360 = pneg %p102
      %p361 = scmp.lt.s32.totalorder %s25, 1
      %s362 = scalar_select %p361, %s25, 1
      %s363 = smul.addr %s362, 32
      %s364 = smul.addr %s363, 4
      %s365 = scalar_lea.vmem %s3, %s364
      %p366 = pneg %p131
      %p367 = pneg %p128
      %p368 = scmp.lt.s32.totalorder %s25, 1
      %s369 = scalar_select %p368, %s25, 1
      %s370 = smul.addr %s369, 256
      %s371 = smul.addr %s370, 4
      %s372 = scalar_lea.vmem %s4, %s371
      %p373 = pneg %p157
      %p374 = pneg %p154
      %p375 = scmp.lt.s32.totalorder %s25, 1
      %s376 = scalar_select %p375, %s25, 1
      %s377 = smul.addr %s376, 2
      %s378 = smul.addr %s377, 8
      %s379 = scalar_lea.vmem %s5, %s378
      %p380 = pneg %p183
      %p381 = pneg %p180
      %p382 = scmp.lt.s32.totalorder %s25, 1
      %s383 = scalar_select %p382, %s25, 1
      %s384 = smul.addr %s383, 16
      %s385 = scalar_lea.vmem %s6, %s384
      %p386 = pneg %p209
      %p387 = pneg %p206
      %p388 = pneg %p235
      %p389 = pneg %p232
      %p390 = scmp.lt.s32.totalorder %s24, 1
      %s391 = scalar_select %p390, %s24, 1
      %s392 = smul.addr %s391, 4
      %s393 = scalar_lea.vmem %s7, %s392
      %p394 = pneg %p261
      %p395 = pneg %p258
      %p396 = scmp.lt.s32.totalorder %s24, 1
      %s397 = scalar_select %p396, %s24, 1
      %s398 = scalar_lea.vmem %s8, %s397
      %p399 = scmp.lt.s32.totalorder %s24, 1
      %s400 = scalar_select %p399, %s24, 1
      %s401 = smul.addr %s400, 4
      %s402 = scalar_lea.vmem %s0, %s401
      %p403 = scmp.lt.s32.totalorder %s25, 1
      %s404 = scalar_select %p403, %s25, 1
      %s405 = smul.addr %s404, 2
      %s406 = smul.addr %s405, 4
      %s407 = scalar_lea.vmem %s1, %s406
      %p408 = scmp.lt.s32.totalorder %s25, 1
      %s409 = scalar_select %p408, %s25, 1
      %s410 = smul.addr %s409, 2
      %s411 = smul.addr %s410, 4
      %s412 = scalar_lea.vmem %s2, %s411
      %p413 = scmp.lt.s32.totalorder %s25, 1
      %s414 = scalar_select %p413, %s25, 1
      %s415 = smul.addr %s414, 32
      %s416 = smul.addr %s415, 4
      %s417 = scalar_lea.vmem %s3, %s416
      %p418 = scmp.lt.s32.totalorder %s25, 1
      %s419 = scalar_select %p418, %s25, 1
      %s420 = smul.addr %s419, 256
      %s421 = smul.addr %s420, 4
      %s422 = scalar_lea.vmem %s4, %s421
      %p423 = scmp.lt.s32.totalorder %s25, 1
      %s424 = scalar_select %p423, %s25, 1
      %s425 = smul.addr %s424, 2
      %s426 = smul.addr %s425, 8
      %s427 = scalar_lea.vmem %s5, %s426
      %p428 = scmp.lt.s32.totalorder %s25, 1
      %s429 = scalar_select %p428, %s25, 1
      %s430 = smul.addr %s429, 16
      %s431 = scalar_lea.vmem %s6, %s430
      %p432 = scmp.lt.s32.totalorder %s24, 1
      %s433 = scalar_select %p432, %s24, 1
      %s434 = smul.addr %s433, 4
      %s435 = scalar_lea.vmem %s7, %s434
      %p436 = scmp.lt.s32.totalorder %s24, 1
      %s437 = scalar_select %p436, %s24, 1
      %s438 = scalar_lea.vmem %s8, %s437
      %p440 = scmp.eq.s32.totalorder %s25, 0
      // Predicated region
      $region49: #{transformer_vae_forward.6} parent=47 // pred_check
        %p441 = pneg %p440
      $region50: #{transformer_vae_forward.6} parent=47 // pred_check_branch
        %443 = sbr.rel (%p441) target = $region52
      $region51: #{transformer_vae_forward.6} parent=47 // pred_region
        %v444 = vld [vmem:[%s402] sm:$0xf]
        %v445 = vunpack.c.l.bf16 %v444
        %vm446 = vcmask 80896
        %447 = vst.msk [vmem:[#allocation2] sm:$0xff] %vm446, %v445
      $region52: #{transformer_vae_forward.6} parent=47 // pred_fallthru
        _
      %v448 = vld [vmem:[#allocation2] sm:$0xff]
      %v449 = vld [vmem:[%s427] sm:$0xff]
      %v450 = vld [vmem:[%s427 + $0x8] sm:$0x1]
      %v451 = vld [vmem:[%s407] sm:$0xf]
      %v452 = vld [vmem:[%s407 + $0x4] sm:$0x1]
      %v453 = vpack.c.bf16 %v448, %v448
      %v456 = vunpack.c.l.b16 %v451
      %v457 = vunpack.c.l.b16 %v452
      %v458 = vpack.c.b16 %v457, %v456
      %vm459 = vcmask 80896
      %v461 = vsel %vm459, %v453, 0
      %vm463 = vcmask 1044480
      %v465 = vsel %vm463, %v458, 0
      %467 = vmatpush.bf16.msra.mxu0 0
      %468 = vmatpush.bf16.msra.mxu0 0
      %469 = vmatpush.bf16.msra.mxu0 0
      %470 = vmatpush.bf16.msra.mxu0 0
      %471 = vmatpush.bf16.msra.mxu0 0
      %472 = vmatpush.bf16.msra.mxu0 0
      %473 = vmatpush.bf16.msra.mxu0 0
      %474 = vmatpush.bf16.msra.mxu0 %v465
      %475 = vmatmul.bf16.gmra.mxu0 %v461
      %v476 = vpop.f32.mrf.mxu0
      %v477 = vadd.f32 0.0, %v476
      %v478 = vpop.f32.mrf.mxu0
      %479 = vdwg.mxu0
      %v480 = vperm.slane %v449, 0
      %v481 = vadd.f32 %v477, %v480
      %v482 = vperm.slane %v449, 1
      %484 = vrot.lane.b32.xlu0 %v482, 10
      %v485 = vpop.permute.xlu0 %484
      %v487 = vadd.f32 %v477, %v485
      %v488 = vperm.slane %v449, 2
      %490 = vrot.lane.b32.xlu0 %v488, 20
      %v491 = vpop.permute.xlu0 %490
      %v493 = vadd.f32 %v477, %v491
      %v494 = vld [vmem:[%s412] sm:$0xf]
      %v495 = vld [vmem:[%s412 + $0x4] sm:$0x1]
      %v496 = vpack.c.bf16 %v481, %v481
      %v497 = vpack.c.bf16 %v487, %v487
      %v498 = vpack.c.bf16 %v493, %v493
      %500 = vrot.lane.b32.xlu0 %v497, 118
      %v501 = vpop.permute.xlu0 %500
      %vm502 = vcmask 39936
      %v504 = vsel %vm502, %v496, 0
      %v507 = vsel %vm502, %v501, 0
      %509 = vmatpush.bf16.xpose.msra.mxu0 0
      %510 = vmatpush.bf16.xpose.msra.mxu0 0
      %511 = vmatpush.bf16.xpose.msra.mxu0 0
      %512 = vmatpush.bf16.xpose.msra.mxu0 0
      %513 = vmatpush.bf16.xpose.msra.mxu0 0
      %514 = vmatpush.bf16.xpose.msra.mxu0 0
      %515 = vmatpush.bf16.xpose.msra.mxu0 0
      %516 = vmatpush.bf16.xpose.msra.mxu0 %v507
      %517 = vmatmul.bf16.gmra.mxu0 %v504
      %v518 = vpop.f32.mrf.mxu0
      %v519 = vadd.f32 0.0, %v518
      %v520 = vpop.f32.mrf.mxu0
      %521 = vdwg.mxu0
      %v522 = vmul.f32 %v519, 0.4472136
      %vm523 = vcmask 64512
      %v524 = vsel %vm523, %v522, -inf
      %525 = vmax.xlane.f32.xlu0 %v524
      %v526 = vpop.xlane.xlu0 %525
      %v527 = vsub.f32 %v522, %v526
      %v528 = vmul.f32 %v527, 1.442695
      %v529 = vpow.pop %v528
      %v530 = vsel %vm523, %v529, 0.0
      %531 = vadd.xlane.f32.xlu0 %v530
      %v532 = vpop.xlane.xlu0 %531
      %v533 = vrcp.pop %v532
      %v534 = vmul.f32 %v529, %v533
      %v535 = vpack.c.bf16 %v534, %v534
      %537 = vrot.lane.b32.xlu0 %v498, 108
      %v538 = vpop.permute.xlu0 %537
      %v540 = vsel %vm523, %v535, 0
      %vm542 = vcmask 1043456
      %v544 = vsel %vm542, %v538, 0
      %546 = vmatpush.bf16.msra.mxu0 0
      %547 = vmatpush.bf16.msra.mxu0 0
      %548 = vmatpush.bf16.msra.mxu0 0
      %549 = vmatpush.bf16.msra.mxu0 0
      %550 = vmatpush.bf16.msra.mxu0 0
      %551 = vmatpush.bf16.msra.mxu0 0
      %552 = vmatpush.bf16.msra.mxu0 0
      %553 = vmatpush.bf16.msra.mxu0 %v544
      %554 = vmatmul.bf16.gmra.mxu0 %v540
      %v555 = vpop.f32.mrf.mxu0
      %v556 = vadd.f32 0.0, %v555
      %v557 = vpop.f32.mrf.mxu0
      %558 = vdwg.mxu0
      %560 = vrot.lane.b32.xlu0 %v496, 123
      %v561 = vpop.permute.xlu0 %560
      %562 = vrot.lane.b32.xlu0 %v497, 113
      %v563 = vpop.permute.xlu0 %562
      %v565 = vsel %vm502, %v561, 0
      %v568 = vsel %vm502, %v563, 0
      %570 = vmatpush.bf16.xpose.msra.mxu0 0
      %571 = vmatpush.bf16.xpose.msra.mxu0 0
      %572 = vmatpush.bf16.xpose.msra.mxu0 0
      %573 = vmatpush.bf16.xpose.msra.mxu0 0
      %574 = vmatpush.bf16.xpose.msra.mxu0 0
      %575 = vmatpush.bf16.xpose.msra.mxu0 0
      %576 = vmatpush.bf16.xpose.msra.mxu0 0
      %577 = vmatpush.bf16.xpose.msra.mxu0 %v568
      %578 = vmatmul.bf16.gmra.mxu0 %v565
      %v579 = vpop.f32.mrf.mxu0
      %v580 = vadd.f32 0.0, %v579
      %v581 = vpop.f32.mrf.mxu0
      %582 = vdwg.mxu0
      %v583 = vmul.f32 %v580, 0.4472136
      %v584 = vsel %vm523, %v583, -inf
      %585 = vmax.xlane.f32.xlu0 %v584
      %v586 = vpop.xlane.xlu0 %585
      %v587 = vsub.f32 %v583, %v586
      %v588 = vmul.f32 %v587, 1.442695
      %v589 = vpow.pop %v588
      %v590 = vsel %vm523, %v589, 0.0
      %591 = vadd.xlane.f32.xlu0 %v590
      %v592 = vpop.xlane.xlu0 %591
      %v593 = vrcp.pop %v592
      %v594 = vmul.f32 %v589, %v593
      %v595 = vpack.c.bf16 %v594, %v594
      %596 = vrot.lane.b32.xlu0 %v498, 103
      %v597 = vpop.permute.xlu0 %596
      %v599 = vsel %vm523, %v595, 0
      %v602 = vsel %vm542, %v597, 0
      %604 = vmatpush.bf16.msra.mxu0 0
      %605 = vmatpush.bf16.msra.mxu0 0
      %606 = vmatpush.bf16.msra.mxu0 0
      %607 = vmatpush.bf16.msra.mxu0 0
      %608 = vmatpush.bf16.msra.mxu0 0
      %609 = vmatpush.bf16.msra.mxu0 0
      %610 = vmatpush.bf16.msra.mxu0 0
      %611 = vmatpush.bf16.msra.mxu0 %v602
      %612 = vmatmul.bf16.gmra.mxu0 %v599
      %v613 = vpop.f32.mrf.mxu0
      %v614 = vadd.f32 0.0, %v613
      %v615 = vpop.f32.mrf.mxu0
      %616 = vdwg.mxu0
      %618 = vrot.lane.b32.xlu0 %v614, 5
      %v619 = vpop.permute.xlu0 %618
      %v621 = vsel %vm502, %v556, %v619
      %v622 = vpack.c.bf16 %v621, %v621
      %v623 = vperm.slane %v449, 3
      %v626 = vunpack.c.l.b16 %v494
      %v627 = vunpack.c.l.b16 %v495
      %v628 = vpack.c.b16 %v627, %v626
      %v630 = vsel %vm459, %v622, 0
      %v633 = vsel %vm463, %v628, 0
      %635 = vmatpush.bf16.msra.mxu0 0
      %636 = vmatpush.bf16.msra.mxu0 0
      %637 = vmatpush.bf16.msra.mxu0 0
      %638 = vmatpush.bf16.msra.mxu0 0
      %639 = vmatpush.bf16.msra.mxu0 0
      %640 = vmatpush.bf16.msra.mxu0 0
      %641 = vmatpush.bf16.msra.mxu0 0
      %642 = vmatpush.bf16.msra.mxu0 %v633
      %643 = vmatmul.bf16.gmra.mxu0 %v630
      %v644 = vpop.f32.mrf.mxu0
      %v645 = vadd.f32 %v623, %v644
      %v646 = vpop.f32.mrf.mxu0
      %647 = vdwg.mxu0
      %v648 = vadd.f32 %v448, %v645
      %v649 = vsel %vm459, %v648, 0.0
      %650 = vadd.xlane.f32.xlu0 %v649
      %v651 = vpop.xlane.xlu0 %650
      %v652 = vrcp.pop 10.0
      %v653 = vmul.f32 10.0, %v652
      %v654 = vsub.f32 1.0, %v653
      %v655 = vmul.f32 %v652, %v654
      %v656 = vadd.f32 %v652, %v655
      %vm657 = vweird.f32 %v652
      %v658 = vsel %vm657, %v652, %v656
      %v659 = vmul.f32 %v651, %v658
      %v660 = vsub.f32 %v648, %v659
      %v661 = vmul.f32 %v660, %v660
      %v662 = vsel %vm459, %v661, 0.0
      %663 = vadd.xlane.f32.xlu0 %v662
      %v664 = vpop.xlane.xlu0 %663
      %v665 = vmul.f32 %v664, %v658
      %v666 = vadd.f32 %v665, 1e-05
      %v667 = vrsqrt.pop %v666
      %v668 = vmul.f32 %v667, %v666
      %v669 = vmul.f32 %v668, %v667
      %v670 = vmul.f32 0.5, %v669
      %v671 = vsub.f32 1.5, %v670
      %v672 = vmul.f32 %v667, %v671
      %vm673 = vweird.f32 %v666
      %vm674 = vweird.f32 %v667
      %vm675 = vmor %vm673, %vm674
      %v676 = vsel %vm675, %v667, %v672
      %v677 = vmul.f32 %v660, %v676
      %v678 = vperm.slane %v449, 4
      %v679 = vmul.f32 %v677, %v678
      %v680 = vperm.slane %v449, 5
      %v681 = vadd.f32 %v679, %v680
      %v682 = vld [vmem:[%s417] sm:$0xff]
      %v683 = vld [vmem:[%s417 + $0x8] sm:$0xff]
      %v684 = vld [vmem:[%s417 + $0x10] sm:$0xff]
      %v685 = vld [vmem:[%s417 + $0x18] sm:$0xff]
      %v686 = vld [vmem:[%s417 + $0x20] sm:$0xff]
      %v687 = vld [vmem:[%s417 + $0x28] sm:$0xff]
      %v688 = vld [vmem:[%s417 + $0x30] sm:$0xff]
      %v689 = vld [vmem:[%s417 + $0x38] sm:$0xff]
      %v690 = vld [vmem:[%s417 + $0x40] sm:$0x11]
      %v691 = vld [vmem:[%s417 + $0x48] sm:$0x11]
      %v692 = vld [vmem:[%s417 + $0x50] sm:$0x11]
      %v693 = vld [vmem:[%s417 + $0x58] sm:$0x11]
      %v694 = vld [vmem:[%s417 + $0x60] sm:$0x11]
      %v695 = vld [vmem:[%s417 + $0x68] sm:$0x11]
      %v696 = vld [vmem:[%s417 + $0x70] sm:$0x11]
      %v697 = vld [vmem:[%s417 + $0x78] sm:$0x11]
      %v698 = vpack.c.bf16 %v681, %v681
      %v699 = vld [vmem:[%s431] sm:$0xff]
      %v700 = vld [vmem:[%s431 + $0x8] sm:$0xff]
      %v703 = vperm.slane %v699, 0
      %v704 = vperm.slane %v699, 1
      %v705 = vperm.slane %v699, 2
      %v706 = vperm.slane %v699, 3
      %v707 = vperm.slane %v699, 4
      %v708 = vperm.slane %v699, 5
      %v709 = vperm.slane %v699, 6
      %v710 = vperm.slane %v699, 7
      %v711 = vperm.slane %v700, 0
      %v712 = vperm.slane %v700, 1
      %v713 = vperm.slane %v700, 2
      %v714 = vperm.slane %v700, 3
      %v715 = vperm.slane %v700, 4
      %v716 = vperm.slane %v700, 5
      %v717 = vperm.slane %v700, 6
      %v718 = vperm.slane %v700, 7
      %v751 = vunpack.c.l.b16 %v682
      %v752 = vunpack.c.h.b16 %v682
      %v753 = vunpack.c.l.b16 %v683
      %v754 = vunpack.c.h.b16 %v683
      %v755 = vunpack.c.l.b16 %v684
      %v756 = vunpack.c.h.b16 %v684
      %v757 = vunpack.c.l.b16 %v685
      %v758 = vunpack.c.h.b16 %v685
      %v759 = vunpack.c.l.b16 %v686
      %v760 = vunpack.c.h.b16 %v686
      %v761 = vunpack.c.l.b16 %v687
      %v762 = vunpack.c.h.b16 %v687
      %v763 = vunpack.c.l.b16 %v688
      %v764 = vunpack.c.h.b16 %v688
      %v765 = vunpack.c.l.b16 %v689
      %v766 = vunpack.c.h.b16 %v689
      %v767 = vunpack.c.l.b16 %v690
      %v768 = vunpack.c.h.b16 %v690
      %v769 = vunpack.c.l.b16 %v691
      %v770 = vunpack.c.h.b16 %v691
      %v771 = vunpack.c.l.b16 %v692
      %v772 = vunpack.c.h.b16 %v692
      %v773 = vunpack.c.l.b16 %v693
      %v774 = vunpack.c.h.b16 %v693
      %v775 = vunpack.c.l.b16 %v694
      %v776 = vunpack.c.h.b16 %v694
      %v777 = vunpack.c.l.b16 %v695
      %v778 = vunpack.c.h.b16 %v695
      %v779 = vunpack.c.l.b16 %v696
      %v780 = vunpack.c.h.b16 %v696
      %v781 = vunpack.c.l.b16 %v697
      %v782 = vunpack.c.h.b16 %v697
      %v783 = vpack.c.b16 %v767, %v751
      %v784 = vpack.c.b16 %v768, %v752
      %v785 = vpack.c.b16 %v769, %v753
      %v786 = vpack.c.b16 %v770, %v754
      %v787 = vpack.c.b16 %v771, %v755
      %v788 = vpack.c.b16 %v772, %v756
      %v789 = vpack.c.b16 %v773, %v757
      %v790 = vpack.c.b16 %v774, %v758
      %v791 = vpack.c.b16 %v775, %v759
      %v792 = vpack.c.b16 %v776, %v760
      %v793 = vpack.c.b16 %v777, %v761
      %v794 = vpack.c.b16 %v778, %v762
      %v795 = vpack.c.b16 %v779, %v763
      %v796 = vpack.c.b16 %v780, %v764
      %v797 = vpack.c.b16 %v781, %v765
      %v798 = vpack.c.b16 %v782, %v766
      %v800 = vsel %vm459, %v698, 0
      %v803 = vsel %vm463, %v783, 0
      %v806 = vsel %vm463, %v784, 0
      %v809 = vsel %vm463, %v785, 0
      %v812 = vsel %vm463, %v786, 0
      %v815 = vsel %vm463, %v787, 0
      %v818 = vsel %vm463, %v788, 0
      %v821 = vsel %vm463, %v789, 0
      %v824 = vsel %vm463, %v790, 0
      %v827 = vsel %vm463, %v791, 0
      %v830 = vsel %vm463, %v792, 0
      %v833 = vsel %vm463, %v793, 0
      %v836 = vsel %vm463, %v794, 0
      %v839 = vsel %vm463, %v795, 0
      %v842 = vsel %vm463, %v796, 0
      %v845 = vsel %vm463, %v797, 0
      %v848 = vsel %vm463, %v798, 0
      %850 = vmatpush.bf16.msra.mxu0 0
      %851 = vmatpush.bf16.msra.mxu0 0
      %852 = vmatpush.bf16.msra.mxu0 0
      %853 = vmatpush.bf16.msra.mxu0 0
      %854 = vmatpush.bf16.msra.mxu0 0
      %855 = vmatpush.bf16.msra.mxu0 0
      %856 = vmatpush.bf16.msra.mxu0 0
      %857 = vmatpush.bf16.msra.mxu0 %v803
      %858 = vmatmul.bf16.gmra.mxu0 %v800
      %v859 = vpop.f32.mrf.mxu0
      %v860 = vadd.f32 %v703, %v859
      %v861 = vpop.f32.mrf.mxu0
      %862 = vdwg.mxu0
      %863 = vmatpush.bf16.msra.mxu0 0
      %864 = vmatpush.bf16.msra.mxu0 0
      %865 = vmatpush.bf16.msra.mxu0 0
      %866 = vmatpush.bf16.msra.mxu0 0
      %867 = vmatpush.bf16.msra.mxu0 0
      %868 = vmatpush.bf16.msra.mxu0 0
      %869 = vmatpush.bf16.msra.mxu0 0
      %870 = vmatpush.bf16.msra.mxu0 %v806
      %871 = vmatmul.bf16.gmra.mxu0 %v800
      %v872 = vpop.f32.mrf.mxu0
      %v873 = vadd.f32 %v704, %v872
      %v874 = vpop.f32.mrf.mxu0
      %875 = vdwg.mxu0
      %876 = vmatpush.bf16.msra.mxu0 0
      %877 = vmatpush.bf16.msra.mxu0 0
      %878 = vmatpush.bf16.msra.mxu0 0
      %879 = vmatpush.bf16.msra.mxu0 0
      %880 = vmatpush.bf16.msra.mxu0 0
      %881 = vmatpush.bf16.msra.mxu0 0
      %882 = vmatpush.bf16.msra.mxu0 0
      %883 = vmatpush.bf16.msra.mxu0 %v809
      %884 = vmatmul.bf16.gmra.mxu0 %v800
      %v885 = vpop.f32.mrf.mxu0
      %v886 = vadd.f32 %v705, %v885
      %v887 = vpop.f32.mrf.mxu0
      %888 = vdwg.mxu0
      %889 = vmatpush.bf16.msra.mxu0 0
      %890 = vmatpush.bf16.msra.mxu0 0
      %891 = vmatpush.bf16.msra.mxu0 0
      %892 = vmatpush.bf16.msra.mxu0 0
      %893 = vmatpush.bf16.msra.mxu0 0
      %894 = vmatpush.bf16.msra.mxu0 0
      %895 = vmatpush.bf16.msra.mxu0 0
      %896 = vmatpush.bf16.msra.mxu0 %v812
      %897 = vmatmul.bf16.gmra.mxu0 %v800
      %v898 = vpop.f32.mrf.mxu0
      %v899 = vadd.f32 %v706, %v898
      %v900 = vpop.f32.mrf.mxu0
      %901 = vdwg.mxu0
      %902 = vmatpush.bf16.msra.mxu0 0
      %903 = vmatpush.bf16.msra.mxu0 0
      %904 = vmatpush.bf16.msra.mxu0 0
      %905 = vmatpush.bf16.msra.mxu0 0
      %906 = vmatpush.bf16.msra.mxu0 0
      %907 = vmatpush.bf16.msra.mxu0 0
      %908 = vmatpush.bf16.msra.mxu0 0
      %909 = vmatpush.bf16.msra.mxu0 %v815
      %910 = vmatmul.bf16.gmra.mxu0 %v800
      %v911 = vpop.f32.mrf.mxu0
      %v912 = vadd.f32 %v707, %v911
      %v913 = vpop.f32.mrf.mxu0
      %914 = vdwg.mxu0
      %915 = vmatpush.bf16.msra.mxu0 0
      %916 = vmatpush.bf16.msra.mxu0 0
      %917 = vmatpush.bf16.msra.mxu0 0
      %918 = vmatpush.bf16.msra.mxu0 0
      %919 = vmatpush.bf16.msra.mxu0 0
      %920 = vmatpush.bf16.msra.mxu0 0
      %921 = vmatpush.bf16.msra.mxu0 0
      %922 = vmatpush.bf16.msra.mxu0 %v818
      %923 = vmatmul.bf16.gmra.mxu0 %v800
      %v924 = vpop.f32.mrf.mxu0
      %v925 = vadd.f32 %v708, %v924
      %v926 = vpop.f32.mrf.mxu0
      %927 = vdwg.mxu0
      %928 = vmatpush.bf16.msra.mxu0 0
      %929 = vmatpush.bf16.msra.mxu0 0
      %930 = vmatpush.bf16.msra.mxu0 0
      %931 = vmatpush.bf16.msra.mxu0 0
      %932 = vmatpush.bf16.msra.mxu0 0
      %933 = vmatpush.bf16.msra.mxu0 0
      %934 = vmatpush.bf16.msra.mxu0 0
      %935 = vmatpush.bf16.msra.mxu0 %v821
      %936 = vmatmul.bf16.gmra.mxu0 %v800
      %v937 = vpop.f32.mrf.mxu0
      %v938 = vadd.f32 %v709, %v937
      %v939 = vpop.f32.mrf.mxu0
      %940 = vdwg.mxu0
      %941 = vmatpush.bf16.msra.mxu0 0
      %942 = vmatpush.bf16.msra.mxu0 0
      %943 = vmatpush.bf16.msra.mxu0 0
      %944 = vmatpush.bf16.msra.mxu0 0
      %945 = vmatpush.bf16.msra.mxu0 0
      %946 = vmatpush.bf16.msra.mxu0 0
      %947 = vmatpush.bf16.msra.mxu0 0
      %948 = vmatpush.bf16.msra.mxu0 %v824
      %949 = vmatmul.bf16.gmra.mxu0 %v800
      %v950 = vpop.f32.mrf.mxu0
      %v951 = vadd.f32 %v710, %v950
      %v952 = vpop.f32.mrf.mxu0
      %953 = vdwg.mxu0
      %954 = vmatpush.bf16.msra.mxu0 0
      %955 = vmatpush.bf16.msra.mxu0 0
      %956 = vmatpush.bf16.msra.mxu0 0
      %957 = vmatpush.bf16.msra.mxu0 0
      %958 = vmatpush.bf16.msra.mxu0 0
      %959 = vmatpush.bf16.msra.mxu0 0
      %960 = vmatpush.bf16.msra.mxu0 0
      %961 = vmatpush.bf16.msra.mxu0 %v827
      %962 = vmatmul.bf16.gmra.mxu0 %v800
      %v963 = vpop.f32.mrf.mxu0
      %v964 = vadd.f32 %v711, %v963
      %v965 = vpop.f32.mrf.mxu0
      %966 = vdwg.mxu0
      %967 = vmatpush.bf16.msra.mxu0 0
      %968 = vmatpush.bf16.msra.mxu0 0
      %969 = vmatpush.bf16.msra.mxu0 0
      %970 = vmatpush.bf16.msra.mxu0 0
      %971 = vmatpush.bf16.msra.mxu0 0
      %972 = vmatpush.bf16.msra.mxu0 0
      %973 = vmatpush.bf16.msra.mxu0 0
      %974 = vmatpush.bf16.msra.mxu0 %v830
      %975 = vmatmul.bf16.gmra.mxu0 %v800
      %v976 = vpop.f32.mrf.mxu0
      %v977 = vadd.f32 %v712, %v976
      %v978 = vpop.f32.mrf.mxu0
      %979 = vdwg.mxu0
      %980 = vmatpush.bf16.msra.mxu0 0
      %981 = vmatpush.bf16.msra.mxu0 0
      %982 = vmatpush.bf16.msra.mxu0 0
      %983 = vmatpush.bf16.msra.mxu0 0
      %984 = vmatpush.bf16.msra.mxu0 0
      %985 = vmatpush.bf16.msra.mxu0 0
      %986 = vmatpush.bf16.msra.mxu0 0
      %987 = vmatpush.bf16.msra.mxu0 %v833
      %988 = vmatmul.bf16.gmra.mxu0 %v800
      %v989 = vpop.f32.mrf.mxu0
      %v990 = vadd.f32 %v713, %v989
      %v991 = vpop.f32.mrf.mxu0
      %992 = vdwg.mxu0
      %993 = vmatpush.bf16.msra.mxu0 0
      %994 = vmatpush.bf16.msra.mxu0 0
      %995 = vmatpush.bf16.msra.mxu0 0
      %996 = vmatpush.bf16.msra.mxu0 0
      %997 = vmatpush.bf16.msra.mxu0 0
      %998 = vmatpush.bf16.msra.mxu0 0
      %999 = vmatpush.bf16.msra.mxu0 0
      %1000 = vmatpush.bf16.msra.mxu0 %v836
      %1001 = vmatmul.bf16.gmra.mxu0 %v800
      %v1002 = vpop.f32.mrf.mxu0
      %v1003 = vadd.f32 %v714, %v1002
      %v1004 = vpop.f32.mrf.mxu0
      %1005 = vdwg.mxu0
      %1006 = vmatpush.bf16.msra.mxu0 0
      %1007 = vmatpush.bf16.msra.mxu0 0
      %1008 = vmatpush.bf16.msra.mxu0 0
      %1009 = vmatpush.bf16.msra.mxu0 0
      %1010 = vmatpush.bf16.msra.mxu0 0
      %1011 = vmatpush.bf16.msra.mxu0 0
      %1012 = vmatpush.bf16.msra.mxu0 0
      %1013 = vmatpush.bf16.msra.mxu0 %v839
      %1014 = vmatmul.bf16.gmra.mxu0 %v800
      %v1015 = vpop.f32.mrf.mxu0
      %v1016 = vadd.f32 %v715, %v1015
      %v1017 = vpop.f32.mrf.mxu0
      %1018 = vdwg.mxu0
      %1019 = vmatpush.bf16.msra.mxu0 0
      %1020 = vmatpush.bf16.msra.mxu0 0
      %1021 = vmatpush.bf16.msra.mxu0 0
      %1022 = vmatpush.bf16.msra.mxu0 0
      %1023 = vmatpush.bf16.msra.mxu0 0
      %1024 = vmatpush.bf16.msra.mxu0 0
      %1025 = vmatpush.bf16.msra.mxu0 0
      %1026 = vmatpush.bf16.msra.mxu0 %v842
      %1027 = vmatmul.bf16.gmra.mxu0 %v800
      %v1028 = vpop.f32.mrf.mxu0
      %v1029 = vadd.f32 %v716, %v1028
      %v1030 = vpop.f32.mrf.mxu0
      %1031 = vdwg.mxu0
      %1032 = vmatpush.bf16.msra.mxu0 0
      %1033 = vmatpush.bf16.msra.mxu0 0
      %1034 = vmatpush.bf16.msra.mxu0 0
      %1035 = vmatpush.bf16.msra.mxu0 0
      %1036 = vmatpush.bf16.msra.mxu0 0
      %1037 = vmatpush.bf16.msra.mxu0 0
      %1038 = vmatpush.bf16.msra.mxu0 0
      %1039 = vmatpush.bf16.msra.mxu0 %v845
      %1040 = vmatmul.bf16.gmra.mxu0 %v800
      %v1041 = vpop.f32.mrf.mxu0
      %v1042 = vadd.f32 %v717, %v1041
      %v1043 = vpop.f32.mrf.mxu0
      %1044 = vdwg.mxu0
      %1045 = vmatpush.bf16.msra.mxu0 0
      %1046 = vmatpush.bf16.msra.mxu0 0
      %1047 = vmatpush.bf16.msra.mxu0 0
      %1048 = vmatpush.bf16.msra.mxu0 0
      %1049 = vmatpush.bf16.msra.mxu0 0
      %1050 = vmatpush.bf16.msra.mxu0 0
      %1051 = vmatpush.bf16.msra.mxu0 0
      %1052 = vmatpush.bf16.msra.mxu0 %v848
      %1053 = vmatmul.bf16.gmra.mxu0 %v800
      %v1054 = vpop.f32.mrf.mxu0
      %v1055 = vadd.f32 %v718, %v1054
      %v1056 = vpop.f32.mrf.mxu0
      %1057 = vdwg.mxu0
      %v1058 = vmax.f32 %v860, 0.0
      %v1059 = vmax.f32 %v873, 0.0
      %v1060 = vmax.f32 %v886, 0.0
      %v1061 = vmax.f32 %v899, 0.0
      %v1062 = vmax.f32 %v912, 0.0
      %v1063 = vmax.f32 %v925, 0.0
      %v1064 = vmax.f32 %v938, 0.0
      %v1065 = vmax.f32 %v951, 0.0
      %v1066 = vmax.f32 %v964, 0.0
      %v1067 = vmax.f32 %v977, 0.0
      %v1068 = vmax.f32 %v990, 0.0
      %v1069 = vmax.f32 %v1003, 0.0
      %v1070 = vmax.f32 %v1016, 0.0
      %v1071 = vmax.f32 %v1029, 0.0
      %v1072 = vmax.f32 %v1042, 0.0
      %v1073 = vmax.f32 %v1055, 0.0
      %v1074 = vpack.c.bf16 %v1058, %v1058
      %v1075 = vpack.c.bf16 %v1059, %v1059
      %v1076 = vpack.c.bf16 %v1060, %v1060
      %v1077 = vpack.c.bf16 %v1061, %v1061
      %v1078 = vpack.c.bf16 %v1062, %v1062
      %v1079 = vpack.c.bf16 %v1063, %v1063
      %v1080 = vpack.c.bf16 %v1064, %v1064
      %v1081 = vpack.c.bf16 %v1065, %v1065
      %v1082 = vpack.c.bf16 %v1066, %v1066
      %v1083 = vpack.c.bf16 %v1067, %v1067
      %v1084 = vpack.c.bf16 %v1068, %v1068
      %v1085 = vpack.c.bf16 %v1069, %v1069
      %v1086 = vpack.c.bf16 %v1070, %v1070
      %v1087 = vpack.c.bf16 %v1071, %v1071
      %v1088 = vpack.c.bf16 %v1072, %v1072
      %v1089 = vpack.c.bf16 %v1073, %v1073
      %v1090 = vld [vmem:[%s422] sm:$0xf]
      %v1091 = vld [vmem:[%s422 + $0x4] sm:$0xf]
      %v1092 = vld [vmem:[%s422 + $0x8] sm:$0xf]
      %v1093 = vld [vmem:[%s422 + $0xc] sm:$0xf]
      %v1094 = vld [vmem:[%s422 + $0x10] sm:$0xf]
      %v1095 = vld [vmem:[%s422 + $0x14] sm:$0xf]
      %v1096 = vld [vmem:[%s422 + $0x18] sm:$0xf]
      %v1097 = vld [vmem:[%s422 + $0x1c] sm:$0xf]
      %v1098 = vld [vmem:[%s422 + $0x20] sm:$0xf]
      %v1099 = vld [vmem:[%s422 + $0x24] sm:$0xf]
      %v1100 = vld [vmem:[%s422 + $0x28] sm:$0xf]
      %v1101 = vld [vmem:[%s422 + $0x2c] sm:$0xf]
      %v1102 = vld [vmem:[%s422 + $0x30] sm:$0xf]
      %v1103 = vld [vmem:[%s422 + $0x34] sm:$0xf]
      %v1104 = vld [vmem:[%s422 + $0x38] sm:$0xf]
      %v1105 = vld [vmem:[%s422 + $0x3c] sm:$0xf]
      %v1106 = vld [vmem:[%s422 + $0x40] sm:$0xf]
      %v1107 = vld [vmem:[%s422 + $0x44] sm:$0xf]
      %v1108 = vld [vmem:[%s422 + $0x48] sm:$0xf]
      %v1109 = vld [vmem:[%s422 + $0x4c] sm:$0xf]
      %v1110 = vld [vmem:[%s422 + $0x50] sm:$0xf]
      %v1111 = vld [vmem:[%s422 + $0x54] sm:$0xf]
      %v1112 = vld [vmem:[%s422 + $0x58] sm:$0xf]
      %v1113 = vld [vmem:[%s422 + $0x5c] sm:$0xf]
      %v1114 = vld [vmem:[%s422 + $0x60] sm:$0xf]
      %v1115 = vld [vmem:[%s422 + $0x64] sm:$0xf]
      %v1116 = vld [vmem:[%s422 + $0x68] sm:$0xf]
      %v1117 = vld [vmem:[%s422 + $0x6c] sm:$0xf]
      %v1118 = vld [vmem:[%s422 + $0x70] sm:$0xf]
      %v1119 = vld [vmem:[%s422 + $0x74] sm:$0xf]
      %v1120 = vld [vmem:[%s422 + $0x78] sm:$0xf]
      %v1121 = vld [vmem:[%s422 + $0x7c] sm:$0xf]
      %v1122 = vld [vmem:[%s422 + $0x80] sm:$0xf]
      %v1123 = vld [vmem:[%s422 + $0x84] sm:$0xf]
      %v1124 = vld [vmem:[%s422 + $0x88] sm:$0xf]
      %v1125 = vld [vmem:[%s422 + $0x8c] sm:$0xf]
      %v1126 = vld [vmem:[%s422 + $0x90] sm:$0xf]
      %v1127 = vld [vmem:[%s422 + $0x94] sm:$0xf]
      %v1128 = vld [vmem:[%s422 + $0x98] sm:$0xf]
      %v1129 = vld [vmem:[%s422 + $0x9c] sm:$0xf]
      %v1130 = vld [vmem:[%s422 + $0xa0] sm:$0xf]
      %v1131 = vld [vmem:[%s422 + $0xa4] sm:$0xf]
      %v1132 = vld [vmem:[%s422 + $0xa8] sm:$0xf]
      %v1133 = vld [vmem:[%s422 + $0xac] sm:$0xf]
      %v1134 = vld [vmem:[%s422 + $0xb0] sm:$0xf]
      %v1135 = vld [vmem:[%s422 + $0xb4] sm:$0xf]
      %v1136 = vld [vmem:[%s422 + $0xb8] sm:$0xf]
      %v1137 = vld [vmem:[%s422 + $0xbc] sm:$0xf]
      %v1138 = vld [vmem:[%s422 + $0xc0] sm:$0xf]
      %v1139 = vld [vmem:[%s422 + $0xc4] sm:$0xf]
      %v1140 = vld [vmem:[%s422 + $0xc8] sm:$0xf]
      %v1141 = vld [vmem:[%s422 + $0xcc] sm:$0xf]
      %v1142 = vld [vmem:[%s422 + $0xd0] sm:$0xf]
      %v1143 = vld [vmem:[%s422 + $0xd4] sm:$0xf]
      %v1144 = vld [vmem:[%s422 + $0xd8] sm:$0xf]
      %v1145 = vld [vmem:[%s422 + $0xdc] sm:$0xf]
      %v1146 = vld [vmem:[%s422 + $0xe0] sm:$0xf]
      %v1147 = vld [vmem:[%s422 + $0xe4] sm:$0xf]
      %v1148 = vld [vmem:[%s422 + $0xe8] sm:$0xf]
      %v1149 = vld [vmem:[%s422 + $0xec] sm:$0xf]
      %v1150 = vld [vmem:[%s422 + $0xf0] sm:$0xf]
      %v1151 = vld [vmem:[%s422 + $0xf4] sm:$0xf]
      %v1152 = vld [vmem:[%s422 + $0xf8] sm:$0xf]
      %v1153 = vld [vmem:[%s422 + $0xfc] sm:$0xf]
      %v1154 = vld [vmem:[%s422 + $0x100] sm:$0xf]
      %v1155 = vld [vmem:[%s422 + $0x104] sm:$0xf]
      %v1156 = vld [vmem:[%s422 + $0x108] sm:$0xf]
      %v1157 = vld [vmem:[%s422 + $0x10c] sm:$0xf]
      %v1158 = vld [vmem:[%s422 + $0x110] sm:$0xf]
      %v1159 = vld [vmem:[%s422 + $0x114] sm:$0xf]
      %v1160 = vld [vmem:[%s422 + $0x118] sm:$0xf]
      %v1161 = vld [vmem:[%s422 + $0x11c] sm:$0xf]
      %v1162 = vld [vmem:[%s422 + $0x120] sm:$0xf]
      %v1163 = vld [vmem:[%s422 + $0x124] sm:$0xf]
      %v1164 = vld [vmem:[%s422 + $0x128] sm:$0xf]
      %v1165 = vld [vmem:[%s422 + $0x12c] sm:$0xf]
      %v1166 = vld [vmem:[%s422 + $0x130] sm:$0xf]
      %v1167 = vld [vmem:[%s422 + $0x134] sm:$0xf]
      %v1168 = vld [vmem:[%s422 + $0x138] sm:$0xf]
      %v1169 = vld [vmem:[%s422 + $0x13c] sm:$0xf]
      %v1170 = vld [vmem:[%s422 + $0x140] sm:$0xf]
      %v1171 = vld [vmem:[%s422 + $0x144] sm:$0xf]
      %v1172 = vld [vmem:[%s422 + $0x148] sm:$0xf]
      %v1173 = vld [vmem:[%s422 + $0x14c] sm:$0xf]
      %v1174 = vld [vmem:[%s422 + $0x150] sm:$0xf]
      %v1175 = vld [vmem:[%s422 + $0x154] sm:$0xf]
      %v1176 = vld [vmem:[%s422 + $0x158] sm:$0xf]
      %v1177 = vld [vmem:[%s422 + $0x15c] sm:$0xf]
      %v1178 = vld [vmem:[%s422 + $0x160] sm:$0xf]
      %v1179 = vld [vmem:[%s422 + $0x164] sm:$0xf]
      %v1180 = vld [vmem:[%s422 + $0x168] sm:$0xf]
      %v1181 = vld [vmem:[%s422 + $0x16c] sm:$0xf]
      %v1182 = vld [vmem:[%s422 + $0x170] sm:$0xf]
      %v1183 = vld [vmem:[%s422 + $0x174] sm:$0xf]
      %v1184 = vld [vmem:[%s422 + $0x178] sm:$0xf]
      %v1185 = vld [vmem:[%s422 + $0x17c] sm:$0xf]
      %v1186 = vld [vmem:[%s422 + $0x180] sm:$0xf]
      %v1187 = vld [vmem:[%s422 + $0x184] sm:$0xf]
      %v1188 = vld [vmem:[%s422 + $0x188] sm:$0xf]
      %v1189 = vld [vmem:[%s422 + $0x18c] sm:$0xf]
      %v1190 = vld [vmem:[%s422 + $0x190] sm:$0xf]
      %v1191 = vld [vmem:[%s422 + $0x194] sm:$0xf]
      %v1192 = vld [vmem:[%s422 + $0x198] sm:$0xf]
      %v1193 = vld [vmem:[%s422 + $0x19c] sm:$0xf]
      %v1194 = vld [vmem:[%s422 + $0x1a0] sm:$0xf]
      %v1195 = vld [vmem:[%s422 + $0x1a4] sm:$0xf]
      %v1196 = vld [vmem:[%s422 + $0x1a8] sm:$0xf]
      %v1197 = vld [vmem:[%s422 + $0x1ac] sm:$0xf]
      %v1198 = vld [vmem:[%s422 + $0x1b0] sm:$0xf]
      %v1199 = vld [vmem:[%s422 + $0x1b4] sm:$0xf]
      %v1200 = vld [vmem:[%s422 + $0x1b8] sm:$0xf]
      %v1201 = vld [vmem:[%s422 + $0x1bc] sm:$0xf]
      %v1202 = vld [vmem:[%s422 + $0x1c0] sm:$0xf]
      %v1203 = vld [vmem:[%s422 + $0x1c4] sm:$0xf]
      %v1204 = vld [vmem:[%s422 + $0x1c8] sm:$0xf]
      %v1205 = vld [vmem:[%s422 + $0x1cc] sm:$0xf]
      %v1206 = vld [vmem:[%s422 + $0x1d0] sm:$0xf]
      %v1207 = vld [vmem:[%s422 + $0x1d4] sm:$0xf]
      %v1208 = vld [vmem:[%s422 + $0x1d8] sm:$0xf]
      %v1209 = vld [vmem:[%s422 + $0x1dc] sm:$0xf]
      %v1210 = vld [vmem:[%s422 + $0x1e0] sm:$0xf]
      %v1211 = vld [vmem:[%s422 + $0x1e4] sm:$0xf]
      %v1212 = vld [vmem:[%s422 + $0x1e8] sm:$0xf]
      %v1213 = vld [vmem:[%s422 + $0x1ec] sm:$0xf]
      %v1214 = vld [vmem:[%s422 + $0x1f0] sm:$0xf]
      %v1215 = vld [vmem:[%s422 + $0x1f4] sm:$0xf]
      %v1216 = vld [vmem:[%s422 + $0x1f8] sm:$0xf]
      %v1217 = vld [vmem:[%s422 + $0x1fc] sm:$0xf]
      %v1218 = vld [vmem:[%s422 + $0x200] sm:$0xf]
      %v1219 = vld [vmem:[%s422 + $0x204] sm:$0xf]
      %v1220 = vld [vmem:[%s422 + $0x208] sm:$0xf]
      %v1221 = vld [vmem:[%s422 + $0x20c] sm:$0xf]
      %v1222 = vld [vmem:[%s422 + $0x210] sm:$0xf]
      %v1223 = vld [vmem:[%s422 + $0x214] sm:$0xf]
      %v1224 = vld [vmem:[%s422 + $0x218] sm:$0xf]
      %v1225 = vld [vmem:[%s422 + $0x21c] sm:$0xf]
      %v1226 = vld [vmem:[%s422 + $0x220] sm:$0xf]
      %v1227 = vld [vmem:[%s422 + $0x224] sm:$0xf]
      %v1228 = vld [vmem:[%s422 + $0x228] sm:$0xf]
      %v1229 = vld [vmem:[%s422 + $0x22c] sm:$0xf]
      %v1230 = vld [vmem:[%s422 + $0x230] sm:$0xf]
      %v1231 = vld [vmem:[%s422 + $0x234] sm:$0xf]
      %v1232 = vld [vmem:[%s422 + $0x238] sm:$0xf]
      %v1233 = vld [vmem:[%s422 + $0x23c] sm:$0xf]
      %v1234 = vld [vmem:[%s422 + $0x240] sm:$0xf]
      %v1235 = vld [vmem:[%s422 + $0x244] sm:$0xf]
      %v1236 = vld [vmem:[%s422 + $0x248] sm:$0xf]
      %v1237 = vld [vmem:[%s422 + $0x24c] sm:$0xf]
      %v1238 = vld [vmem:[%s422 + $0x250] sm:$0xf]
      %v1239 = vld [vmem:[%s422 + $0x254] sm:$0xf]
      %v1240 = vld [vmem:[%s422 + $0x258] sm:$0xf]
      %v1241 = vld [vmem:[%s422 + $0x25c] sm:$0xf]
      %v1242 = vld [vmem:[%s422 + $0x260] sm:$0xf]
      %v1243 = vld [vmem:[%s422 + $0x264] sm:$0xf]
      %v1244 = vld [vmem:[%s422 + $0x268] sm:$0xf]
      %v1245 = vld [vmem:[%s422 + $0x26c] sm:$0xf]
      %v1246 = vld [vmem:[%s422 + $0x270] sm:$0xf]
      %v1247 = vld [vmem:[%s422 + $0x274] sm:$0xf]
      %v1248 = vld [vmem:[%s422 + $0x278] sm:$0xf]
      %v1249 = vld [vmem:[%s422 + $0x27c] sm:$0xf]
      %v1250 = vld [vmem:[%s422 + $0x280] sm:$0xf]
      %v1251 = vld [vmem:[%s422 + $0x284] sm:$0xf]
      %v1252 = vld [vmem:[%s422 + $0x288] sm:$0xf]
      %v1253 = vld [vmem:[%s422 + $0x28c] sm:$0xf]
      %v1254 = vld [vmem:[%s422 + $0x290] sm:$0xf]
      %v1255 = vld [vmem:[%s422 + $0x294] sm:$0xf]
      %v1256 = vld [vmem:[%s422 + $0x298] sm:$0xf]
      %v1257 = vld [vmem:[%s422 + $0x29c] sm:$0xf]
      %v1258 = vld [vmem:[%s422 + $0x2a0] sm:$0xf]
      %v1259 = vld [vmem:[%s422 + $0x2a4] sm:$0xf]
      %v1260 = vld [vmem:[%s422 + $0x2a8] sm:$0xf]
      %v1261 = vld [vmem:[%s422 + $0x2ac] sm:$0xf]
      %v1262 = vld [vmem:[%s422 + $0x2b0] sm:$0xf]
      %v1263 = vld [vmem:[%s422 + $0x2b4] sm:$0xf]
      %v1264 = vld [vmem:[%s422 + $0x2b8] sm:$0xf]
      %v1265 = vld [vmem:[%s422 + $0x2bc] sm:$0xf]
      %v1266 = vld [vmem:[%s422 + $0x2c0] sm:$0xf]
      %v1267 = vld [vmem:[%s422 + $0x2c4] sm:$0xf]
      %v1268 = vld [vmem:[%s422 + $0x2c8] sm:$0xf]
      %v1269 = vld [vmem:[%s422 + $0x2cc] sm:$0xf]
      %v1270 = vld [vmem:[%s422 + $0x2d0] sm:$0xf]
      %v1271 = vld [vmem:[%s422 + $0x2d4] sm:$0xf]
      %v1272 = vld [vmem:[%s422 + $0x2d8] sm:$0xf]
      %v1273 = vld [vmem:[%s422 + $0x2dc] sm:$0xf]
      %v1274 = vld [vmem:[%s422 + $0x2e0] sm:$0xf]
      %v1275 = vld [vmem:[%s422 + $0x2e4] sm:$0xf]
      %v1276 = vld [vmem:[%s422 + $0x2e8] sm:$0xf]
      %v1277 = vld [vmem:[%s422 + $0x2ec] sm:$0xf]
      %v1278 = vld [vmem:[%s422 + $0x2f0] sm:$0xf]
      %v1279 = vld [vmem:[%s422 + $0x2f4] sm:$0xf]
      %v1280 = vld [vmem:[%s422 + $0x2f8] sm:$0xf]
      %v1281 = vld [vmem:[%s422 + $0x2fc] sm:$0xf]
      %v1282 = vld [vmem:[%s422 + $0x300] sm:$0xf]
      %v1283 = vld [vmem:[%s422 + $0x304] sm:$0xf]
      %v1284 = vld [vmem:[%s422 + $0x308] sm:$0xf]
      %v1285 = vld [vmem:[%s422 + $0x30c] sm:$0xf]
      %v1286 = vld [vmem:[%s422 + $0x310] sm:$0xf]
      %v1287 = vld [vmem:[%s422 + $0x314] sm:$0xf]
      %v1288 = vld [vmem:[%s422 + $0x318] sm:$0xf]
      %v1289 = vld [vmem:[%s422 + $0x31c] sm:$0xf]
      %v1290 = vld [vmem:[%s422 + $0x320] sm:$0xf]
      %v1291 = vld [vmem:[%s422 + $0x324] sm:$0xf]
      %v1292 = vld [vmem:[%s422 + $0x328] sm:$0xf]
      %v1293 = vld [vmem:[%s422 + $0x32c] sm:$0xf]
      %v1294 = vld [vmem:[%s422 + $0x330] sm:$0xf]
      %v1295 = vld [vmem:[%s422 + $0x334] sm:$0xf]
      %v1296 = vld [vmem:[%s422 + $0x338] sm:$0xf]
      %v1297 = vld [vmem:[%s422 + $0x33c] sm:$0xf]
      %v1298 = vld [vmem:[%s422 + $0x340] sm:$0xf]
      %v1299 = vld [vmem:[%s422 + $0x344] sm:$0xf]
      %v1300 = vld [vmem:[%s422 + $0x348] sm:$0xf]
      %v1301 = vld [vmem:[%s422 + $0x34c] sm:$0xf]
      %v1302 = vld [vmem:[%s422 + $0x350] sm:$0xf]
      %v1303 = vld [vmem:[%s422 + $0x354] sm:$0xf]
      %v1304 = vld [vmem:[%s422 + $0x358] sm:$0xf]
      %v1305 = vld [vmem:[%s422 + $0x35c] sm:$0xf]
      %v1306 = vld [vmem:[%s422 + $0x360] sm:$0xf]
      %v1307 = vld [vmem:[%s422 + $0x364] sm:$0xf]
      %v1308 = vld [vmem:[%s422 + $0x368] sm:$0xf]
      %v1309 = vld [vmem:[%s422 + $0x36c] sm:$0xf]
      %v1310 = vld [vmem:[%s422 + $0x370] sm:$0xf]
      %v1311 = vld [vmem:[%s422 + $0x374] sm:$0xf]
      %v1312 = vld [vmem:[%s422 + $0x378] sm:$0xf]
      %v1313 = vld [vmem:[%s422 + $0x37c] sm:$0xf]
      %v1314 = vld [vmem:[%s422 + $0x380] sm:$0xf]
      %v1315 = vld [vmem:[%s422 + $0x384] sm:$0xf]
      %v1316 = vld [vmem:[%s422 + $0x388] sm:$0xf]
      %v1317 = vld [vmem:[%s422 + $0x38c] sm:$0xf]
      %v1318 = vld [vmem:[%s422 + $0x390] sm:$0xf]
      %v1319 = vld [vmem:[%s422 + $0x394] sm:$0xf]
      %v1320 = vld [vmem:[%s422 + $0x398] sm:$0xf]
      %v1321 = vld [vmem:[%s422 + $0x39c] sm:$0xf]
      %v1322 = vld [vmem:[%s422 + $0x3a0] sm:$0xf]
      %v1323 = vld [vmem:[%s422 + $0x3a4] sm:$0xf]
      %v1324 = vld [vmem:[%s422 + $0x3a8] sm:$0xf]
      %v1325 = vld [vmem:[%s422 + $0x3ac] sm:$0xf]
      %v1326 = vld [vmem:[%s422 + $0x3b0] sm:$0xf]
      %v1327 = vld [vmem:[%s422 + $0x3b4] sm:$0xf]
      %v1328 = vld [vmem:[%s422 + $0x3b8] sm:$0xf]
      %v1329 = vld [vmem:[%s422 + $0x3bc] sm:$0xf]
      %v1330 = vld [vmem:[%s422 + $0x3c0] sm:$0xf]
      %v1331 = vld [vmem:[%s422 + $0x3c4] sm:$0xf]
      %v1332 = vld [vmem:[%s422 + $0x3c8] sm:$0xf]
      %v1333 = vld [vmem:[%s422 + $0x3cc] sm:$0xf]
      %v1334 = vld [vmem:[%s422 + $0x3d0] sm:$0xf]
      %v1335 = vld [vmem:[%s422 + $0x3d4] sm:$0xf]
      %v1336 = vld [vmem:[%s422 + $0x3d8] sm:$0xf]
      %v1337 = vld [vmem:[%s422 + $0x3dc] sm:$0xf]
      %v1338 = vld [vmem:[%s422 + $0x3e0] sm:$0xf]
      %v1339 = vld [vmem:[%s422 + $0x3e4] sm:$0xf]
      %v1340 = vld [vmem:[%s422 + $0x3e8] sm:$0xf]
      %v1341 = vld [vmem:[%s422 + $0x3ec] sm:$0xf]
      %v1342 = vld [vmem:[%s422 + $0x3f0] sm:$0xf]
      %v1343 = vld [vmem:[%s422 + $0x3f4] sm:$0xf]
      %v1344 = vld [vmem:[%s422 + $0x3f8] sm:$0xf]
      %v1345 = vld [vmem:[%s422 + $0x3fc] sm:$0xf]
      %v1346 = vperm.slane %v449, 6
      %v1603 = vunpack.c.l.b16 %v1090
      %v1604 = vunpack.c.l.b16 %v1091
      %v1605 = vunpack.c.l.b16 %v1092
      %v1606 = vunpack.c.l.b16 %v1093
      %v1607 = vunpack.c.l.b16 %v1094
      %v1608 = vunpack.c.l.b16 %v1095
      %v1609 = vunpack.c.l.b16 %v1096
      %v1610 = vunpack.c.l.b16 %v1097
      %v1611 = vunpack.c.l.b16 %v1098
      %v1612 = vunpack.c.l.b16 %v1099
      %v1613 = vunpack.c.l.b16 %v1100
      %v1614 = vunpack.c.l.b16 %v1101
      %v1615 = vunpack.c.l.b16 %v1102
      %v1616 = vunpack.c.l.b16 %v1103
      %v1617 = vunpack.c.l.b16 %v1104
      %v1618 = vunpack.c.l.b16 %v1105
      %v1619 = vunpack.c.l.b16 %v1106
      %v1620 = vunpack.c.l.b16 %v1107
      %v1621 = vunpack.c.l.b16 %v1108
      %v1622 = vunpack.c.l.b16 %v1109
      %v1623 = vunpack.c.l.b16 %v1110
      %v1624 = vunpack.c.l.b16 %v1111
      %v1625 = vunpack.c.l.b16 %v1112
      %v1626 = vunpack.c.l.b16 %v1113
      %v1627 = vunpack.c.l.b16 %v1114
      %v1628 = vunpack.c.l.b16 %v1115
      %v1629 = vunpack.c.l.b16 %v1116
      %v1630 = vunpack.c.l.b16 %v1117
      %v1631 = vunpack.c.l.b16 %v1118
      %v1632 = vunpack.c.l.b16 %v1119
      %v1633 = vunpack.c.l.b16 %v1120
      %v1634 = vunpack.c.l.b16 %v1121
      %v1635 = vunpack.c.l.b16 %v1122
      %v1636 = vunpack.c.l.b16 %v1123
      %v1637 = vunpack.c.l.b16 %v1124
      %v1638 = vunpack.c.l.b16 %v1125
      %v1639 = vunpack.c.l.b16 %v1126
      %v1640 = vunpack.c.l.b16 %v1127
      %v1641 = vunpack.c.l.b16 %v1128
      %v1642 = vunpack.c.l.b16 %v1129
      %v1643 = vunpack.c.l.b16 %v1130
      %v1644 = vunpack.c.l.b16 %v1131
      %v1645 = vunpack.c.l.b16 %v1132
      %v1646 = vunpack.c.l.b16 %v1133
      %v1647 = vunpack.c.l.b16 %v1134
      %v1648 = vunpack.c.l.b16 %v1135
      %v1649 = vunpack.c.l.b16 %v1136
      %v1650 = vunpack.c.l.b16 %v1137
      %v1651 = vunpack.c.l.b16 %v1138
      %v1652 = vunpack.c.l.b16 %v1139
      %v1653 = vunpack.c.l.b16 %v1140
      %v1654 = vunpack.c.l.b16 %v1141
      %v1655 = vunpack.c.l.b16 %v1142
      %v1656 = vunpack.c.l.b16 %v1143
      %v1657 = vunpack.c.l.b16 %v1144
      %v1658 = vunpack.c.l.b16 %v1145
      %v1659 = vunpack.c.l.b16 %v1146
      %v1660 = vunpack.c.l.b16 %v1147
      %v1661 = vunpack.c.l.b16 %v1148
      %v1662 = vunpack.c.l.b16 %v1149
      %v1663 = vunpack.c.l.b16 %v1150
      %v1664 = vunpack.c.l.b16 %v1151
      %v1665 = vunpack.c.l.b16 %v1152
      %v1666 = vunpack.c.l.b16 %v1153
      %v1667 = vunpack.c.l.b16 %v1154
      %v1668 = vunpack.c.l.b16 %v1155
      %v1669 = vunpack.c.l.b16 %v1156
      %v1670 = vunpack.c.l.b16 %v1157
      %v1671 = vunpack.c.l.b16 %v1158
      %v1672 = vunpack.c.l.b16 %v1159
      %v1673 = vunpack.c.l.b16 %v1160
      %v1674 = vunpack.c.l.b16 %v1161
      %v1675 = vunpack.c.l.b16 %v1162
      %v1676 = vunpack.c.l.b16 %v1163
      %v1677 = vunpack.c.l.b16 %v1164
      %v1678 = vunpack.c.l.b16 %v1165
      %v1679 = vunpack.c.l.b16 %v1166
      %v1680 = vunpack.c.l.b16 %v1167
      %v1681 = vunpack.c.l.b16 %v1168
      %v1682 = vunpack.c.l.b16 %v1169
      %v1683 = vunpack.c.l.b16 %v1170
      %v1684 = vunpack.c.l.b16 %v1171
      %v1685 = vunpack.c.l.b16 %v1172
      %v1686 = vunpack.c.l.b16 %v1173
      %v1687 = vunpack.c.l.b16 %v1174
      %v1688 = vunpack.c.l.b16 %v1175
      %v1689 = vunpack.c.l.b16 %v1176
      %v1690 = vunpack.c.l.b16 %v1177
      %v1691 = vunpack.c.l.b16 %v1178
      %v1692 = vunpack.c.l.b16 %v1179
      %v1693 = vunpack.c.l.b16 %v1180
      %v1694 = vunpack.c.l.b16 %v1181
      %v1695 = vunpack.c.l.b16 %v1182
      %v1696 = vunpack.c.l.b16 %v1183
      %v1697 = vunpack.c.l.b16 %v1184
      %v1698 = vunpack.c.l.b16 %v1185
      %v1699 = vunpack.c.l.b16 %v1186
      %v1700 = vunpack.c.l.b16 %v1187
      %v1701 = vunpack.c.l.b16 %v1188
      %v1702 = vunpack.c.l.b16 %v1189
      %v1703 = vunpack.c.l.b16 %v1190
      %v1704 = vunpack.c.l.b16 %v1191
      %v1705 = vunpack.c.l.b16 %v1192
      %v1706 = vunpack.c.l.b16 %v1193
      %v1707 = vunpack.c.l.b16 %v1194
      %v1708 = vunpack.c.l.b16 %v1195
      %v1709 = vunpack.c.l.b16 %v1196
      %v1710 = vunpack.c.l.b16 %v1197
      %v1711 = vunpack.c.l.b16 %v1198
      %v1712 = vunpack.c.l.b16 %v1199
      %v1713 = vunpack.c.l.b16 %v1200
      %v1714 = vunpack.c.l.b16 %v1201
      %v1715 = vunpack.c.l.b16 %v1202
      %v1716 = vunpack.c.l.b16 %v1203
      %v1717 = vunpack.c.l.b16 %v1204
      %v1718 = vunpack.c.l.b16 %v1205
      %v1719 = vunpack.c.l.b16 %v1206
      %v1720 = vunpack.c.l.b16 %v1207
      %v1721 = vunpack.c.l.b16 %v1208
      %v1722 = vunpack.c.l.b16 %v1209
      %v1723 = vunpack.c.l.b16 %v1210
      %v1724 = vunpack.c.l.b16 %v1211
      %v1725 = vunpack.c.l.b16 %v1212
      %v1726 = vunpack.c.l.b16 %v1213
      %v1727 = vunpack.c.l.b16 %v1214
      %v1728 = vunpack.c.l.b16 %v1215
      %v1729 = vunpack.c.l.b16 %v1216
      %v1730 = vunpack.c.l.b16 %v1217
      %v1731 = vunpack.c.l.b16 %v1218
      %v1732 = vunpack.c.l.b16 %v1219
      %v1733 = vunpack.c.l.b16 %v1220
      %v1734 = vunpack.c.l.b16 %v1221
      %v1735 = vunpack.c.l.b16 %v1222
      %v1736 = vunpack.c.l.b16 %v1223
      %v1737 = vunpack.c.l.b16 %v1224
      %v1738 = vunpack.c.l.b16 %v1225
      %v1739 = vunpack.c.l.b16 %v1226
      %v1740 = vunpack.c.l.b16 %v1227
      %v1741 = vunpack.c.l.b16 %v1228
      %v1742 = vunpack.c.l.b16 %v1229
      %v1743 = vunpack.c.l.b16 %v1230
      %v1744 = vunpack.c.l.b16 %v1231
      %v1745 = vunpack.c.l.b16 %v1232
      %v1746 = vunpack.c.l.b16 %v1233
      %v1747 = vunpack.c.l.b16 %v1234
      %v1748 = vunpack.c.l.b16 %v1235
      %v1749 = vunpack.c.l.b16 %v1236
      %v1750 = vunpack.c.l.b16 %v1237
      %v1751 = vunpack.c.l.b16 %v1238
      %v1752 = vunpack.c.l.b16 %v1239
      %v1753 = vunpack.c.l.b16 %v1240
      %v1754 = vunpack.c.l.b16 %v1241
      %v1755 = vunpack.c.l.b16 %v1242
      %v1756 = vunpack.c.l.b16 %v1243
      %v1757 = vunpack.c.l.b16 %v1244
      %v1758 = vunpack.c.l.b16 %v1245
      %v1759 = vunpack.c.l.b16 %v1246
      %v1760 = vunpack.c.l.b16 %v1247
      %v1761 = vunpack.c.l.b16 %v1248
      %v1762 = vunpack.c.l.b16 %v1249
      %v1763 = vunpack.c.l.b16 %v1250
      %v1764 = vunpack.c.l.b16 %v1251
      %v1765 = vunpack.c.l.b16 %v1252
      %v1766 = vunpack.c.l.b16 %v1253
      %v1767 = vunpack.c.l.b16 %v1254
      %v1768 = vunpack.c.l.b16 %v1255
      %v1769 = vunpack.c.l.b16 %v1256
      %v1770 = vunpack.c.l.b16 %v1257
      %v1771 = vunpack.c.l.b16 %v1258
      %v1772 = vunpack.c.l.b16 %v1259
      %v1773 = vunpack.c.l.b16 %v1260
      %v1774 = vunpack.c.l.b16 %v1261
      %v1775 = vunpack.c.l.b16 %v1262
      %v1776 = vunpack.c.l.b16 %v1263
      %v1777 = vunpack.c.l.b16 %v1264
      %v1778 = vunpack.c.l.b16 %v1265
      %v1779 = vunpack.c.l.b16 %v1266
      %v1780 = vunpack.c.l.b16 %v1267
      %v1781 = vunpack.c.l.b16 %v1268
      %v1782 = vunpack.c.l.b16 %v1269
      %v1783 = vunpack.c.l.b16 %v1270
      %v1784 = vunpack.c.l.b16 %v1271
      %v1785 = vunpack.c.l.b16 %v1272
      %v1786 = vunpack.c.l.b16 %v1273
      %v1787 = vunpack.c.l.b16 %v1274
      %v1788 = vunpack.c.l.b16 %v1275
      %v1789 = vunpack.c.l.b16 %v1276
      %v1790 = vunpack.c.l.b16 %v1277
      %v1791 = vunpack.c.l.b16 %v1278
      %v1792 = vunpack.c.l.b16 %v1279
      %v1793 = vunpack.c.l.b16 %v1280
      %v1794 = vunpack.c.l.b16 %v1281
      %v1795 = vunpack.c.l.b16 %v1282
      %v1796 = vunpack.c.l.b16 %v1283
      %v1797 = vunpack.c.l.b16 %v1284
      %v1798 = vunpack.c.l.b16 %v1285
      %v1799 = vunpack.c.l.b16 %v1286
      %v1800 = vunpack.c.l.b16 %v1287
      %v1801 = vunpack.c.l.b16 %v1288
      %v1802 = vunpack.c.l.b16 %v1289
      %v1803 = vunpack.c.l.b16 %v1290
      %v1804 = vunpack.c.l.b16 %v1291
      %v1805 = vunpack.c.l.b16 %v1292
      %v1806 = vunpack.c.l.b16 %v1293
      %v1807 = vunpack.c.l.b16 %v1294
      %v1808 = vunpack.c.l.b16 %v1295
      %v1809 = vunpack.c.l.b16 %v1296
      %v1810 = vunpack.c.l.b16 %v1297
      %v1811 = vunpack.c.l.b16 %v1298
      %v1812 = vunpack.c.l.b16 %v1299
      %v1813 = vunpack.c.l.b16 %v1300
      %v1814 = vunpack.c.l.b16 %v1301
      %v1815 = vunpack.c.l.b16 %v1302
      %v1816 = vunpack.c.l.b16 %v1303
      %v1817 = vunpack.c.l.b16 %v1304
      %v1818 = vunpack.c.l.b16 %v1305
      %v1819 = vunpack.c.l.b16 %v1306
      %v1820 = vunpack.c.l.b16 %v1307
      %v1821 = vunpack.c.l.b16 %v1308
      %v1822 = vunpack.c.l.b16 %v1309
      %v1823 = vunpack.c.l.b16 %v1310
      %v1824 = vunpack.c.l.b16 %v1311
      %v1825 = vunpack.c.l.b16 %v1312
      %v1826 = vunpack.c.l.b16 %v1313
      %v1827 = vunpack.c.l.b16 %v1314
      %v1828 = vunpack.c.l.b16 %v1315
      %v1829 = vunpack.c.l.b16 %v1316
      %v1830 = vunpack.c.l.b16 %v1317
      %v1831 = vunpack.c.l.b16 %v1318
      %v1832 = vunpack.c.l.b16 %v1319
      %v1833 = vunpack.c.l.b16 %v1320
      %v1834 = vunpack.c.l.b16 %v1321
      %v1835 = vunpack.c.l.b16 %v1322
      %v1836 = vunpack.c.l.b16 %v1323
      %v1837 = vunpack.c.l.b16 %v1324
      %v1838 = vunpack.c.l.b16 %v1325
      %v1839 = vunpack.c.l.b16 %v1326
      %v1840 = vunpack.c.l.b16 %v1327
      %v1841 = vunpack.c.l.b16 %v1328
      %v1842 = vunpack.c.l.b16 %v1329
      %v1843 = vunpack.c.l.b16 %v1330
      %v1844 = vunpack.c.l.b16 %v1331
      %v1845 = vunpack.c.l.b16 %v1332
      %v1846 = vunpack.c.l.b16 %v1333
      %v1847 = vunpack.c.l.b16 %v1334
      %v1848 = vunpack.c.l.b16 %v1335
      %v1849 = vunpack.c.l.b16 %v1336
      %v1850 = vunpack.c.l.b16 %v1337
      %v1851 = vunpack.c.l.b16 %v1338
      %v1852 = vunpack.c.l.b16 %v1339
      %v1853 = vunpack.c.l.b16 %v1340
      %v1854 = vunpack.c.l.b16 %v1341
      %v1855 = vunpack.c.l.b16 %v1342
      %v1856 = vunpack.c.l.b16 %v1343
      %v1857 = vunpack.c.l.b16 %v1344
      %v1858 = vunpack.c.l.b16 %v1345
      %v1859 = vpack.c.b16 %v1604, %v1603
      %v1860 = vpack.c.b16 %v1606, %v1605
      %v1861 = vpack.c.b16 %v1608, %v1607
      %v1862 = vpack.c.b16 %v1610, %v1609
      %v1863 = vpack.c.b16 %v1612, %v1611
      %v1864 = vpack.c.b16 %v1614, %v1613
      %v1865 = vpack.c.b16 %v1616, %v1615
      %v1866 = vpack.c.b16 %v1618, %v1617
      %v1867 = vpack.c.b16 %v1620, %v1619
      %v1868 = vpack.c.b16 %v1622, %v1621
      %v1869 = vpack.c.b16 %v1624, %v1623
      %v1870 = vpack.c.b16 %v1626, %v1625
      %v1871 = vpack.c.b16 %v1628, %v1627
      %v1872 = vpack.c.b16 %v1630, %v1629
      %v1873 = vpack.c.b16 %v1632, %v1631
      %v1874 = vpack.c.b16 %v1634, %v1633
      %v1875 = vpack.c.b16 %v1636, %v1635
      %v1876 = vpack.c.b16 %v1638, %v1637
      %v1877 = vpack.c.b16 %v1640, %v1639
      %v1878 = vpack.c.b16 %v1642, %v1641
      %v1879 = vpack.c.b16 %v1644, %v1643
      %v1880 = vpack.c.b16 %v1646, %v1645
      %v1881 = vpack.c.b16 %v1648, %v1647
      %v1882 = vpack.c.b16 %v1650, %v1649
      %v1883 = vpack.c.b16 %v1652, %v1651
      %v1884 = vpack.c.b16 %v1654, %v1653
      %v1885 = vpack.c.b16 %v1656, %v1655
      %v1886 = vpack.c.b16 %v1658, %v1657
      %v1887 = vpack.c.b16 %v1660, %v1659
      %v1888 = vpack.c.b16 %v1662, %v1661
      %v1889 = vpack.c.b16 %v1664, %v1663
      %v1890 = vpack.c.b16 %v1666, %v1665
      %v1891 = vpack.c.b16 %v1668, %v1667
      %v1892 = vpack.c.b16 %v1670, %v1669
      %v1893 = vpack.c.b16 %v1672, %v1671
      %v1894 = vpack.c.b16 %v1674, %v1673
      %v1895 = vpack.c.b16 %v1676, %v1675
      %v1896 = vpack.c.b16 %v1678, %v1677
      %v1897 = vpack.c.b16 %v1680, %v1679
      %v1898 = vpack.c.b16 %v1682, %v1681
      %v1899 = vpack.c.b16 %v1684, %v1683
      %v1900 = vpack.c.b16 %v1686, %v1685
      %v1901 = vpack.c.b16 %v1688, %v1687
      %v1902 = vpack.c.b16 %v1690, %v1689
      %v1903 = vpack.c.b16 %v1692, %v1691
      %v1904 = vpack.c.b16 %v1694, %v1693
      %v1905 = vpack.c.b16 %v1696, %v1695
      %v1906 = vpack.c.b16 %v1698, %v1697
      %v1907 = vpack.c.b16 %v1700, %v1699
      %v1908 = vpack.c.b16 %v1702, %v1701
      %v1909 = vpack.c.b16 %v1704, %v1703
      %v1910 = vpack.c.b16 %v1706, %v1705
      %v1911 = vpack.c.b16 %v1708, %v1707
      %v1912 = vpack.c.b16 %v1710, %v1709
      %v1913 = vpack.c.b16 %v1712, %v1711
      %v1914 = vpack.c.b16 %v1714, %v1713
      %v1915 = vpack.c.b16 %v1716, %v1715
      %v1916 = vpack.c.b16 %v1718, %v1717
      %v1917 = vpack.c.b16 %v1720, %v1719
      %v1918 = vpack.c.b16 %v1722, %v1721
      %v1919 = vpack.c.b16 %v1724, %v1723
      %v1920 = vpack.c.b16 %v1726, %v1725
      %v1921 = vpack.c.b16 %v1728, %v1727
      %v1922 = vpack.c.b16 %v1730, %v1729
      %v1923 = vpack.c.b16 %v1732, %v1731
      %v1924 = vpack.c.b16 %v1734, %v1733
      %v1925 = vpack.c.b16 %v1736, %v1735
      %v1926 = vpack.c.b16 %v1738, %v1737
      %v1927 = vpack.c.b16 %v1740, %v1739
      %v1928 = vpack.c.b16 %v1742, %v1741
      %v1929 = vpack.c.b16 %v1744, %v1743
      %v1930 = vpack.c.b16 %v1746, %v1745
      %v1931 = vpack.c.b16 %v1748, %v1747
      %v1932 = vpack.c.b16 %v1750, %v1749
      %v1933 = vpack.c.b16 %v1752, %v1751
      %v1934 = vpack.c.b16 %v1754, %v1753
      %v1935 = vpack.c.b16 %v1756, %v1755
      %v1936 = vpack.c.b16 %v1758, %v1757
      %v1937 = vpack.c.b16 %v1760, %v1759
      %v1938 = vpack.c.b16 %v1762, %v1761
      %v1939 = vpack.c.b16 %v1764, %v1763
      %v1940 = vpack.c.b16 %v1766, %v1765
      %v1941 = vpack.c.b16 %v1768, %v1767
      %v1942 = vpack.c.b16 %v1770, %v1769
      %v1943 = vpack.c.b16 %v1772, %v1771
      %v1944 = vpack.c.b16 %v1774, %v1773
      %v1945 = vpack.c.b16 %v1776, %v1775
      %v1946 = vpack.c.b16 %v1778, %v1777
      %v1947 = vpack.c.b16 %v1780, %v1779
      %v1948 = vpack.c.b16 %v1782, %v1781
      %v1949 = vpack.c.b16 %v1784, %v1783
      %v1950 = vpack.c.b16 %v1786, %v1785
      %v1951 = vpack.c.b16 %v1788, %v1787
      %v1952 = vpack.c.b16 %v1790, %v1789
      %v1953 = vpack.c.b16 %v1792, %v1791
      %v1954 = vpack.c.b16 %v1794, %v1793
      %v1955 = vpack.c.b16 %v1796, %v1795
      %v1956 = vpack.c.b16 %v1798, %v1797
      %v1957 = vpack.c.b16 %v1800, %v1799
      %v1958 = vpack.c.b16 %v1802, %v1801
      %v1959 = vpack.c.b16 %v1804, %v1803
      %v1960 = vpack.c.b16 %v1806, %v1805
      %v1961 = vpack.c.b16 %v1808, %v1807
      %v1962 = vpack.c.b16 %v1810, %v1809
      %v1963 = vpack.c.b16 %v1812, %v1811
      %v1964 = vpack.c.b16 %v1814, %v1813
      %v1965 = vpack.c.b16 %v1816, %v1815
      %v1966 = vpack.c.b16 %v1818, %v1817
      %v1967 = vpack.c.b16 %v1820, %v1819
      %v1968 = vpack.c.b16 %v1822, %v1821
      %v1969 = vpack.c.b16 %v1824, %v1823
      %v1970 = vpack.c.b16 %v1826, %v1825
      %v1971 = vpack.c.b16 %v1828, %v1827
      %v1972 = vpack.c.b16 %v1830, %v1829
      %v1973 = vpack.c.b16 %v1832, %v1831
      %v1974 = vpack.c.b16 %v1834, %v1833
      %v1975 = vpack.c.b16 %v1836, %v1835
      %v1976 = vpack.c.b16 %v1838, %v1837
      %v1977 = vpack.c.b16 %v1840, %v1839
      %v1978 = vpack.c.b16 %v1842, %v1841
      %v1979 = vpack.c.b16 %v1844, %v1843
      %v1980 = vpack.c.b16 %v1846, %v1845
      %v1981 = vpack.c.b16 %v1848, %v1847
      %v1982 = vpack.c.b16 %v1850, %v1849
      %v1983 = vpack.c.b16 %v1852, %v1851
      %v1984 = vpack.c.b16 %v1854, %v1853
      %v1985 = vpack.c.b16 %v1856, %v1855
      %v1986 = vpack.c.b16 %v1858, %v1857
      %2115 = vmatpush.bf16.msra.mxu0 %v1866
      %2116 = vmatpush.bf16.msra.mxu0 %v1865
      %2117 = vmatpush.bf16.msra.mxu0 %v1864
      %2118 = vmatpush.bf16.msra.mxu0 %v1863
      %2119 = vmatpush.bf16.msra.mxu0 %v1862
      %2120 = vmatpush.bf16.msra.mxu0 %v1861
      %2121 = vmatpush.bf16.msra.mxu0 %v1860
      %2122 = vmatpush.bf16.msra.mxu0 %v1859
      %2123 = vmatmul.bf16.gmra.mxu0 %v1074
      %v2124 = vpop.f32.mrf.mxu0
      %v2125 = vadd.f32 %v1346, %v2124
      %v2126 = vpop.f32.mrf.mxu0
      %2127 = vdwg.mxu0
      %2128 = vmatpush.bf16.msra.mxu0 %v1874
      %2129 = vmatpush.bf16.msra.mxu0 %v1873
      %2130 = vmatpush.bf16.msra.mxu0 %v1872
      %2131 = vmatpush.bf16.msra.mxu0 %v1871
      %2132 = vmatpush.bf16.msra.mxu0 %v1870
      %2133 = vmatpush.bf16.msra.mxu0 %v1869
      %2134 = vmatpush.bf16.msra.mxu0 %v1868
      %2135 = vmatpush.bf16.msra.mxu0 %v1867
      %2136 = vmatmul.bf16.gmra.mxu0 %v1075
      %v2137 = vpop.f32.mrf.mxu0
      %v2138 = vadd.f32 %v2125, %v2137
      %v2139 = vpop.f32.mrf.mxu0
      %2140 = vdwg.mxu0
      %2141 = vmatpush.bf16.msra.mxu0 %v1882
      %2142 = vmatpush.bf16.msra.mxu0 %v1881
      %2143 = vmatpush.bf16.msra.mxu0 %v1880
      %2144 = vmatpush.bf16.msra.mxu0 %v1879
      %2145 = vmatpush.bf16.msra.mxu0 %v1878
      %2146 = vmatpush.bf16.msra.mxu0 %v1877
      %2147 = vmatpush.bf16.msra.mxu0 %v1876
      %2148 = vmatpush.bf16.msra.mxu0 %v1875
      %2149 = vmatmul.bf16.gmra.mxu0 %v1076
      %v2150 = vpop.f32.mrf.mxu0
      %v2151 = vadd.f32 %v2138, %v2150
      %v2152 = vpop.f32.mrf.mxu0
      %2153 = vdwg.mxu0
      %2154 = vmatpush.bf16.msra.mxu0 %v1890
      %2155 = vmatpush.bf16.msra.mxu0 %v1889
      %2156 = vmatpush.bf16.msra.mxu0 %v1888
      %2157 = vmatpush.bf16.msra.mxu0 %v1887
      %2158 = vmatpush.bf16.msra.mxu0 %v1886
      %2159 = vmatpush.bf16.msra.mxu0 %v1885
      %2160 = vmatpush.bf16.msra.mxu0 %v1884
      %2161 = vmatpush.bf16.msra.mxu0 %v1883
      %2162 = vmatmul.bf16.gmra.mxu0 %v1077
      %v2163 = vpop.f32.mrf.mxu0
      %v2164 = vadd.f32 %v2151, %v2163
      %v2165 = vpop.f32.mrf.mxu0
      %2166 = vdwg.mxu0
      %2167 = vmatpush.bf16.msra.mxu0 %v1898
      %2168 = vmatpush.bf16.msra.mxu0 %v1897
      %2169 = vmatpush.bf16.msra.mxu0 %v1896
      %2170 = vmatpush.bf16.msra.mxu0 %v1895
      %2171 = vmatpush.bf16.msra.mxu0 %v1894
      %2172 = vmatpush.bf16.msra.mxu0 %v1893
      %2173 = vmatpush.bf16.msra.mxu0 %v1892
      %2174 = vmatpush.bf16.msra.mxu0 %v1891
      %2175 = vmatmul.bf16.gmra.mxu0 %v1078
      %v2176 = vpop.f32.mrf.mxu0
      %v2177 = vadd.f32 %v2164, %v2176
      %v2178 = vpop.f32.mrf.mxu0
      %2179 = vdwg.mxu0
      %2180 = vmatpush.bf16.msra.mxu0 %v1906
      %2181 = vmatpush.bf16.msra.mxu0 %v1905
      %2182 = vmatpush.bf16.msra.mxu0 %v1904
      %2183 = vmatpush.bf16.msra.mxu0 %v1903
      %2184 = vmatpush.bf16.msra.mxu0 %v1902
      %2185 = vmatpush.bf16.msra.mxu0 %v1901
      %2186 = vmatpush.bf16.msra.mxu0 %v1900
      %2187 = vmatpush.bf16.msra.mxu0 %v1899
      %2188 = vmatmul.bf16.gmra.mxu0 %v1079
      %v2189 = vpop.f32.mrf.mxu0
      %v2190 = vadd.f32 %v2177, %v2189
      %v2191 = vpop.f32.mrf.mxu0
      %2192 = vdwg.mxu0
      %2193 = vmatpush.bf16.msra.mxu0 %v1914
      %2194 = vmatpush.bf16.msra.mxu0 %v1913
      %2195 = vmatpush.bf16.msra.mxu0 %v1912
      %2196 = vmatpush.bf16.msra.mxu0 %v1911
      %2197 = vmatpush.bf16.msra.mxu0 %v1910
      %2198 = vmatpush.bf16.msra.mxu0 %v1909
      %2199 = vmatpush.bf16.msra.mxu0 %v1908
      %2200 = vmatpush.bf16.msra.mxu0 %v1907
      %2201 = vmatmul.bf16.gmra.mxu0 %v1080
      %v2202 = vpop.f32.mrf.mxu0
      %v2203 = vadd.f32 %v2190, %v2202
      %v2204 = vpop.f32.mrf.mxu0
      %2205 = vdwg.mxu0
      %2206 = vmatpush.bf16.msra.mxu0 %v1922
      %2207 = vmatpush.bf16.msra.mxu0 %v1921
      %2208 = vmatpush.bf16.msra.mxu0 %v1920
      %2209 = vmatpush.bf16.msra.mxu0 %v1919
      %2210 = vmatpush.bf16.msra.mxu0 %v1918
      %2211 = vmatpush.bf16.msra.mxu0 %v1917
      %2212 = vmatpush.bf16.msra.mxu0 %v1916
      %2213 = vmatpush.bf16.msra.mxu0 %v1915
      %2214 = vmatmul.bf16.gmra.mxu0 %v1081
      %v2215 = vpop.f32.mrf.mxu0
      %v2216 = vadd.f32 %v2203, %v2215
      %v2217 = vpop.f32.mrf.mxu0
      %2218 = vdwg.mxu0
      %2219 = vmatpush.bf16.msra.mxu0 %v1930
      %2220 = vmatpush.bf16.msra.mxu0 %v1929
      %2221 = vmatpush.bf16.msra.mxu0 %v1928
      %2222 = vmatpush.bf16.msra.mxu0 %v1927
      %2223 = vmatpush.bf16.msra.mxu0 %v1926
      %2224 = vmatpush.bf16.msra.mxu0 %v1925
      %2225 = vmatpush.bf16.msra.mxu0 %v1924
      %2226 = vmatpush.bf16.msra.mxu0 %v1923
      %2227 = vmatmul.bf16.gmra.mxu0 %v1082
      %v2228 = vpop.f32.mrf.mxu0
      %v2229 = vadd.f32 %v2216, %v2228
      %v2230 = vpop.f32.mrf.mxu0
      %2231 = vdwg.mxu0
      %2232 = vmatpush.bf16.msra.mxu0 %v1938
      %2233 = vmatpush.bf16.msra.mxu0 %v1937
      %2234 = vmatpush.bf16.msra.mxu0 %v1936
      %2235 = vmatpush.bf16.msra.mxu0 %v1935
      %2236 = vmatpush.bf16.msra.mxu0 %v1934
      %2237 = vmatpush.bf16.msra.mxu0 %v1933
      %2238 = vmatpush.bf16.msra.mxu0 %v1932
      %2239 = vmatpush.bf16.msra.mxu0 %v1931
      %2240 = vmatmul.bf16.gmra.mxu0 %v1083
      %v2241 = vpop.f32.mrf.mxu0
      %v2242 = vadd.f32 %v2229, %v2241
      %v2243 = vpop.f32.mrf.mxu0
      %2244 = vdwg.mxu0
      %2245 = vmatpush.bf16.msra.mxu0 %v1946
      %2246 = vmatpush.bf16.msra.mxu0 %v1945
      %2247 = vmatpush.bf16.msra.mxu0 %v1944
      %2248 = vmatpush.bf16.msra.mxu0 %v1943
      %2249 = vmatpush.bf16.msra.mxu0 %v1942
      %2250 = vmatpush.bf16.msra.mxu0 %v1941
      %2251 = vmatpush.bf16.msra.mxu0 %v1940
      %2252 = vmatpush.bf16.msra.mxu0 %v1939
      %2253 = vmatmul.bf16.gmra.mxu0 %v1084
      %v2254 = vpop.f32.mrf.mxu0
      %v2255 = vadd.f32 %v2242, %v2254
      %v2256 = vpop.f32.mrf.mxu0
      %2257 = vdwg.mxu0
      %2258 = vmatpush.bf16.msra.mxu0 %v1954
      %2259 = vmatpush.bf16.msra.mxu0 %v1953
      %2260 = vmatpush.bf16.msra.mxu0 %v1952
      %2261 = vmatpush.bf16.msra.mxu0 %v1951
      %2262 = vmatpush.bf16.msra.mxu0 %v1950
      %2263 = vmatpush.bf16.msra.mxu0 %v1949
      %2264 = vmatpush.bf16.msra.mxu0 %v1948
      %2265 = vmatpush.bf16.msra.mxu0 %v1947
      %2266 = vmatmul.bf16.gmra.mxu0 %v1085
      %v2267 = vpop.f32.mrf.mxu0
      %v2268 = vadd.f32 %v2255, %v2267
      %v2269 = vpop.f32.mrf.mxu0
      %2270 = vdwg.mxu0
      %2271 = vmatpush.bf16.msra.mxu0 %v1962
      %2272 = vmatpush.bf16.msra.mxu0 %v1961
      %2273 = vmatpush.bf16.msra.mxu0 %v1960
      %2274 = vmatpush.bf16.msra.mxu0 %v1959
      %2275 = vmatpush.bf16.msra.mxu0 %v1958
      %2276 = vmatpush.bf16.msra.mxu0 %v1957
      %2277 = vmatpush.bf16.msra.mxu0 %v1956
      %2278 = vmatpush.bf16.msra.mxu0 %v1955
      %2279 = vmatmul.bf16.gmra.mxu0 %v1086
      %v2280 = vpop.f32.mrf.mxu0
      %v2281 = vadd.f32 %v2268, %v2280
      %v2282 = vpop.f32.mrf.mxu0
      %2283 = vdwg.mxu0
      %2284 = vmatpush.bf16.msra.mxu0 %v1970
      %2285 = vmatpush.bf16.msra.mxu0 %v1969
      %2286 = vmatpush.bf16.msra.mxu0 %v1968
      %2287 = vmatpush.bf16.msra.mxu0 %v1967
      %2288 = vmatpush.bf16.msra.mxu0 %v1966
      %2289 = vmatpush.bf16.msra.mxu0 %v1965
      %2290 = vmatpush.bf16.msra.mxu0 %v1964
      %2291 = vmatpush.bf16.msra.mxu0 %v1963
      %2292 = vmatmul.bf16.gmra.mxu0 %v1087
      %v2293 = vpop.f32.mrf.mxu0
      %v2294 = vadd.f32 %v2281, %v2293
      %v2295 = vpop.f32.mrf.mxu0
      %2296 = vdwg.mxu0
      %2297 = vmatpush.bf16.msra.mxu0 %v1978
      %2298 = vmatpush.bf16.msra.mxu0 %v1977
      %2299 = vmatpush.bf16.msra.mxu0 %v1976
      %2300 = vmatpush.bf16.msra.mxu0 %v1975
      %2301 = vmatpush.bf16.msra.mxu0 %v1974
      %2302 = vmatpush.bf16.msra.mxu0 %v1973
      %2303 = vmatpush.bf16.msra.mxu0 %v1972
      %2304 = vmatpush.bf16.msra.mxu0 %v1971
      %2305 = vmatmul.bf16.gmra.mxu0 %v1088
      %v2306 = vpop.f32.mrf.mxu0
      %v2307 = vadd.f32 %v2294, %v2306
      %v2308 = vpop.f32.mrf.mxu0
      %2309 = vdwg.mxu0
      %2310 = vmatpush.bf16.msra.mxu0 %v1986
      %2311 = vmatpush.bf16.msra.mxu0 %v1985
      %2312 = vmatpush.bf16.msra.mxu0 %v1984
      %2313 = vmatpush.bf16.msra.mxu0 %v1983
      %2314 = vmatpush.bf16.msra.mxu0 %v1982
      %2315 = vmatpush.bf16.msra.mxu0 %v1981
      %2316 = vmatpush.bf16.msra.mxu0 %v1980
      %2317 = vmatpush.bf16.msra.mxu0 %v1979
      %2318 = vmatmul.bf16.gmra.mxu0 %v1089
      %v2319 = vpop.f32.mrf.mxu0
      %v2320 = vadd.f32 %v2307, %v2319
      %v2321 = vpop.f32.mrf.mxu0
      %2322 = vdwg.mxu0
      %v2323 = vadd.f32 %v681, %v2320
      %v2324 = vsel %vm459, %v2323, 0.0
      %2325 = vadd.xlane.f32.xlu0 %v2324
      %v2326 = vpop.xlane.xlu0 %2325
      %v2327 = vmul.f32 %v2326, %v658
      %v2328 = vsub.f32 %v2323, %v2327
      %v2329 = vmul.f32 %v2328, %v2328
      %v2330 = vsel %vm459, %v2329, 0.0
      %2331 = vadd.xlane.f32.xlu0 %v2330
      %v2332 = vpop.xlane.xlu0 %2331
      %v2333 = vmul.f32 %v2332, %v658
      %v2334 = vadd.f32 %v2333, 1e-05
      %v2335 = vrsqrt.pop %v2334
      %v2336 = vmul.f32 %v2335, %v2334
      %v2337 = vmul.f32 %v2336, %v2335
      %v2338 = vmul.f32 0.5, %v2337
      %v2339 = vsub.f32 1.5, %v2338
      %v2340 = vmul.f32 %v2335, %v2339
      %vm2341 = vweird.f32 %v2334
      %vm2342 = vweird.f32 %v2335
      %vm2343 = vmor %vm2341, %vm2342
      %v2344 = vsel %vm2343, %v2335, %v2340
      %v2345 = vmul.f32 %v2328, %v2344
      %v2346 = vperm.slane %v449, 7
      %v2347 = vmul.f32 %v2345, %v2346
      %v2348 = vperm.slane %v450, 0
      %v2349 = vadd.f32 %v2347, %v2348
      %2350 = vst.msk [vmem:[#allocation2] sm:$0xff] %vm459, %v2349
      %p2351 = scmp.eq.s32.totalorder %s25, 1
      // Predicated region
      $region53: #{transformer_vae_forward.6} parent=47 // pred_check
        %p2352 = pneg %p2351
      $region54: #{transformer_vae_forward.6} parent=47 // pred_check_branch
        %2354 = sbr.rel (%p2352) target = $region56
      $region55: #{transformer_vae_forward.6} parent=47 // pred_region
        %v2355 = vpack.c.bf16 %v2349, %v2349
        %vm2356 = vcmask 76800
        %2357 = vst.msk [vmem:[%s435] sm:$0xf] %vm2356, %v2355
        %v2358 = vsel %vm459, %v2349, 0.0
        %v2359 = vrot.slane %v2358, 4
        %v2360 = vadd.f32 %v2358, %v2359
        %v2361 = vrot.slane %v2360, 2
        %v2362 = vadd.f32 %v2360, %v2361
        %v2363 = vrot.slane %v2362, 1
        %v2364 = vadd.f32 %v2362, %v2363
        %v2365 = vrcp.pop 8.0
        %v2366 = vmul.f32 8.0, %v2365
        %v2367 = vsub.f32 1.0, %v2366
        %v2368 = vmul.f32 %v2365, %v2367
        %v2369 = vadd.f32 %v2365, %v2368
        %vm2370 = vweird.f32 %v2365
        %v2371 = vsel %vm2370, %v2365, %v2369
        %v2372 = vmul.f32 %v2364, %v2371
        %vm2373 = vcmask 73728
        %2374 = vst.msk [vmem:[%s438] sm:$0x1] %vm2373, %v2372
      $region56: #{transformer_vae_forward.6} parent=47 // pred_fallthru
        _
      %p2375 = scmp.lt.s32.totalorder %s24, 1
      %s2376 = scalar_select %p2375, %s24, 1
      %s2377 = smul.addr %s2376, 4
      %s2378 = scalar_lea.vmem %s7, %s2377
      %p2379 = scmp.lt.s32.totalorder %s24, 1
      %s2380 = scalar_select %p2379, %s24, 1
      %s2381 = scalar_lea.vmem %s8, %s2380
      // Predicated region
      $region57: #{transformer_vae_forward.6} parent=47 // pred_check
        %p2382 = pneg %p232
      $region58: #{transformer_vae_forward.6} parent=47 // pred_check_branch
        %2384 = sbr.rel (%p2382) target = $region60
      $region59: #{transformer_vae_forward.6} parent=47 // pred_region
        _
      $region60: #{transformer_vae_forward.6} parent=47 // pred_fallthru
        _
      // Predicated region
      $region61: #{transformer_vae_forward.6} parent=47 // pred_check
        %p2385 = pneg %p258
      $region62: #{transformer_vae_forward.6} parent=47 // pred_check_branch
        %2387 = sbr.rel (%p2385) target = $region64
      $region63: #{transformer_vae_forward.6} parent=47 // pred_region
        _
      $region64: #{transformer_vae_forward.6} parent=47 // pred_fallthru
        _
    $region48: #{transformer_vae_forward.6} parent=5 // pred_fallthru
      _
    %p2388 = scmp.le.s32.totalorder 2, %s15
    // Predicated region
    $region65: #{transformer_vae_forward.6} parent=5 // pred_check
      %p2389 = pneg %p2388
    $region66: #{transformer_vae_forward.6} parent=5 // pred_check_branch
      %2391 = sbr.rel (%p2389) target = $region68
    $region67: #{transformer_vae_forward.6} parent=5 // pred_region
      %s2392 = ssub.s32 %s15, 2
      // Predicated region
      $region69: #{transformer_vae_forward.6} parent=67 // pred_check
        %p2393 = pneg %p238
      $region70: #{transformer_vae_forward.6} parent=67 // pred_check_branch
        %2395 = sbr.rel (%p2393) target = $region72
      $region71: #{transformer_vae_forward.6} parent=67 // pred_region
        %p2396 = scmp.lt.s32.totalorder %s26, 1
        %s2397 = scalar_select %p2396, %s26, 1
        %s2398 = smul.addr %s2397, 4
        %s2399 = scalar_lea.vmem %s7, %s2398
      $region72: #{transformer_vae_forward.6} parent=67 // pred_fallthru
        _
      // Predicated region
      $region73: #{transformer_vae_forward.6} parent=67 // pred_check
        %p2400 = pneg %p264
      $region74: #{transformer_vae_forward.6} parent=67 // pred_check_branch
        %2402 = sbr.rel (%p2400) target = $region76
      $region75: #{transformer_vae_forward.6} parent=67 // pred_region
        %p2403 = scmp.lt.s32.totalorder %s26, 1
        %s2404 = scalar_select %p2403, %s26, 1
        %s2405 = scalar_lea.vmem %s8, %s2404
      $region76: #{transformer_vae_forward.6} parent=67 // pred_fallthru
        _
    $region68: #{transformer_vae_forward.6} parent=5 // pred_fallthru
      _
  $region6: #{transformer_vae_forward.6} parent=0 // loop_footer
    %s19 = sadd.s32 1, %s15
  $region7: #{transformer_vae_forward.6} parent=0 // loop_footer_branch
    %14 = sbr.rel target = $region3
  $region8: #{transformer_vae_forward.6} parent=0 // loop_exit
    _

// kernel: transformer_vae_forward.9
$region0: #{transformer_vae_forward.9}
  #allocation0 [shape = 'u32[]', space=smem, size = 0x4, offset = 0x4, fixed_abs, tag = 'smem constant byte address 0x4 - core index']
  #allocation1 [shape = 'u32[72,128]{1,0:T(1,128)}', space=vmem, size = 0x9000, scoped, tag = 'internal scratch']
  %s0 = inlined_call_operand.vmem [shape: bf16[16,10], index: 0, kind: input, shape index: {}]
  %s1 = inlined_call_operand.vmem [shape: bf16[10,10], index: 1, kind: input, shape index: {}]
  %s2 = inlined_call_operand.vmem [shape: f32[1,10], index: 2, kind: input, shape index: {}]
  %s3 = inlined_call_operand.vmem [shape: f32[16,10], index: 3, kind: output, shape index: {}]
  %s4 = sld [smem:[#allocation0]]
  $region45: #{transformer_vae_forward.9} parent=0
    _
  %s6 = ssub.s32 1, %s4
  %s7 = scalar_select 0, %s6, %s4
  loop: start=0, step=1, limit=4
  $region2: #{transformer_vae_forward.9} parent=0 // loop_pre_header
    _
  $region3: #{transformer_vae_forward.9} parent=0 // loop_header
    %s9 = sphi 0, %s13
    %p10 = scmp.ge.s32.totalorder %s9, 4
    %s19 = sphi 0, %s21
    %s22 = sphi 0, %s19
    %s23 = sphi 0, %s22
    %s39 = sphi 0, %s23
    %s43 = sphi 0, %s43
    %s45 = sphi 0, %s43
    %s46 = sphi 0, %s45
    %s60 = sphi 0, %s46
    %s64 = sphi 0, %s64
    %s66 = sphi 0, %s64
    %s67 = sphi 0, %s66
    %s81 = sphi 0, %s67
    %s87 = sphi 0, %s89
    %s90 = sphi 0, %s87
    %s91 = sphi 0, %s90
    %s107 = sphi 0, %s91
  $region4: #{transformer_vae_forward.9} parent=0 // loop_header_branch
    %12 = sbr.rel (%p10) target = $region8
  $region5: #{transformer_vae_forward.9} parent=0 // loop_body
    %s14 = ssub.s32 %s9, 1
    %s15 = ssub.s32 %s9, 2
    %s16 = sadd.s32 %s9, 1
    %s17 = ssub.s32 %s9, %s16
    %p18 = scmp.eq.s32.totalorder %s17, 0
    %s20 = sadd.s32 %s19, 1
    %s21 = scalar_select %p18, %s19, %s20
    %p24 = pneg %p18
    %p25 = scmp.eq.s32.totalorder %s9, 1
    %p26 = por %p24, %p25
    %p27 = scmp.ne.s32.totalorder %s19, %s22
    %p28 = scmp.eq.s32.totalorder %s9, 0
    %p29 = por %p27, %p28
    %p30 = scmp.ne.s32.totalorder %s19, %s22
    %p31 = scmp.eq.s32.totalorder %s14, 1
    %p32 = por %p30, %p31
    %p33 = scmp.ne.s32.totalorder %s22, %s23
    %p34 = scmp.eq.s32.totalorder %s14, 0
    %p35 = por %p33, %p34
    %p36 = scmp.ne.s32.totalorder %s22, %s23
    %p37 = scmp.eq.s32.totalorder %s15, 1
    %p38 = por %p36, %p37
    %p40 = scmp.ne.s32.totalorder %s23, %s39
    %p41 = scmp.eq.s32.totalorder %s15, 0
    %p42 = por %p40, %p41
    %s44 = sadd.s32 %s43, 1
    %p47 = scmp.eq.s32.totalorder %s9, 1
    %p48 = scmp.ne.s32.totalorder %s43, %s45
    %p49 = scmp.eq.s32.totalorder %s9, 0
    %p50 = por %p48, %p49
    %p51 = scmp.ne.s32.totalorder %s43, %s45
    %p52 = scmp.eq.s32.totalorder %s14, 1
    %p53 = por %p51, %p52
    %p54 = scmp.ne.s32.totalorder %s45, %s46
    %p55 = scmp.eq.s32.totalorder %s14, 0
    %p56 = por %p54, %p55
    %p57 = scmp.ne.s32.totalorder %s45, %s46
    %p58 = scmp.eq.s32.totalorder %s15, 1
    %p59 = por %p57, %p58
    %p61 = scmp.ne.s32.totalorder %s46, %s60
    %p62 = scmp.eq.s32.totalorder %s15, 0
    %p63 = por %p61, %p62
    %s65 = sadd.s32 %s64, 1
    %p68 = scmp.eq.s32.totalorder %s9, 1
    %p69 = scmp.ne.s32.totalorder %s64, %s66
    %p70 = scmp.eq.s32.totalorder %s9, 0
    %p71 = por %p69, %p70
    %p72 = scmp.ne.s32.totalorder %s64, %s66
    %p73 = scmp.eq.s32.totalorder %s14, 1
    %p74 = por %p72, %p73
    %p75 = scmp.ne.s32.totalorder %s66, %s67
    %p76 = scmp.eq.s32.totalorder %s14, 0
    %p77 = por %p75, %p76
    %p78 = scmp.ne.s32.totalorder %s66, %s67
    %p79 = scmp.eq.s32.totalorder %s15, 1
    %p80 = por %p78, %p79
    %p82 = scmp.ne.s32.totalorder %s67, %s81
    %p83 = scmp.eq.s32.totalorder %s15, 0
    %p84 = por %p82, %p83
    %s85 = ssub.s32 %s9, %s16
    %p86 = scmp.eq.s32.totalorder %s85, 0
    %s88 = sadd.s32 %s87, 1
    %s89 = scalar_select %p86, %s87, %s88
    %p92 = pneg %p86
    %p93 = scmp.eq.s32.totalorder %s9, 1
    %p94 = por %p92, %p93
    %p95 = scmp.ne.s32.totalorder %s87, %s90
    %p96 = scmp.eq.s32.totalorder %s9, 0
    %p97 = por %p95, %p96
    %p98 = scmp.ne.s32.totalorder %s87, %s90
    %p99 = scmp.eq.s32.totalorder %s14, 1
    %p100 = por %p98, %p99
    %p101 = scmp.ne.s32.totalorder %s90, %s91
    %p102 = scmp.eq.s32.totalorder %s14, 0
    %p103 = por %p101, %p102
    %p104 = scmp.ne.s32.totalorder %s90, %s91
    %p105 = scmp.eq.s32.totalorder %s15, 1
    %p106 = por %p104, %p105
    %p108 = scmp.ne.s32.totalorder %s91, %s107
    %p109 = scmp.eq.s32.totalorder %s15, 0
    %p110 = por %p108, %p109
    %p111 = scmp.le.s32.totalorder 1, %s9
    %p112 = scmp.lt.s32.totalorder %s9, 3
    %p113 = pnand %p111, %p112
    %p114 = pneg %p113
    // Predicated region
    $region9: #{transformer_vae_forward.9} parent=5 // pred_check
      _
    $region10: #{transformer_vae_forward.9} parent=5 // pred_check_branch
      %116 = sbr.rel (%p113) target = $region12
    $region11: #{transformer_vae_forward.9} parent=5 // pred_region
      %s117 = ssub.s32 %s9, 1
      // Predicated region
      $region13: #{transformer_vae_forward.9} parent=11 // pred_check
        %p118 = pneg %p56
      $region14: #{transformer_vae_forward.9} parent=11 // pred_check_branch
        %120 = sbr.rel (%p118) target = $region16
      $region15: #{transformer_vae_forward.9} parent=11 // pred_region
        _
      $region16: #{transformer_vae_forward.9} parent=11 // pred_fallthru
        _
      // Predicated region
      $region17: #{transformer_vae_forward.9} parent=11 // pred_check
        %p121 = pneg %p77
      $region18: #{transformer_vae_forward.9} parent=11 // pred_check_branch
        %123 = sbr.rel (%p121) target = $region20
      $region19: #{transformer_vae_forward.9} parent=11 // pred_region
        _
      $region20: #{transformer_vae_forward.9} parent=11 // pred_fallthru
        _
    $region12: #{transformer_vae_forward.9} parent=5 // pred_fallthru
      _
    %p124 = scmp.lt.s32.totalorder %s9, 2
    // Predicated region
    $region21: #{transformer_vae_forward.9} parent=5 // pred_check
      %p125 = pneg %p124
    $region22: #{transformer_vae_forward.9} parent=5 // pred_check_branch
      %127 = sbr.rel (%p125) target = $region24
    $region23: #{transformer_vae_forward.9} parent=5 // pred_region
      // Predicated region
      $region25: #{transformer_vae_forward.9} parent=23 // pred_check
        %p128 = pneg %p29
      $region26: #{transformer_vae_forward.9} parent=23 // pred_check_branch
        %130 = sbr.rel (%p128) target = $region28
      $region27: #{transformer_vae_forward.9} parent=23 // pred_region
        %p131 = scmp.lt.s32.totalorder %s9, 1
        %s132 = scalar_select %p131, %s9, 1
        %s133 = smul.addr %s132, 4
        %s134 = scalar_lea.vmem %s0, %s133
      $region28: #{transformer_vae_forward.9} parent=23 // pred_fallthru
        _
    $region24: #{transformer_vae_forward.9} parent=5 // pred_fallthru
      _
    %p135 = scmp.le.s32.totalorder 1, %s9
    %p136 = scmp.lt.s32.totalorder %s9, 3
    %p137 = pnand %p135, %p136
    %p138 = pneg %p137
    // Predicated region
    $region29: #{transformer_vae_forward.9} parent=5 // pred_check
      _
    $region30: #{transformer_vae_forward.9} parent=5 // pred_check_branch
      %140 = sbr.rel (%p137) target = $region32
    $region31: #{transformer_vae_forward.9} parent=5 // pred_region
      %s141 = ssub.s32 %s9, 1
      %p142 = scmp.lt.s32.totalorder %s14, 1
      %s143 = scalar_select %p142, %s14, 1
      %s144 = smul.addr %s143, 4
      %s145 = scalar_lea.vmem %s0, %s144
      %p146 = pneg %p35
      %p147 = pneg %p32
      %p148 = pneg %p56
      %p149 = pneg %p53
      %p150 = pneg %p77
      %p151 = pneg %p74
      %p152 = pneg %p103
      %p153 = pneg %p100
      %p154 = scmp.lt.s32.totalorder %s14, 1
      %s155 = scalar_select %p154, %s14, 1
      %s156 = smul.addr %s155, 8
      %s157 = scalar_lea.vmem %s3, %s156
      %p158 = scmp.lt.s32.totalorder %s14, 1
      %s159 = scalar_select %p158, %s14, 1
      %s160 = smul.addr %s159, 4
      %s161 = scalar_lea.vmem %s0, %s160
      %p162 = scmp.lt.s32.totalorder %s14, 1
      %s163 = scalar_select %p162, %s14, 1
      %s164 = smul.addr %s163, 8
      %s165 = scalar_lea.vmem %s3, %s164
      %v167 = vld [vmem:[%s161] sm:$0xf]
      %v168 = vld [vmem:[%s1] sm:$0xf]
      %v169 = vld [vmem:[%s1 + $0x4] sm:$0x1]
      %v170 = vld [vmem:[%s2] sm:$0x1]
      %v172 = vperm.slane %v170, 0
      %v176 = vunpack.c.l.b16 %v168
      %v177 = vunpack.c.l.b16 %v169
      %v178 = vpack.c.b16 %v177, %v176
      %vm179 = vcmask 80896
      %v181 = vsel %vm179, %v167, 0
      %vm183 = vcmask 1044480
      %v185 = vsel %vm183, %v178, 0
      %187 = vmatpush.bf16.msra.mxu0 0
      %188 = vmatpush.bf16.msra.mxu0 0
      %189 = vmatpush.bf16.msra.mxu0 0
      %190 = vmatpush.bf16.msra.mxu0 0
      %191 = vmatpush.bf16.msra.mxu0 0
      %192 = vmatpush.bf16.msra.mxu0 0
      %193 = vmatpush.bf16.msra.mxu0 0
      %194 = vmatpush.bf16.msra.mxu0 %v185
      %195 = vmatmul.bf16.gmra.mxu0 %v181
      %v196 = vpop.f32.mrf.mxu0
      %v197 = vadd.f32 %v172, %v196
      %v198 = vpop.f32.mrf.mxu0
      %199 = vdwg.mxu0
      %200 = vst.msk [vmem:[%s165] sm:$0xff] %vm179, %v197
      %p201 = scmp.lt.s32.totalorder %s14, 1
      %s202 = scalar_select %p201, %s14, 1
      %s203 = smul.addr %s202, 8
      %s204 = scalar_lea.vmem %s3, %s203
      // Predicated region
      $region33: #{transformer_vae_forward.9} parent=31 // pred_check
        %p205 = pneg %p100
      $region34: #{transformer_vae_forward.9} parent=31 // pred_check_branch
        %207 = sbr.rel (%p205) target = $region36
      $region35: #{transformer_vae_forward.9} parent=31 // pred_region
        _
      $region36: #{transformer_vae_forward.9} parent=31 // pred_fallthru
        _
    $region32: #{transformer_vae_forward.9} parent=5 // pred_fallthru
      _
    %p208 = scmp.le.s32.totalorder 2, %s9
    // Predicated region
    $region37: #{transformer_vae_forward.9} parent=5 // pred_check
      %p209 = pneg %p208
    $region38: #{transformer_vae_forward.9} parent=5 // pred_check_branch
      %211 = sbr.rel (%p209) target = $region40
    $region39: #{transformer_vae_forward.9} parent=5 // pred_region
      %s212 = ssub.s32 %s9, 2
      // Predicated region
      $region41: #{transformer_vae_forward.9} parent=39 // pred_check
        %p213 = pneg %p106
      $region42: #{transformer_vae_forward.9} parent=39 // pred_check_branch
        %215 = sbr.rel (%p213) target = $region44
      $region43: #{transformer_vae_forward.9} parent=39 // pred_region
        %p216 = scmp.lt.s32.totalorder %s15, 1
        %s217 = scalar_select %p216, %s15, 1
        %s218 = smul.addr %s217, 8
        %s219 = scalar_lea.vmem %s3, %s218
      $region44: #{transformer_vae_forward.9} parent=39 // pred_fallthru
        _
    $region40: #{transformer_vae_forward.9} parent=5 // pred_fallthru
      _
  $region6: #{transformer_vae_forward.9} parent=0 // loop_footer
    %s13 = sadd.s32 1, %s9
  $region7: #{transformer_vae_forward.9} parent=0 // loop_footer_branch
    %8 = sbr.rel target = $region3
  $region8: #{transformer_vae_forward.9} parent=0 // loop_exit
    _

// kernel: transformer_vae_forward.8
$region0: #{transformer_vae_forward.8}
  #allocation0 [shape = 'u32[]', space=smem, size = 0x4, offset = 0x4, fixed_abs, tag = 'smem constant byte address 0x4 - core index']
  #allocation1 [shape = 'u32[72,128]{1,0:T(1,128)}', space=vmem, size = 0x9000, scoped, tag = 'internal scratch']
  #allocation2 [shape = 'f32[8,10]{1,0:T(8,128)}', space=vmem, size = 0x1000, scoped, tag = 'scratch operand']
  %s0 = inlined_call_operand.vmem [shape: bf16[2,1,10], index: 0, kind: input, shape index: {}]
  %s1 = inlined_call_operand.vmem [shape: bf16[2,8,10], index: 1, kind: input, shape index: {}]
  %s2 = inlined_call_operand.vmem [shape: bf16[2,10,30], index: 2, kind: input, shape index: {}]
  %s3 = inlined_call_operand.vmem [shape: bf16[2,10,10], index: 3, kind: input, shape index: {}]
  %s4 = inlined_call_operand.vmem [shape: bf16[2,10,10], index: 4, kind: input, shape index: {}]
  %s5 = inlined_call_operand.vmem [shape: bf16[2,10,20], index: 5, kind: input, shape index: {}]
  %s6 = inlined_call_operand.vmem [shape: bf16[2,10,10], index: 6, kind: input, shape index: {}]
  %s7 = inlined_call_operand.vmem [shape: bf16[2,10,2048], index: 7, kind: input, shape index: {}]
  %s8 = inlined_call_operand.vmem [shape: bf16[2,2048,10], index: 8, kind: input, shape index: {}]
  %s9 = inlined_call_operand.vmem [shape: f32[2,15,10], index: 9, kind: input, shape index: {}]
  %s10 = inlined_call_operand.vmem [shape: f32[2,1,2048], index: 10, kind: input, shape index: {}]
  %s11 = inlined_call_operand.vmem [shape: bf16[2,8,10], index: 11, kind: output, shape index: {}]
  %s12 = sld [smem:[#allocation0]]
  $region85: #{transformer_vae_forward.8} parent=0
    _
  %s14 = ssub.s32 1, %s12
  %s15 = scalar_select 0, %s14, %s12
  loop: start=0, step=1, limit=6
  $region2: #{transformer_vae_forward.8} parent=0 // loop_pre_header
    _
  $region3: #{transformer_vae_forward.8} parent=0 // loop_header
    %s17 = sphi 0, %s21
    %p18 = scmp.ge.s32.totalorder %s17, 6
    %s24 = sphi 0, %s36
    %s25 = sphi 0, %s32
    %s26 = sphi 0, %s24
    %s27 = sphi 0, %s25
    %s28 = sphi 0, %s26
    %s29 = sphi 0, %s27
    %s39 = sphi 0, %s41
    %s42 = sphi 0, %s39
    %s43 = sphi 0, %s42
    %s59 = sphi 0, %s43
    %s65 = sphi 0, %s67
    %s68 = sphi 0, %s65
    %s69 = sphi 0, %s68
    %s85 = sphi 0, %s69
    %s91 = sphi 0, %s93
    %s94 = sphi 0, %s91
    %s95 = sphi 0, %s94
    %s111 = sphi 0, %s95
    %s117 = sphi 0, %s119
    %s120 = sphi 0, %s117
    %s121 = sphi 0, %s120
    %s137 = sphi 0, %s121
    %s143 = sphi 0, %s145
    %s146 = sphi 0, %s143
    %s147 = sphi 0, %s146
    %s163 = sphi 0, %s147
    %s169 = sphi 0, %s171
    %s172 = sphi 0, %s169
    %s173 = sphi 0, %s172
    %s189 = sphi 0, %s173
    %s195 = sphi 0, %s197
    %s198 = sphi 0, %s195
    %s199 = sphi 0, %s198
    %s215 = sphi 0, %s199
    %s221 = sphi 0, %s223
    %s224 = sphi 0, %s221
    %s225 = sphi 0, %s224
    %s241 = sphi 0, %s225
    %s247 = sphi 0, %s249
    %s250 = sphi 0, %s247
    %s251 = sphi 0, %s250
    %s267 = sphi 0, %s251
    %s273 = sphi 0, %s275
    %s276 = sphi 0, %s273
    %s277 = sphi 0, %s276
    %s293 = sphi 0, %s277
    %s299 = sphi 0, %s301
    %s302 = sphi 0, %s299
    %s303 = sphi 0, %s302
    %s319 = sphi 0, %s303
    %s325 = sphi 0, %s327
    %s328 = sphi 0, %s325
    %s329 = sphi 0, %s328
    %s345 = sphi 0, %s329
  $region4: #{transformer_vae_forward.8} parent=0 // loop_header_branch
    %20 = sbr.rel (%p18) target = $region8
  $region5: #{transformer_vae_forward.8} parent=0 // loop_body
    %s22 = ssub.s32 %s17, 1
    %s23 = ssub.s32 %s17, 2
    %s30 = sadd.s32 1, %s25
    %p31 = scmp.ge.s32.totalorder %s30, 2
    %s32 = scalar_select %p31, 0, %s30
    %s33 = sadd.s32 1, %s24
    %s34 = scalar_select %p31, %s33, %s24
    %p35 = scmp.ge.s32.totalorder %s34, 2
    %s36 = scalar_select %p35, 0, %s34
    %s37 = ssub.s32 %s24, %s36
    %p38 = scmp.eq.s32.totalorder %s37, 0
    %s40 = sadd.s32 %s39, 1
    %s41 = scalar_select %p38, %s39, %s40
    %p44 = pneg %p38
    %p45 = scmp.eq.s32.totalorder %s17, 3
    %p46 = por %p44, %p45
    %p47 = scmp.ne.s32.totalorder %s39, %s42
    %p48 = scmp.eq.s32.totalorder %s17, 0
    %p49 = por %p47, %p48
    %p50 = scmp.ne.s32.totalorder %s39, %s42
    %p51 = scmp.eq.s32.totalorder %s22, 3
    %p52 = por %p50, %p51
    %p53 = scmp.ne.s32.totalorder %s42, %s43
    %p54 = scmp.eq.s32.totalorder %s22, 0
    %p55 = por %p53, %p54
    %p56 = scmp.ne.s32.totalorder %s42, %s43
    %p57 = scmp.eq.s32.totalorder %s23, 3
    %p58 = por %p56, %p57
    %p60 = scmp.ne.s32.totalorder %s43, %s59
    %p61 = scmp.eq.s32.totalorder %s23, 0
    %p62 = por %p60, %p61
    %s63 = ssub.s32 %s24, %s36
    %p64 = scmp.eq.s32.totalorder %s63, 0
    %s66 = sadd.s32 %s65, 1
    %s67 = scalar_select %p64, %s65, %s66
    %p70 = pneg %p64
    %p71 = scmp.eq.s32.totalorder %s17, 3
    %p72 = por %p70, %p71
    %p73 = scmp.ne.s32.totalorder %s65, %s68
    %p74 = scmp.eq.s32.totalorder %s17, 0
    %p75 = por %p73, %p74
    %p76 = scmp.ne.s32.totalorder %s65, %s68
    %p77 = scmp.eq.s32.totalorder %s22, 3
    %p78 = por %p76, %p77
    %p79 = scmp.ne.s32.totalorder %s68, %s69
    %p80 = scmp.eq.s32.totalorder %s22, 0
    %p81 = por %p79, %p80
    %p82 = scmp.ne.s32.totalorder %s68, %s69
    %p83 = scmp.eq.s32.totalorder %s23, 3
    %p84 = por %p82, %p83
    %p86 = scmp.ne.s32.totalorder %s69, %s85
    %p87 = scmp.eq.s32.totalorder %s23, 0
    %p88 = por %p86, %p87
    %s89 = ssub.s32 %s25, %s32
    %p90 = scmp.eq.s32.totalorder %s89, 0
    %s92 = sadd.s32 %s91, 1
    %s93 = scalar_select %p90, %s91, %s92
    %p96 = pneg %p90
    %p97 = scmp.eq.s32.totalorder %s17, 3
    %p98 = por %p96, %p97
    %p99 = scmp.ne.s32.totalorder %s91, %s94
    %p100 = scmp.eq.s32.totalorder %s17, 0
    %p101 = por %p99, %p100
    %p102 = scmp.ne.s32.totalorder %s91, %s94
    %p103 = scmp.eq.s32.totalorder %s22, 3
    %p104 = por %p102, %p103
    %p105 = scmp.ne.s32.totalorder %s94, %s95
    %p106 = scmp.eq.s32.totalorder %s22, 0
    %p107 = por %p105, %p106
    %p108 = scmp.ne.s32.totalorder %s94, %s95
    %p109 = scmp.eq.s32.totalorder %s23, 3
    %p110 = por %p108, %p109
    %p112 = scmp.ne.s32.totalorder %s95, %s111
    %p113 = scmp.eq.s32.totalorder %s23, 0
    %p114 = por %p112, %p113
    %s115 = ssub.s32 %s25, %s32
    %p116 = scmp.eq.s32.totalorder %s115, 0
    %s118 = sadd.s32 %s117, 1
    %s119 = scalar_select %p116, %s117, %s118
    %p122 = pneg %p116
    %p123 = scmp.eq.s32.totalorder %s17, 3
    %p124 = por %p122, %p123
    %p125 = scmp.ne.s32.totalorder %s117, %s120
    %p126 = scmp.eq.s32.totalorder %s17, 0
    %p127 = por %p125, %p126
    %p128 = scmp.ne.s32.totalorder %s117, %s120
    %p129 = scmp.eq.s32.totalorder %s22, 3
    %p130 = por %p128, %p129
    %p131 = scmp.ne.s32.totalorder %s120, %s121
    %p132 = scmp.eq.s32.totalorder %s22, 0
    %p133 = por %p131, %p132
    %p134 = scmp.ne.s32.totalorder %s120, %s121
    %p135 = scmp.eq.s32.totalorder %s23, 3
    %p136 = por %p134, %p135
    %p138 = scmp.ne.s32.totalorder %s121, %s137
    %p139 = scmp.eq.s32.totalorder %s23, 0
    %p140 = por %p138, %p139
    %s141 = ssub.s32 %s25, %s32
    %p142 = scmp.eq.s32.totalorder %s141, 0
    %s144 = sadd.s32 %s143, 1
    %s145 = scalar_select %p142, %s143, %s144
    %p148 = pneg %p142
    %p149 = scmp.eq.s32.totalorder %s17, 3
    %p150 = por %p148, %p149
    %p151 = scmp.ne.s32.totalorder %s143, %s146
    %p152 = scmp.eq.s32.totalorder %s17, 0
    %p153 = por %p151, %p152
    %p154 = scmp.ne.s32.totalorder %s143, %s146
    %p155 = scmp.eq.s32.totalorder %s22, 3
    %p156 = por %p154, %p155
    %p157 = scmp.ne.s32.totalorder %s146, %s147
    %p158 = scmp.eq.s32.totalorder %s22, 0
    %p159 = por %p157, %p158
    %p160 = scmp.ne.s32.totalorder %s146, %s147
    %p161 = scmp.eq.s32.totalorder %s23, 3
    %p162 = por %p160, %p161
    %p164 = scmp.ne.s32.totalorder %s147, %s163
    %p165 = scmp.eq.s32.totalorder %s23, 0
    %p166 = por %p164, %p165
    %s167 = ssub.s32 %s25, %s32
    %p168 = scmp.eq.s32.totalorder %s167, 0
    %s170 = sadd.s32 %s169, 1
    %s171 = scalar_select %p168, %s169, %s170
    %p174 = pneg %p168
    %p175 = scmp.eq.s32.totalorder %s17, 3
    %p176 = por %p174, %p175
    %p177 = scmp.ne.s32.totalorder %s169, %s172
    %p178 = scmp.eq.s32.totalorder %s17, 0
    %p179 = por %p177, %p178
    %p180 = scmp.ne.s32.totalorder %s169, %s172
    %p181 = scmp.eq.s32.totalorder %s22, 3
    %p182 = por %p180, %p181
    %p183 = scmp.ne.s32.totalorder %s172, %s173
    %p184 = scmp.eq.s32.totalorder %s22, 0
    %p185 = por %p183, %p184
    %p186 = scmp.ne.s32.totalorder %s172, %s173
    %p187 = scmp.eq.s32.totalorder %s23, 3
    %p188 = por %p186, %p187
    %p190 = scmp.ne.s32.totalorder %s173, %s189
    %p191 = scmp.eq.s32.totalorder %s23, 0
    %p192 = por %p190, %p191
    %s193 = ssub.s32 %s25, %s32
    %p194 = scmp.eq.s32.totalorder %s193, 0
    %s196 = sadd.s32 %s195, 1
    %s197 = scalar_select %p194, %s195, %s196
    %p200 = pneg %p194
    %p201 = scmp.eq.s32.totalorder %s17, 3
    %p202 = por %p200, %p201
    %p203 = scmp.ne.s32.totalorder %s195, %s198
    %p204 = scmp.eq.s32.totalorder %s17, 0
    %p205 = por %p203, %p204
    %p206 = scmp.ne.s32.totalorder %s195, %s198
    %p207 = scmp.eq.s32.totalorder %s22, 3
    %p208 = por %p206, %p207
    %p209 = scmp.ne.s32.totalorder %s198, %s199
    %p210 = scmp.eq.s32.totalorder %s22, 0
    %p211 = por %p209, %p210
    %p212 = scmp.ne.s32.totalorder %s198, %s199
    %p213 = scmp.eq.s32.totalorder %s23, 3
    %p214 = por %p212, %p213
    %p216 = scmp.ne.s32.totalorder %s199, %s215
    %p217 = scmp.eq.s32.totalorder %s23, 0
    %p218 = por %p216, %p217
    %s219 = ssub.s32 %s25, %s32
    %p220 = scmp.eq.s32.totalorder %s219, 0
    %s222 = sadd.s32 %s221, 1
    %s223 = scalar_select %p220, %s221, %s222
    %p226 = pneg %p220
    %p227 = scmp.eq.s32.totalorder %s17, 3
    %p228 = por %p226, %p227
    %p229 = scmp.ne.s32.totalorder %s221, %s224
    %p230 = scmp.eq.s32.totalorder %s17, 0
    %p231 = por %p229, %p230
    %p232 = scmp.ne.s32.totalorder %s221, %s224
    %p233 = scmp.eq.s32.totalorder %s22, 3
    %p234 = por %p232, %p233
    %p235 = scmp.ne.s32.totalorder %s224, %s225
    %p236 = scmp.eq.s32.totalorder %s22, 0
    %p237 = por %p235, %p236
    %p238 = scmp.ne.s32.totalorder %s224, %s225
    %p239 = scmp.eq.s32.totalorder %s23, 3
    %p240 = por %p238, %p239
    %p242 = scmp.ne.s32.totalorder %s225, %s241
    %p243 = scmp.eq.s32.totalorder %s23, 0
    %p244 = por %p242, %p243
    %s245 = ssub.s32 %s25, %s32
    %p246 = scmp.eq.s32.totalorder %s245, 0
    %s248 = sadd.s32 %s247, 1
    %s249 = scalar_select %p246, %s247, %s248
    %p252 = pneg %p246
    %p253 = scmp.eq.s32.totalorder %s17, 3
    %p254 = por %p252, %p253
    %p255 = scmp.ne.s32.totalorder %s247, %s250
    %p256 = scmp.eq.s32.totalorder %s17, 0
    %p257 = por %p255, %p256
    %p258 = scmp.ne.s32.totalorder %s247, %s250
    %p259 = scmp.eq.s32.totalorder %s22, 3
    %p260 = por %p258, %p259
    %p261 = scmp.ne.s32.totalorder %s250, %s251
    %p262 = scmp.eq.s32.totalorder %s22, 0
    %p263 = por %p261, %p262
    %p264 = scmp.ne.s32.totalorder %s250, %s251
    %p265 = scmp.eq.s32.totalorder %s23, 3
    %p266 = por %p264, %p265
    %p268 = scmp.ne.s32.totalorder %s251, %s267
    %p269 = scmp.eq.s32.totalorder %s23, 0
    %p270 = por %p268, %p269
    %s271 = ssub.s32 %s25, %s32
    %p272 = scmp.eq.s32.totalorder %s271, 0
    %s274 = sadd.s32 %s273, 1
    %s275 = scalar_select %p272, %s273, %s274
    %p278 = pneg %p272
    %p279 = scmp.eq.s32.totalorder %s17, 3
    %p280 = por %p278, %p279
    %p281 = scmp.ne.s32.totalorder %s273, %s276
    %p282 = scmp.eq.s32.totalorder %s17, 0
    %p283 = por %p281, %p282
    %p284 = scmp.ne.s32.totalorder %s273, %s276
    %p285 = scmp.eq.s32.totalorder %s22, 3
    %p286 = por %p284, %p285
    %p287 = scmp.ne.s32.totalorder %s276, %s277
    %p288 = scmp.eq.s32.totalorder %s22, 0
    %p289 = por %p287, %p288
    %p290 = scmp.ne.s32.totalorder %s276, %s277
    %p291 = scmp.eq.s32.totalorder %s23, 3
    %p292 = por %p290, %p291
    %p294 = scmp.ne.s32.totalorder %s277, %s293
    %p295 = scmp.eq.s32.totalorder %s23, 0
    %p296 = por %p294, %p295
    %s297 = ssub.s32 %s25, %s32
    %p298 = scmp.eq.s32.totalorder %s297, 0
    %s300 = sadd.s32 %s299, 1
    %s301 = scalar_select %p298, %s299, %s300
    %p304 = pneg %p298
    %p305 = scmp.eq.s32.totalorder %s17, 3
    %p306 = por %p304, %p305
    %p307 = scmp.ne.s32.totalorder %s299, %s302
    %p308 = scmp.eq.s32.totalorder %s17, 0
    %p309 = por %p307, %p308
    %p310 = scmp.ne.s32.totalorder %s299, %s302
    %p311 = scmp.eq.s32.totalorder %s22, 3
    %p312 = por %p310, %p311
    %p313 = scmp.ne.s32.totalorder %s302, %s303
    %p314 = scmp.eq.s32.totalorder %s22, 0
    %p315 = por %p313, %p314
    %p316 = scmp.ne.s32.totalorder %s302, %s303
    %p317 = scmp.eq.s32.totalorder %s23, 3
    %p318 = por %p316, %p317
    %p320 = scmp.ne.s32.totalorder %s303, %s319
    %p321 = scmp.eq.s32.totalorder %s23, 0
    %p322 = por %p320, %p321
    %s323 = ssub.s32 %s24, %s36
    %p324 = scmp.eq.s32.totalorder %s323, 0
    %s326 = sadd.s32 %s325, 1
    %s327 = scalar_select %p324, %s325, %s326
    %p330 = pneg %p324
    %p331 = scmp.eq.s32.totalorder %s17, 3
    %p332 = por %p330, %p331
    %p333 = scmp.ne.s32.totalorder %s325, %s328
    %p334 = scmp.eq.s32.totalorder %s17, 0
    %p335 = por %p333, %p334
    %p336 = scmp.ne.s32.totalorder %s325, %s328
    %p337 = scmp.eq.s32.totalorder %s22, 3
    %p338 = por %p336, %p337
    %p339 = scmp.ne.s32.totalorder %s328, %s329
    %p340 = scmp.eq.s32.totalorder %s22, 0
    %p341 = por %p339, %p340
    %p342 = scmp.ne.s32.totalorder %s328, %s329
    %p343 = scmp.eq.s32.totalorder %s23, 3
    %p344 = por %p342, %p343
    %p346 = scmp.ne.s32.totalorder %s329, %s345
    %p347 = scmp.eq.s32.totalorder %s23, 0
    %p348 = por %p346, %p347
    %p349 = scmp.le.s32.totalorder 1, %s17
    %p350 = scmp.lt.s32.totalorder %s17, 5
    %p351 = pnand %p349, %p350
    %p352 = pneg %p351
    // Predicated region
    $region9: #{transformer_vae_forward.8} parent=5 // pred_check
      _
    $region10: #{transformer_vae_forward.8} parent=5 // pred_check_branch
      %354 = sbr.rel (%p351) target = $region12
    $region11: #{transformer_vae_forward.8} parent=5 // pred_region
      %s355 = ssub.s32 %s17, 1
    $region12: #{transformer_vae_forward.8} parent=5 // pred_fallthru
      _
    %p356 = scmp.lt.s32.totalorder %s17, 4
    // Predicated region
    $region13: #{transformer_vae_forward.8} parent=5 // pred_check
      %p357 = pneg %p356
    $region14: #{transformer_vae_forward.8} parent=5 // pred_check_branch
      %359 = sbr.rel (%p357) target = $region16
    $region15: #{transformer_vae_forward.8} parent=5 // pred_region
      // Predicated region
      $region17: #{transformer_vae_forward.8} parent=15 // pred_check
        %p360 = pneg %p49
      $region18: #{transformer_vae_forward.8} parent=15 // pred_check_branch
        %362 = sbr.rel (%p360) target = $region20
      $region19: #{transformer_vae_forward.8} parent=15 // pred_region
        %p363 = scmp.lt.s32.totalorder %s24, 1
        %s364 = scalar_select %p363, %s24, 1
        %s365 = scalar_lea.vmem %s0, %s364
      $region20: #{transformer_vae_forward.8} parent=15 // pred_fallthru
        _
      // Predicated region
      $region21: #{transformer_vae_forward.8} parent=15 // pred_check
        %p366 = pneg %p75
      $region22: #{transformer_vae_forward.8} parent=15 // pred_check_branch
        %368 = sbr.rel (%p366) target = $region24
      $region23: #{transformer_vae_forward.8} parent=15 // pred_region
        %p369 = scmp.lt.s32.totalorder %s24, 1
        %s370 = scalar_select %p369, %s24, 1
        %s371 = smul.addr %s370, 4
        %s372 = scalar_lea.vmem %s1, %s371
      $region24: #{transformer_vae_forward.8} parent=15 // pred_fallthru
        _
      // Predicated region
      $region25: #{transformer_vae_forward.8} parent=15 // pred_check
        %p373 = pneg %p101
      $region26: #{transformer_vae_forward.8} parent=15 // pred_check_branch
        %375 = sbr.rel (%p373) target = $region28
      $region27: #{transformer_vae_forward.8} parent=15 // pred_region
        %p376 = scmp.lt.s32.totalorder %s25, 1
        %s377 = scalar_select %p376, %s25, 1
        %s378 = smul.addr %s377, 2
        %s379 = smul.addr %s378, 4
        %s380 = scalar_lea.vmem %s2, %s379
      $region28: #{transformer_vae_forward.8} parent=15 // pred_fallthru
        _
      // Predicated region
      $region29: #{transformer_vae_forward.8} parent=15 // pred_check
        %p381 = pneg %p127
      $region30: #{transformer_vae_forward.8} parent=15 // pred_check_branch
        %383 = sbr.rel (%p381) target = $region32
      $region31: #{transformer_vae_forward.8} parent=15 // pred_region
        %p384 = scmp.lt.s32.totalorder %s25, 1
        %s385 = scalar_select %p384, %s25, 1
        %s386 = smul.addr %s385, 2
        %s387 = smul.addr %s386, 4
        %s388 = scalar_lea.vmem %s3, %s387
      $region32: #{transformer_vae_forward.8} parent=15 // pred_fallthru
        _
      // Predicated region
      $region33: #{transformer_vae_forward.8} parent=15 // pred_check
        %p389 = pneg %p153
      $region34: #{transformer_vae_forward.8} parent=15 // pred_check_branch
        %391 = sbr.rel (%p389) target = $region36
      $region35: #{transformer_vae_forward.8} parent=15 // pred_region
        %p392 = scmp.lt.s32.totalorder %s25, 1
        %s393 = scalar_select %p392, %s25, 1
        %s394 = smul.addr %s393, 2
        %s395 = smul.addr %s394, 4
        %s396 = scalar_lea.vmem %s4, %s395
      $region36: #{transformer_vae_forward.8} parent=15 // pred_fallthru
        _
      // Predicated region
      $region37: #{transformer_vae_forward.8} parent=15 // pred_check
        %p397 = pneg %p179
      $region38: #{transformer_vae_forward.8} parent=15 // pred_check_branch
        %399 = sbr.rel (%p397) target = $region40
      $region39: #{transformer_vae_forward.8} parent=15 // pred_region
        %p400 = scmp.lt.s32.totalorder %s25, 1
        %s401 = scalar_select %p400, %s25, 1
        %s402 = smul.addr %s401, 2
        %s403 = smul.addr %s402, 4
        %s404 = scalar_lea.vmem %s5, %s403
      $region40: #{transformer_vae_forward.8} parent=15 // pred_fallthru
        _
      // Predicated region
      $region41: #{transformer_vae_forward.8} parent=15 // pred_check
        %p405 = pneg %p205
      $region42: #{transformer_vae_forward.8} parent=15 // pred_check_branch
        %407 = sbr.rel (%p405) target = $region44
      $region43: #{transformer_vae_forward.8} parent=15 // pred_region
        %p408 = scmp.lt.s32.totalorder %s25, 1
        %s409 = scalar_select %p408, %s25, 1
        %s410 = smul.addr %s409, 2
        %s411 = smul.addr %s410, 4
        %s412 = scalar_lea.vmem %s6, %s411
      $region44: #{transformer_vae_forward.8} parent=15 // pred_fallthru
        _
      // Predicated region
      $region45: #{transformer_vae_forward.8} parent=15 // pred_check
        %p413 = pneg %p231
      $region46: #{transformer_vae_forward.8} parent=15 // pred_check_branch
        %415 = sbr.rel (%p413) target = $region48
      $region47: #{transformer_vae_forward.8} parent=15 // pred_region
        %p416 = scmp.lt.s32.totalorder %s25, 1
        %s417 = scalar_select %p416, %s25, 1
        %s418 = smul.addr %s417, 32
        %s419 = smul.addr %s418, 4
        %s420 = scalar_lea.vmem %s7, %s419
      $region48: #{transformer_vae_forward.8} parent=15 // pred_fallthru
        _
      // Predicated region
      $region49: #{transformer_vae_forward.8} parent=15 // pred_check
        %p421 = pneg %p257
      $region50: #{transformer_vae_forward.8} parent=15 // pred_check_branch
        %423 = sbr.rel (%p421) target = $region52
      $region51: #{transformer_vae_forward.8} parent=15 // pred_region
        %p424 = scmp.lt.s32.totalorder %s25, 1
        %s425 = scalar_select %p424, %s25, 1
        %s426 = smul.addr %s425, 256
        %s427 = smul.addr %s426, 4
        %s428 = scalar_lea.vmem %s8, %s427
      $region52: #{transformer_vae_forward.8} parent=15 // pred_fallthru
        _
      // Predicated region
      $region53: #{transformer_vae_forward.8} parent=15 // pred_check
        %p429 = pneg %p283
      $region54: #{transformer_vae_forward.8} parent=15 // pred_check_branch
        %431 = sbr.rel (%p429) target = $region56
      $region55: #{transformer_vae_forward.8} parent=15 // pred_region
        %p432 = scmp.lt.s32.totalorder %s25, 1
        %s433 = scalar_select %p432, %s25, 1
        %s434 = smul.addr %s433, 2
        %s435 = smul.addr %s434, 8
        %s436 = scalar_lea.vmem %s9, %s435
      $region56: #{transformer_vae_forward.8} parent=15 // pred_fallthru
        _
      // Predicated region
      $region57: #{transformer_vae_forward.8} parent=15 // pred_check
        %p437 = pneg %p309
      $region58: #{transformer_vae_forward.8} parent=15 // pred_check_branch
        %439 = sbr.rel (%p437) target = $region60
      $region59: #{transformer_vae_forward.8} parent=15 // pred_region
        %p440 = scmp.lt.s32.totalorder %s25, 1
        %s441 = scalar_select %p440, %s25, 1
        %s442 = smul.addr %s441, 16
        %s443 = scalar_lea.vmem %s10, %s442
      $region60: #{transformer_vae_forward.8} parent=15 // pred_fallthru
        _
    $region16: #{transformer_vae_forward.8} parent=5 // pred_fallthru
      _
    %p444 = scmp.le.s32.totalorder 1, %s17
    %p445 = scmp.lt.s32.totalorder %s17, 5
    %p446 = pnand %p444, %p445
    %p447 = pneg %p446
    // Predicated region
    $region61: #{transformer_vae_forward.8} parent=5 // pred_check
      _
    $region62: #{transformer_vae_forward.8} parent=5 // pred_check_branch
      %449 = sbr.rel (%p446) target = $region64
    $region63: #{transformer_vae_forward.8} parent=5 // pred_region
      %s450 = ssub.s32 %s17, 1
      %p451 = scmp.lt.s32.totalorder %s26, 1
      %s452 = scalar_select %p451, %s26, 1
      %s453 = scalar_lea.vmem %s0, %s452
      %p454 = pneg %p55
      %p455 = pneg %p52
      %p456 = scmp.lt.s32.totalorder %s26, 1
      %s457 = scalar_select %p456, %s26, 1
      %s458 = smul.addr %s457, 4
      %s459 = scalar_lea.vmem %s1, %s458
      %p460 = pneg %p81
      %p461 = pneg %p78
      %p462 = scmp.lt.s32.totalorder %s27, 1
      %s463 = scalar_select %p462, %s27, 1
      %s464 = smul.addr %s463, 2
      %s465 = smul.addr %s464, 4
      %s466 = scalar_lea.vmem %s2, %s465
      %p467 = pneg %p107
      %p468 = pneg %p104
      %p469 = scmp.lt.s32.totalorder %s27, 1
      %s470 = scalar_select %p469, %s27, 1
      %s471 = smul.addr %s470, 2
      %s472 = smul.addr %s471, 4
      %s473 = scalar_lea.vmem %s3, %s472
      %p474 = pneg %p133
      %p475 = pneg %p130
      %p476 = scmp.lt.s32.totalorder %s27, 1
      %s477 = scalar_select %p476, %s27, 1
      %s478 = smul.addr %s477, 2
      %s479 = smul.addr %s478, 4
      %s480 = scalar_lea.vmem %s4, %s479
      %p481 = pneg %p159
      %p482 = pneg %p156
      %p483 = scmp.lt.s32.totalorder %s27, 1
      %s484 = scalar_select %p483, %s27, 1
      %s485 = smul.addr %s484, 2
      %s486 = smul.addr %s485, 4
      %s487 = scalar_lea.vmem %s5, %s486
      %p488 = pneg %p185
      %p489 = pneg %p182
      %p490 = scmp.lt.s32.totalorder %s27, 1
      %s491 = scalar_select %p490, %s27, 1
      %s492 = smul.addr %s491, 2
      %s493 = smul.addr %s492, 4
      %s494 = scalar_lea.vmem %s6, %s493
      %p495 = pneg %p211
      %p496 = pneg %p208
      %p497 = scmp.lt.s32.totalorder %s27, 1
      %s498 = scalar_select %p497, %s27, 1
      %s499 = smul.addr %s498, 32
      %s500 = smul.addr %s499, 4
      %s501 = scalar_lea.vmem %s7, %s500
      %p502 = pneg %p237
      %p503 = pneg %p234
      %p504 = scmp.lt.s32.totalorder %s27, 1
      %s505 = scalar_select %p504, %s27, 1
      %s506 = smul.addr %s505, 256
      %s507 = smul.addr %s506, 4
      %s508 = scalar_lea.vmem %s8, %s507
      %p509 = pneg %p263
      %p510 = pneg %p260
      %p511 = scmp.lt.s32.totalorder %s27, 1
      %s512 = scalar_select %p511, %s27, 1
      %s513 = smul.addr %s512, 2
      %s514 = smul.addr %s513, 8
      %s515 = scalar_lea.vmem %s9, %s514
      %p516 = pneg %p289
      %p517 = pneg %p286
      %p518 = scmp.lt.s32.totalorder %s27, 1
      %s519 = scalar_select %p518, %s27, 1
      %s520 = smul.addr %s519, 16
      %s521 = scalar_lea.vmem %s10, %s520
      %p522 = pneg %p315
      %p523 = pneg %p312
      %p524 = pneg %p341
      %p525 = pneg %p338
      %p526 = scmp.lt.s32.totalorder %s26, 1
      %s527 = scalar_select %p526, %s26, 1
      %s528 = smul.addr %s527, 4
      %s529 = scalar_lea.vmem %s11, %s528
      %p530 = scmp.lt.s32.totalorder %s26, 1
      %s531 = scalar_select %p530, %s26, 1
      %s532 = scalar_lea.vmem %s0, %s531
      %p533 = scmp.lt.s32.totalorder %s26, 1
      %s534 = scalar_select %p533, %s26, 1
      %s535 = smul.addr %s534, 4
      %s536 = scalar_lea.vmem %s1, %s535
      %p537 = scmp.lt.s32.totalorder %s27, 1
      %s538 = scalar_select %p537, %s27, 1
      %s539 = smul.addr %s538, 2
      %s540 = smul.addr %s539, 4
      %s541 = scalar_lea.vmem %s2, %s540
      %p542 = scmp.lt.s32.totalorder %s27, 1
      %s543 = scalar_select %p542, %s27, 1
      %s544 = smul.addr %s543, 2
      %s545 = smul.addr %s544, 4
      %s546 = scalar_lea.vmem %s3, %s545
      %p547 = scmp.lt.s32.totalorder %s27, 1
      %s548 = scalar_select %p547, %s27, 1
      %s549 = smul.addr %s548, 2
      %s550 = smul.addr %s549, 4
      %s551 = scalar_lea.vmem %s4, %s550
      %p552 = scmp.lt.s32.totalorder %s27, 1
      %s553 = scalar_select %p552, %s27, 1
      %s554 = smul.addr %s553, 2
      %s555 = smul.addr %s554, 4
      %s556 = scalar_lea.vmem %s5, %s555
      %p557 = scmp.lt.s32.totalorder %s27, 1
      %s558 = scalar_select %p557, %s27, 1
      %s559 = smul.addr %s558, 2
      %s560 = smul.addr %s559, 4
      %s561 = scalar_lea.vmem %s6, %s560
      %p562 = scmp.lt.s32.totalorder %s27, 1
      %s563 = scalar_select %p562, %s27, 1
      %s564 = smul.addr %s563, 32
      %s565 = smul.addr %s564, 4
      %s566 = scalar_lea.vmem %s7, %s565
      %p567 = scmp.lt.s32.totalorder %s27, 1
      %s568 = scalar_select %p567, %s27, 1
      %s569 = smul.addr %s568, 256
      %s570 = smul.addr %s569, 4
      %s571 = scalar_lea.vmem %s8, %s570
      %p572 = scmp.lt.s32.totalorder %s27, 1
      %s573 = scalar_select %p572, %s27, 1
      %s574 = smul.addr %s573, 2
      %s575 = smul.addr %s574, 8
      %s576 = scalar_lea.vmem %s9, %s575
      %p577 = scmp.lt.s32.totalorder %s27, 1
      %s578 = scalar_select %p577, %s27, 1
      %s579 = smul.addr %s578, 16
      %s580 = scalar_lea.vmem %s10, %s579
      %p581 = scmp.lt.s32.totalorder %s26, 1
      %s582 = scalar_select %p581, %s26, 1
      %s583 = smul.addr %s582, 4
      %s584 = scalar_lea.vmem %s11, %s583
      %p586 = scmp.eq.s32.totalorder %s27, 0
      // Predicated region
      $region65: #{transformer_vae_forward.8} parent=63 // pred_check
        %p587 = pneg %p586
      $region66: #{transformer_vae_forward.8} parent=63 // pred_check_branch
        %589 = sbr.rel (%p587) target = $region68
      $region67: #{transformer_vae_forward.8} parent=63 // pred_region
        %v590 = vld [vmem:[%s532] sm:$0x1]
        %v591 = vunpack.c.l.bf16 %v590
        %v592 = vperm.slane %v591, 0
        %vm593 = vcmask 80896
        %594 = vst.msk [vmem:[#allocation2] sm:$0xff] %vm593, %v592
      $region68: #{transformer_vae_forward.8} parent=63 // pred_fallthru
        _
      %v595 = vld [vmem:[#allocation2] sm:$0xff]
      %v596 = vld [vmem:[%s576] sm:$0xff]
      %v597 = vld [vmem:[%s576 + $0x8] sm:$0x7f]
      %v598 = vld [vmem:[%s536] sm:$0xf]
      %v599 = vld [vmem:[%s541] sm:$0xf]
      %v600 = vld [vmem:[%s541 + $0x4] sm:$0x1]
      %v601 = vpack.c.bf16 %v595, %v595
      %v604 = vunpack.c.l.b16 %v599
      %v605 = vunpack.c.l.b16 %v600
      %v606 = vpack.c.b16 %v605, %v604
      %vm607 = vcmask 80896
      %v609 = vsel %vm607, %v601, 0
      %vm611 = vcmask 1044480
      %v613 = vsel %vm611, %v606, 0
      %615 = vmatpush.bf16.msra.mxu0 0
      %616 = vmatpush.bf16.msra.mxu0 0
      %617 = vmatpush.bf16.msra.mxu0 0
      %618 = vmatpush.bf16.msra.mxu0 0
      %619 = vmatpush.bf16.msra.mxu0 0
      %620 = vmatpush.bf16.msra.mxu0 0
      %621 = vmatpush.bf16.msra.mxu0 0
      %622 = vmatpush.bf16.msra.mxu0 %v613
      %623 = vmatmul.bf16.gmra.mxu0 %v609
      %v624 = vpop.f32.mrf.mxu0
      %v625 = vadd.f32 0.0, %v624
      %v626 = vpop.f32.mrf.mxu0
      %627 = vdwg.mxu0
      %v628 = vperm.slane %v596, 0
      %v629 = vadd.f32 %v625, %v628
      %v630 = vperm.slane %v596, 1
      %632 = vrot.lane.b32.xlu0 %v630, 10
      %v633 = vpop.permute.xlu0 %632
      %v635 = vadd.f32 %v625, %v633
      %v636 = vperm.slane %v596, 2
      %638 = vrot.lane.b32.xlu0 %v636, 20
      %v639 = vpop.permute.xlu0 %638
      %v641 = vadd.f32 %v625, %v639
      %v642 = vld [vmem:[%s546] sm:$0xf]
      %v643 = vld [vmem:[%s546 + $0x4] sm:$0x1]
      %v644 = vpack.c.bf16 %v629, %v629
      %v645 = vpack.c.bf16 %v635, %v635
      %v646 = vpack.c.bf16 %v641, %v641
      %648 = vrot.lane.b32.xlu0 %v645, 118
      %v649 = vpop.permute.xlu0 %648
      %vm650 = vcmask 39936
      %v652 = vsel %vm650, %v644, 0
      %v655 = vsel %vm650, %v649, 0
      %657 = vmatpush.bf16.xpose.msra.mxu0 0
      %658 = vmatpush.bf16.xpose.msra.mxu0 0
      %659 = vmatpush.bf16.xpose.msra.mxu0 0
      %660 = vmatpush.bf16.xpose.msra.mxu0 0
      %661 = vmatpush.bf16.xpose.msra.mxu0 0
      %662 = vmatpush.bf16.xpose.msra.mxu0 0
      %663 = vmatpush.bf16.xpose.msra.mxu0 0
      %664 = vmatpush.bf16.xpose.msra.mxu0 %v655
      %665 = vmatmul.bf16.gmra.mxu0 %v652
      %v666 = vpop.f32.mrf.mxu0
      %v667 = vadd.f32 0.0, %v666
      %v668 = vpop.f32.mrf.mxu0
      %669 = vdwg.mxu0
      %v670 = vmul.f32 %v667, 0.4472136
      %vm671 = vcmask 64512
      %v672 = vsel %vm671, %v670, -inf
      %673 = vmax.xlane.f32.xlu0 %v672
      %v674 = vpop.xlane.xlu0 %673
      %v675 = vsub.f32 %v670, %v674
      %v676 = vmul.f32 %v675, 1.442695
      %v677 = vpow.pop %v676
      %v678 = vsel %vm671, %v677, 0.0
      %679 = vadd.xlane.f32.xlu0 %v678
      %v680 = vpop.xlane.xlu0 %679
      %v681 = vrcp.pop %v680
      %v682 = vmul.f32 %v677, %v681
      %v683 = vpack.c.bf16 %v682, %v682
      %685 = vrot.lane.b32.xlu0 %v646, 108
      %v686 = vpop.permute.xlu0 %685
      %v688 = vsel %vm671, %v683, 0
      %vm690 = vcmask 1043456
      %v692 = vsel %vm690, %v686, 0
      %694 = vmatpush.bf16.msra.mxu0 0
      %695 = vmatpush.bf16.msra.mxu0 0
      %696 = vmatpush.bf16.msra.mxu0 0
      %697 = vmatpush.bf16.msra.mxu0 0
      %698 = vmatpush.bf16.msra.mxu0 0
      %699 = vmatpush.bf16.msra.mxu0 0
      %700 = vmatpush.bf16.msra.mxu0 0
      %701 = vmatpush.bf16.msra.mxu0 %v692
      %702 = vmatmul.bf16.gmra.mxu0 %v688
      %v703 = vpop.f32.mrf.mxu0
      %v704 = vadd.f32 0.0, %v703
      %v705 = vpop.f32.mrf.mxu0
      %706 = vdwg.mxu0
      %708 = vrot.lane.b32.xlu0 %v644, 123
      %v709 = vpop.permute.xlu0 %708
      %710 = vrot.lane.b32.xlu0 %v645, 113
      %v711 = vpop.permute.xlu0 %710
      %v713 = vsel %vm650, %v709, 0
      %v716 = vsel %vm650, %v711, 0
      %718 = vmatpush.bf16.xpose.msra.mxu0 0
      %719 = vmatpush.bf16.xpose.msra.mxu0 0
      %720 = vmatpush.bf16.xpose.msra.mxu0 0
      %721 = vmatpush.bf16.xpose.msra.mxu0 0
      %722 = vmatpush.bf16.xpose.msra.mxu0 0
      %723 = vmatpush.bf16.xpose.msra.mxu0 0
      %724 = vmatpush.bf16.xpose.msra.mxu0 0
      %725 = vmatpush.bf16.xpose.msra.mxu0 %v716
      %726 = vmatmul.bf16.gmra.mxu0 %v713
      %v727 = vpop.f32.mrf.mxu0
      %v728 = vadd.f32 0.0, %v727
      %v729 = vpop.f32.mrf.mxu0
      %730 = vdwg.mxu0
      %v731 = vmul.f32 %v728, 0.4472136
      %v732 = vsel %vm671, %v731, -inf
      %733 = vmax.xlane.f32.xlu0 %v732
      %v734 = vpop.xlane.xlu0 %733
      %v735 = vsub.f32 %v731, %v734
      %v736 = vmul.f32 %v735, 1.442695
      %v737 = vpow.pop %v736
      %v738 = vsel %vm671, %v737, 0.0
      %739 = vadd.xlane.f32.xlu0 %v738
      %v740 = vpop.xlane.xlu0 %739
      %v741 = vrcp.pop %v740
      %v742 = vmul.f32 %v737, %v741
      %v743 = vpack.c.bf16 %v742, %v742
      %744 = vrot.lane.b32.xlu0 %v646, 103
      %v745 = vpop.permute.xlu0 %744
      %v747 = vsel %vm671, %v743, 0
      %v750 = vsel %vm690, %v745, 0
      %752 = vmatpush.bf16.msra.mxu0 0
      %753 = vmatpush.bf16.msra.mxu0 0
      %754 = vmatpush.bf16.msra.mxu0 0
      %755 = vmatpush.bf16.msra.mxu0 0
      %756 = vmatpush.bf16.msra.mxu0 0
      %757 = vmatpush.bf16.msra.mxu0 0
      %758 = vmatpush.bf16.msra.mxu0 0
      %759 = vmatpush.bf16.msra.mxu0 %v750
      %760 = vmatmul.bf16.gmra.mxu0 %v747
      %v761 = vpop.f32.mrf.mxu0
      %v762 = vadd.f32 0.0, %v761
      %v763 = vpop.f32.mrf.mxu0
      %764 = vdwg.mxu0
      %766 = vrot.lane.b32.xlu0 %v762, 5
      %v767 = vpop.permute.xlu0 %766
      %v769 = vsel %vm650, %v704, %v767
      %v770 = vpack.c.bf16 %v769, %v769
      %v771 = vperm.slane %v596, 3
      %v774 = vunpack.c.l.b16 %v642
      %v775 = vunpack.c.l.b16 %v643
      %v776 = vpack.c.b16 %v775, %v774
      %v778 = vsel %vm607, %v770, 0
      %v781 = vsel %vm611, %v776, 0
      %783 = vmatpush.bf16.msra.mxu0 0
      %784 = vmatpush.bf16.msra.mxu0 0
      %785 = vmatpush.bf16.msra.mxu0 0
      %786 = vmatpush.bf16.msra.mxu0 0
      %787 = vmatpush.bf16.msra.mxu0 0
      %788 = vmatpush.bf16.msra.mxu0 0
      %789 = vmatpush.bf16.msra.mxu0 0
      %790 = vmatpush.bf16.msra.mxu0 %v781
      %791 = vmatmul.bf16.gmra.mxu0 %v778
      %v792 = vpop.f32.mrf.mxu0
      %v793 = vadd.f32 %v771, %v792
      %v794 = vpop.f32.mrf.mxu0
      %795 = vdwg.mxu0
      %v796 = vadd.f32 %v595, %v793
      %v797 = vsel %vm607, %v796, 0.0
      %798 = vadd.xlane.f32.xlu0 %v797
      %v799 = vpop.xlane.xlu0 %798
      %v800 = vrcp.pop 10.0
      %v801 = vmul.f32 10.0, %v800
      %v802 = vsub.f32 1.0, %v801
      %v803 = vmul.f32 %v800, %v802
      %v804 = vadd.f32 %v800, %v803
      %vm805 = vweird.f32 %v800
      %v806 = vsel %vm805, %v800, %v804
      %v807 = vmul.f32 %v799, %v806
      %v808 = vsub.f32 %v796, %v807
      %v809 = vmul.f32 %v808, %v808
      %v810 = vsel %vm607, %v809, 0.0
      %811 = vadd.xlane.f32.xlu0 %v810
      %v812 = vpop.xlane.xlu0 %811
      %v813 = vmul.f32 %v812, %v806
      %v814 = vadd.f32 %v813, 1e-05
      %v815 = vrsqrt.pop %v814
      %v816 = vmul.f32 %v815, %v814
      %v817 = vmul.f32 %v816, %v815
      %v818 = vmul.f32 0.5, %v817
      %v819 = vsub.f32 1.5, %v818
      %v820 = vmul.f32 %v815, %v819
      %vm821 = vweird.f32 %v814
      %vm822 = vweird.f32 %v815
      %vm823 = vmor %vm821, %vm822
      %v824 = vsel %vm823, %v815, %v820
      %v825 = vmul.f32 %v808, %v824
      %v826 = vperm.slane %v596, 4
      %v827 = vmul.f32 %v825, %v826
      %v828 = vperm.slane %v596, 5
      %v829 = vadd.f32 %v827, %v828
      %v830 = vld [vmem:[%s551] sm:$0xf]
      %v831 = vld [vmem:[%s551 + $0x4] sm:$0x1]
      %v832 = vpack.c.bf16 %v829, %v829
      %v833 = vperm.slane %v596, 6
      %v836 = vunpack.c.l.b16 %v830
      %v837 = vunpack.c.l.b16 %v831
      %v838 = vpack.c.b16 %v837, %v836
      %v840 = vsel %vm607, %v832, 0
      %v843 = vsel %vm611, %v838, 0
      %845 = vmatpush.bf16.msra.mxu0 0
      %846 = vmatpush.bf16.msra.mxu0 0
      %847 = vmatpush.bf16.msra.mxu0 0
      %848 = vmatpush.bf16.msra.mxu0 0
      %849 = vmatpush.bf16.msra.mxu0 0
      %850 = vmatpush.bf16.msra.mxu0 0
      %851 = vmatpush.bf16.msra.mxu0 0
      %852 = vmatpush.bf16.msra.mxu0 %v843
      %853 = vmatmul.bf16.gmra.mxu0 %v840
      %v854 = vpop.f32.mrf.mxu0
      %v855 = vadd.f32 %v833, %v854
      %v856 = vpop.f32.mrf.mxu0
      %857 = vdwg.mxu0
      %v858 = vld [vmem:[%s556] sm:$0xf]
      %v859 = vld [vmem:[%s556 + $0x4] sm:$0x1]
      %v862 = vunpack.c.l.b16 %v858
      %v863 = vunpack.c.l.b16 %v859
      %v864 = vpack.c.b16 %v863, %v862
      %v866 = vsel %vm607, %v598, 0
      %v869 = vsel %vm611, %v864, 0
      %871 = vmatpush.bf16.msra.mxu0 0
      %872 = vmatpush.bf16.msra.mxu0 0
      %873 = vmatpush.bf16.msra.mxu0 0
      %874 = vmatpush.bf16.msra.mxu0 0
      %875 = vmatpush.bf16.msra.mxu0 0
      %876 = vmatpush.bf16.msra.mxu0 0
      %877 = vmatpush.bf16.msra.mxu0 0
      %878 = vmatpush.bf16.msra.mxu0 %v869
      %879 = vmatmul.bf16.gmra.mxu0 %v866
      %v880 = vpop.f32.mrf.mxu0
      %v881 = vadd.f32 0.0, %v880
      %v882 = vpop.f32.mrf.mxu0
      %883 = vdwg.mxu0
      %v884 = vperm.slane %v596, 7
      %v885 = vadd.f32 %v881, %v884
      %v886 = vperm.slane %v597, 0
      %888 = vrot.lane.b32.xlu0 %v886, 10
      %v889 = vpop.permute.xlu0 %888
      %v891 = vadd.f32 %v881, %v889
      %v892 = vld [vmem:[%s561] sm:$0xf]
      %v893 = vld [vmem:[%s561 + $0x4] sm:$0x1]
      %v894 = vpack.c.bf16 %v855, %v855
      %v895 = vpack.c.bf16 %v885, %v885
      %v896 = vpack.c.bf16 %v891, %v891
      %v898 = vsel %vm650, %v894, 0
      %v901 = vsel %vm650, %v895, 0
      %903 = vmatpush.bf16.xpose.msra.mxu0 0
      %904 = vmatpush.bf16.xpose.msra.mxu0 0
      %905 = vmatpush.bf16.xpose.msra.mxu0 0
      %906 = vmatpush.bf16.xpose.msra.mxu0 0
      %907 = vmatpush.bf16.xpose.msra.mxu0 0
      %908 = vmatpush.bf16.xpose.msra.mxu0 0
      %909 = vmatpush.bf16.xpose.msra.mxu0 0
      %910 = vmatpush.bf16.xpose.msra.mxu0 %v901
      %911 = vmatmul.bf16.gmra.mxu0 %v898
      %v912 = vpop.f32.mrf.mxu0
      %v913 = vadd.f32 0.0, %v912
      %v914 = vpop.f32.mrf.mxu0
      %915 = vdwg.mxu0
      %v916 = vmul.f32 %v913, 0.4472136
      %v917 = vsel %vm671, %v916, -inf
      %918 = vmax.xlane.f32.xlu0 %v917
      %v919 = vpop.xlane.xlu0 %918
      %v920 = vsub.f32 %v916, %v919
      %v921 = vmul.f32 %v920, 1.442695
      %v922 = vpow.pop %v921
      %v923 = vsel %vm671, %v922, 0.0
      %924 = vadd.xlane.f32.xlu0 %v923
      %v925 = vpop.xlane.xlu0 %924
      %v926 = vrcp.pop %v925
      %v927 = vmul.f32 %v922, %v926
      %v928 = vpack.c.bf16 %v927, %v927
      %930 = vrot.lane.b32.xlu0 %v896, 118
      %v931 = vpop.permute.xlu0 %930
      %v933 = vsel %vm671, %v928, 0
      %v936 = vsel %vm690, %v931, 0
      %938 = vmatpush.bf16.msra.mxu0 0
      %939 = vmatpush.bf16.msra.mxu0 0
      %940 = vmatpush.bf16.msra.mxu0 0
      %941 = vmatpush.bf16.msra.mxu0 0
      %942 = vmatpush.bf16.msra.mxu0 0
      %943 = vmatpush.bf16.msra.mxu0 0
      %944 = vmatpush.bf16.msra.mxu0 0
      %945 = vmatpush.bf16.msra.mxu0 %v936
      %946 = vmatmul.bf16.gmra.mxu0 %v933
      %v947 = vpop.f32.mrf.mxu0
      %v948 = vadd.f32 0.0, %v947
      %v949 = vpop.f32.mrf.mxu0
      %950 = vdwg.mxu0
      %952 = vrot.lane.b32.xlu0 %v894, 123
      %v953 = vpop.permute.xlu0 %952
      %955 = vrot.lane.b32.xlu0 %v895, 123
      %v956 = vpop.permute.xlu0 %955
      %v958 = vsel %vm650, %v953, 0
      %v961 = vsel %vm650, %v956, 0
      %963 = vmatpush.bf16.xpose.msra.mxu0 0
      %964 = vmatpush.bf16.xpose.msra.mxu0 0
      %965 = vmatpush.bf16.xpose.msra.mxu0 0
      %966 = vmatpush.bf16.xpose.msra.mxu0 0
      %967 = vmatpush.bf16.xpose.msra.mxu0 0
      %968 = vmatpush.bf16.xpose.msra.mxu0 0
      %969 = vmatpush.bf16.xpose.msra.mxu0 0
      %970 = vmatpush.bf16.xpose.msra.mxu0 %v961
      %971 = vmatmul.bf16.gmra.mxu0 %v958
      %v972 = vpop.f32.mrf.mxu0
      %v973 = vadd.f32 0.0, %v972
      %v974 = vpop.f32.mrf.mxu0
      %975 = vdwg.mxu0
      %v976 = vmul.f32 %v973, 0.4472136
      %v977 = vsel %vm671, %v976, -inf
      %978 = vmax.xlane.f32.xlu0 %v977
      %v979 = vpop.xlane.xlu0 %978
      %v980 = vsub.f32 %v976, %v979
      %v981 = vmul.f32 %v980, 1.442695
      %v982 = vpow.pop %v981
      %v983 = vsel %vm671, %v982, 0.0
      %984 = vadd.xlane.f32.xlu0 %v983
      %v985 = vpop.xlane.xlu0 %984
      %v986 = vrcp.pop %v985
      %v987 = vmul.f32 %v982, %v986
      %v988 = vpack.c.bf16 %v987, %v987
      %989 = vrot.lane.b32.xlu0 %v896, 113
      %v990 = vpop.permute.xlu0 %989
      %v992 = vsel %vm671, %v988, 0
      %v995 = vsel %vm690, %v990, 0
      %997 = vmatpush.bf16.msra.mxu0 0
      %998 = vmatpush.bf16.msra.mxu0 0
      %999 = vmatpush.bf16.msra.mxu0 0
      %1000 = vmatpush.bf16.msra.mxu0 0
      %1001 = vmatpush.bf16.msra.mxu0 0
      %1002 = vmatpush.bf16.msra.mxu0 0
      %1003 = vmatpush.bf16.msra.mxu0 0
      %1004 = vmatpush.bf16.msra.mxu0 %v995
      %1005 = vmatmul.bf16.gmra.mxu0 %v992
      %v1006 = vpop.f32.mrf.mxu0
      %v1007 = vadd.f32 0.0, %v1006
      %v1008 = vpop.f32.mrf.mxu0
      %1009 = vdwg.mxu0
      %1011 = vrot.lane.b32.xlu0 %v1007, 5
      %v1012 = vpop.permute.xlu0 %1011
      %v1014 = vsel %vm650, %v948, %v1012
      %v1015 = vpack.c.bf16 %v1014, %v1014
      %v1016 = vperm.slane %v597, 1
      %v1019 = vunpack.c.l.b16 %v892
      %v1020 = vunpack.c.l.b16 %v893
      %v1021 = vpack.c.b16 %v1020, %v1019
      %v1023 = vsel %vm607, %v1015, 0
      %v1026 = vsel %vm611, %v1021, 0
      %1028 = vmatpush.bf16.msra.mxu0 0
      %1029 = vmatpush.bf16.msra.mxu0 0
      %1030 = vmatpush.bf16.msra.mxu0 0
      %1031 = vmatpush.bf16.msra.mxu0 0
      %1032 = vmatpush.bf16.msra.mxu0 0
      %1033 = vmatpush.bf16.msra.mxu0 0
      %1034 = vmatpush.bf16.msra.mxu0 0
      %1035 = vmatpush.bf16.msra.mxu0 %v1026
      %1036 = vmatmul.bf16.gmra.mxu0 %v1023
      %v1037 = vpop.f32.mrf.mxu0
      %v1038 = vadd.f32 %v1016, %v1037
      %v1039 = vpop.f32.mrf.mxu0
      %1040 = vdwg.mxu0
      %v1041 = vadd.f32 %v829, %v1038
      %v1042 = vsel %vm607, %v1041, 0.0
      %1043 = vadd.xlane.f32.xlu0 %v1042
      %v1044 = vpop.xlane.xlu0 %1043
      %v1045 = vmul.f32 %v1044, %v806
      %v1046 = vsub.f32 %v1041, %v1045
      %v1047 = vmul.f32 %v1046, %v1046
      %v1048 = vsel %vm607, %v1047, 0.0
      %1049 = vadd.xlane.f32.xlu0 %v1048
      %v1050 = vpop.xlane.xlu0 %1049
      %v1051 = vmul.f32 %v1050, %v806
      %v1052 = vadd.f32 %v1051, 1e-05
      %v1053 = vrsqrt.pop %v1052
      %v1054 = vmul.f32 %v1053, %v1052
      %v1055 = vmul.f32 %v1054, %v1053
      %v1056 = vmul.f32 0.5, %v1055
      %v1057 = vsub.f32 1.5, %v1056
      %v1058 = vmul.f32 %v1053, %v1057
      %vm1059 = vweird.f32 %v1052
      %vm1060 = vweird.f32 %v1053
      %vm1061 = vmor %vm1059, %vm1060
      %v1062 = vsel %vm1061, %v1053, %v1058
      %v1063 = vmul.f32 %v1046, %v1062
      %v1064 = vperm.slane %v597, 2
      %v1065 = vmul.f32 %v1063, %v1064
      %v1066 = vperm.slane %v597, 3
      %v1067 = vadd.f32 %v1065, %v1066
      %v1068 = vld [vmem:[%s566] sm:$0xff]
      %v1069 = vld [vmem:[%s566 + $0x8] sm:$0xff]
      %v1070 = vld [vmem:[%s566 + $0x10] sm:$0xff]
      %v1071 = vld [vmem:[%s566 + $0x18] sm:$0xff]
      %v1072 = vld [vmem:[%s566 + $0x20] sm:$0xff]
      %v1073 = vld [vmem:[%s566 + $0x28] sm:$0xff]
      %v1074 = vld [vmem:[%s566 + $0x30] sm:$0xff]
      %v1075 = vld [vmem:[%s566 + $0x38] sm:$0xff]
      %v1076 = vld [vmem:[%s566 + $0x40] sm:$0x11]
      %v1077 = vld [vmem:[%s566 + $0x48] sm:$0x11]
      %v1078 = vld [vmem:[%s566 + $0x50] sm:$0x11]
      %v1079 = vld [vmem:[%s566 + $0x58] sm:$0x11]
      %v1080 = vld [vmem:[%s566 + $0x60] sm:$0x11]
      %v1081 = vld [vmem:[%s566 + $0x68] sm:$0x11]
      %v1082 = vld [vmem:[%s566 + $0x70] sm:$0x11]
      %v1083 = vld [vmem:[%s566 + $0x78] sm:$0x11]
      %v1084 = vpack.c.bf16 %v1067, %v1067
      %v1085 = vld [vmem:[%s580] sm:$0xff]
      %v1086 = vld [vmem:[%s580 + $0x8] sm:$0xff]
      %v1089 = vperm.slane %v1085, 0
      %v1090 = vperm.slane %v1085, 1
      %v1091 = vperm.slane %v1085, 2
      %v1092 = vperm.slane %v1085, 3
      %v1093 = vperm.slane %v1085, 4
      %v1094 = vperm.slane %v1085, 5
      %v1095 = vperm.slane %v1085, 6
      %v1096 = vperm.slane %v1085, 7
      %v1097 = vperm.slane %v1086, 0
      %v1098 = vperm.slane %v1086, 1
      %v1099 = vperm.slane %v1086, 2
      %v1100 = vperm.slane %v1086, 3
      %v1101 = vperm.slane %v1086, 4
      %v1102 = vperm.slane %v1086, 5
      %v1103 = vperm.slane %v1086, 6
      %v1104 = vperm.slane %v1086, 7
      %v1137 = vunpack.c.l.b16 %v1068
      %v1138 = vunpack.c.h.b16 %v1068
      %v1139 = vunpack.c.l.b16 %v1069
      %v1140 = vunpack.c.h.b16 %v1069
      %v1141 = vunpack.c.l.b16 %v1070
      %v1142 = vunpack.c.h.b16 %v1070
      %v1143 = vunpack.c.l.b16 %v1071
      %v1144 = vunpack.c.h.b16 %v1071
      %v1145 = vunpack.c.l.b16 %v1072
      %v1146 = vunpack.c.h.b16 %v1072
      %v1147 = vunpack.c.l.b16 %v1073
      %v1148 = vunpack.c.h.b16 %v1073
      %v1149 = vunpack.c.l.b16 %v1074
      %v1150 = vunpack.c.h.b16 %v1074
      %v1151 = vunpack.c.l.b16 %v1075
      %v1152 = vunpack.c.h.b16 %v1075
      %v1153 = vunpack.c.l.b16 %v1076
      %v1154 = vunpack.c.h.b16 %v1076
      %v1155 = vunpack.c.l.b16 %v1077
      %v1156 = vunpack.c.h.b16 %v1077
      %v1157 = vunpack.c.l.b16 %v1078
      %v1158 = vunpack.c.h.b16 %v1078
      %v1159 = vunpack.c.l.b16 %v1079
      %v1160 = vunpack.c.h.b16 %v1079
      %v1161 = vunpack.c.l.b16 %v1080
      %v1162 = vunpack.c.h.b16 %v1080
      %v1163 = vunpack.c.l.b16 %v1081
      %v1164 = vunpack.c.h.b16 %v1081
      %v1165 = vunpack.c.l.b16 %v1082
      %v1166 = vunpack.c.h.b16 %v1082
      %v1167 = vunpack.c.l.b16 %v1083
      %v1168 = vunpack.c.h.b16 %v1083
      %v1169 = vpack.c.b16 %v1153, %v1137
      %v1170 = vpack.c.b16 %v1154, %v1138
      %v1171 = vpack.c.b16 %v1155, %v1139
      %v1172 = vpack.c.b16 %v1156, %v1140
      %v1173 = vpack.c.b16 %v1157, %v1141
      %v1174 = vpack.c.b16 %v1158, %v1142
      %v1175 = vpack.c.b16 %v1159, %v1143
      %v1176 = vpack.c.b16 %v1160, %v1144
      %v1177 = vpack.c.b16 %v1161, %v1145
      %v1178 = vpack.c.b16 %v1162, %v1146
      %v1179 = vpack.c.b16 %v1163, %v1147
      %v1180 = vpack.c.b16 %v1164, %v1148
      %v1181 = vpack.c.b16 %v1165, %v1149
      %v1182 = vpack.c.b16 %v1166, %v1150
      %v1183 = vpack.c.b16 %v1167, %v1151
      %v1184 = vpack.c.b16 %v1168, %v1152
      %v1186 = vsel %vm607, %v1084, 0
      %v1189 = vsel %vm611, %v1169, 0
      %v1192 = vsel %vm611, %v1170, 0
      %v1195 = vsel %vm611, %v1171, 0
      %v1198 = vsel %vm611, %v1172, 0
      %v1201 = vsel %vm611, %v1173, 0
      %v1204 = vsel %vm611, %v1174, 0
      %v1207 = vsel %vm611, %v1175, 0
      %v1210 = vsel %vm611, %v1176, 0
      %v1213 = vsel %vm611, %v1177, 0
      %v1216 = vsel %vm611, %v1178, 0
      %v1219 = vsel %vm611, %v1179, 0
      %v1222 = vsel %vm611, %v1180, 0
      %v1225 = vsel %vm611, %v1181, 0
      %v1228 = vsel %vm611, %v1182, 0
      %v1231 = vsel %vm611, %v1183, 0
      %v1234 = vsel %vm611, %v1184, 0
      %1236 = vmatpush.bf16.msra.mxu0 0
      %1237 = vmatpush.bf16.msra.mxu0 0
      %1238 = vmatpush.bf16.msra.mxu0 0
      %1239 = vmatpush.bf16.msra.mxu0 0
      %1240 = vmatpush.bf16.msra.mxu0 0
      %1241 = vmatpush.bf16.msra.mxu0 0
      %1242 = vmatpush.bf16.msra.mxu0 0
      %1243 = vmatpush.bf16.msra.mxu0 %v1189
      %1244 = vmatmul.bf16.gmra.mxu0 %v1186
      %v1245 = vpop.f32.mrf.mxu0
      %v1246 = vadd.f32 %v1089, %v1245
      %v1247 = vpop.f32.mrf.mxu0
      %1248 = vdwg.mxu0
      %1249 = vmatpush.bf16.msra.mxu0 0
      %1250 = vmatpush.bf16.msra.mxu0 0
      %1251 = vmatpush.bf16.msra.mxu0 0
      %1252 = vmatpush.bf16.msra.mxu0 0
      %1253 = vmatpush.bf16.msra.mxu0 0
      %1254 = vmatpush.bf16.msra.mxu0 0
      %1255 = vmatpush.bf16.msra.mxu0 0
      %1256 = vmatpush.bf16.msra.mxu0 %v1192
      %1257 = vmatmul.bf16.gmra.mxu0 %v1186
      %v1258 = vpop.f32.mrf.mxu0
      %v1259 = vadd.f32 %v1090, %v1258
      %v1260 = vpop.f32.mrf.mxu0
      %1261 = vdwg.mxu0
      %1262 = vmatpush.bf16.msra.mxu0 0
      %1263 = vmatpush.bf16.msra.mxu0 0
      %1264 = vmatpush.bf16.msra.mxu0 0
      %1265 = vmatpush.bf16.msra.mxu0 0
      %1266 = vmatpush.bf16.msra.mxu0 0
      %1267 = vmatpush.bf16.msra.mxu0 0
      %1268 = vmatpush.bf16.msra.mxu0 0
      %1269 = vmatpush.bf16.msra.mxu0 %v1195
      %1270 = vmatmul.bf16.gmra.mxu0 %v1186
      %v1271 = vpop.f32.mrf.mxu0
      %v1272 = vadd.f32 %v1091, %v1271
      %v1273 = vpop.f32.mrf.mxu0
      %1274 = vdwg.mxu0
      %1275 = vmatpush.bf16.msra.mxu0 0
      %1276 = vmatpush.bf16.msra.mxu0 0
      %1277 = vmatpush.bf16.msra.mxu0 0
      %1278 = vmatpush.bf16.msra.mxu0 0
      %1279 = vmatpush.bf16.msra.mxu0 0
      %1280 = vmatpush.bf16.msra.mxu0 0
      %1281 = vmatpush.bf16.msra.mxu0 0
      %1282 = vmatpush.bf16.msra.mxu0 %v1198
      %1283 = vmatmul.bf16.gmra.mxu0 %v1186
      %v1284 = vpop.f32.mrf.mxu0
      %v1285 = vadd.f32 %v1092, %v1284
      %v1286 = vpop.f32.mrf.mxu0
      %1287 = vdwg.mxu0
      %1288 = vmatpush.bf16.msra.mxu0 0
      %1289 = vmatpush.bf16.msra.mxu0 0
      %1290 = vmatpush.bf16.msra.mxu0 0
      %1291 = vmatpush.bf16.msra.mxu0 0
      %1292 = vmatpush.bf16.msra.mxu0 0
      %1293 = vmatpush.bf16.msra.mxu0 0
      %1294 = vmatpush.bf16.msra.mxu0 0
      %1295 = vmatpush.bf16.msra.mxu0 %v1201
      %1296 = vmatmul.bf16.gmra.mxu0 %v1186
      %v1297 = vpop.f32.mrf.mxu0
      %v1298 = vadd.f32 %v1093, %v1297
      %v1299 = vpop.f32.mrf.mxu0
      %1300 = vdwg.mxu0
      %1301 = vmatpush.bf16.msra.mxu0 0
      %1302 = vmatpush.bf16.msra.mxu0 0
      %1303 = vmatpush.bf16.msra.mxu0 0
      %1304 = vmatpush.bf16.msra.mxu0 0
      %1305 = vmatpush.bf16.msra.mxu0 0
      %1306 = vmatpush.bf16.msra.mxu0 0
      %1307 = vmatpush.bf16.msra.mxu0 0
      %1308 = vmatpush.bf16.msra.mxu0 %v1204
      %1309 = vmatmul.bf16.gmra.mxu0 %v1186
      %v1310 = vpop.f32.mrf.mxu0
      %v1311 = vadd.f32 %v1094, %v1310
      %v1312 = vpop.f32.mrf.mxu0
      %1313 = vdwg.mxu0
      %1314 = vmatpush.bf16.msra.mxu0 0
      %1315 = vmatpush.bf16.msra.mxu0 0
      %1316 = vmatpush.bf16.msra.mxu0 0
      %1317 = vmatpush.bf16.msra.mxu0 0
      %1318 = vmatpush.bf16.msra.mxu0 0
      %1319 = vmatpush.bf16.msra.mxu0 0
      %1320 = vmatpush.bf16.msra.mxu0 0
      %1321 = vmatpush.bf16.msra.mxu0 %v1207
      %1322 = vmatmul.bf16.gmra.mxu0 %v1186
      %v1323 = vpop.f32.mrf.mxu0
      %v1324 = vadd.f32 %v1095, %v1323
      %v1325 = vpop.f32.mrf.mxu0
      %1326 = vdwg.mxu0
      %1327 = vmatpush.bf16.msra.mxu0 0
      %1328 = vmatpush.bf16.msra.mxu0 0
      %1329 = vmatpush.bf16.msra.mxu0 0
      %1330 = vmatpush.bf16.msra.mxu0 0
      %1331 = vmatpush.bf16.msra.mxu0 0
      %1332 = vmatpush.bf16.msra.mxu0 0
      %1333 = vmatpush.bf16.msra.mxu0 0
      %1334 = vmatpush.bf16.msra.mxu0 %v1210
      %1335 = vmatmul.bf16.gmra.mxu0 %v1186
      %v1336 = vpop.f32.mrf.mxu0
      %v1337 = vadd.f32 %v1096, %v1336
      %v1338 = vpop.f32.mrf.mxu0
      %1339 = vdwg.mxu0
      %1340 = vmatpush.bf16.msra.mxu0 0
      %1341 = vmatpush.bf16.msra.mxu0 0
      %1342 = vmatpush.bf16.msra.mxu0 0
      %1343 = vmatpush.bf16.msra.mxu0 0
      %1344 = vmatpush.bf16.msra.mxu0 0
      %1345 = vmatpush.bf16.msra.mxu0 0
      %1346 = vmatpush.bf16.msra.mxu0 0
      %1347 = vmatpush.bf16.msra.mxu0 %v1213
      %1348 = vmatmul.bf16.gmra.mxu0 %v1186
      %v1349 = vpop.f32.mrf.mxu0
      %v1350 = vadd.f32 %v1097, %v1349
      %v1351 = vpop.f32.mrf.mxu0
      %1352 = vdwg.mxu0
      %1353 = vmatpush.bf16.msra.mxu0 0
      %1354 = vmatpush.bf16.msra.mxu0 0
      %1355 = vmatpush.bf16.msra.mxu0 0
      %1356 = vmatpush.bf16.msra.mxu0 0
      %1357 = vmatpush.bf16.msra.mxu0 0
      %1358 = vmatpush.bf16.msra.mxu0 0
      %1359 = vmatpush.bf16.msra.mxu0 0
      %1360 = vmatpush.bf16.msra.mxu0 %v1216
      %1361 = vmatmul.bf16.gmra.mxu0 %v1186
      %v1362 = vpop.f32.mrf.mxu0
      %v1363 = vadd.f32 %v1098, %v1362
      %v1364 = vpop.f32.mrf.mxu0
      %1365 = vdwg.mxu0
      %1366 = vmatpush.bf16.msra.mxu0 0
      %1367 = vmatpush.bf16.msra.mxu0 0
      %1368 = vmatpush.bf16.msra.mxu0 0
      %1369 = vmatpush.bf16.msra.mxu0 0
      %1370 = vmatpush.bf16.msra.mxu0 0
      %1371 = vmatpush.bf16.msra.mxu0 0
      %1372 = vmatpush.bf16.msra.mxu0 0
      %1373 = vmatpush.bf16.msra.mxu0 %v1219
      %1374 = vmatmul.bf16.gmra.mxu0 %v1186
      %v1375 = vpop.f32.mrf.mxu0
      %v1376 = vadd.f32 %v1099, %v1375
      %v1377 = vpop.f32.mrf.mxu0
      %1378 = vdwg.mxu0
      %1379 = vmatpush.bf16.msra.mxu0 0
      %1380 = vmatpush.bf16.msra.mxu0 0
      %1381 = vmatpush.bf16.msra.mxu0 0
      %1382 = vmatpush.bf16.msra.mxu0 0
      %1383 = vmatpush.bf16.msra.mxu0 0
      %1384 = vmatpush.bf16.msra.mxu0 0
      %1385 = vmatpush.bf16.msra.mxu0 0
      %1386 = vmatpush.bf16.msra.mxu0 %v1222
      %1387 = vmatmul.bf16.gmra.mxu0 %v1186
      %v1388 = vpop.f32.mrf.mxu0
      %v1389 = vadd.f32 %v1100, %v1388
      %v1390 = vpop.f32.mrf.mxu0
      %1391 = vdwg.mxu0
      %1392 = vmatpush.bf16.msra.mxu0 0
      %1393 = vmatpush.bf16.msra.mxu0 0
      %1394 = vmatpush.bf16.msra.mxu0 0
      %1395 = vmatpush.bf16.msra.mxu0 0
      %1396 = vmatpush.bf16.msra.mxu0 0
      %1397 = vmatpush.bf16.msra.mxu0 0
      %1398 = vmatpush.bf16.msra.mxu0 0
      %1399 = vmatpush.bf16.msra.mxu0 %v1225
      %1400 = vmatmul.bf16.gmra.mxu0 %v1186
      %v1401 = vpop.f32.mrf.mxu0
      %v1402 = vadd.f32 %v1101, %v1401
      %v1403 = vpop.f32.mrf.mxu0
      %1404 = vdwg.mxu0
      %1405 = vmatpush.bf16.msra.mxu0 0
      %1406 = vmatpush.bf16.msra.mxu0 0
      %1407 = vmatpush.bf16.msra.mxu0 0
      %1408 = vmatpush.bf16.msra.mxu0 0
      %1409 = vmatpush.bf16.msra.mxu0 0
      %1410 = vmatpush.bf16.msra.mxu0 0
      %1411 = vmatpush.bf16.msra.mxu0 0
      %1412 = vmatpush.bf16.msra.mxu0 %v1228
      %1413 = vmatmul.bf16.gmra.mxu0 %v1186
      %v1414 = vpop.f32.mrf.mxu0
      %v1415 = vadd.f32 %v1102, %v1414
      %v1416 = vpop.f32.mrf.mxu0
      %1417 = vdwg.mxu0
      %1418 = vmatpush.bf16.msra.mxu0 0
      %1419 = vmatpush.bf16.msra.mxu0 0
      %1420 = vmatpush.bf16.msra.mxu0 0
      %1421 = vmatpush.bf16.msra.mxu0 0
      %1422 = vmatpush.bf16.msra.mxu0 0
      %1423 = vmatpush.bf16.msra.mxu0 0
      %1424 = vmatpush.bf16.msra.mxu0 0
      %1425 = vmatpush.bf16.msra.mxu0 %v1231
      %1426 = vmatmul.bf16.gmra.mxu0 %v1186
      %v1427 = vpop.f32.mrf.mxu0
      %v1428 = vadd.f32 %v1103, %v1427
      %v1429 = vpop.f32.mrf.mxu0
      %1430 = vdwg.mxu0
      %1431 = vmatpush.bf16.msra.mxu0 0
      %1432 = vmatpush.bf16.msra.mxu0 0
      %1433 = vmatpush.bf16.msra.mxu0 0
      %1434 = vmatpush.bf16.msra.mxu0 0
      %1435 = vmatpush.bf16.msra.mxu0 0
      %1436 = vmatpush.bf16.msra.mxu0 0
      %1437 = vmatpush.bf16.msra.mxu0 0
      %1438 = vmatpush.bf16.msra.mxu0 %v1234
      %1439 = vmatmul.bf16.gmra.mxu0 %v1186
      %v1440 = vpop.f32.mrf.mxu0
      %v1441 = vadd.f32 %v1104, %v1440
      %v1442 = vpop.f32.mrf.mxu0
      %1443 = vdwg.mxu0
      %v1444 = vmax.f32 %v1246, 0.0
      %v1445 = vmax.f32 %v1259, 0.0
      %v1446 = vmax.f32 %v1272, 0.0
      %v1447 = vmax.f32 %v1285, 0.0
      %v1448 = vmax.f32 %v1298, 0.0
      %v1449 = vmax.f32 %v1311, 0.0
      %v1450 = vmax.f32 %v1324, 0.0
      %v1451 = vmax.f32 %v1337, 0.0
      %v1452 = vmax.f32 %v1350, 0.0
      %v1453 = vmax.f32 %v1363, 0.0
      %v1454 = vmax.f32 %v1376, 0.0
      %v1455 = vmax.f32 %v1389, 0.0
      %v1456 = vmax.f32 %v1402, 0.0
      %v1457 = vmax.f32 %v1415, 0.0
      %v1458 = vmax.f32 %v1428, 0.0
      %v1459 = vmax.f32 %v1441, 0.0
      %v1460 = vpack.c.bf16 %v1444, %v1444
      %v1461 = vpack.c.bf16 %v1445, %v1445
      %v1462 = vpack.c.bf16 %v1446, %v1446
      %v1463 = vpack.c.bf16 %v1447, %v1447
      %v1464 = vpack.c.bf16 %v1448, %v1448
      %v1465 = vpack.c.bf16 %v1449, %v1449
      %v1466 = vpack.c.bf16 %v1450, %v1450
      %v1467 = vpack.c.bf16 %v1451, %v1451
      %v1468 = vpack.c.bf16 %v1452, %v1452
      %v1469 = vpack.c.bf16 %v1453, %v1453
      %v1470 = vpack.c.bf16 %v1454, %v1454
      %v1471 = vpack.c.bf16 %v1455, %v1455
      %v1472 = vpack.c.bf16 %v1456, %v1456
      %v1473 = vpack.c.bf16 %v1457, %v1457
      %v1474 = vpack.c.bf16 %v1458, %v1458
      %v1475 = vpack.c.bf16 %v1459, %v1459
      %v1476 = vld [vmem:[%s571] sm:$0xf]
      %v1477 = vld [vmem:[%s571 + $0x4] sm:$0xf]
      %v1478 = vld [vmem:[%s571 + $0x8] sm:$0xf]
      %v1479 = vld [vmem:[%s571 + $0xc] sm:$0xf]
      %v1480 = vld [vmem:[%s571 + $0x10] sm:$0xf]
      %v1481 = vld [vmem:[%s571 + $0x14] sm:$0xf]
      %v1482 = vld [vmem:[%s571 + $0x18] sm:$0xf]
      %v1483 = vld [vmem:[%s571 + $0x1c] sm:$0xf]
      %v1484 = vld [vmem:[%s571 + $0x20] sm:$0xf]
      %v1485 = vld [vmem:[%s571 + $0x24] sm:$0xf]
      %v1486 = vld [vmem:[%s571 + $0x28] sm:$0xf]
      %v1487 = vld [vmem:[%s571 + $0x2c] sm:$0xf]
      %v1488 = vld [vmem:[%s571 + $0x30] sm:$0xf]
      %v1489 = vld [vmem:[%s571 + $0x34] sm:$0xf]
      %v1490 = vld [vmem:[%s571 + $0x38] sm:$0xf]
      %v1491 = vld [vmem:[%s571 + $0x3c] sm:$0xf]
      %v1492 = vld [vmem:[%s571 + $0x40] sm:$0xf]
      %v1493 = vld [vmem:[%s571 + $0x44] sm:$0xf]
      %v1494 = vld [vmem:[%s571 + $0x48] sm:$0xf]
      %v1495 = vld [vmem:[%s571 + $0x4c] sm:$0xf]
      %v1496 = vld [vmem:[%s571 + $0x50] sm:$0xf]
      %v1497 = vld [vmem:[%s571 + $0x54] sm:$0xf]
      %v1498 = vld [vmem:[%s571 + $0x58] sm:$0xf]
      %v1499 = vld [vmem:[%s571 + $0x5c] sm:$0xf]
      %v1500 = vld [vmem:[%s571 + $0x60] sm:$0xf]
      %v1501 = vld [vmem:[%s571 + $0x64] sm:$0xf]
      %v1502 = vld [vmem:[%s571 + $0x68] sm:$0xf]
      %v1503 = vld [vmem:[%s571 + $0x6c] sm:$0xf]
      %v1504 = vld [vmem:[%s571 + $0x70] sm:$0xf]
      %v1505 = vld [vmem:[%s571 + $0x74] sm:$0xf]
      %v1506 = vld [vmem:[%s571 + $0x78] sm:$0xf]
      %v1507 = vld [vmem:[%s571 + $0x7c] sm:$0xf]
      %v1508 = vld [vmem:[%s571 + $0x80] sm:$0xf]
      %v1509 = vld [vmem:[%s571 + $0x84] sm:$0xf]
      %v1510 = vld [vmem:[%s571 + $0x88] sm:$0xf]
      %v1511 = vld [vmem:[%s571 + $0x8c] sm:$0xf]
      %v1512 = vld [vmem:[%s571 + $0x90] sm:$0xf]
      %v1513 = vld [vmem:[%s571 + $0x94] sm:$0xf]
      %v1514 = vld [vmem:[%s571 + $0x98] sm:$0xf]
      %v1515 = vld [vmem:[%s571 + $0x9c] sm:$0xf]
      %v1516 = vld [vmem:[%s571 + $0xa0] sm:$0xf]
      %v1517 = vld [vmem:[%s571 + $0xa4] sm:$0xf]
      %v1518 = vld [vmem:[%s571 + $0xa8] sm:$0xf]
      %v1519 = vld [vmem:[%s571 + $0xac] sm:$0xf]
      %v1520 = vld [vmem:[%s571 + $0xb0] sm:$0xf]
      %v1521 = vld [vmem:[%s571 + $0xb4] sm:$0xf]
      %v1522 = vld [vmem:[%s571 + $0xb8] sm:$0xf]
      %v1523 = vld [vmem:[%s571 + $0xbc] sm:$0xf]
      %v1524 = vld [vmem:[%s571 + $0xc0] sm:$0xf]
      %v1525 = vld [vmem:[%s571 + $0xc4] sm:$0xf]
      %v1526 = vld [vmem:[%s571 + $0xc8] sm:$0xf]
      %v1527 = vld [vmem:[%s571 + $0xcc] sm:$0xf]
      %v1528 = vld [vmem:[%s571 + $0xd0] sm:$0xf]
      %v1529 = vld [vmem:[%s571 + $0xd4] sm:$0xf]
      %v1530 = vld [vmem:[%s571 + $0xd8] sm:$0xf]
      %v1531 = vld [vmem:[%s571 + $0xdc] sm:$0xf]
      %v1532 = vld [vmem:[%s571 + $0xe0] sm:$0xf]
      %v1533 = vld [vmem:[%s571 + $0xe4] sm:$0xf]
      %v1534 = vld [vmem:[%s571 + $0xe8] sm:$0xf]
      %v1535 = vld [vmem:[%s571 + $0xec] sm:$0xf]
      %v1536 = vld [vmem:[%s571 + $0xf0] sm:$0xf]
      %v1537 = vld [vmem:[%s571 + $0xf4] sm:$0xf]
      %v1538 = vld [vmem:[%s571 + $0xf8] sm:$0xf]
      %v1539 = vld [vmem:[%s571 + $0xfc] sm:$0xf]
      %v1540 = vld [vmem:[%s571 + $0x100] sm:$0xf]
      %v1541 = vld [vmem:[%s571 + $0x104] sm:$0xf]
      %v1542 = vld [vmem:[%s571 + $0x108] sm:$0xf]
      %v1543 = vld [vmem:[%s571 + $0x10c] sm:$0xf]
      %v1544 = vld [vmem:[%s571 + $0x110] sm:$0xf]
      %v1545 = vld [vmem:[%s571 + $0x114] sm:$0xf]
      %v1546 = vld [vmem:[%s571 + $0x118] sm:$0xf]
      %v1547 = vld [vmem:[%s571 + $0x11c] sm:$0xf]
      %v1548 = vld [vmem:[%s571 + $0x120] sm:$0xf]
      %v1549 = vld [vmem:[%s571 + $0x124] sm:$0xf]
      %v1550 = vld [vmem:[%s571 + $0x128] sm:$0xf]
      %v1551 = vld [vmem:[%s571 + $0x12c] sm:$0xf]
      %v1552 = vld [vmem:[%s571 + $0x130] sm:$0xf]
      %v1553 = vld [vmem:[%s571 + $0x134] sm:$0xf]
      %v1554 = vld [vmem:[%s571 + $0x138] sm:$0xf]
      %v1555 = vld [vmem:[%s571 + $0x13c] sm:$0xf]
      %v1556 = vld [vmem:[%s571 + $0x140] sm:$0xf]
      %v1557 = vld [vmem:[%s571 + $0x144] sm:$0xf]
      %v1558 = vld [vmem:[%s571 + $0x148] sm:$0xf]
      %v1559 = vld [vmem:[%s571 + $0x14c] sm:$0xf]
      %v1560 = vld [vmem:[%s571 + $0x150] sm:$0xf]
      %v1561 = vld [vmem:[%s571 + $0x154] sm:$0xf]
      %v1562 = vld [vmem:[%s571 + $0x158] sm:$0xf]
      %v1563 = vld [vmem:[%s571 + $0x15c] sm:$0xf]
      %v1564 = vld [vmem:[%s571 + $0x160] sm:$0xf]
      %v1565 = vld [vmem:[%s571 + $0x164] sm:$0xf]
      %v1566 = vld [vmem:[%s571 + $0x168] sm:$0xf]
      %v1567 = vld [vmem:[%s571 + $0x16c] sm:$0xf]
      %v1568 = vld [vmem:[%s571 + $0x170] sm:$0xf]
      %v1569 = vld [vmem:[%s571 + $0x174] sm:$0xf]
      %v1570 = vld [vmem:[%s571 + $0x178] sm:$0xf]
      %v1571 = vld [vmem:[%s571 + $0x17c] sm:$0xf]
      %v1572 = vld [vmem:[%s571 + $0x180] sm:$0xf]
      %v1573 = vld [vmem:[%s571 + $0x184] sm:$0xf]
      %v1574 = vld [vmem:[%s571 + $0x188] sm:$0xf]
      %v1575 = vld [vmem:[%s571 + $0x18c] sm:$0xf]
      %v1576 = vld [vmem:[%s571 + $0x190] sm:$0xf]
      %v1577 = vld [vmem:[%s571 + $0x194] sm:$0xf]
      %v1578 = vld [vmem:[%s571 + $0x198] sm:$0xf]
      %v1579 = vld [vmem:[%s571 + $0x19c] sm:$0xf]
      %v1580 = vld [vmem:[%s571 + $0x1a0] sm:$0xf]
      %v1581 = vld [vmem:[%s571 + $0x1a4] sm:$0xf]
      %v1582 = vld [vmem:[%s571 + $0x1a8] sm:$0xf]
      %v1583 = vld [vmem:[%s571 + $0x1ac] sm:$0xf]
      %v1584 = vld [vmem:[%s571 + $0x1b0] sm:$0xf]
      %v1585 = vld [vmem:[%s571 + $0x1b4] sm:$0xf]
      %v1586 = vld [vmem:[%s571 + $0x1b8] sm:$0xf]
      %v1587 = vld [vmem:[%s571 + $0x1bc] sm:$0xf]
      %v1588 = vld [vmem:[%s571 + $0x1c0] sm:$0xf]
      %v1589 = vld [vmem:[%s571 + $0x1c4] sm:$0xf]
      %v1590 = vld [vmem:[%s571 + $0x1c8] sm:$0xf]
      %v1591 = vld [vmem:[%s571 + $0x1cc] sm:$0xf]
      %v1592 = vld [vmem:[%s571 + $0x1d0] sm:$0xf]
      %v1593 = vld [vmem:[%s571 + $0x1d4] sm:$0xf]
      %v1594 = vld [vmem:[%s571 + $0x1d8] sm:$0xf]
      %v1595 = vld [vmem:[%s571 + $0x1dc] sm:$0xf]
      %v1596 = vld [vmem:[%s571 + $0x1e0] sm:$0xf]
      %v1597 = vld [vmem:[%s571 + $0x1e4] sm:$0xf]
      %v1598 = vld [vmem:[%s571 + $0x1e8] sm:$0xf]
      %v1599 = vld [vmem:[%s571 + $0x1ec] sm:$0xf]
      %v1600 = vld [vmem:[%s571 + $0x1f0] sm:$0xf]
      %v1601 = vld [vmem:[%s571 + $0x1f4] sm:$0xf]
      %v1602 = vld [vmem:[%s571 + $0x1f8] sm:$0xf]
      %v1603 = vld [vmem:[%s571 + $0x1fc] sm:$0xf]
      %v1604 = vld [vmem:[%s571 + $0x200] sm:$0xf]
      %v1605 = vld [vmem:[%s571 + $0x204] sm:$0xf]
      %v1606 = vld [vmem:[%s571 + $0x208] sm:$0xf]
      %v1607 = vld [vmem:[%s571 + $0x20c] sm:$0xf]
      %v1608 = vld [vmem:[%s571 + $0x210] sm:$0xf]
      %v1609 = vld [vmem:[%s571 + $0x214] sm:$0xf]
      %v1610 = vld [vmem:[%s571 + $0x218] sm:$0xf]
      %v1611 = vld [vmem:[%s571 + $0x21c] sm:$0xf]
      %v1612 = vld [vmem:[%s571 + $0x220] sm:$0xf]
      %v1613 = vld [vmem:[%s571 + $0x224] sm:$0xf]
      %v1614 = vld [vmem:[%s571 + $0x228] sm:$0xf]
      %v1615 = vld [vmem:[%s571 + $0x22c] sm:$0xf]
      %v1616 = vld [vmem:[%s571 + $0x230] sm:$0xf]
      %v1617 = vld [vmem:[%s571 + $0x234] sm:$0xf]
      %v1618 = vld [vmem:[%s571 + $0x238] sm:$0xf]
      %v1619 = vld [vmem:[%s571 + $0x23c] sm:$0xf]
      %v1620 = vld [vmem:[%s571 + $0x240] sm:$0xf]
      %v1621 = vld [vmem:[%s571 + $0x244] sm:$0xf]
      %v1622 = vld [vmem:[%s571 + $0x248] sm:$0xf]
      %v1623 = vld [vmem:[%s571 + $0x24c] sm:$0xf]
      %v1624 = vld [vmem:[%s571 + $0x250] sm:$0xf]
      %v1625 = vld [vmem:[%s571 + $0x254] sm:$0xf]
      %v1626 = vld [vmem:[%s571 + $0x258] sm:$0xf]
      %v1627 = vld [vmem:[%s571 + $0x25c] sm:$0xf]
      %v1628 = vld [vmem:[%s571 + $0x260] sm:$0xf]
      %v1629 = vld [vmem:[%s571 + $0x264] sm:$0xf]
      %v1630 = vld [vmem:[%s571 + $0x268] sm:$0xf]
      %v1631 = vld [vmem:[%s571 + $0x26c] sm:$0xf]
      %v1632 = vld [vmem:[%s571 + $0x270] sm:$0xf]
      %v1633 = vld [vmem:[%s571 + $0x274] sm:$0xf]
      %v1634 = vld [vmem:[%s571 + $0x278] sm:$0xf]
      %v1635 = vld [vmem:[%s571 + $0x27c] sm:$0xf]
      %v1636 = vld [vmem:[%s571 + $0x280] sm:$0xf]
      %v1637 = vld [vmem:[%s571 + $0x284] sm:$0xf]
      %v1638 = vld [vmem:[%s571 + $0x288] sm:$0xf]
      %v1639 = vld [vmem:[%s571 + $0x28c] sm:$0xf]
      %v1640 = vld [vmem:[%s571 + $0x290] sm:$0xf]
      %v1641 = vld [vmem:[%s571 + $0x294] sm:$0xf]
      %v1642 = vld [vmem:[%s571 + $0x298] sm:$0xf]
      %v1643 = vld [vmem:[%s571 + $0x29c] sm:$0xf]
      %v1644 = vld [vmem:[%s571 + $0x2a0] sm:$0xf]
      %v1645 = vld [vmem:[%s571 + $0x2a4] sm:$0xf]
      %v1646 = vld [vmem:[%s571 + $0x2a8] sm:$0xf]
      %v1647 = vld [vmem:[%s571 + $0x2ac] sm:$0xf]
      %v1648 = vld [vmem:[%s571 + $0x2b0] sm:$0xf]
      %v1649 = vld [vmem:[%s571 + $0x2b4] sm:$0xf]
      %v1650 = vld [vmem:[%s571 + $0x2b8] sm:$0xf]
      %v1651 = vld [vmem:[%s571 + $0x2bc] sm:$0xf]
      %v1652 = vld [vmem:[%s571 + $0x2c0] sm:$0xf]
      %v1653 = vld [vmem:[%s571 + $0x2c4] sm:$0xf]
      %v1654 = vld [vmem:[%s571 + $0x2c8] sm:$0xf]
      %v1655 = vld [vmem:[%s571 + $0x2cc] sm:$0xf]
      %v1656 = vld [vmem:[%s571 + $0x2d0] sm:$0xf]
      %v1657 = vld [vmem:[%s571 + $0x2d4] sm:$0xf]
      %v1658 = vld [vmem:[%s571 + $0x2d8] sm:$0xf]
      %v1659 = vld [vmem:[%s571 + $0x2dc] sm:$0xf]
      %v1660 = vld [vmem:[%s571 + $0x2e0] sm:$0xf]
      %v1661 = vld [vmem:[%s571 + $0x2e4] sm:$0xf]
      %v1662 = vld [vmem:[%s571 + $0x2e8] sm:$0xf]
      %v1663 = vld [vmem:[%s571 + $0x2ec] sm:$0xf]
      %v1664 = vld [vmem:[%s571 + $0x2f0] sm:$0xf]
      %v1665 = vld [vmem:[%s571 + $0x2f4] sm:$0xf]
      %v1666 = vld [vmem:[%s571 + $0x2f8] sm:$0xf]
      %v1667 = vld [vmem:[%s571 + $0x2fc] sm:$0xf]
      %v1668 = vld [vmem:[%s571 + $0x300] sm:$0xf]
      %v1669 = vld [vmem:[%s571 + $0x304] sm:$0xf]
      %v1670 = vld [vmem:[%s571 + $0x308] sm:$0xf]
      %v1671 = vld [vmem:[%s571 + $0x30c] sm:$0xf]
      %v1672 = vld [vmem:[%s571 + $0x310] sm:$0xf]
      %v1673 = vld [vmem:[%s571 + $0x314] sm:$0xf]
      %v1674 = vld [vmem:[%s571 + $0x318] sm:$0xf]
      %v1675 = vld [vmem:[%s571 + $0x31c] sm:$0xf]
      %v1676 = vld [vmem:[%s571 + $0x320] sm:$0xf]
      %v1677 = vld [vmem:[%s571 + $0x324] sm:$0xf]
      %v1678 = vld [vmem:[%s571 + $0x328] sm:$0xf]
      %v1679 = vld [vmem:[%s571 + $0x32c] sm:$0xf]
      %v1680 = vld [vmem:[%s571 + $0x330] sm:$0xf]
      %v1681 = vld [vmem:[%s571 + $0x334] sm:$0xf]
      %v1682 = vld [vmem:[%s571 + $0x338] sm:$0xf]
      %v1683 = vld [vmem:[%s571 + $0x33c] sm:$0xf]
      %v1684 = vld [vmem:[%s571 + $0x340] sm:$0xf]
      %v1685 = vld [vmem:[%s571 + $0x344] sm:$0xf]
      %v1686 = vld [vmem:[%s571 + $0x348] sm:$0xf]
      %v1687 = vld [vmem:[%s571 + $0x34c] sm:$0xf]
      %v1688 = vld [vmem:[%s571 + $0x350] sm:$0xf]
      %v1689 = vld [vmem:[%s571 + $0x354] sm:$0xf]
      %v1690 = vld [vmem:[%s571 + $0x358] sm:$0xf]
      %v1691 = vld [vmem:[%s571 + $0x35c] sm:$0xf]
      %v1692 = vld [vmem:[%s571 + $0x360] sm:$0xf]
      %v1693 = vld [vmem:[%s571 + $0x364] sm:$0xf]
      %v1694 = vld [vmem:[%s571 + $0x368] sm:$0xf]
      %v1695 = vld [vmem:[%s571 + $0x36c] sm:$0xf]
      %v1696 = vld [vmem:[%s571 + $0x370] sm:$0xf]
      %v1697 = vld [vmem:[%s571 + $0x374] sm:$0xf]
      %v1698 = vld [vmem:[%s571 + $0x378] sm:$0xf]
      %v1699 = vld [vmem:[%s571 + $0x37c] sm:$0xf]
      %v1700 = vld [vmem:[%s571 + $0x380] sm:$0xf]
      %v1701 = vld [vmem:[%s571 + $0x384] sm:$0xf]
      %v1702 = vld [vmem:[%s571 + $0x388] sm:$0xf]
      %v1703 = vld [vmem:[%s571 + $0x38c] sm:$0xf]
      %v1704 = vld [vmem:[%s571 + $0x390] sm:$0xf]
      %v1705 = vld [vmem:[%s571 + $0x394] sm:$0xf]
      %v1706 = vld [vmem:[%s571 + $0x398] sm:$0xf]
      %v1707 = vld [vmem:[%s571 + $0x39c] sm:$0xf]
      %v1708 = vld [vmem:[%s571 + $0x3a0] sm:$0xf]
      %v1709 = vld [vmem:[%s571 + $0x3a4] sm:$0xf]
      %v1710 = vld [vmem:[%s571 + $0x3a8] sm:$0xf]
      %v1711 = vld [vmem:[%s571 + $0x3ac] sm:$0xf]
      %v1712 = vld [vmem:[%s571 + $0x3b0] sm:$0xf]
      %v1713 = vld [vmem:[%s571 + $0x3b4] sm:$0xf]
      %v1714 = vld [vmem:[%s571 + $0x3b8] sm:$0xf]
      %v1715 = vld [vmem:[%s571 + $0x3bc] sm:$0xf]
      %v1716 = vld [vmem:[%s571 + $0x3c0] sm:$0xf]
      %v1717 = vld [vmem:[%s571 + $0x3c4] sm:$0xf]
      %v1718 = vld [vmem:[%s571 + $0x3c8] sm:$0xf]
      %v1719 = vld [vmem:[%s571 + $0x3cc] sm:$0xf]
      %v1720 = vld [vmem:[%s571 + $0x3d0] sm:$0xf]
      %v1721 = vld [vmem:[%s571 + $0x3d4] sm:$0xf]
      %v1722 = vld [vmem:[%s571 + $0x3d8] sm:$0xf]
      %v1723 = vld [vmem:[%s571 + $0x3dc] sm:$0xf]
      %v1724 = vld [vmem:[%s571 + $0x3e0] sm:$0xf]
      %v1725 = vld [vmem:[%s571 + $0x3e4] sm:$0xf]
      %v1726 = vld [vmem:[%s571 + $0x3e8] sm:$0xf]
      %v1727 = vld [vmem:[%s571 + $0x3ec] sm:$0xf]
      %v1728 = vld [vmem:[%s571 + $0x3f0] sm:$0xf]
      %v1729 = vld [vmem:[%s571 + $0x3f4] sm:$0xf]
      %v1730 = vld [vmem:[%s571 + $0x3f8] sm:$0xf]
      %v1731 = vld [vmem:[%s571 + $0x3fc] sm:$0xf]
      %v1732 = vperm.slane %v597, 4
      %v1989 = vunpack.c.l.b16 %v1476
      %v1990 = vunpack.c.l.b16 %v1477
      %v1991 = vunpack.c.l.b16 %v1478
      %v1992 = vunpack.c.l.b16 %v1479
      %v1993 = vunpack.c.l.b16 %v1480
      %v1994 = vunpack.c.l.b16 %v1481
      %v1995 = vunpack.c.l.b16 %v1482
      %v1996 = vunpack.c.l.b16 %v1483
      %v1997 = vunpack.c.l.b16 %v1484
      %v1998 = vunpack.c.l.b16 %v1485
      %v1999 = vunpack.c.l.b16 %v1486
      %v2000 = vunpack.c.l.b16 %v1487
      %v2001 = vunpack.c.l.b16 %v1488
      %v2002 = vunpack.c.l.b16 %v1489
      %v2003 = vunpack.c.l.b16 %v1490
      %v2004 = vunpack.c.l.b16 %v1491
      %v2005 = vunpack.c.l.b16 %v1492
      %v2006 = vunpack.c.l.b16 %v1493
      %v2007 = vunpack.c.l.b16 %v1494
      %v2008 = vunpack.c.l.b16 %v1495
      %v2009 = vunpack.c.l.b16 %v1496
      %v2010 = vunpack.c.l.b16 %v1497
      %v2011 = vunpack.c.l.b16 %v1498
      %v2012 = vunpack.c.l.b16 %v1499
      %v2013 = vunpack.c.l.b16 %v1500
      %v2014 = vunpack.c.l.b16 %v1501
      %v2015 = vunpack.c.l.b16 %v1502
      %v2016 = vunpack.c.l.b16 %v1503
      %v2017 = vunpack.c.l.b16 %v1504
      %v2018 = vunpack.c.l.b16 %v1505
      %v2019 = vunpack.c.l.b16 %v1506
      %v2020 = vunpack.c.l.b16 %v1507
      %v2021 = vunpack.c.l.b16 %v1508
      %v2022 = vunpack.c.l.b16 %v1509
      %v2023 = vunpack.c.l.b16 %v1510
      %v2024 = vunpack.c.l.b16 %v1511
      %v2025 = vunpack.c.l.b16 %v1512
      %v2026 = vunpack.c.l.b16 %v1513
      %v2027 = vunpack.c.l.b16 %v1514
      %v2028 = vunpack.c.l.b16 %v1515
      %v2029 = vunpack.c.l.b16 %v1516
      %v2030 = vunpack.c.l.b16 %v1517
      %v2031 = vunpack.c.l.b16 %v1518
      %v2032 = vunpack.c.l.b16 %v1519
      %v2033 = vunpack.c.l.b16 %v1520
      %v2034 = vunpack.c.l.b16 %v1521
      %v2035 = vunpack.c.l.b16 %v1522
      %v2036 = vunpack.c.l.b16 %v1523
      %v2037 = vunpack.c.l.b16 %v1524
      %v2038 = vunpack.c.l.b16 %v1525
      %v2039 = vunpack.c.l.b16 %v1526
      %v2040 = vunpack.c.l.b16 %v1527
      %v2041 = vunpack.c.l.b16 %v1528
      %v2042 = vunpack.c.l.b16 %v1529
      %v2043 = vunpack.c.l.b16 %v1530
      %v2044 = vunpack.c.l.b16 %v1531
      %v2045 = vunpack.c.l.b16 %v1532
      %v2046 = vunpack.c.l.b16 %v1533
      %v2047 = vunpack.c.l.b16 %v1534
      %v2048 = vunpack.c.l.b16 %v1535
      %v2049 = vunpack.c.l.b16 %v1536
      %v2050 = vunpack.c.l.b16 %v1537
      %v2051 = vunpack.c.l.b16 %v1538
      %v2052 = vunpack.c.l.b16 %v1539
      %v2053 = vunpack.c.l.b16 %v1540
      %v2054 = vunpack.c.l.b16 %v1541
      %v2055 = vunpack.c.l.b16 %v1542
      %v2056 = vunpack.c.l.b16 %v1543
      %v2057 = vunpack.c.l.b16 %v1544
      %v2058 = vunpack.c.l.b16 %v1545
      %v2059 = vunpack.c.l.b16 %v1546
      %v2060 = vunpack.c.l.b16 %v1547
      %v2061 = vunpack.c.l.b16 %v1548
      %v2062 = vunpack.c.l.b16 %v1549
      %v2063 = vunpack.c.l.b16 %v1550
      %v2064 = vunpack.c.l.b16 %v1551
      %v2065 = vunpack.c.l.b16 %v1552
      %v2066 = vunpack.c.l.b16 %v1553
      %v2067 = vunpack.c.l.b16 %v1554
      %v2068 = vunpack.c.l.b16 %v1555
      %v2069 = vunpack.c.l.b16 %v1556
      %v2070 = vunpack.c.l.b16 %v1557
      %v2071 = vunpack.c.l.b16 %v1558
      %v2072 = vunpack.c.l.b16 %v1559
      %v2073 = vunpack.c.l.b16 %v1560
      %v2074 = vunpack.c.l.b16 %v1561
      %v2075 = vunpack.c.l.b16 %v1562
      %v2076 = vunpack.c.l.b16 %v1563
      %v2077 = vunpack.c.l.b16 %v1564
      %v2078 = vunpack.c.l.b16 %v1565
      %v2079 = vunpack.c.l.b16 %v1566
      %v2080 = vunpack.c.l.b16 %v1567
      %v2081 = vunpack.c.l.b16 %v1568
      %v2082 = vunpack.c.l.b16 %v1569
      %v2083 = vunpack.c.l.b16 %v1570
      %v2084 = vunpack.c.l.b16 %v1571
      %v2085 = vunpack.c.l.b16 %v1572
      %v2086 = vunpack.c.l.b16 %v1573
      %v2087 = vunpack.c.l.b16 %v1574
      %v2088 = vunpack.c.l.b16 %v1575
      %v2089 = vunpack.c.l.b16 %v1576
      %v2090 = vunpack.c.l.b16 %v1577
      %v2091 = vunpack.c.l.b16 %v1578
      %v2092 = vunpack.c.l.b16 %v1579
      %v2093 = vunpack.c.l.b16 %v1580
      %v2094 = vunpack.c.l.b16 %v1581
      %v2095 = vunpack.c.l.b16 %v1582
      %v2096 = vunpack.c.l.b16 %v1583
      %v2097 = vunpack.c.l.b16 %v1584
      %v2098 = vunpack.c.l.b16 %v1585
      %v2099 = vunpack.c.l.b16 %v1586
      %v2100 = vunpack.c.l.b16 %v1587
      %v2101 = vunpack.c.l.b16 %v1588
      %v2102 = vunpack.c.l.b16 %v1589
      %v2103 = vunpack.c.l.b16 %v1590
      %v2104 = vunpack.c.l.b16 %v1591
      %v2105 = vunpack.c.l.b16 %v1592
      %v2106 = vunpack.c.l.b16 %v1593
      %v2107 = vunpack.c.l.b16 %v1594
      %v2108 = vunpack.c.l.b16 %v1595
      %v2109 = vunpack.c.l.b16 %v1596
      %v2110 = vunpack.c.l.b16 %v1597
      %v2111 = vunpack.c.l.b16 %v1598
      %v2112 = vunpack.c.l.b16 %v1599
      %v2113 = vunpack.c.l.b16 %v1600
      %v2114 = vunpack.c.l.b16 %v1601
      %v2115 = vunpack.c.l.b16 %v1602
      %v2116 = vunpack.c.l.b16 %v1603
      %v2117 = vunpack.c.l.b16 %v1604
      %v2118 = vunpack.c.l.b16 %v1605
      %v2119 = vunpack.c.l.b16 %v1606
      %v2120 = vunpack.c.l.b16 %v1607
      %v2121 = vunpack.c.l.b16 %v1608
      %v2122 = vunpack.c.l.b16 %v1609
      %v2123 = vunpack.c.l.b16 %v1610
      %v2124 = vunpack.c.l.b16 %v1611
      %v2125 = vunpack.c.l.b16 %v1612
      %v2126 = vunpack.c.l.b16 %v1613
      %v2127 = vunpack.c.l.b16 %v1614
      %v2128 = vunpack.c.l.b16 %v1615
      %v2129 = vunpack.c.l.b16 %v1616
      %v2130 = vunpack.c.l.b16 %v1617
      %v2131 = vunpack.c.l.b16 %v1618
      %v2132 = vunpack.c.l.b16 %v1619
      %v2133 = vunpack.c.l.b16 %v1620
      %v2134 = vunpack.c.l.b16 %v1621
      %v2135 = vunpack.c.l.b16 %v1622
      %v2136 = vunpack.c.l.b16 %v1623
      %v2137 = vunpack.c.l.b16 %v1624
      %v2138 = vunpack.c.l.b16 %v1625
      %v2139 = vunpack.c.l.b16 %v1626
      %v2140 = vunpack.c.l.b16 %v1627
      %v2141 = vunpack.c.l.b16 %v1628
      %v2142 = vunpack.c.l.b16 %v1629
      %v2143 = vunpack.c.l.b16 %v1630
      %v2144 = vunpack.c.l.b16 %v1631
      %v2145 = vunpack.c.l.b16 %v1632
      %v2146 = vunpack.c.l.b16 %v1633
      %v2147 = vunpack.c.l.b16 %v1634
      %v2148 = vunpack.c.l.b16 %v1635
      %v2149 = vunpack.c.l.b16 %v1636
      %v2150 = vunpack.c.l.b16 %v1637
      %v2151 = vunpack.c.l.b16 %v1638
      %v2152 = vunpack.c.l.b16 %v1639
      %v2153 = vunpack.c.l.b16 %v1640
      %v2154 = vunpack.c.l.b16 %v1641
      %v2155 = vunpack.c.l.b16 %v1642
      %v2156 = vunpack.c.l.b16 %v1643
      %v2157 = vunpack.c.l.b16 %v1644
      %v2158 = vunpack.c.l.b16 %v1645
      %v2159 = vunpack.c.l.b16 %v1646
      %v2160 = vunpack.c.l.b16 %v1647
      %v2161 = vunpack.c.l.b16 %v1648
      %v2162 = vunpack.c.l.b16 %v1649
      %v2163 = vunpack.c.l.b16 %v1650
      %v2164 = vunpack.c.l.b16 %v1651
      %v2165 = vunpack.c.l.b16 %v1652
      %v2166 = vunpack.c.l.b16 %v1653
      %v2167 = vunpack.c.l.b16 %v1654
      %v2168 = vunpack.c.l.b16 %v1655
      %v2169 = vunpack.c.l.b16 %v1656
      %v2170 = vunpack.c.l.b16 %v1657
      %v2171 = vunpack.c.l.b16 %v1658
      %v2172 = vunpack.c.l.b16 %v1659
      %v2173 = vunpack.c.l.b16 %v1660
      %v2174 = vunpack.c.l.b16 %v1661
      %v2175 = vunpack.c.l.b16 %v1662
      %v2176 = vunpack.c.l.b16 %v1663
      %v2177 = vunpack.c.l.b16 %v1664
      %v2178 = vunpack.c.l.b16 %v1665
      %v2179 = vunpack.c.l.b16 %v1666
      %v2180 = vunpack.c.l.b16 %v1667
      %v2181 = vunpack.c.l.b16 %v1668
      %v2182 = vunpack.c.l.b16 %v1669
      %v2183 = vunpack.c.l.b16 %v1670
      %v2184 = vunpack.c.l.b16 %v1671
      %v2185 = vunpack.c.l.b16 %v1672
      %v2186 = vunpack.c.l.b16 %v1673
      %v2187 = vunpack.c.l.b16 %v1674
      %v2188 = vunpack.c.l.b16 %v1675
      %v2189 = vunpack.c.l.b16 %v1676
      %v2190 = vunpack.c.l.b16 %v1677
      %v2191 = vunpack.c.l.b16 %v1678
      %v2192 = vunpack.c.l.b16 %v1679
      %v2193 = vunpack.c.l.b16 %v1680
      %v2194 = vunpack.c.l.b16 %v1681
      %v2195 = vunpack.c.l.b16 %v1682
      %v2196 = vunpack.c.l.b16 %v1683
      %v2197 = vunpack.c.l.b16 %v1684
      %v2198 = vunpack.c.l.b16 %v1685
      %v2199 = vunpack.c.l.b16 %v1686
      %v2200 = vunpack.c.l.b16 %v1687
      %v2201 = vunpack.c.l.b16 %v1688
      %v2202 = vunpack.c.l.b16 %v1689
      %v2203 = vunpack.c.l.b16 %v1690
      %v2204 = vunpack.c.l.b16 %v1691
      %v2205 = vunpack.c.l.b16 %v1692
      %v2206 = vunpack.c.l.b16 %v1693
      %v2207 = vunpack.c.l.b16 %v1694
      %v2208 = vunpack.c.l.b16 %v1695
      %v2209 = vunpack.c.l.b16 %v1696
      %v2210 = vunpack.c.l.b16 %v1697
      %v2211 = vunpack.c.l.b16 %v1698
      %v2212 = vunpack.c.l.b16 %v1699
      %v2213 = vunpack.c.l.b16 %v1700
      %v2214 = vunpack.c.l.b16 %v1701
      %v2215 = vunpack.c.l.b16 %v1702
      %v2216 = vunpack.c.l.b16 %v1703
      %v2217 = vunpack.c.l.b16 %v1704
      %v2218 = vunpack.c.l.b16 %v1705
      %v2219 = vunpack.c.l.b16 %v1706
      %v2220 = vunpack.c.l.b16 %v1707
      %v2221 = vunpack.c.l.b16 %v1708
      %v2222 = vunpack.c.l.b16 %v1709
      %v2223 = vunpack.c.l.b16 %v1710
      %v2224 = vunpack.c.l.b16 %v1711
      %v2225 = vunpack.c.l.b16 %v1712
      %v2226 = vunpack.c.l.b16 %v1713
      %v2227 = vunpack.c.l.b16 %v1714
      %v2228 = vunpack.c.l.b16 %v1715
      %v2229 = vunpack.c.l.b16 %v1716
      %v2230 = vunpack.c.l.b16 %v1717
      %v2231 = vunpack.c.l.b16 %v1718
      %v2232 = vunpack.c.l.b16 %v1719
      %v2233 = vunpack.c.l.b16 %v1720
      %v2234 = vunpack.c.l.b16 %v1721
      %v2235 = vunpack.c.l.b16 %v1722
      %v2236 = vunpack.c.l.b16 %v1723
      %v2237 = vunpack.c.l.b16 %v1724
      %v2238 = vunpack.c.l.b16 %v1725
      %v2239 = vunpack.c.l.b16 %v1726
      %v2240 = vunpack.c.l.b16 %v1727
      %v2241 = vunpack.c.l.b16 %v1728
      %v2242 = vunpack.c.l.b16 %v1729
      %v2243 = vunpack.c.l.b16 %v1730
      %v2244 = vunpack.c.l.b16 %v1731
      %v2245 = vpack.c.b16 %v1990, %v1989
      %v2246 = vpack.c.b16 %v1992, %v1991
      %v2247 = vpack.c.b16 %v1994, %v1993
      %v2248 = vpack.c.b16 %v1996, %v1995
      %v2249 = vpack.c.b16 %v1998, %v1997
      %v2250 = vpack.c.b16 %v2000, %v1999
      %v2251 = vpack.c.b16 %v2002, %v2001
      %v2252 = vpack.c.b16 %v2004, %v2003
      %v2253 = vpack.c.b16 %v2006, %v2005
      %v2254 = vpack.c.b16 %v2008, %v2007
      %v2255 = vpack.c.b16 %v2010, %v2009
      %v2256 = vpack.c.b16 %v2012, %v2011
      %v2257 = vpack.c.b16 %v2014, %v2013
      %v2258 = vpack.c.b16 %v2016, %v2015
      %v2259 = vpack.c.b16 %v2018, %v2017
      %v2260 = vpack.c.b16 %v2020, %v2019
      %v2261 = vpack.c.b16 %v2022, %v2021
      %v2262 = vpack.c.b16 %v2024, %v2023
      %v2263 = vpack.c.b16 %v2026, %v2025
      %v2264 = vpack.c.b16 %v2028, %v2027
      %v2265 = vpack.c.b16 %v2030, %v2029
      %v2266 = vpack.c.b16 %v2032, %v2031
      %v2267 = vpack.c.b16 %v2034, %v2033
      %v2268 = vpack.c.b16 %v2036, %v2035
      %v2269 = vpack.c.b16 %v2038, %v2037
      %v2270 = vpack.c.b16 %v2040, %v2039
      %v2271 = vpack.c.b16 %v2042, %v2041
      %v2272 = vpack.c.b16 %v2044, %v2043
      %v2273 = vpack.c.b16 %v2046, %v2045
      %v2274 = vpack.c.b16 %v2048, %v2047
      %v2275 = vpack.c.b16 %v2050, %v2049
      %v2276 = vpack.c.b16 %v2052, %v2051
      %v2277 = vpack.c.b16 %v2054, %v2053
      %v2278 = vpack.c.b16 %v2056, %v2055
      %v2279 = vpack.c.b16 %v2058, %v2057
      %v2280 = vpack.c.b16 %v2060, %v2059
      %v2281 = vpack.c.b16 %v2062, %v2061
      %v2282 = vpack.c.b16 %v2064, %v2063
      %v2283 = vpack.c.b16 %v2066, %v2065
      %v2284 = vpack.c.b16 %v2068, %v2067
      %v2285 = vpack.c.b16 %v2070, %v2069
      %v2286 = vpack.c.b16 %v2072, %v2071
      %v2287 = vpack.c.b16 %v2074, %v2073
      %v2288 = vpack.c.b16 %v2076, %v2075
      %v2289 = vpack.c.b16 %v2078, %v2077
      %v2290 = vpack.c.b16 %v2080, %v2079
      %v2291 = vpack.c.b16 %v2082, %v2081
      %v2292 = vpack.c.b16 %v2084, %v2083
      %v2293 = vpack.c.b16 %v2086, %v2085
      %v2294 = vpack.c.b16 %v2088, %v2087
      %v2295 = vpack.c.b16 %v2090, %v2089
      %v2296 = vpack.c.b16 %v2092, %v2091
      %v2297 = vpack.c.b16 %v2094, %v2093
      %v2298 = vpack.c.b16 %v2096, %v2095
      %v2299 = vpack.c.b16 %v2098, %v2097
      %v2300 = vpack.c.b16 %v2100, %v2099
      %v2301 = vpack.c.b16 %v2102, %v2101
      %v2302 = vpack.c.b16 %v2104, %v2103
      %v2303 = vpack.c.b16 %v2106, %v2105
      %v2304 = vpack.c.b16 %v2108, %v2107
      %v2305 = vpack.c.b16 %v2110, %v2109
      %v2306 = vpack.c.b16 %v2112, %v2111
      %v2307 = vpack.c.b16 %v2114, %v2113
      %v2308 = vpack.c.b16 %v2116, %v2115
      %v2309 = vpack.c.b16 %v2118, %v2117
      %v2310 = vpack.c.b16 %v2120, %v2119
      %v2311 = vpack.c.b16 %v2122, %v2121
      %v2312 = vpack.c.b16 %v2124, %v2123
      %v2313 = vpack.c.b16 %v2126, %v2125
      %v2314 = vpack.c.b16 %v2128, %v2127
      %v2315 = vpack.c.b16 %v2130, %v2129
      %v2316 = vpack.c.b16 %v2132, %v2131
      %v2317 = vpack.c.b16 %v2134, %v2133
      %v2318 = vpack.c.b16 %v2136, %v2135
      %v2319 = vpack.c.b16 %v2138, %v2137
      %v2320 = vpack.c.b16 %v2140, %v2139
      %v2321 = vpack.c.b16 %v2142, %v2141
      %v2322 = vpack.c.b16 %v2144, %v2143
      %v2323 = vpack.c.b16 %v2146, %v2145
      %v2324 = vpack.c.b16 %v2148, %v2147
      %v2325 = vpack.c.b16 %v2150, %v2149
      %v2326 = vpack.c.b16 %v2152, %v2151
      %v2327 = vpack.c.b16 %v2154, %v2153
      %v2328 = vpack.c.b16 %v2156, %v2155
      %v2329 = vpack.c.b16 %v2158, %v2157
      %v2330 = vpack.c.b16 %v2160, %v2159
      %v2331 = vpack.c.b16 %v2162, %v2161
      %v2332 = vpack.c.b16 %v2164, %v2163
      %v2333 = vpack.c.b16 %v2166, %v2165
      %v2334 = vpack.c.b16 %v2168, %v2167
      %v2335 = vpack.c.b16 %v2170, %v2169
      %v2336 = vpack.c.b16 %v2172, %v2171
      %v2337 = vpack.c.b16 %v2174, %v2173
      %v2338 = vpack.c.b16 %v2176, %v2175
      %v2339 = vpack.c.b16 %v2178, %v2177
      %v2340 = vpack.c.b16 %v2180, %v2179
      %v2341 = vpack.c.b16 %v2182, %v2181
      %v2342 = vpack.c.b16 %v2184, %v2183
      %v2343 = vpack.c.b16 %v2186, %v2185
      %v2344 = vpack.c.b16 %v2188, %v2187
      %v2345 = vpack.c.b16 %v2190, %v2189
      %v2346 = vpack.c.b16 %v2192, %v2191
      %v2347 = vpack.c.b16 %v2194, %v2193
      %v2348 = vpack.c.b16 %v2196, %v2195
      %v2349 = vpack.c.b16 %v2198, %v2197
      %v2350 = vpack.c.b16 %v2200, %v2199
      %v2351 = vpack.c.b16 %v2202, %v2201
      %v2352 = vpack.c.b16 %v2204, %v2203
      %v2353 = vpack.c.b16 %v2206, %v2205
      %v2354 = vpack.c.b16 %v2208, %v2207
      %v2355 = vpack.c.b16 %v2210, %v2209
      %v2356 = vpack.c.b16 %v2212, %v2211
      %v2357 = vpack.c.b16 %v2214, %v2213
      %v2358 = vpack.c.b16 %v2216, %v2215
      %v2359 = vpack.c.b16 %v2218, %v2217
      %v2360 = vpack.c.b16 %v2220, %v2219
      %v2361 = vpack.c.b16 %v2222, %v2221
      %v2362 = vpack.c.b16 %v2224, %v2223
      %v2363 = vpack.c.b16 %v2226, %v2225
      %v2364 = vpack.c.b16 %v2228, %v2227
      %v2365 = vpack.c.b16 %v2230, %v2229
      %v2366 = vpack.c.b16 %v2232, %v2231
      %v2367 = vpack.c.b16 %v2234, %v2233
      %v2368 = vpack.c.b16 %v2236, %v2235
      %v2369 = vpack.c.b16 %v2238, %v2237
      %v2370 = vpack.c.b16 %v2240, %v2239
      %v2371 = vpack.c.b16 %v2242, %v2241
      %v2372 = vpack.c.b16 %v2244, %v2243
      %2501 = vmatpush.bf16.msra.mxu0 %v2252
      %2502 = vmatpush.bf16.msra.mxu0 %v2251
      %2503 = vmatpush.bf16.msra.mxu0 %v2250
      %2504 = vmatpush.bf16.msra.mxu0 %v2249
      %2505 = vmatpush.bf16.msra.mxu0 %v2248
      %2506 = vmatpush.bf16.msra.mxu0 %v2247
      %2507 = vmatpush.bf16.msra.mxu0 %v2246
      %2508 = vmatpush.bf16.msra.mxu0 %v2245
      %2509 = vmatmul.bf16.gmra.mxu0 %v1460
      %v2510 = vpop.f32.mrf.mxu0
      %v2511 = vadd.f32 %v1732, %v2510
      %v2512 = vpop.f32.mrf.mxu0
      %2513 = vdwg.mxu0
      %2514 = vmatpush.bf16.msra.mxu0 %v2260
      %2515 = vmatpush.bf16.msra.mxu0 %v2259
      %2516 = vmatpush.bf16.msra.mxu0 %v2258
      %2517 = vmatpush.bf16.msra.mxu0 %v2257
      %2518 = vmatpush.bf16.msra.mxu0 %v2256
      %2519 = vmatpush.bf16.msra.mxu0 %v2255
      %2520 = vmatpush.bf16.msra.mxu0 %v2254
      %2521 = vmatpush.bf16.msra.mxu0 %v2253
      %2522 = vmatmul.bf16.gmra.mxu0 %v1461
      %v2523 = vpop.f32.mrf.mxu0
      %v2524 = vadd.f32 %v2511, %v2523
      %v2525 = vpop.f32.mrf.mxu0
      %2526 = vdwg.mxu0
      %2527 = vmatpush.bf16.msra.mxu0 %v2268
      %2528 = vmatpush.bf16.msra.mxu0 %v2267
      %2529 = vmatpush.bf16.msra.mxu0 %v2266
      %2530 = vmatpush.bf16.msra.mxu0 %v2265
      %2531 = vmatpush.bf16.msra.mxu0 %v2264
      %2532 = vmatpush.bf16.msra.mxu0 %v2263
      %2533 = vmatpush.bf16.msra.mxu0 %v2262
      %2534 = vmatpush.bf16.msra.mxu0 %v2261
      %2535 = vmatmul.bf16.gmra.mxu0 %v1462
      %v2536 = vpop.f32.mrf.mxu0
      %v2537 = vadd.f32 %v2524, %v2536
      %v2538 = vpop.f32.mrf.mxu0
      %2539 = vdwg.mxu0
      %2540 = vmatpush.bf16.msra.mxu0 %v2276
      %2541 = vmatpush.bf16.msra.mxu0 %v2275
      %2542 = vmatpush.bf16.msra.mxu0 %v2274
      %2543 = vmatpush.bf16.msra.mxu0 %v2273
      %2544 = vmatpush.bf16.msra.mxu0 %v2272
      %2545 = vmatpush.bf16.msra.mxu0 %v2271
      %2546 = vmatpush.bf16.msra.mxu0 %v2270
      %2547 = vmatpush.bf16.msra.mxu0 %v2269
      %2548 = vmatmul.bf16.gmra.mxu0 %v1463
      %v2549 = vpop.f32.mrf.mxu0
      %v2550 = vadd.f32 %v2537, %v2549
      %v2551 = vpop.f32.mrf.mxu0
      %2552 = vdwg.mxu0
      %2553 = vmatpush.bf16.msra.mxu0 %v2284
      %2554 = vmatpush.bf16.msra.mxu0 %v2283
      %2555 = vmatpush.bf16.msra.mxu0 %v2282
      %2556 = vmatpush.bf16.msra.mxu0 %v2281
      %2557 = vmatpush.bf16.msra.mxu0 %v2280
      %2558 = vmatpush.bf16.msra.mxu0 %v2279
      %2559 = vmatpush.bf16.msra.mxu0 %v2278
      %2560 = vmatpush.bf16.msra.mxu0 %v2277
      %2561 = vmatmul.bf16.gmra.mxu0 %v1464
      %v2562 = vpop.f32.mrf.mxu0
      %v2563 = vadd.f32 %v2550, %v2562
      %v2564 = vpop.f32.mrf.mxu0
      %2565 = vdwg.mxu0
      %2566 = vmatpush.bf16.msra.mxu0 %v2292
      %2567 = vmatpush.bf16.msra.mxu0 %v2291
      %2568 = vmatpush.bf16.msra.mxu0 %v2290
      %2569 = vmatpush.bf16.msra.mxu0 %v2289
      %2570 = vmatpush.bf16.msra.mxu0 %v2288
      %2571 = vmatpush.bf16.msra.mxu0 %v2287
      %2572 = vmatpush.bf16.msra.mxu0 %v2286
      %2573 = vmatpush.bf16.msra.mxu0 %v2285
      %2574 = vmatmul.bf16.gmra.mxu0 %v1465
      %v2575 = vpop.f32.mrf.mxu0
      %v2576 = vadd.f32 %v2563, %v2575
      %v2577 = vpop.f32.mrf.mxu0
      %2578 = vdwg.mxu0
      %2579 = vmatpush.bf16.msra.mxu0 %v2300
      %2580 = vmatpush.bf16.msra.mxu0 %v2299
      %2581 = vmatpush.bf16.msra.mxu0 %v2298
      %2582 = vmatpush.bf16.msra.mxu0 %v2297
      %2583 = vmatpush.bf16.msra.mxu0 %v2296
      %2584 = vmatpush.bf16.msra.mxu0 %v2295
      %2585 = vmatpush.bf16.msra.mxu0 %v2294
      %2586 = vmatpush.bf16.msra.mxu0 %v2293
      %2587 = vmatmul.bf16.gmra.mxu0 %v1466
      %v2588 = vpop.f32.mrf.mxu0
      %v2589 = vadd.f32 %v2576, %v2588
      %v2590 = vpop.f32.mrf.mxu0
      %2591 = vdwg.mxu0
      %2592 = vmatpush.bf16.msra.mxu0 %v2308
      %2593 = vmatpush.bf16.msra.mxu0 %v2307
      %2594 = vmatpush.bf16.msra.mxu0 %v2306
      %2595 = vmatpush.bf16.msra.mxu0 %v2305
      %2596 = vmatpush.bf16.msra.mxu0 %v2304
      %2597 = vmatpush.bf16.msra.mxu0 %v2303
      %2598 = vmatpush.bf16.msra.mxu0 %v2302
      %2599 = vmatpush.bf16.msra.mxu0 %v2301
      %2600 = vmatmul.bf16.gmra.mxu0 %v1467
      %v2601 = vpop.f32.mrf.mxu0
      %v2602 = vadd.f32 %v2589, %v2601
      %v2603 = vpop.f32.mrf.mxu0
      %2604 = vdwg.mxu0
      %2605 = vmatpush.bf16.msra.mxu0 %v2316
      %2606 = vmatpush.bf16.msra.mxu0 %v2315
      %2607 = vmatpush.bf16.msra.mxu0 %v2314
      %2608 = vmatpush.bf16.msra.mxu0 %v2313
      %2609 = vmatpush.bf16.msra.mxu0 %v2312
      %2610 = vmatpush.bf16.msra.mxu0 %v2311
      %2611 = vmatpush.bf16.msra.mxu0 %v2310
      %2612 = vmatpush.bf16.msra.mxu0 %v2309
      %2613 = vmatmul.bf16.gmra.mxu0 %v1468
      %v2614 = vpop.f32.mrf.mxu0
      %v2615 = vadd.f32 %v2602, %v2614
      %v2616 = vpop.f32.mrf.mxu0
      %2617 = vdwg.mxu0
      %2618 = vmatpush.bf16.msra.mxu0 %v2324
      %2619 = vmatpush.bf16.msra.mxu0 %v2323
      %2620 = vmatpush.bf16.msra.mxu0 %v2322
      %2621 = vmatpush.bf16.msra.mxu0 %v2321
      %2622 = vmatpush.bf16.msra.mxu0 %v2320
      %2623 = vmatpush.bf16.msra.mxu0 %v2319
      %2624 = vmatpush.bf16.msra.mxu0 %v2318
      %2625 = vmatpush.bf16.msra.mxu0 %v2317
      %2626 = vmatmul.bf16.gmra.mxu0 %v1469
      %v2627 = vpop.f32.mrf.mxu0
      %v2628 = vadd.f32 %v2615, %v2627
      %v2629 = vpop.f32.mrf.mxu0
      %2630 = vdwg.mxu0
      %2631 = vmatpush.bf16.msra.mxu0 %v2332
      %2632 = vmatpush.bf16.msra.mxu0 %v2331
      %2633 = vmatpush.bf16.msra.mxu0 %v2330
      %2634 = vmatpush.bf16.msra.mxu0 %v2329
      %2635 = vmatpush.bf16.msra.mxu0 %v2328
      %2636 = vmatpush.bf16.msra.mxu0 %v2327
      %2637 = vmatpush.bf16.msra.mxu0 %v2326
      %2638 = vmatpush.bf16.msra.mxu0 %v2325
      %2639 = vmatmul.bf16.gmra.mxu0 %v1470
      %v2640 = vpop.f32.mrf.mxu0
      %v2641 = vadd.f32 %v2628, %v2640
      %v2642 = vpop.f32.mrf.mxu0
      %2643 = vdwg.mxu0
      %2644 = vmatpush.bf16.msra.mxu0 %v2340
      %2645 = vmatpush.bf16.msra.mxu0 %v2339
      %2646 = vmatpush.bf16.msra.mxu0 %v2338
      %2647 = vmatpush.bf16.msra.mxu0 %v2337
      %2648 = vmatpush.bf16.msra.mxu0 %v2336
      %2649 = vmatpush.bf16.msra.mxu0 %v2335
      %2650 = vmatpush.bf16.msra.mxu0 %v2334
      %2651 = vmatpush.bf16.msra.mxu0 %v2333
      %2652 = vmatmul.bf16.gmra.mxu0 %v1471
      %v2653 = vpop.f32.mrf.mxu0
      %v2654 = vadd.f32 %v2641, %v2653
      %v2655 = vpop.f32.mrf.mxu0
      %2656 = vdwg.mxu0
      %2657 = vmatpush.bf16.msra.mxu0 %v2348
      %2658 = vmatpush.bf16.msra.mxu0 %v2347
      %2659 = vmatpush.bf16.msra.mxu0 %v2346
      %2660 = vmatpush.bf16.msra.mxu0 %v2345
      %2661 = vmatpush.bf16.msra.mxu0 %v2344
      %2662 = vmatpush.bf16.msra.mxu0 %v2343
      %2663 = vmatpush.bf16.msra.mxu0 %v2342
      %2664 = vmatpush.bf16.msra.mxu0 %v2341
      %2665 = vmatmul.bf16.gmra.mxu0 %v1472
      %v2666 = vpop.f32.mrf.mxu0
      %v2667 = vadd.f32 %v2654, %v2666
      %v2668 = vpop.f32.mrf.mxu0
      %2669 = vdwg.mxu0
      %2670 = vmatpush.bf16.msra.mxu0 %v2356
      %2671 = vmatpush.bf16.msra.mxu0 %v2355
      %2672 = vmatpush.bf16.msra.mxu0 %v2354
      %2673 = vmatpush.bf16.msra.mxu0 %v2353
      %2674 = vmatpush.bf16.msra.mxu0 %v2352
      %2675 = vmatpush.bf16.msra.mxu0 %v2351
      %2676 = vmatpush.bf16.msra.mxu0 %v2350
      %2677 = vmatpush.bf16.msra.mxu0 %v2349
      %2678 = vmatmul.bf16.gmra.mxu0 %v1473
      %v2679 = vpop.f32.mrf.mxu0
      %v2680 = vadd.f32 %v2667, %v2679
      %v2681 = vpop.f32.mrf.mxu0
      %2682 = vdwg.mxu0
      %2683 = vmatpush.bf16.msra.mxu0 %v2364
      %2684 = vmatpush.bf16.msra.mxu0 %v2363
      %2685 = vmatpush.bf16.msra.mxu0 %v2362
      %2686 = vmatpush.bf16.msra.mxu0 %v2361
      %2687 = vmatpush.bf16.msra.mxu0 %v2360
      %2688 = vmatpush.bf16.msra.mxu0 %v2359
      %2689 = vmatpush.bf16.msra.mxu0 %v2358
      %2690 = vmatpush.bf16.msra.mxu0 %v2357
      %2691 = vmatmul.bf16.gmra.mxu0 %v1474
      %v2692 = vpop.f32.mrf.mxu0
      %v2693 = vadd.f32 %v2680, %v2692
      %v2694 = vpop.f32.mrf.mxu0
      %2695 = vdwg.mxu0
      %2696 = vmatpush.bf16.msra.mxu0 %v2372
      %2697 = vmatpush.bf16.msra.mxu0 %v2371
      %2698 = vmatpush.bf16.msra.mxu0 %v2370
      %2699 = vmatpush.bf16.msra.mxu0 %v2369
      %2700 = vmatpush.bf16.msra.mxu0 %v2368
      %2701 = vmatpush.bf16.msra.mxu0 %v2367
      %2702 = vmatpush.bf16.msra.mxu0 %v2366
      %2703 = vmatpush.bf16.msra.mxu0 %v2365
      %2704 = vmatmul.bf16.gmra.mxu0 %v1475
      %v2705 = vpop.f32.mrf.mxu0
      %v2706 = vadd.f32 %v2693, %v2705
      %v2707 = vpop.f32.mrf.mxu0
      %2708 = vdwg.mxu0
      %v2709 = vadd.f32 %v1067, %v2706
      %v2710 = vsel %vm607, %v2709, 0.0
      %2711 = vadd.xlane.f32.xlu0 %v2710
      %v2712 = vpop.xlane.xlu0 %2711
      %v2713 = vmul.f32 %v2712, %v806
      %v2714 = vsub.f32 %v2709, %v2713
      %v2715 = vmul.f32 %v2714, %v2714
      %v2716 = vsel %vm607, %v2715, 0.0
      %2717 = vadd.xlane.f32.xlu0 %v2716
      %v2718 = vpop.xlane.xlu0 %2717
      %v2719 = vmul.f32 %v2718, %v806
      %v2720 = vadd.f32 %v2719, 1e-05
      %v2721 = vrsqrt.pop %v2720
      %v2722 = vmul.f32 %v2721, %v2720
      %v2723 = vmul.f32 %v2722, %v2721
      %v2724 = vmul.f32 0.5, %v2723
      %v2725 = vsub.f32 1.5, %v2724
      %v2726 = vmul.f32 %v2721, %v2725
      %vm2727 = vweird.f32 %v2720
      %vm2728 = vweird.f32 %v2721
      %vm2729 = vmor %vm2727, %vm2728
      %v2730 = vsel %vm2729, %v2721, %v2726
      %v2731 = vmul.f32 %v2714, %v2730
      %v2732 = vperm.slane %v597, 5
      %v2733 = vmul.f32 %v2731, %v2732
      %v2734 = vperm.slane %v597, 6
      %v2735 = vadd.f32 %v2733, %v2734
      %2736 = vst.msk [vmem:[#allocation2] sm:$0xff] %vm607, %v2735
      %p2737 = scmp.eq.s32.totalorder %s27, 1
      // Predicated region
      $region69: #{transformer_vae_forward.8} parent=63 // pred_check
        %p2738 = pneg %p2737
      $region70: #{transformer_vae_forward.8} parent=63 // pred_check_branch
        %2740 = sbr.rel (%p2738) target = $region72
      $region71: #{transformer_vae_forward.8} parent=63 // pred_region
        %v2741 = vpack.c.bf16 %v2735, %v2735
        %vm2742 = vcmask 76800
        %2743 = vst.msk [vmem:[%s584] sm:$0xf] %vm2742, %v2741
      $region72: #{transformer_vae_forward.8} parent=63 // pred_fallthru
        _
      %p2744 = scmp.lt.s32.totalorder %s26, 1
      %s2745 = scalar_select %p2744, %s26, 1
      %s2746 = smul.addr %s2745, 4
      %s2747 = scalar_lea.vmem %s11, %s2746
      // Predicated region
      $region73: #{transformer_vae_forward.8} parent=63 // pred_check
        %p2748 = pneg %p338
      $region74: #{transformer_vae_forward.8} parent=63 // pred_check_branch
        %2750 = sbr.rel (%p2748) target = $region76
      $region75: #{transformer_vae_forward.8} parent=63 // pred_region
        _
      $region76: #{transformer_vae_forward.8} parent=63 // pred_fallthru
        _
    $region64: #{transformer_vae_forward.8} parent=5 // pred_fallthru
      _
    %p2751 = scmp.le.s32.totalorder 2, %s17
    // Predicated region
    $region77: #{transformer_vae_forward.8} parent=5 // pred_check
      %p2752 = pneg %p2751
    $region78: #{transformer_vae_forward.8} parent=5 // pred_check_branch
      %2754 = sbr.rel (%p2752) target = $region80
    $region79: #{transformer_vae_forward.8} parent=5 // pred_region
      %s2755 = ssub.s32 %s17, 2
      // Predicated region
      $region81: #{transformer_vae_forward.8} parent=79 // pred_check
        %p2756 = pneg %p344
      $region82: #{transformer_vae_forward.8} parent=79 // pred_check_branch
        %2758 = sbr.rel (%p2756) target = $region84
      $region83: #{transformer_vae_forward.8} parent=79 // pred_region
        %p2759 = scmp.lt.s32.totalorder %s28, 1
        %s2760 = scalar_select %p2759, %s28, 1
        %s2761 = smul.addr %s2760, 4
        %s2762 = scalar_lea.vmem %s11, %s2761
      $region84: #{transformer_vae_forward.8} parent=79 // pred_fallthru
        _
    $region80: #{transformer_vae_forward.8} parent=5 // pred_fallthru
      _
  $region6: #{transformer_vae_forward.8} parent=0 // loop_footer
    %s21 = sadd.s32 1, %s17
  $region7: #{transformer_vae_forward.8} parent=0 // loop_footer_branch
    %16 = sbr.rel target = $region3
  $region8: #{transformer_vae_forward.8} parent=0 // loop_exit
    _

</llo_original>
